<compile_context>
chip_gen: v7x
topology: tpu7x:2x2x1
jax: 0.10.0
libtpu: 0.0.40
codegen_flags: <defaults>
</compile_context>

<pallas_src>
import math

import jax
import jax.numpy as jnp
from jax.experimental import pallas as pl
from jax.experimental.pallas import tpu as pltpu

NEG_INF = -1000000000.0


def _mha_attn_kernel(num_heads, head_dim, hidden, inv_sqrt_d):
    """Flash-style attention over (nh, Tq, d)/(nh, Tkv, d) blocks + fused out-proj."""

    def kernel(q_ref, k_ref, v_ref, bias_ref, wp_ref, bp_ref, out_ref,
               m_sc, l_sc, acc_sc, ctx_sc):
        ki = pl.program_id(2)

        @pl.when(ki == 0)
        def _init():
            m_sc[...] = jnp.full(m_sc.shape, -jnp.inf, m_sc.dtype)
            l_sc[...] = jnp.zeros(l_sc.shape, l_sc.dtype)
            acc_sc[...] = jnp.zeros(acc_sc.shape, acc_sc.dtype)

        q = q_ref[0]                                     # (nh, Tq,  d) bf16
        k = k_ref[0]                                     # (nh, Tkv, d) bf16
        v = v_ref[0]                                     # (nh, Tkv, d) bf16
        bias = bias_ref[0].astype(jnp.float32)           # (Tq, Tkv)  additive mask

        # Batched QK^T over heads: contract the last dims directly
        # (no materialized transpose), f32 accumulation on the MXU.
        s = jnp.einsum('hqd,hkd->hqk', q, k,
                       preferred_element_type=jnp.float32)        # (nh, Tq, Tkv)
        s = s * inv_sqrt_d + bias[None, :, :]

        # Online (flash) softmax update.
        m_prev = m_sc[...]
        m_new = jnp.maximum(m_prev, jnp.max(s, axis=-1, keepdims=True))
        alpha = jnp.exp(m_prev - m_new)
        p = jnp.exp(s - m_new)
        l_sc[...] = alpha * l_sc[...] + jnp.sum(p, axis=-1, keepdims=True)
        acc_sc[...] = alpha * acc_sc[...] + jnp.einsum(
            'hqk,hkd->hqd', p.astype(v.dtype), v,
            preferred_element_type=jnp.float32)                   # (nh, Tq, d)
        m_sc[...] = m_new

        @pl.when(ki == pl.num_programs(2) - 1)
        def _finalize():
            # Normalize and lay the heads out along lanes (lane offset h*d),
            # then ONE wide (Tq, H) @ (H, H) output projection.
            inv_l = pl.reciprocal(l_sc[...], approx=True)         # (nh, Tq, 1)
            for h in range(num_heads):                            # static unroll
                lo = h * head_dim
                ctx_sc[:, lo:lo + head_dim] = acc_sc[h] * inv_l[h]
            out = jnp.dot(ctx_sc[...].astype(jnp.bfloat16), wp_ref[...],
                          preferred_element_type=jnp.float32)     # (Tq, H)
            out_ref[0] = (out + bp_ref[...]).astype(out_ref.dtype)

    return kernel


def _fuse_heads(w_stacked, b_stacked):
    """(nh, H, d) per-head weights -> one wide (H, nh*d); biases -> (1, nh*d)."""
    nh, H, d = w_stacked.shape
    w = jnp.transpose(w_stacked, (1, 0, 2)).reshape(H, nh * d)
    b = jnp.transpose(b_stacked, (1, 0, 2)).reshape(1, nh * d)
    return w, b


def _pick_vmem_limit():
    """Per-generation VMEM budget (v5e/v6e: 128 MiB, v7x: 64 MiB) with headroom."""
    cap = 64 * 1024 * 1024
    try:
        cap = int(getattr(pltpu.get_tpu_info(), "vmem_capacity_bytes", cap))
    except Exception:
        pass
    return int(min(cap * 3 // 4, 100 * 1024 * 1024))


def multi_headed_attention(x, mask, params, *, num_heads, tq=128, tkv=128):
    """x: (B, S, H) f32, mask: (B, S, S) int32 (0 -> masked)."""
    B, S, H = x.shape
    d = H // num_heads
    assert num_heads * d == H

    wq_s, bq_s, wk_s, bk_s, wv_s, bv_s, wp, bp = params

    # One-time per-head -> wide weight fusion (outside the kernel).
    wq, bq = _fuse_heads(wq_s, bq_s)
    wk, bk = _fuse_heads(wk_s, bk_s)
    wv, bv = _fuse_heads(wv_s, bv_s)

    # --- Q/K/V projections hoisted out of the kernel: computed exactly ONCE as
    #     wide batched bf16 matmuls (f32 accumulation), then laid out head-major
    #     (B, nh, S, d) so the kernel's batched dots need no lane sub-slicing. ---
    xb = x.astype(jnp.bfloat16)

    def project(w, b):
        y = jnp.dot(xb, w.astype(jnp.bfloat16),
                    preferred_element_type=jnp.float32) + b        # (B, S, H) f32
        y = y.reshape(B, S, num_heads, d).transpose(0, 2, 1, 3)    # (B, nh, S, d)
        return y.astype(jnp.bfloat16)

    q = project(wq, bq)
    k = project(wk, bk)
    v = project(wv, bv)

    # Precomputed additive mask bias (bf16 stream: 2 B/elem vs 4 B int32).
    bias = jnp.where(mask == 0, jnp.float32(NEG_INF),
                     jnp.float32(0.0)).astype(jnp.bfloat16)        # (B, S, S)

    wp_b = wp.astype(jnp.bfloat16)                                 # (H, H)
    bp_f = bp.astype(jnp.float32)                                  # (1, H)

    # Tile selection (raise tq/tkv to 256 on v6e/v5e when S, H allow).
    tq = min(tq, S)
    tkv = min(tkv, S)
    assert S % tq == 0 and S % tkv == 0, "S must be divisible by the tile sizes"
    assert tq % 8 == 0 or tq == S
    assert tkv % 128 == 0 or tkv == S, "kv tile must be lane-aligned or full S"
    n_q = S // tq
    n_kv = S // tkv

    # Cost estimate for the kernel only (projections are separate XLA matmuls).
    flops = int(4 * B * S * S * H + 2 * B * S * H * H)
    transcendentals = int(B * num_heads * S * S)
    bytes_accessed = int(
        2 * B * S * H                       # q (bf16), fetched once per q-tile
        + 2 * n_q * 2 * B * S * H           # k, v re-streamed per q-tile (bf16)
        + 2 * B * S * S                     # additive mask bias (bf16)
        + 4 * B * S * H                     # f32 output
        + 2 * H * H + 4 * H)                # Wp + bp

    grid_spec = pltpu.PrefetchScalarGridSpec(
        num_scalar_prefetch=0,
        grid=(B, n_q, n_kv),
        in_specs=[
            pl.BlockSpec((1, num_heads, tq, d), lambda b, qi, ki: (b, 0, qi, 0)),
            pl.BlockSpec((1, num_heads, tkv, d), lambda b, qi, ki: (b, 0, ki, 0)),
            pl.BlockSpec((1, num_heads, tkv, d), lambda b, qi, ki: (b, 0, ki, 0)),
            pl.BlockSpec((1, tq, tkv), lambda b, qi, ki: (b, qi, ki)),
            pl.BlockSpec((H, H), lambda b, qi, ki: (0, 0)),
            pl.BlockSpec((1, H), lambda b, qi, ki: (0, 0)),
        ],
        out_specs=pl.BlockSpec((1, tq, H), lambda b, qi, ki: (b, qi, 0)),
        scratch_shapes=[
            pltpu.VMEM((num_heads, tq, 1), jnp.float32),   # running max m
            pltpu.VMEM((num_heads, tq, 1), jnp.float32),   # running sum l
            pltpu.VMEM((num_heads, tq, d), jnp.float32),   # ctx accumulator
            pltpu.VMEM((tq, H), jnp.float32),              # lane-packed ctx heads
        ],
    )

    return pl.pallas_call(
        _mha_attn_kernel(num_heads, d, H, 1.0 / math.sqrt(d)),
        out_shape=jax.ShapeDtypeStruct((B, S, H), jnp.float32),
        grid_spec=grid_spec,
        compiler_params=pltpu.CompilerParams(
            dimension_semantics=("parallel", "parallel", "arbitrary"),
            vmem_limit_bytes=_pick_vmem_limit()),
        cost_estimate=pl.CostEstimate(
            flops=flops,
            transcendentals=transcendentals,
            bytes_accessed=bytes_accessed),
    )(q, k, v, bias, wp_b, bp_f)


def init_params(key, hidden_size, num_heads):
    d = hidden_size // num_heads
    ks = jax.random.split(key, 8)
    scale = 1.0 / math.sqrt(hidden_size)
    # Stacked per-head projection weights (num_heads, H, d); biases (num_heads, 1, d).
    wq = jax.random.uniform(ks[0], (num_heads, hidden_size, d), jnp.float32, -scale, scale)
    bq = jax.random.uniform(ks[1], (num_heads, 1, d), jnp.float32, -scale, scale)
    wk = jax.random.uniform(ks[2], (num_heads, hidden_size, d), jnp.float32, -scale, scale)
    bk = jax.random.uniform(ks[3], (num_heads, 1, d), jnp.float32, -scale, scale)
    wv = jax.random.uniform(ks[4], (num_heads, hidden_size, d), jnp.float32, -scale, scale)
    bv = jax.random.uniform(ks[5], (num_heads, 1, d), jnp.float32, -scale, scale)
    wp = jax.random.uniform(ks[6], (hidden_size, hidden_size), jnp.float32, -scale, scale)
    bp = jax.random.uniform(ks[7], (1, hidden_size), jnp.float32, -scale, scale)
    return wq, bq, wk, bk, wv, bv, wp, bp


def reference(x, mask, params, *, num_heads):
    """Pure-JAX reference mirroring the PyTorch module (per-head linears)."""
    wq, bq, wk, bk, wv, bv, wp, bp = params
    H = x.shape[-1]
    d = H // num_heads
    heads = []
    for h in range(num_heads):
        q = x @ wq[h] + bq[h]
        k = x @ wk[h] + bk[h]
        v = x @ wv[h] + bv[h]
        s = q @ jnp.swapaxes(k, 1, 2) / math.sqrt(d)
        s = jnp.where(mask == 0, NEG_INF, s)
        p = jax.nn.softmax(s, axis=-1)
        heads.append(p @ v)
    return jnp.concatenate(heads, axis=-1) @ wp + bp


if __name__ == "__main__":
    # S=256 with tq=tkv=128 exercises both q-tiling and the multi-step online
    # softmax (kv) path; shapes are still tiny overall.
    B, S, H, NH = 2, 256, 32, 4

    key = jax.random.PRNGKey(0)
    k_x, k_m, k_p = jax.random.split(key, 3)

    x = jax.random.normal(k_x, (B, S, H), jnp.float32)
    mask = (jax.random.uniform(k_m, (B, S, S)) > 0.3).astype(jnp.int32)
    params = init_params(k_p, H, NH)

    out = multi_headed_attention(x, mask, params, num_heads=NH, tq=128, tkv=128)
    out = jax.block_until_ready(out)

    ref = reference(x, mask, params, num_heads=NH)
    assert out.shape == (B, S, H)
    max_err = float(jnp.max(jnp.abs(out - ref)))
    # bf16 MXU operands (f32 accumulation) + approx softmax reciprocal -> loose tol.
    assert jnp.allclose(out, ref, atol=5e-2, rtol=5e-2), (
        f"mismatch vs reference (max abs err {max_err})")

    print("KERNEL_OK")
</pallas_src>

<mosaic_0001>
module attributes {stable_mosaic.version = 11 : i64} {
  func.func @kernel(%arg0: i32, %arg1: i32, %arg2: i32, %arg3: memref<1x4x128x8xbf16, #tpu.memory_space<vmem>>, %arg4: memref<1x4x128x8xbf16, #tpu.memory_space<vmem>>, %arg5: memref<1x4x128x8xbf16, #tpu.memory_space<vmem>>, %arg6: memref<1x128x128xbf16, #tpu.memory_space<vmem>>, %arg7: memref<32x32xbf16, #tpu.memory_space<vmem>>, %arg8: memref<1x32xf32, #tpu.memory_space<vmem>>, %arg9: memref<1x128x32xf32, #tpu.memory_space<vmem>>, %arg10: memref<4x128x1xf32, #tpu.memory_space<vmem>>, %arg11: memref<4x128x1xf32, #tpu.memory_space<vmem>>, %arg12: memref<4x128x8xf32, #tpu.memory_space<vmem>>, %arg13: memref<128x32xf32, #tpu.memory_space<vmem>>) attributes {dimension_semantics = [#tpu.dimension_semantics<parallel>, #tpu.dimension_semantics<parallel>, #tpu.dimension_semantics<arbitrary>], iteration_bounds = array<i64: 2, 2, 2>, scalar_prefetch = 0 : i64, scratch_operands = 4 : i64, tpu.core_type = #tpu.core_type<tc>, window_params = [{transform_indices = @transform_0, window_bounds = array<i64: 1, 4, 128, 8>}, {transform_indices = @transform_1, window_bounds = array<i64: 1, 4, 128, 8>}, {transform_indices = @transform_2, window_bounds = array<i64: 1, 4, 128, 8>}, {transform_indices = @transform_3, window_bounds = array<i64: 1, 128, 128>}, {pipeline_mode = #tpu.pipeline_mode<synchronous>, transform_indices = @transform_4, window_bounds = array<i64: 32, 32>}, {pipeline_mode = #tpu.pipeline_mode<synchronous>, transform_indices = @transform_5, window_bounds = array<i64: 1, 32>}, {transform_indices = @transform_6, window_bounds = array<i64: 1, 128, 32>}]} {
    %c0_i32 = arith.constant 0 : i32
    %0 = arith.cmpi eq, %arg2, %c0_i32 : i32
    %1 = arith.extui %0 : i1 to i32
    %c0_i32_0 = arith.constant 0 : i32
    %2 = arith.cmpi ne, %1, %c0_i32_0 : i32
    scf.if %2 {
      %cst_38 = arith.constant 0xFF800000 : f32
      %44 = vector.broadcast %cst_38 : f32 to vector<4x128x1xf32>
      %c0_39 = arith.constant 0 : index
      %c0_40 = arith.constant 0 : index
      %c0_41 = arith.constant 0 : index
      %45 = vector.load %arg10[%c0_39, %c0_40, %c0_41] : memref<4x128x1xf32, #tpu.memory_space<vmem>>, vector<4x128x1xf32>
      tpu.vector_store %arg10[%c0_39, %c0_40, %c0_41], %44 {strides = array<i32>} : memref<4x128x1xf32, #tpu.memory_space<vmem>>, vector<4x128x1xf32>,
      %cst_42 = arith.constant 0.000000e+00 : f32
      %46 = vector.broadcast %cst_42 : f32 to vector<4x128x1xf32>
      %c0_43 = arith.constant 0 : index
      %c0_44 = arith.constant 0 : index
      %c0_45 = arith.constant 0 : index
      %47 = vector.load %arg11[%c0_43, %c0_44, %c0_45] : memref<4x128x1xf32, #tpu.memory_space<vmem>>, vector<4x128x1xf32>
      tpu.vector_store %arg11[%c0_43, %c0_44, %c0_45], %46 {strides = array<i32>} : memref<4x128x1xf32, #tpu.memory_space<vmem>>, vector<4x128x1xf32>,
      %cst_46 = arith.constant 0.000000e+00 : f32
      %48 = vector.broadcast %cst_46 : f32 to vector<4x128x8xf32>
      %c0_47 = arith.constant 0 : index
      %c0_48 = arith.constant 0 : index
      %c0_49 = arith.constant 0 : index
      %49 = vector.load %arg12[%c0_47, %c0_48, %c0_49] : memref<4x128x8xf32, #tpu.memory_space<vmem>>, vector<4x128x8xf32>
      tpu.vector_store %arg12[%c0_47, %c0_48, %c0_49], %48 {strides = array<i32>} : memref<4x128x8xf32, #tpu.memory_space<vmem>>, vector<4x128x8xf32>,
    } else {
    }
    %c0 = arith.constant 0 : index
    %c0_1 = arith.constant 0 : index
    %c0_2 = arith.constant 0 : index
    %c0_3 = arith.constant 0 : index
    %3 = vector.load %arg3[%c0, %c0_1, %c0_2, %c0_3] : memref<1x4x128x8xbf16, #tpu.memory_space<vmem>>, vector<1x4x128x8xbf16>
    %4 = vector.shape_cast %3 : vector<1x4x128x8xbf16> to vector<4x128x8xbf16>
    %c0_4 = arith.constant 0 : index
    %c0_5 = arith.constant 0 : index
    %c0_6 = arith.constant 0 : index
    %c0_7 = arith.constant 0 : index
    %5 = vector.load %arg4[%c0_4, %c0_5, %c0_6, %c0_7] : memref<1x4x128x8xbf16, #tpu.memory_space<vmem>>, vector<1x4x128x8xbf16>
    %6 = vector.shape_cast %5 : vector<1x4x128x8xbf16> to vector<4x128x8xbf16>
    %c0_8 = arith.constant 0 : index
    %c0_9 = arith.constant 0 : index
    %c0_10 = arith.constant 0 : index
    %c0_11 = arith.constant 0 : index
    %7 = vector.load %arg5[%c0_8, %c0_9, %c0_10, %c0_11] : memref<1x4x128x8xbf16, #tpu.memory_space<vmem>>, vector<1x4x128x8xbf16>
    %8 = vector.shape_cast %7 : vector<1x4x128x8xbf16> to vector<4x128x8xbf16>
    %c0_12 = arith.constant 0 : index
    %c0_13 = arith.constant 0 : index
    %c0_14 = arith.constant 0 : index
    %9 = vector.load %arg6[%c0_12, %c0_13, %c0_14] : memref<1x128x128xbf16, #tpu.memory_space<vmem>>, vector<1x128x128xbf16>
    %10 = vector.shape_cast %9 : vector<1x128x128xbf16> to vector<128x128xbf16>
    %11 = arith.extf %10 : vector<128x128xbf16> to vector<128x128xf32>
    "tpu.trace_start"() <{level = 10 : i32, message = "hqd,hkd->hqk"}> : () -> ()
    %cst = arith.constant dense<0.000000e+00> : vector<4x128x128xf32>
    %12 = tpu.matmul %4, %6, %cst {dimension_numbers = #tpu.dot_dimension_numbers<[2], [2], [1], [1], [0, 0, 0, 1, 1, 1], [0], [0]>} : vector<4x128x8xbf16>, vector<4x128x8xbf16>, vector<4x128x128xf32> -> vector<4x128x128xf32>
    "tpu.trace_stop"() : () -> ()
    %cst_15 = arith.constant 0.353553385 : f32
    %13 = vector.broadcast %cst_15 : f32 to vector<4x128x128xf32>
    %14 = arith.mulf %12, %13 : vector<4x128x128xf32>
    %15 = vector.shape_cast %11 : vector<128x128xf32> to vector<1x128x128xf32>
    %16 = vector.broadcast %15 : vector<1x128x128xf32> to vector<4x128x128xf32>
    %17 = arith.addf %14, %16 : vector<4x128x128xf32>
    %c0_16 = arith.constant 0 : index
    %c0_17 = arith.constant 0 : index
    %c0_18 = arith.constant 0 : index
    %18 = vector.load %arg10[%c0_16, %c0_17, %c0_18] : memref<4x128x1xf32, #tpu.memory_space<vmem>>, vector<4x128x1xf32>
    %cst_19 = arith.constant dense<0xFF800000> : vector<4x128xf32>
    %19 = vector.multi_reduction <maximumf>, %17, %cst_19 [2] : vector<4x128x128xf32> to vector<4x128xf32>
    %20 = vector.shape_cast %19 : vector<4x128xf32> to vector<4x128x1xf32>
    %21 = arith.maximumf %18, %20 : vector<4x128x1xf32>
    %22 = arith.subf %18, %21 : vector<4x128x1xf32>
    %23 = math.exp %22 : vector<4x128x1xf32>
    %24 = vector.broadcast %21 : vector<4x128x1xf32> to vector<4x128x128xf32>
    %25 = arith.subf %17, %24 : vector<4x128x128xf32>
    %26 = math.exp %25 : vector<4x128x128xf32>
    %c0_20 = arith.constant 0 : index
    %c0_21 = arith.constant 0 : index
    %c0_22 = arith.constant 0 : index
    %27 = vector.load %arg11[%c0_20, %c0_21, %c0_22] : memref<4x128x1xf32, #tpu.memory_space<vmem>>, vector<4x128x1xf32>
    %28 = arith.mulf %23, %27 : vector<4x128x1xf32>
    %cst_23 = arith.constant dense<0.000000e+00> : vector<4x128xf32>
    %29 = vector.multi_reduction <add>, %26, %cst_23 [2] : vector<4x128x128xf32> to vector<4x128xf32>
    %30 = vector.shape_cast %29 : vector<4x128xf32> to vector<4x128x1xf32>
    %31 = arith.addf %28, %30 : vector<4x128x1xf32>
    %c0_24 = arith.constant 0 : index
    %c0_25 = arith.constant 0 : index
    %c0_26 = arith.constant 0 : index
    %32 = vector.load %arg11[%c0_24, %c0_25, %c0_26] : memref<4x128x1xf32, #tpu.memory_space<vmem>>, vector<4x128x1xf32>
    tpu.vector_store %arg11[%c0_24, %c0_25, %c0_26], %31 {strides = array<i32>} : memref<4x128x1xf32, #tpu.memory_space<vmem>>, vector<4x128x1xf32>,
    %c0_27 = arith.constant 0 : index
    %c0_28 = arith.constant 0 : index
    %c0_29 = arith.constant 0 : index
    %33 = vector.load %arg12[%c0_27, %c0_28, %c0_29] : memref<4x128x8xf32, #tpu.memory_space<vmem>>, vector<4x128x8xf32>
    %34 = vector.broadcast %23 : vector<4x128x1xf32> to vector<4x128x8xf32>
    %35 = arith.mulf %34, %33 : vector<4x128x8xf32>
    %36 = arith.truncf %26 : vector<4x128x128xf32> to vector<4x128x128xbf16>
    "tpu.trace_start"() <{level = 10 : i32, message = "hqk,hkd->hqd"}> : () -> ()
    %cst_30 = arith.constant dense<0.000000e+00> : vector<4x128x8xf32>
    %37 = tpu.matmul %36, %8, %cst_30 {dimension_numbers = #tpu.dot_dimension_numbers<[2], [1], [1], [2], [0, 0, 0, 1, 1, 2], [0], [0]>} : vector<4x128x128xbf16>, vector<4x128x8xbf16>, vector<4x128x8xf32> -> vector<4x128x8xf32>
    "tpu.trace_stop"() : () -> ()
    %38 = arith.addf %35, %37 : vector<4x128x8xf32>
    %c0_31 = arith.constant 0 : index
    %c0_32 = arith.constant 0 : index
    %c0_33 = arith.constant 0 : index
    %39 = vector.load %arg12[%c0_31, %c0_32, %c0_33] : memref<4x128x8xf32, #tpu.memory_space<vmem>>, vector<4x128x8xf32>
    tpu.vector_store %arg12[%c0_31, %c0_32, %c0_33], %38 {strides = array<i32>} : memref<4x128x8xf32, #tpu.memory_space<vmem>>, vector<4x128x8xf32>,
    %c0_34 = arith.constant 0 : index
    %c0_35 = arith.constant 0 : index
    %c0_36 = arith.constant 0 : index
    %40 = vector.load %arg10[%c0_34, %c0_35, %c0_36] : memref<4x128x1xf32, #tpu.memory_space<vmem>>, vector<4x128x1xf32>
    tpu.vector_store %arg10[%c0_34, %c0_35, %c0_36], %21 {strides = array<i32>} : memref<4x128x1xf32, #tpu.memory_space<vmem>>, vector<4x128x1xf32>,
    %c1_i32 = arith.constant 1 : i32
    %41 = arith.cmpi eq, %arg2, %c1_i32 : i32
    %42 = arith.extui %41 : i1 to i32
    %c0_i32_37 = arith.constant 0 : i32
    %43 = arith.cmpi ne, %42, %c0_i32_37 : i32
    scf.if %43 {
      %c0_38 = arith.constant 0 : index
      %c0_39 = arith.constant 0 : index
      %c0_40 = arith.constant 0 : index
      %44 = vector.load %arg11[%c0_38, %c0_39, %c0_40] : memref<4x128x1xf32, #tpu.memory_space<vmem>>, vector<4x128x1xf32>
      %45 = tpu.reciprocal %44 {approx = true} : vector<4x128x1xf32> -> vector<4x128x1xf32>
      %c0_41 = arith.constant 0 : index
      %c0_42 = arith.constant 0 : index
      %c0_43 = arith.constant 0 : index
      %46 = vector.load %arg12[%c0_41, %c0_42, %c0_43] : memref<4x128x8xf32, #tpu.memory_space<vmem>>, vector<1x128x8xf32>
      %47 = vector.shape_cast %46 : vector<1x128x8xf32> to vector<128x8xf32>
      %48 = vector.extract_strided_slice %45 {offsets = [0, 0, 0], sizes = [1, 128, 1], strides = [1, 1, 1]} : vector<4x128x1xf32> to vector<1x128x1xf32>
      %49 = vector.shape_cast %48 : vector<1x128x1xf32> to vector<128x1xf32>
      %50 = vector.broadcast %49 : vector<128x1xf32> to vector<128x8xf32>
      %51 = arith.mulf %47, %50 : vector<128x8xf32>
      %c0_44 = arith.constant 0 : index
      %c0_45 = arith.constant 0 : index
      %52 = vector.load %arg13[%c0_44, %c0_45] : memref<128x32xf32, #tpu.memory_space<vmem>>, vector<128x8xf32>
      tpu.vector_store %arg13[%c0_44, %c0_45], %51 {strides = array<i32>} : memref<128x32xf32, #tpu.memory_space<vmem>>, vector<128x8xf32>,
      %c1 = arith.constant 1 : index
      %c0_46 = arith.constant 0 : index
      %c0_47 = arith.constant 0 : index
      %53 = vector.load %arg12[%c1, %c0_46, %c0_47] : memref<4x128x8xf32, #tpu.memory_space<vmem>>, vector<1x128x8xf32>
      %54 = vector.shape_cast %53 : vector<1x128x8xf32> to vector<128x8xf32>
      %55 = vector.extract_strided_slice %45 {offsets = [1, 0, 0], sizes = [1, 128, 1], strides = [1, 1, 1]} : vector<4x128x1xf32> to vector<1x128x1xf32>
      %56 = vector.shape_cast %55 : vector<1x128x1xf32> to vector<128x1xf32>
      %57 = vector.broadcast %56 : vector<128x1xf32> to vector<128x8xf32>
      %58 = arith.mulf %54, %57 : vector<128x8xf32>
      %c0_48 = arith.constant 0 : index
      %c8 = arith.constant 8 : index
      %59 = vector.load %arg13[%c0_48, %c8] : memref<128x32xf32, #tpu.memory_space<vmem>>, vector<128x8xf32>
      tpu.vector_store %arg13[%c0_48, %c8], %58 {strides = array<i32>} : memref<128x32xf32, #tpu.memory_space<vmem>>, vector<128x8xf32>,
      %c2 = arith.constant 2 : index
      %c0_49 = arith.constant 0 : index
      %c0_50 = arith.constant 0 : index
      %60 = vector.load %arg12[%c2, %c0_49, %c0_50] : memref<4x128x8xf32, #tpu.memory_space<vmem>>, vector<1x128x8xf32>
      %61 = vector.shape_cast %60 : vector<1x128x8xf32> to vector<128x8xf32>
      %62 = vector.extract_strided_slice %45 {offsets = [2, 0, 0], sizes = [1, 128, 1], strides = [1, 1, 1]} : vector<4x128x1xf32> to vector<1x128x1xf32>
      %63 = vector.shape_cast %62 : vector<1x128x1xf32> to vector<128x1xf32>
      %64 = vector.broadcast %63 : vector<128x1xf32> to vector<128x8xf32>
      %65 = arith.mulf %61, %64 : vector<128x8xf32>
      %c0_51 = arith.constant 0 : index
      %c16 = arith.constant 16 : index
      %66 = vector.load %arg13[%c0_51, %c16] : memref<128x32xf32, #tpu.memory_space<vmem>>, vector<128x8xf32>
      tpu.vector_store %arg13[%c0_51, %c16], %65 {strides = array<i32>} : memref<128x32xf32, #tpu.memory_space<vmem>>, vector<128x8xf32>,
      %c3 = arith.constant 3 : index
      %c0_52 = arith.constant 0 : index
      %c0_53 = arith.constant 0 : index
      %67 = vector.load %arg12[%c3, %c0_52, %c0_53] : memref<4x128x8xf32, #tpu.memory_space<vmem>>, vector<1x128x8xf32>
      %68 = vector.shape_cast %67 : vector<1x128x8xf32> to vector<128x8xf32>
      %69 = vector.extract_strided_slice %45 {offsets = [3, 0, 0], sizes = [1, 128, 1], strides = [1, 1, 1]} : vector<4x128x1xf32> to vector<1x128x1xf32>
      %70 = vector.shape_cast %69 : vector<1x128x1xf32> to vector<128x1xf32>
      %71 = vector.broadcast %70 : vector<128x1xf32> to vector<128x8xf32>
      %72 = arith.mulf %68, %71 : vector<128x8xf32>
      %c0_54 = arith.constant 0 : index
      %c24 = arith.constant 24 : index
      %73 = vector.load %arg13[%c0_54, %c24] : memref<128x32xf32, #tpu.memory_space<vmem>>, vector<128x8xf32>
      tpu.vector_store %arg13[%c0_54, %c24], %72 {strides = array<i32>} : memref<128x32xf32, #tpu.memory_space<vmem>>, vector<128x8xf32>,
      %c0_55 = arith.constant 0 : index
      %c0_56 = arith.constant 0 : index
      %74 = vector.load %arg13[%c0_55, %c0_56] : memref<128x32xf32, #tpu.memory_space<vmem>>, vector<128x32xf32>
      %75 = arith.truncf %74 : vector<128x32xf32> to vector<128x32xbf16>
      %c0_57 = arith.constant 0 : index
      %c0_58 = arith.constant 0 : index
      %76 = vector.load %arg7[%c0_57, %c0_58] : memref<32x32xbf16, #tpu.memory_space<vmem>>, vector<32x32xbf16>
      %cst_59 = arith.constant dense<0.000000e+00> : vector<128x32xf32>
      %77 = tpu.matmul %75, %76, %cst_59 {dimension_numbers = #tpu.dot_dimension_numbers<[1], [0], [0], [1], [0, 0, 1, 1], [], []>} : vector<128x32xbf16>, vector<32x32xbf16>, vector<128x32xf32> -> vector<128x32xf32>
      %c0_60 = arith.constant 0 : index
      %c0_61 = arith.constant 0 : index
      %78 = vector.load %arg8[%c0_60, %c0_61] : memref<1x32xf32, #tpu.memory_space<vmem>>, vector<1x32xf32>
      %79 = vector.broadcast %78 : vector<1x32xf32> to vector<128x32xf32>
      %80 = arith.addf %77, %79 : vector<128x32xf32>
      %c0_62 = arith.constant 0 : index
      %c0_63 = arith.constant 0 : index
      %c0_64 = arith.constant 0 : index
      %81 = vector.load %arg9[%c0_62, %c0_63, %c0_64] : memref<1x128x32xf32, #tpu.memory_space<vmem>>, vector<1x128x32xf32>
      %82 = vector.shape_cast %81 : vector<1x128x32xf32> to vector<128x32xf32>
      %83 = vector.shape_cast %80 : vector<128x32xf32> to vector<1x128x32xf32>
      tpu.vector_store %arg9[%c0_62, %c0_63, %c0_64], %83 {strides = array<i32>} : memref<1x128x32xf32, #tpu.memory_space<vmem>>, vector<1x128x32xf32>,
    } else {
    }
    return
  }
  func.func @transform_0(%arg0: i32, %arg1: i32, %arg2: i32) -> (i32, i32, i32, i32) {
    %c0_i32 = arith.constant 0 : i32
    %c0_i32_0 = arith.constant 0 : i32
    %c0_i32_1 = arith.constant 0 : i32
    return %arg0, %c0_i32, %arg1, %c0_i32_0 : i32, i32, i32, i32
  }
  func.func @transform_1(%arg0: i32, %arg1: i32, %arg2: i32) -> (i32, i32, i32, i32) {
    %c0_i32 = arith.constant 0 : i32
    %c0_i32_0 = arith.constant 0 : i32
    %c0_i32_1 = arith.constant 0 : i32
    return %arg0, %c0_i32, %arg2, %c0_i32_0 : i32, i32, i32, i32
  }
  func.func @transform_2(%arg0: i32, %arg1: i32, %arg2: i32) -> (i32, i32, i32, i32) {
    %c0_i32 = arith.constant 0 : i32
    %c0_i32_0 = arith.constant 0 : i32
    %c0_i32_1 = arith.constant 0 : i32
    return %arg0, %c0_i32, %arg2, %c0_i32_0 : i32, i32, i32, i32
  }
  func.func @transform_3(%arg0: i32, %arg1: i32, %arg2: i32) -> (i32, i32, i32) {
    %c0_i32 = arith.constant 0 : i32
    return %arg0, %arg1, %arg2 : i32, i32, i32
  }
  func.func @transform_4(%arg0: i32, %arg1: i32, %arg2: i32) -> (i32, i32) {
    %c0_i32 = arith.constant 0 : i32
    %c0_i32_0 = arith.constant 0 : i32
    %c0_i32_1 = arith.constant 0 : i32
    return %c0_i32, %c0_i32_0 : i32, i32
  }
  func.func @transform_5(%arg0: i32, %arg1: i32, %arg2: i32) -> (i32, i32) {
    %c0_i32 = arith.constant 0 : i32
    %c0_i32_0 = arith.constant 0 : i32
    %c0_i32_1 = arith.constant 0 : i32
    return %c0_i32, %c0_i32_0 : i32, i32
  }
  func.func @transform_6(%arg0: i32, %arg1: i32, %arg2: i32) -> (i32, i32, i32) {
    %c0_i32 = arith.constant 0 : i32
    %c0_i32_0 = arith.constant 0 : i32
    return %arg0, %arg1, %c0_i32 : i32, i32, i32
  }
}

</mosaic_0001>

<llo_original>
// kernel: tpu_custom_call.1
$region0: #{tpu_custom_call.1}
  #allocation0 [shape = 'u32[]', space=smem, size = 0x4, offset = 0x4, fixed_abs, tag = 'smem constant byte address 0x4 - core index']
  #allocation1 [shape = 'u32[144,128]{1,0:T(1,128)}', space=vmem, size = 0x12000, scoped, tag = 'internal scratch']
  #allocation2 [shape = 'f32[4,128,1]{2,1,0:T(8,128)}', space=vmem, size = 0x40000, scoped, tag = 'scratch operand']
  #allocation3 [shape = 'f32[4,128,1]{2,1,0:T(8,128)}', space=vmem, size = 0x40000, scoped, tag = 'scratch operand']
  #allocation4 [shape = 'f32[4,128,8]{2,1,0:T(8,128)}', space=vmem, size = 0x40000, scoped, tag = 'scratch operand']
  #allocation5 [shape = 'f32[128,32]{1,0:T(8,128)}', space=vmem, size = 0x10000, scoped, tag = 'scratch operand']
  %s0 = inlined_call_operand.vmem [shape: bf16[2,4,256,8], index: 0, kind: input, shape index: {}]
  %s1 = inlined_call_operand.vmem [shape: bf16[2,4,256,8], index: 1, kind: input, shape index: {}]
  %s2 = inlined_call_operand.vmem [shape: bf16[2,4,256,8], index: 2, kind: input, shape index: {}]
  %s3 = inlined_call_operand.vmem [shape: bf16[2,256,256], index: 3, kind: input, shape index: {}]
  %s4 = inlined_call_operand.vmem [shape: bf16[32,32], index: 4, kind: input, shape index: {}]
  %s5 = inlined_call_operand.vmem [shape: f32[1,32], index: 5, kind: input, shape index: {}]
  %s6 = inlined_call_operand.vmem [shape: f32[2,256,32], index: 6, kind: output, shape index: {}]
  %s7 = sld [smem:[#allocation0]]
  $region229: #{tpu_custom_call.1} parent=0
    _
  %s9 = ssub.s32 1, %s7
  %s10 = scalar_select 0, %s9, %s7
  $region1: #{tpu_custom_call.1} parent=0
    #allocation6 [shape = 'u8[262144]{0}', space=vmem, size = 0x40000, scoped, tag = 'input window, operand 0']
    #allocation7 [shape = 'u8[262144]{0}', space=vmem, size = 0x40000, scoped, tag = 'input window, operand 1']
    #allocation8 [shape = 'u8[262144]{0}', space=vmem, size = 0x40000, scoped, tag = 'input window, operand 2']
    #allocation9 [shape = 'u8[65536]{0}', space=vmem, size = 0x10000, scoped, tag = 'input window, operand 3']
    loop: start=0, step=1, limit=10
    $region2: #{tpu_custom_call.1} parent=1 // loop_pre_header
      _
    $region3: #{tpu_custom_call.1} parent=1 // loop_header
      %s12 = sphi 0, %s16
      %p13 = scmp.ge.s32.totalorder %s12, 10
      %s19 = sphi 0, %s38
      %s20 = sphi 0, %s34
      %s21 = sphi 0, %s30
      %s22 = sphi 0, %s19
      %s23 = sphi 0, %s20
      %s24 = sphi 0, %s21
      %s25 = sphi 0, %s22
      %s26 = sphi 0, %s23
      %s27 = sphi 0, %s24
      %s43 = sphi 0, %s45
      %s46 = sphi 0, %s43
      %s47 = sphi 0, %s46
      %s63 = sphi 0, %s47
      %s71 = sphi 0, %s73
      %s74 = sphi 0, %s71
      %s75 = sphi 0, %s74
      %s91 = sphi 0, %s75
      %s99 = sphi 0, %s101
      %s102 = sphi 0, %s99
      %s103 = sphi 0, %s102
      %s119 = sphi 0, %s103
      %s129 = sphi 0, %s131
      %s132 = sphi 0, %s129
      %s133 = sphi 0, %s132
      %s149 = sphi 0, %s133
      %s153 = sphi 0, %s153
      %s155 = sphi 0, %s153
      %s156 = sphi 0, %s155
      %s170 = sphi 0, %s156
      %s174 = sphi 0, %s174
      %s176 = sphi 0, %s174
      %s177 = sphi 0, %s176
      %s191 = sphi 0, %s177
      %s199 = sphi 0, %s201
      %s202 = sphi 0, %s199
      %s203 = sphi 0, %s202
      %s219 = sphi 0, %s203
    $region4: #{tpu_custom_call.1} parent=1 // loop_header_branch
      %15 = sbr.rel (%p13) target = $region8
    $region5: #{tpu_custom_call.1} parent=1 // loop_body
      %s17 = ssub.s32 %s12, 1
      %s18 = ssub.s32 %s12, 2
      %s28 = sadd.s32 1, %s21
      %p29 = scmp.ge.s32.totalorder %s28, 2
      %s30 = scalar_select %p29, 0, %s28
      %s31 = sadd.s32 1, %s20
      %s32 = scalar_select %p29, %s31, %s20
      %p33 = scmp.ge.s32.totalorder %s32, 2
      %s34 = scalar_select %p33, 0, %s32
      %s35 = sadd.s32 1, %s19
      %s36 = scalar_select %p33, %s35, %s19
      %p37 = scmp.ge.s32.totalorder %s36, 2
      %s38 = scalar_select %p37, 0, %s36
      %s39 = ssub.s32 %s19, %s38
      %s40 = ssub.s32 %s20, %s34
      %s41 = sor.u32 %s39, %s40
      %p42 = scmp.eq.s32.totalorder %s41, 0
      %s44 = sadd.s32 %s43, 1
      %s45 = scalar_select %p42, %s43, %s44
      %p48 = pneg %p42
      %p49 = scmp.eq.s32.totalorder %s12, 7
      %p50 = por %p48, %p49
      %p51 = scmp.ne.s32.totalorder %s43, %s46
      %p52 = scmp.eq.s32.totalorder %s12, 0
      %p53 = por %p51, %p52
      %p54 = scmp.ne.s32.totalorder %s43, %s46
      %p55 = scmp.eq.s32.totalorder %s17, 7
      %p56 = por %p54, %p55
      %p57 = scmp.ne.s32.totalorder %s46, %s47
      %p58 = scmp.eq.s32.totalorder %s17, 0
      %p59 = por %p57, %p58
      %p60 = scmp.ne.s32.totalorder %s46, %s47
      %p61 = scmp.eq.s32.totalorder %s18, 7
      %p62 = por %p60, %p61
      %p64 = scmp.ne.s32.totalorder %s47, %s63
      %p65 = scmp.eq.s32.totalorder %s18, 0
      %p66 = por %p64, %p65
      %s67 = ssub.s32 %s19, %s38
      %s68 = ssub.s32 %s21, %s30
      %s69 = sor.u32 %s67, %s68
      %p70 = scmp.eq.s32.totalorder %s69, 0
      %s72 = sadd.s32 %s71, 1
      %s73 = scalar_select %p70, %s71, %s72
      %p76 = pneg %p70
      %p77 = scmp.eq.s32.totalorder %s12, 7
      %p78 = por %p76, %p77
      %p79 = scmp.ne.s32.totalorder %s71, %s74
      %p80 = scmp.eq.s32.totalorder %s12, 0
      %p81 = por %p79, %p80
      %p82 = scmp.ne.s32.totalorder %s71, %s74
      %p83 = scmp.eq.s32.totalorder %s17, 7
      %p84 = por %p82, %p83
      %p85 = scmp.ne.s32.totalorder %s74, %s75
      %p86 = scmp.eq.s32.totalorder %s17, 0
      %p87 = por %p85, %p86
      %p88 = scmp.ne.s32.totalorder %s74, %s75
      %p89 = scmp.eq.s32.totalorder %s18, 7
      %p90 = por %p88, %p89
      %p92 = scmp.ne.s32.totalorder %s75, %s91
      %p93 = scmp.eq.s32.totalorder %s18, 0
      %p94 = por %p92, %p93
      %s95 = ssub.s32 %s19, %s38
      %s96 = ssub.s32 %s21, %s30
      %s97 = sor.u32 %s95, %s96
      %p98 = scmp.eq.s32.totalorder %s97, 0
      %s100 = sadd.s32 %s99, 1
      %s101 = scalar_select %p98, %s99, %s100
      %p104 = pneg %p98
      %p105 = scmp.eq.s32.totalorder %s12, 7
      %p106 = por %p104, %p105
      %p107 = scmp.ne.s32.totalorder %s99, %s102
      %p108 = scmp.eq.s32.totalorder %s12, 0
      %p109 = por %p107, %p108
      %p110 = scmp.ne.s32.totalorder %s99, %s102
      %p111 = scmp.eq.s32.totalorder %s17, 7
      %p112 = por %p110, %p111
      %p113 = scmp.ne.s32.totalorder %s102, %s103
      %p114 = scmp.eq.s32.totalorder %s17, 0
      %p115 = por %p113, %p114
      %p116 = scmp.ne.s32.totalorder %s102, %s103
      %p117 = scmp.eq.s32.totalorder %s18, 7
      %p118 = por %p116, %p117
      %p120 = scmp.ne.s32.totalorder %s103, %s119
      %p121 = scmp.eq.s32.totalorder %s18, 0
      %p122 = por %p120, %p121
      %s123 = ssub.s32 %s19, %s38
      %s124 = ssub.s32 %s20, %s34
      %s125 = sor.u32 %s123, %s124
      %s126 = ssub.s32 %s21, %s30
      %s127 = sor.u32 %s125, %s126
      %p128 = scmp.eq.s32.totalorder %s127, 0
      %s130 = sadd.s32 %s129, 1
      %s131 = scalar_select %p128, %s129, %s130
      %p134 = pneg %p128
      %p135 = scmp.eq.s32.totalorder %s12, 7
      %p136 = por %p134, %p135
      %p137 = scmp.ne.s32.totalorder %s129, %s132
      %p138 = scmp.eq.s32.totalorder %s12, 0
      %p139 = por %p137, %p138
      %p140 = scmp.ne.s32.totalorder %s129, %s132
      %p141 = scmp.eq.s32.totalorder %s17, 7
      %p142 = por %p140, %p141
      %p143 = scmp.ne.s32.totalorder %s132, %s133
      %p144 = scmp.eq.s32.totalorder %s17, 0
      %p145 = por %p143, %p144
      %p146 = scmp.ne.s32.totalorder %s132, %s133
      %p147 = scmp.eq.s32.totalorder %s18, 7
      %p148 = por %p146, %p147
      %p150 = scmp.ne.s32.totalorder %s133, %s149
      %p151 = scmp.eq.s32.totalorder %s18, 0
      %p152 = por %p150, %p151
      %s154 = sadd.s32 %s153, 1
      %p157 = scmp.eq.s32.totalorder %s12, 7
      %p158 = scmp.ne.s32.totalorder %s153, %s155
      %p159 = scmp.eq.s32.totalorder %s12, 0
      %p160 = por %p158, %p159
      %p161 = scmp.ne.s32.totalorder %s153, %s155
      %p162 = scmp.eq.s32.totalorder %s17, 7
      %p163 = por %p161, %p162
      %p164 = scmp.ne.s32.totalorder %s155, %s156
      %p165 = scmp.eq.s32.totalorder %s17, 0
      %p166 = por %p164, %p165
      %p167 = scmp.ne.s32.totalorder %s155, %s156
      %p168 = scmp.eq.s32.totalorder %s18, 7
      %p169 = por %p167, %p168
      %p171 = scmp.ne.s32.totalorder %s156, %s170
      %p172 = scmp.eq.s32.totalorder %s18, 0
      %p173 = por %p171, %p172
      %s175 = sadd.s32 %s174, 1
      %p178 = scmp.eq.s32.totalorder %s12, 7
      %p179 = scmp.ne.s32.totalorder %s174, %s176
      %p180 = scmp.eq.s32.totalorder %s12, 0
      %p181 = por %p179, %p180
      %p182 = scmp.ne.s32.totalorder %s174, %s176
      %p183 = scmp.eq.s32.totalorder %s17, 7
      %p184 = por %p182, %p183
      %p185 = scmp.ne.s32.totalorder %s176, %s177
      %p186 = scmp.eq.s32.totalorder %s17, 0
      %p187 = por %p185, %p186
      %p188 = scmp.ne.s32.totalorder %s176, %s177
      %p189 = scmp.eq.s32.totalorder %s18, 7
      %p190 = por %p188, %p189
      %p192 = scmp.ne.s32.totalorder %s177, %s191
      %p193 = scmp.eq.s32.totalorder %s18, 0
      %p194 = por %p192, %p193
      %s195 = ssub.s32 %s19, %s38
      %s196 = ssub.s32 %s20, %s34
      %s197 = sor.u32 %s195, %s196
      %p198 = scmp.eq.s32.totalorder %s197, 0
      %s200 = sadd.s32 %s199, 1
      %s201 = scalar_select %p198, %s199, %s200
      %p204 = pneg %p198
      %p205 = scmp.eq.s32.totalorder %s12, 7
      %p206 = por %p204, %p205
      %p207 = scmp.ne.s32.totalorder %s199, %s202
      %p208 = scmp.eq.s32.totalorder %s12, 0
      %p209 = por %p207, %p208
      %p210 = scmp.ne.s32.totalorder %s199, %s202
      %p211 = scmp.eq.s32.totalorder %s17, 7
      %p212 = por %p210, %p211
      %p213 = scmp.ne.s32.totalorder %s202, %s203
      %p214 = scmp.eq.s32.totalorder %s17, 0
      %p215 = por %p213, %p214
      %p216 = scmp.ne.s32.totalorder %s202, %s203
      %p217 = scmp.eq.s32.totalorder %s18, 7
      %p218 = por %p216, %p217
      %p220 = scmp.ne.s32.totalorder %s203, %s219
      %p221 = scmp.eq.s32.totalorder %s18, 0
      %p222 = por %p220, %p221
      %p223 = scmp.le.s32.totalorder 1, %s12
      %p224 = scmp.lt.s32.totalorder %s12, 9
      %p225 = pnand %p223, %p224
      %p226 = pneg %p225
      // Predicated region
      $region9: #{tpu_custom_call.1} parent=5 // pred_check
        _
      $region10: #{tpu_custom_call.1} parent=5 // pred_check_branch
        %228 = sbr.rel (%p225) target = $region12
      $region11: #{tpu_custom_call.1} parent=5 // pred_region
        %s229 = ssub.s32 %s12, 1
        // Predicated region
        $region13: #{tpu_custom_call.1} parent=11 // pred_check
          %p230 = pneg %p166
        $region14: #{tpu_custom_call.1} parent=11 // pred_check_branch
          %232 = sbr.rel (%p230) target = $region16
        $region15: #{tpu_custom_call.1} parent=11 // pred_region
          _
        $region16: #{tpu_custom_call.1} parent=11 // pred_fallthru
          _
        // Predicated region
        $region17: #{tpu_custom_call.1} parent=11 // pred_check
          %p233 = pneg %p187
        $region18: #{tpu_custom_call.1} parent=11 // pred_check_branch
          %235 = sbr.rel (%p233) target = $region20
        $region19: #{tpu_custom_call.1} parent=11 // pred_region
          _
        $region20: #{tpu_custom_call.1} parent=11 // pred_fallthru
          _
      $region12: #{tpu_custom_call.1} parent=5 // pred_fallthru
        _
      %p236 = scmp.lt.s32.totalorder %s12, 8
      // Predicated region
      $region21: #{tpu_custom_call.1} parent=5 // pred_check
        %p237 = pneg %p236
      $region22: #{tpu_custom_call.1} parent=5 // pred_check_branch
        %239 = sbr.rel (%p237) target = $region24
      $region23: #{tpu_custom_call.1} parent=5 // pred_region
        // Predicated region
        $region25: #{tpu_custom_call.1} parent=23 // pred_check
          %p240 = pneg %p53
        $region26: #{tpu_custom_call.1} parent=23 // pred_check_branch
          %242 = sbr.rel (%p240) target = $region28
        $region27: #{tpu_custom_call.1} parent=23 // pred_region
          %s243 = sand.u32 %s43, 1
          %s244 = sand.u32 %s43, 1
          %s245 = smul.addr %s244, 256
          %s246 = scalar_lea.vmem [#allocation6], %s245
          %s247 = smul.u32 16, %s20
          %s248 = smul.addr %s19, 128
          %s249 = sadd.s32 %s247, %s248
          %s250 = smul.addr %s249, 4
          %s251 = scalar_lea.vmem %s0, %s250
          // Predicated region
          $region29: #{tpu_custom_call.1} parent=27 // pred_check
            _
          $region30: #{tpu_custom_call.1} parent=27 // pred_check_branch
            %253 = sbr.rel (0) target = $region32
          $region31: #{tpu_custom_call.1} parent=27 // pred_region
            // Predicated region
            $region33: #{tpu_custom_call.1} parent=31 // pred_check
              _
            $region34: #{tpu_custom_call.1} parent=31 // pred_check_branch
              %255 = sbr.rel target = $region36
            $region35: #{tpu_custom_call.1} parent=31 // pred_region
              // Predicated region
              $region48: #{tpu_custom_call.1} parent=35 // pred_check
                _
              $region49: #{tpu_custom_call.1} parent=35 // pred_check_branch
                %396 = sbr.rel (0) target = $region51
              $region50: #{tpu_custom_call.1} parent=35 // pred_region
                loop: start=0, step=1, limit=1
                $region52: #{tpu_custom_call.1} parent=50 // loop_pre_header
                  _
                $region53: #{tpu_custom_call.1} parent=50 // loop_header
                  %s398 = sphi 0, %s402
                  %p399 = scmp.ge.s32.totalorder %s398, 1
                  %s403 = sphi %s251, %s251
                  %s404 = sphi %s246, %s246
                $region54: #{tpu_custom_call.1} parent=50 // loop_header_branch
                  %401 = sbr.rel (%p399) target = $region58
                $region55: #{tpu_custom_call.1} parent=50 // loop_body
                  _
                $region56: #{tpu_custom_call.1} parent=50 // loop_footer
                  %s402 = sadd.s32 1, %s398
                $region57: #{tpu_custom_call.1} parent=50 // loop_footer_branch
                  %397 = sbr.rel target = $region53
                $region58: #{tpu_custom_call.1} parent=50 // loop_exit
                  _
                loop: start=0, step=1, limit=1
                $region59: #{tpu_custom_call.1} parent=50 // loop_pre_header
                  _
                $region60: #{tpu_custom_call.1} parent=50 // loop_header
                  %s407 = sphi 0, %s411
                  %p408 = scmp.ge.s32.totalorder %s407, 1
                  %s412 = sphi %s251, %s251
                  %s413 = sphi %s246, %s246
                $region61: #{tpu_custom_call.1} parent=50 // loop_header_branch
                  %410 = sbr.rel (%p408) target = $region65
                $region62: #{tpu_custom_call.1} parent=50 // loop_body
                  %v414 = vld [vmem:[%s412] sm:$0xf]
                  %415 = vst [vmem:[%s413] sm:$0xf] %v414
                  %v416 = vld [vmem:[%s412 + $0x4] sm:$0xf]
                  %417 = vst [vmem:[%s413 + $0x4] sm:$0xf] %v416
                  %v418 = vld [vmem:[%s412 + $0x8] sm:$0xf]
                  %419 = vst [vmem:[%s413 + $0x8] sm:$0xf] %v418
                  %v420 = vld [vmem:[%s412 + $0xc] sm:$0xf]
                  %421 = vst [vmem:[%s413 + $0xc] sm:$0xf] %v420
                  %v422 = vld [vmem:[%s412 + $0x10] sm:$0xf]
                  %423 = vst [vmem:[%s413 + $0x10] sm:$0xf] %v422
                  %v424 = vld [vmem:[%s412 + $0x14] sm:$0xf]
                  %425 = vst [vmem:[%s413 + $0x14] sm:$0xf] %v424
                  %v426 = vld [vmem:[%s412 + $0x18] sm:$0xf]
                  %427 = vst [vmem:[%s413 + $0x18] sm:$0xf] %v426
                  %v428 = vld [vmem:[%s412 + $0x1c] sm:$0xf]
                  %429 = vst [vmem:[%s413 + $0x1c] sm:$0xf] %v428
                  %v430 = vld [vmem:[%s412 + $0x20] sm:$0xf]
                  %431 = vst [vmem:[%s413 + $0x20] sm:$0xf] %v430
                  %v432 = vld [vmem:[%s412 + $0x24] sm:$0xf]
                  %433 = vst [vmem:[%s413 + $0x24] sm:$0xf] %v432
                  %v434 = vld [vmem:[%s412 + $0x28] sm:$0xf]
                  %435 = vst [vmem:[%s413 + $0x28] sm:$0xf] %v434
                  %v436 = vld [vmem:[%s412 + $0x2c] sm:$0xf]
                  %437 = vst [vmem:[%s413 + $0x2c] sm:$0xf] %v436
                  %v438 = vld [vmem:[%s412 + $0x30] sm:$0xf]
                  %439 = vst [vmem:[%s413 + $0x30] sm:$0xf] %v438
                  %v440 = vld [vmem:[%s412 + $0x34] sm:$0xf]
                  %441 = vst [vmem:[%s413 + $0x34] sm:$0xf] %v440
                  %v442 = vld [vmem:[%s412 + $0x38] sm:$0xf]
                  %443 = vst [vmem:[%s413 + $0x38] sm:$0xf] %v442
                  %v444 = vld [vmem:[%s412 + $0x3c] sm:$0xf]
                  %445 = vst [vmem:[%s413 + $0x3c] sm:$0xf] %v444
                  %v446 = vld [vmem:[%s412 + $0x80] sm:$0xf]
                  %447 = vst [vmem:[%s413 + $0x40] sm:$0xf] %v446
                  %v448 = vld [vmem:[%s412 + $0x84] sm:$0xf]
                  %449 = vst [vmem:[%s413 + $0x44] sm:$0xf] %v448
                  %v450 = vld [vmem:[%s412 + $0x88] sm:$0xf]
                  %451 = vst [vmem:[%s413 + $0x48] sm:$0xf] %v450
                  %v452 = vld [vmem:[%s412 + $0x8c] sm:$0xf]
                  %453 = vst [vmem:[%s413 + $0x4c] sm:$0xf] %v452
                  %v454 = vld [vmem:[%s412 + $0x90] sm:$0xf]
                  %455 = vst [vmem:[%s413 + $0x50] sm:$0xf] %v454
                  %v456 = vld [vmem:[%s412 + $0x94] sm:$0xf]
                  %457 = vst [vmem:[%s413 + $0x54] sm:$0xf] %v456
                  %v458 = vld [vmem:[%s412 + $0x98] sm:$0xf]
                  %459 = vst [vmem:[%s413 + $0x58] sm:$0xf] %v458
                  %v460 = vld [vmem:[%s412 + $0x9c] sm:$0xf]
                  %461 = vst [vmem:[%s413 + $0x5c] sm:$0xf] %v460
                  %v462 = vld [vmem:[%s412 + $0xa0] sm:$0xf]
                  %463 = vst [vmem:[%s413 + $0x60] sm:$0xf] %v462
                  %v464 = vld [vmem:[%s412 + $0xa4] sm:$0xf]
                  %465 = vst [vmem:[%s413 + $0x64] sm:$0xf] %v464
                  %v466 = vld [vmem:[%s412 + $0xa8] sm:$0xf]
                  %467 = vst [vmem:[%s413 + $0x68] sm:$0xf] %v466
                  %v468 = vld [vmem:[%s412 + $0xac] sm:$0xf]
                  %469 = vst [vmem:[%s413 + $0x6c] sm:$0xf] %v468
                  %v470 = vld [vmem:[%s412 + $0xb0] sm:$0xf]
                  %471 = vst [vmem:[%s413 + $0x70] sm:$0xf] %v470
                  %v472 = vld [vmem:[%s412 + $0xb4] sm:$0xf]
                  %473 = vst [vmem:[%s413 + $0x74] sm:$0xf] %v472
                  %v474 = vld [vmem:[%s412 + $0xb8] sm:$0xf]
                  %475 = vst [vmem:[%s413 + $0x78] sm:$0xf] %v474
                  %v476 = vld [vmem:[%s412 + $0xbc] sm:$0xf]
                  %477 = vst [vmem:[%s413 + $0x7c] sm:$0xf] %v476
                  %v478 = vld [vmem:[%s412 + $0x100] sm:$0xf]
                  %479 = vst [vmem:[%s413 + $0x80] sm:$0xf] %v478
                  %v480 = vld [vmem:[%s412 + $0x104] sm:$0xf]
                  %481 = vst [vmem:[%s413 + $0x84] sm:$0xf] %v480
                  %v482 = vld [vmem:[%s412 + $0x108] sm:$0xf]
                  %483 = vst [vmem:[%s413 + $0x88] sm:$0xf] %v482
                  %v484 = vld [vmem:[%s412 + $0x10c] sm:$0xf]
                  %485 = vst [vmem:[%s413 + $0x8c] sm:$0xf] %v484
                  %v486 = vld [vmem:[%s412 + $0x110] sm:$0xf]
                  %487 = vst [vmem:[%s413 + $0x90] sm:$0xf] %v486
                  %v488 = vld [vmem:[%s412 + $0x114] sm:$0xf]
                  %489 = vst [vmem:[%s413 + $0x94] sm:$0xf] %v488
                  %v490 = vld [vmem:[%s412 + $0x118] sm:$0xf]
                  %491 = vst [vmem:[%s413 + $0x98] sm:$0xf] %v490
                  %v492 = vld [vmem:[%s412 + $0x11c] sm:$0xf]
                  %493 = vst [vmem:[%s413 + $0x9c] sm:$0xf] %v492
                  %v494 = vld [vmem:[%s412 + $0x120] sm:$0xf]
                  %495 = vst [vmem:[%s413 + $0xa0] sm:$0xf] %v494
                  %v496 = vld [vmem:[%s412 + $0x124] sm:$0xf]
                  %497 = vst [vmem:[%s413 + $0xa4] sm:$0xf] %v496
                  %v498 = vld [vmem:[%s412 + $0x128] sm:$0xf]
                  %499 = vst [vmem:[%s413 + $0xa8] sm:$0xf] %v498
                  %v500 = vld [vmem:[%s412 + $0x12c] sm:$0xf]
                  %501 = vst [vmem:[%s413 + $0xac] sm:$0xf] %v500
                  %v502 = vld [vmem:[%s412 + $0x130] sm:$0xf]
                  %503 = vst [vmem:[%s413 + $0xb0] sm:$0xf] %v502
                  %v504 = vld [vmem:[%s412 + $0x134] sm:$0xf]
                  %505 = vst [vmem:[%s413 + $0xb4] sm:$0xf] %v504
                  %v506 = vld [vmem:[%s412 + $0x138] sm:$0xf]
                  %507 = vst [vmem:[%s413 + $0xb8] sm:$0xf] %v506
                  %v508 = vld [vmem:[%s412 + $0x13c] sm:$0xf]
                  %509 = vst [vmem:[%s413 + $0xbc] sm:$0xf] %v508
                  %v510 = vld [vmem:[%s412 + $0x180] sm:$0xf]
                  %511 = vst [vmem:[%s413 + $0xc0] sm:$0xf] %v510
                  %v512 = vld [vmem:[%s412 + $0x184] sm:$0xf]
                  %513 = vst [vmem:[%s413 + $0xc4] sm:$0xf] %v512
                  %v514 = vld [vmem:[%s412 + $0x188] sm:$0xf]
                  %515 = vst [vmem:[%s413 + $0xc8] sm:$0xf] %v514
                  %v516 = vld [vmem:[%s412 + $0x18c] sm:$0xf]
                  %517 = vst [vmem:[%s413 + $0xcc] sm:$0xf] %v516
                  %v518 = vld [vmem:[%s412 + $0x190] sm:$0xf]
                  %519 = vst [vmem:[%s413 + $0xd0] sm:$0xf] %v518
                  %v520 = vld [vmem:[%s412 + $0x194] sm:$0xf]
                  %521 = vst [vmem:[%s413 + $0xd4] sm:$0xf] %v520
                  %v522 = vld [vmem:[%s412 + $0x198] sm:$0xf]
                  %523 = vst [vmem:[%s413 + $0xd8] sm:$0xf] %v522
                  %v524 = vld [vmem:[%s412 + $0x19c] sm:$0xf]
                  %525 = vst [vmem:[%s413 + $0xdc] sm:$0xf] %v524
                  %v526 = vld [vmem:[%s412 + $0x1a0] sm:$0xf]
                  %527 = vst [vmem:[%s413 + $0xe0] sm:$0xf] %v526
                  %v528 = vld [vmem:[%s412 + $0x1a4] sm:$0xf]
                  %529 = vst [vmem:[%s413 + $0xe4] sm:$0xf] %v528
                  %v530 = vld [vmem:[%s412 + $0x1a8] sm:$0xf]
                  %531 = vst [vmem:[%s413 + $0xe8] sm:$0xf] %v530
                  %v532 = vld [vmem:[%s412 + $0x1ac] sm:$0xf]
                  %533 = vst [vmem:[%s413 + $0xec] sm:$0xf] %v532
                  %v534 = vld [vmem:[%s412 + $0x1b0] sm:$0xf]
                  %535 = vst [vmem:[%s413 + $0xf0] sm:$0xf] %v534
                  %v536 = vld [vmem:[%s412 + $0x1b4] sm:$0xf]
                  %537 = vst [vmem:[%s413 + $0xf4] sm:$0xf] %v536
                  %v538 = vld [vmem:[%s412 + $0x1b8] sm:$0xf]
                  %539 = vst [vmem:[%s413 + $0xf8] sm:$0xf] %v538
                  %v540 = vld [vmem:[%s412 + $0x1bc] sm:$0xf]
                  %541 = vst [vmem:[%s413 + $0xfc] sm:$0xf] %v540
                $region63: #{tpu_custom_call.1} parent=50 // loop_footer
                  %s411 = sadd.s32 1, %s407
                $region64: #{tpu_custom_call.1} parent=50 // loop_footer_branch
                  %406 = sbr.rel target = $region60
                $region65: #{tpu_custom_call.1} parent=50 // loop_exit
                  _
              $region51: #{tpu_custom_call.1} parent=35 // pred_fallthru
                _
            $region36: #{tpu_custom_call.1} parent=31 // pred_fallthru
              _
            // Predicated region
            $region37: #{tpu_custom_call.1} parent=31 // pred_check
              _
            $region38: #{tpu_custom_call.1} parent=31 // pred_check_branch
              %257 = sbr.rel (0) target = $region40
            $region39: #{tpu_custom_call.1} parent=31 // pred_region
              loop: start=0, step=1, limit=1
              $region41: #{tpu_custom_call.1} parent=39 // loop_pre_header
                _
              $region42: #{tpu_custom_call.1} parent=39 // loop_header
                %s260 = sphi 0, %s264
                %p261 = scmp.ge.s32.totalorder %s260, 1
                %s265 = sphi %s251, %s251
                %s266 = sphi %s246, %s246
              $region43: #{tpu_custom_call.1} parent=39 // loop_header_branch
                %263 = sbr.rel (%p261) target = $region47
              $region44: #{tpu_custom_call.1} parent=39 // loop_body
                %v267 = vld [vmem:[%s265] sm:$0xf]
                %268 = vst [vmem:[%s266] sm:$0xf] %v267
                %v269 = vld [vmem:[%s265 + $0x4] sm:$0xf]
                %270 = vst [vmem:[%s266 + $0x4] sm:$0xf] %v269
                %v271 = vld [vmem:[%s265 + $0x8] sm:$0xf]
                %272 = vst [vmem:[%s266 + $0x8] sm:$0xf] %v271
                %v273 = vld [vmem:[%s265 + $0xc] sm:$0xf]
                %274 = vst [vmem:[%s266 + $0xc] sm:$0xf] %v273
                %v275 = vld [vmem:[%s265 + $0x10] sm:$0xf]
                %276 = vst [vmem:[%s266 + $0x10] sm:$0xf] %v275
                %v277 = vld [vmem:[%s265 + $0x14] sm:$0xf]
                %278 = vst [vmem:[%s266 + $0x14] sm:$0xf] %v277
                %v279 = vld [vmem:[%s265 + $0x18] sm:$0xf]
                %280 = vst [vmem:[%s266 + $0x18] sm:$0xf] %v279
                %v281 = vld [vmem:[%s265 + $0x1c] sm:$0xf]
                %282 = vst [vmem:[%s266 + $0x1c] sm:$0xf] %v281
                %v283 = vld [vmem:[%s265 + $0x20] sm:$0xf]
                %284 = vst [vmem:[%s266 + $0x20] sm:$0xf] %v283
                %v285 = vld [vmem:[%s265 + $0x24] sm:$0xf]
                %286 = vst [vmem:[%s266 + $0x24] sm:$0xf] %v285
                %v287 = vld [vmem:[%s265 + $0x28] sm:$0xf]
                %288 = vst [vmem:[%s266 + $0x28] sm:$0xf] %v287
                %v289 = vld [vmem:[%s265 + $0x2c] sm:$0xf]
                %290 = vst [vmem:[%s266 + $0x2c] sm:$0xf] %v289
                %v291 = vld [vmem:[%s265 + $0x30] sm:$0xf]
                %292 = vst [vmem:[%s266 + $0x30] sm:$0xf] %v291
                %v293 = vld [vmem:[%s265 + $0x34] sm:$0xf]
                %294 = vst [vmem:[%s266 + $0x34] sm:$0xf] %v293
                %v295 = vld [vmem:[%s265 + $0x38] sm:$0xf]
                %296 = vst [vmem:[%s266 + $0x38] sm:$0xf] %v295
                %v297 = vld [vmem:[%s265 + $0x3c] sm:$0xf]
                %298 = vst [vmem:[%s266 + $0x3c] sm:$0xf] %v297
                %v299 = vld [vmem:[%s265 + $0x80] sm:$0xf]
                %300 = vst [vmem:[%s266 + $0x40] sm:$0xf] %v299
                %v301 = vld [vmem:[%s265 + $0x84] sm:$0xf]
                %302 = vst [vmem:[%s266 + $0x44] sm:$0xf] %v301
                %v303 = vld [vmem:[%s265 + $0x88] sm:$0xf]
                %304 = vst [vmem:[%s266 + $0x48] sm:$0xf] %v303
                %v305 = vld [vmem:[%s265 + $0x8c] sm:$0xf]
                %306 = vst [vmem:[%s266 + $0x4c] sm:$0xf] %v305
                %v307 = vld [vmem:[%s265 + $0x90] sm:$0xf]
                %308 = vst [vmem:[%s266 + $0x50] sm:$0xf] %v307
                %v309 = vld [vmem:[%s265 + $0x94] sm:$0xf]
                %310 = vst [vmem:[%s266 + $0x54] sm:$0xf] %v309
                %v311 = vld [vmem:[%s265 + $0x98] sm:$0xf]
                %312 = vst [vmem:[%s266 + $0x58] sm:$0xf] %v311
                %v313 = vld [vmem:[%s265 + $0x9c] sm:$0xf]
                %314 = vst [vmem:[%s266 + $0x5c] sm:$0xf] %v313
                %v315 = vld [vmem:[%s265 + $0xa0] sm:$0xf]
                %316 = vst [vmem:[%s266 + $0x60] sm:$0xf] %v315
                %v317 = vld [vmem:[%s265 + $0xa4] sm:$0xf]
                %318 = vst [vmem:[%s266 + $0x64] sm:$0xf] %v317
                %v319 = vld [vmem:[%s265 + $0xa8] sm:$0xf]
                %320 = vst [vmem:[%s266 + $0x68] sm:$0xf] %v319
                %v321 = vld [vmem:[%s265 + $0xac] sm:$0xf]
                %322 = vst [vmem:[%s266 + $0x6c] sm:$0xf] %v321
                %v323 = vld [vmem:[%s265 + $0xb0] sm:$0xf]
                %324 = vst [vmem:[%s266 + $0x70] sm:$0xf] %v323
                %v325 = vld [vmem:[%s265 + $0xb4] sm:$0xf]
                %326 = vst [vmem:[%s266 + $0x74] sm:$0xf] %v325
                %v327 = vld [vmem:[%s265 + $0xb8] sm:$0xf]
                %328 = vst [vmem:[%s266 + $0x78] sm:$0xf] %v327
                %v329 = vld [vmem:[%s265 + $0xbc] sm:$0xf]
                %330 = vst [vmem:[%s266 + $0x7c] sm:$0xf] %v329
                %v331 = vld [vmem:[%s265 + $0x100] sm:$0xf]
                %332 = vst [vmem:[%s266 + $0x80] sm:$0xf] %v331
                %v333 = vld [vmem:[%s265 + $0x104] sm:$0xf]
                %334 = vst [vmem:[%s266 + $0x84] sm:$0xf] %v333
                %v335 = vld [vmem:[%s265 + $0x108] sm:$0xf]
                %336 = vst [vmem:[%s266 + $0x88] sm:$0xf] %v335
                %v337 = vld [vmem:[%s265 + $0x10c] sm:$0xf]
                %338 = vst [vmem:[%s266 + $0x8c] sm:$0xf] %v337
                %v339 = vld [vmem:[%s265 + $0x110] sm:$0xf]
                %340 = vst [vmem:[%s266 + $0x90] sm:$0xf] %v339
                %v341 = vld [vmem:[%s265 + $0x114] sm:$0xf]
                %342 = vst [vmem:[%s266 + $0x94] sm:$0xf] %v341
                %v343 = vld [vmem:[%s265 + $0x118] sm:$0xf]
                %344 = vst [vmem:[%s266 + $0x98] sm:$0xf] %v343
                %v345 = vld [vmem:[%s265 + $0x11c] sm:$0xf]
                %346 = vst [vmem:[%s266 + $0x9c] sm:$0xf] %v345
                %v347 = vld [vmem:[%s265 + $0x120] sm:$0xf]
                %348 = vst [vmem:[%s266 + $0xa0] sm:$0xf] %v347
                %v349 = vld [vmem:[%s265 + $0x124] sm:$0xf]
                %350 = vst [vmem:[%s266 + $0xa4] sm:$0xf] %v349
                %v351 = vld [vmem:[%s265 + $0x128] sm:$0xf]
                %352 = vst [vmem:[%s266 + $0xa8] sm:$0xf] %v351
                %v353 = vld [vmem:[%s265 + $0x12c] sm:$0xf]
                %354 = vst [vmem:[%s266 + $0xac] sm:$0xf] %v353
                %v355 = vld [vmem:[%s265 + $0x130] sm:$0xf]
                %356 = vst [vmem:[%s266 + $0xb0] sm:$0xf] %v355
                %v357 = vld [vmem:[%s265 + $0x134] sm:$0xf]
                %358 = vst [vmem:[%s266 + $0xb4] sm:$0xf] %v357
                %v359 = vld [vmem:[%s265 + $0x138] sm:$0xf]
                %360 = vst [vmem:[%s266 + $0xb8] sm:$0xf] %v359
                %v361 = vld [vmem:[%s265 + $0x13c] sm:$0xf]
                %362 = vst [vmem:[%s266 + $0xbc] sm:$0xf] %v361
                %v363 = vld [vmem:[%s265 + $0x180] sm:$0xf]
                %364 = vst [vmem:[%s266 + $0xc0] sm:$0xf] %v363
                %v365 = vld [vmem:[%s265 + $0x184] sm:$0xf]
                %366 = vst [vmem:[%s266 + $0xc4] sm:$0xf] %v365
                %v367 = vld [vmem:[%s265 + $0x188] sm:$0xf]
                %368 = vst [vmem:[%s266 + $0xc8] sm:$0xf] %v367
                %v369 = vld [vmem:[%s265 + $0x18c] sm:$0xf]
                %370 = vst [vmem:[%s266 + $0xcc] sm:$0xf] %v369
                %v371 = vld [vmem:[%s265 + $0x190] sm:$0xf]
                %372 = vst [vmem:[%s266 + $0xd0] sm:$0xf] %v371
                %v373 = vld [vmem:[%s265 + $0x194] sm:$0xf]
                %374 = vst [vmem:[%s266 + $0xd4] sm:$0xf] %v373
                %v375 = vld [vmem:[%s265 + $0x198] sm:$0xf]
                %376 = vst [vmem:[%s266 + $0xd8] sm:$0xf] %v375
                %v377 = vld [vmem:[%s265 + $0x19c] sm:$0xf]
                %378 = vst [vmem:[%s266 + $0xdc] sm:$0xf] %v377
                %v379 = vld [vmem:[%s265 + $0x1a0] sm:$0xf]
                %380 = vst [vmem:[%s266 + $0xe0] sm:$0xf] %v379
                %v381 = vld [vmem:[%s265 + $0x1a4] sm:$0xf]
                %382 = vst [vmem:[%s266 + $0xe4] sm:$0xf] %v381
                %v383 = vld [vmem:[%s265 + $0x1a8] sm:$0xf]
                %384 = vst [vmem:[%s266 + $0xe8] sm:$0xf] %v383
                %v385 = vld [vmem:[%s265 + $0x1ac] sm:$0xf]
                %386 = vst [vmem:[%s266 + $0xec] sm:$0xf] %v385
                %v387 = vld [vmem:[%s265 + $0x1b0] sm:$0xf]
                %388 = vst [vmem:[%s266 + $0xf0] sm:$0xf] %v387
                %v389 = vld [vmem:[%s265 + $0x1b4] sm:$0xf]
                %390 = vst [vmem:[%s266 + $0xf4] sm:$0xf] %v389
                %v391 = vld [vmem:[%s265 + $0x1b8] sm:$0xf]
                %392 = vst [vmem:[%s266 + $0xf8] sm:$0xf] %v391
                %v393 = vld [vmem:[%s265 + $0x1bc] sm:$0xf]
                %394 = vst [vmem:[%s266 + $0xfc] sm:$0xf] %v393
              $region45: #{tpu_custom_call.1} parent=39 // loop_footer
                %s264 = sadd.s32 1, %s260
              $region46: #{tpu_custom_call.1} parent=39 // loop_footer_branch
                %259 = sbr.rel target = $region42
              $region47: #{tpu_custom_call.1} parent=39 // loop_exit
                _
            $region40: #{tpu_custom_call.1} parent=31 // pred_fallthru
              _
          $region32: #{tpu_custom_call.1} parent=27 // pred_fallthru
            _
          %542 = vnop
        $region28: #{tpu_custom_call.1} parent=23 // pred_fallthru
          _
        // Predicated region
        $region66: #{tpu_custom_call.1} parent=23 // pred_check
          %p543 = pneg %p81
        $region67: #{tpu_custom_call.1} parent=23 // pred_check_branch
          %545 = sbr.rel (%p543) target = $region69
        $region68: #{tpu_custom_call.1} parent=23 // pred_region
          %s546 = sand.u32 %s71, 1
          %s547 = sand.u32 %s71, 1
          %s548 = smul.addr %s547, 256
          %s549 = scalar_lea.vmem [#allocation7], %s548
          %s550 = smul.u32 16, %s21
          %s551 = smul.addr %s19, 128
          %s552 = sadd.s32 %s550, %s551
          %s553 = smul.addr %s552, 4
          %s554 = scalar_lea.vmem %s1, %s553
          // Predicated region
          $region70: #{tpu_custom_call.1} parent=68 // pred_check
            _
          $region71: #{tpu_custom_call.1} parent=68 // pred_check_branch
            %556 = sbr.rel (0) target = $region73
          $region72: #{tpu_custom_call.1} parent=68 // pred_region
            // Predicated region
            $region74: #{tpu_custom_call.1} parent=72 // pred_check
              _
            $region75: #{tpu_custom_call.1} parent=72 // pred_check_branch
              %558 = sbr.rel target = $region77
            $region76: #{tpu_custom_call.1} parent=72 // pred_region
              // Predicated region
              $region89: #{tpu_custom_call.1} parent=76 // pred_check
                _
              $region90: #{tpu_custom_call.1} parent=76 // pred_check_branch
                %699 = sbr.rel (0) target = $region92
              $region91: #{tpu_custom_call.1} parent=76 // pred_region
                loop: start=0, step=1, limit=1
                $region93: #{tpu_custom_call.1} parent=91 // loop_pre_header
                  _
                $region94: #{tpu_custom_call.1} parent=91 // loop_header
                  %s701 = sphi 0, %s705
                  %p702 = scmp.ge.s32.totalorder %s701, 1
                  %s706 = sphi %s554, %s554
                  %s707 = sphi %s549, %s549
                $region95: #{tpu_custom_call.1} parent=91 // loop_header_branch
                  %704 = sbr.rel (%p702) target = $region99
                $region96: #{tpu_custom_call.1} parent=91 // loop_body
                  _
                $region97: #{tpu_custom_call.1} parent=91 // loop_footer
                  %s705 = sadd.s32 1, %s701
                $region98: #{tpu_custom_call.1} parent=91 // loop_footer_branch
                  %700 = sbr.rel target = $region94
                $region99: #{tpu_custom_call.1} parent=91 // loop_exit
                  _
                loop: start=0, step=1, limit=1
                $region100: #{tpu_custom_call.1} parent=91 // loop_pre_header
                  _
                $region101: #{tpu_custom_call.1} parent=91 // loop_header
                  %s710 = sphi 0, %s714
                  %p711 = scmp.ge.s32.totalorder %s710, 1
                  %s715 = sphi %s554, %s554
                  %s716 = sphi %s549, %s549
                $region102: #{tpu_custom_call.1} parent=91 // loop_header_branch
                  %713 = sbr.rel (%p711) target = $region106
                $region103: #{tpu_custom_call.1} parent=91 // loop_body
                  %v717 = vld [vmem:[%s715] sm:$0xf]
                  %718 = vst [vmem:[%s716] sm:$0xf] %v717
                  %v719 = vld [vmem:[%s715 + $0x4] sm:$0xf]
                  %720 = vst [vmem:[%s716 + $0x4] sm:$0xf] %v719
                  %v721 = vld [vmem:[%s715 + $0x8] sm:$0xf]
                  %722 = vst [vmem:[%s716 + $0x8] sm:$0xf] %v721
                  %v723 = vld [vmem:[%s715 + $0xc] sm:$0xf]
                  %724 = vst [vmem:[%s716 + $0xc] sm:$0xf] %v723
                  %v725 = vld [vmem:[%s715 + $0x10] sm:$0xf]
                  %726 = vst [vmem:[%s716 + $0x10] sm:$0xf] %v725
                  %v727 = vld [vmem:[%s715 + $0x14] sm:$0xf]
                  %728 = vst [vmem:[%s716 + $0x14] sm:$0xf] %v727
                  %v729 = vld [vmem:[%s715 + $0x18] sm:$0xf]
                  %730 = vst [vmem:[%s716 + $0x18] sm:$0xf] %v729
                  %v731 = vld [vmem:[%s715 + $0x1c] sm:$0xf]
                  %732 = vst [vmem:[%s716 + $0x1c] sm:$0xf] %v731
                  %v733 = vld [vmem:[%s715 + $0x20] sm:$0xf]
                  %734 = vst [vmem:[%s716 + $0x20] sm:$0xf] %v733
                  %v735 = vld [vmem:[%s715 + $0x24] sm:$0xf]
                  %736 = vst [vmem:[%s716 + $0x24] sm:$0xf] %v735
                  %v737 = vld [vmem:[%s715 + $0x28] sm:$0xf]
                  %738 = vst [vmem:[%s716 + $0x28] sm:$0xf] %v737
                  %v739 = vld [vmem:[%s715 + $0x2c] sm:$0xf]
                  %740 = vst [vmem:[%s716 + $0x2c] sm:$0xf] %v739
                  %v741 = vld [vmem:[%s715 + $0x30] sm:$0xf]
                  %742 = vst [vmem:[%s716 + $0x30] sm:$0xf] %v741
                  %v743 = vld [vmem:[%s715 + $0x34] sm:$0xf]
                  %744 = vst [vmem:[%s716 + $0x34] sm:$0xf] %v743
                  %v745 = vld [vmem:[%s715 + $0x38] sm:$0xf]
                  %746 = vst [vmem:[%s716 + $0x38] sm:$0xf] %v745
                  %v747 = vld [vmem:[%s715 + $0x3c] sm:$0xf]
                  %748 = vst [vmem:[%s716 + $0x3c] sm:$0xf] %v747
                  %v749 = vld [vmem:[%s715 + $0x80] sm:$0xf]
                  %750 = vst [vmem:[%s716 + $0x40] sm:$0xf] %v749
                  %v751 = vld [vmem:[%s715 + $0x84] sm:$0xf]
                  %752 = vst [vmem:[%s716 + $0x44] sm:$0xf] %v751
                  %v753 = vld [vmem:[%s715 + $0x88] sm:$0xf]
                  %754 = vst [vmem:[%s716 + $0x48] sm:$0xf] %v753
                  %v755 = vld [vmem:[%s715 + $0x8c] sm:$0xf]
                  %756 = vst [vmem:[%s716 + $0x4c] sm:$0xf] %v755
                  %v757 = vld [vmem:[%s715 + $0x90] sm:$0xf]
                  %758 = vst [vmem:[%s716 + $0x50] sm:$0xf] %v757
                  %v759 = vld [vmem:[%s715 + $0x94] sm:$0xf]
                  %760 = vst [vmem:[%s716 + $0x54] sm:$0xf] %v759
                  %v761 = vld [vmem:[%s715 + $0x98] sm:$0xf]
                  %762 = vst [vmem:[%s716 + $0x58] sm:$0xf] %v761
                  %v763 = vld [vmem:[%s715 + $0x9c] sm:$0xf]
                  %764 = vst [vmem:[%s716 + $0x5c] sm:$0xf] %v763
                  %v765 = vld [vmem:[%s715 + $0xa0] sm:$0xf]
                  %766 = vst [vmem:[%s716 + $0x60] sm:$0xf] %v765
                  %v767 = vld [vmem:[%s715 + $0xa4] sm:$0xf]
                  %768 = vst [vmem:[%s716 + $0x64] sm:$0xf] %v767
                  %v769 = vld [vmem:[%s715 + $0xa8] sm:$0xf]
                  %770 = vst [vmem:[%s716 + $0x68] sm:$0xf] %v769
                  %v771 = vld [vmem:[%s715 + $0xac] sm:$0xf]
                  %772 = vst [vmem:[%s716 + $0x6c] sm:$0xf] %v771
                  %v773 = vld [vmem:[%s715 + $0xb0] sm:$0xf]
                  %774 = vst [vmem:[%s716 + $0x70] sm:$0xf] %v773
                  %v775 = vld [vmem:[%s715 + $0xb4] sm:$0xf]
                  %776 = vst [vmem:[%s716 + $0x74] sm:$0xf] %v775
                  %v777 = vld [vmem:[%s715 + $0xb8] sm:$0xf]
                  %778 = vst [vmem:[%s716 + $0x78] sm:$0xf] %v777
                  %v779 = vld [vmem:[%s715 + $0xbc] sm:$0xf]
                  %780 = vst [vmem:[%s716 + $0x7c] sm:$0xf] %v779
                  %v781 = vld [vmem:[%s715 + $0x100] sm:$0xf]
                  %782 = vst [vmem:[%s716 + $0x80] sm:$0xf] %v781
                  %v783 = vld [vmem:[%s715 + $0x104] sm:$0xf]
                  %784 = vst [vmem:[%s716 + $0x84] sm:$0xf] %v783
                  %v785 = vld [vmem:[%s715 + $0x108] sm:$0xf]
                  %786 = vst [vmem:[%s716 + $0x88] sm:$0xf] %v785
                  %v787 = vld [vmem:[%s715 + $0x10c] sm:$0xf]
                  %788 = vst [vmem:[%s716 + $0x8c] sm:$0xf] %v787
                  %v789 = vld [vmem:[%s715 + $0x110] sm:$0xf]
                  %790 = vst [vmem:[%s716 + $0x90] sm:$0xf] %v789
                  %v791 = vld [vmem:[%s715 + $0x114] sm:$0xf]
                  %792 = vst [vmem:[%s716 + $0x94] sm:$0xf] %v791
                  %v793 = vld [vmem:[%s715 + $0x118] sm:$0xf]
                  %794 = vst [vmem:[%s716 + $0x98] sm:$0xf] %v793
                  %v795 = vld [vmem:[%s715 + $0x11c] sm:$0xf]
                  %796 = vst [vmem:[%s716 + $0x9c] sm:$0xf] %v795
                  %v797 = vld [vmem:[%s715 + $0x120] sm:$0xf]
                  %798 = vst [vmem:[%s716 + $0xa0] sm:$0xf] %v797
                  %v799 = vld [vmem:[%s715 + $0x124] sm:$0xf]
                  %800 = vst [vmem:[%s716 + $0xa4] sm:$0xf] %v799
                  %v801 = vld [vmem:[%s715 + $0x128] sm:$0xf]
                  %802 = vst [vmem:[%s716 + $0xa8] sm:$0xf] %v801
                  %v803 = vld [vmem:[%s715 + $0x12c] sm:$0xf]
                  %804 = vst [vmem:[%s716 + $0xac] sm:$0xf] %v803
                  %v805 = vld [vmem:[%s715 + $0x130] sm:$0xf]
                  %806 = vst [vmem:[%s716 + $0xb0] sm:$0xf] %v805
                  %v807 = vld [vmem:[%s715 + $0x134] sm:$0xf]
                  %808 = vst [vmem:[%s716 + $0xb4] sm:$0xf] %v807
                  %v809 = vld [vmem:[%s715 + $0x138] sm:$0xf]
                  %810 = vst [vmem:[%s716 + $0xb8] sm:$0xf] %v809
                  %v811 = vld [vmem:[%s715 + $0x13c] sm:$0xf]
                  %812 = vst [vmem:[%s716 + $0xbc] sm:$0xf] %v811
                  %v813 = vld [vmem:[%s715 + $0x180] sm:$0xf]
                  %814 = vst [vmem:[%s716 + $0xc0] sm:$0xf] %v813
                  %v815 = vld [vmem:[%s715 + $0x184] sm:$0xf]
                  %816 = vst [vmem:[%s716 + $0xc4] sm:$0xf] %v815
                  %v817 = vld [vmem:[%s715 + $0x188] sm:$0xf]
                  %818 = vst [vmem:[%s716 + $0xc8] sm:$0xf] %v817
                  %v819 = vld [vmem:[%s715 + $0x18c] sm:$0xf]
                  %820 = vst [vmem:[%s716 + $0xcc] sm:$0xf] %v819
                  %v821 = vld [vmem:[%s715 + $0x190] sm:$0xf]
                  %822 = vst [vmem:[%s716 + $0xd0] sm:$0xf] %v821
                  %v823 = vld [vmem:[%s715 + $0x194] sm:$0xf]
                  %824 = vst [vmem:[%s716 + $0xd4] sm:$0xf] %v823
                  %v825 = vld [vmem:[%s715 + $0x198] sm:$0xf]
                  %826 = vst [vmem:[%s716 + $0xd8] sm:$0xf] %v825
                  %v827 = vld [vmem:[%s715 + $0x19c] sm:$0xf]
                  %828 = vst [vmem:[%s716 + $0xdc] sm:$0xf] %v827
                  %v829 = vld [vmem:[%s715 + $0x1a0] sm:$0xf]
                  %830 = vst [vmem:[%s716 + $0xe0] sm:$0xf] %v829
                  %v831 = vld [vmem:[%s715 + $0x1a4] sm:$0xf]
                  %832 = vst [vmem:[%s716 + $0xe4] sm:$0xf] %v831
                  %v833 = vld [vmem:[%s715 + $0x1a8] sm:$0xf]
                  %834 = vst [vmem:[%s716 + $0xe8] sm:$0xf] %v833
                  %v835 = vld [vmem:[%s715 + $0x1ac] sm:$0xf]
                  %836 = vst [vmem:[%s716 + $0xec] sm:$0xf] %v835
                  %v837 = vld [vmem:[%s715 + $0x1b0] sm:$0xf]
                  %838 = vst [vmem:[%s716 + $0xf0] sm:$0xf] %v837
                  %v839 = vld [vmem:[%s715 + $0x1b4] sm:$0xf]
                  %840 = vst [vmem:[%s716 + $0xf4] sm:$0xf] %v839
                  %v841 = vld [vmem:[%s715 + $0x1b8] sm:$0xf]
                  %842 = vst [vmem:[%s716 + $0xf8] sm:$0xf] %v841
                  %v843 = vld [vmem:[%s715 + $0x1bc] sm:$0xf]
                  %844 = vst [vmem:[%s716 + $0xfc] sm:$0xf] %v843
                $region104: #{tpu_custom_call.1} parent=91 // loop_footer
                  %s714 = sadd.s32 1, %s710
                $region105: #{tpu_custom_call.1} parent=91 // loop_footer_branch
                  %709 = sbr.rel target = $region101
                $region106: #{tpu_custom_call.1} parent=91 // loop_exit
                  _
              $region92: #{tpu_custom_call.1} parent=76 // pred_fallthru
                _
            $region77: #{tpu_custom_call.1} parent=72 // pred_fallthru
              _
            // Predicated region
            $region78: #{tpu_custom_call.1} parent=72 // pred_check
              _
            $region79: #{tpu_custom_call.1} parent=72 // pred_check_branch
              %560 = sbr.rel (0) target = $region81
            $region80: #{tpu_custom_call.1} parent=72 // pred_region
              loop: start=0, step=1, limit=1
              $region82: #{tpu_custom_call.1} parent=80 // loop_pre_header
                _
              $region83: #{tpu_custom_call.1} parent=80 // loop_header
                %s563 = sphi 0, %s567
                %p564 = scmp.ge.s32.totalorder %s563, 1
                %s568 = sphi %s554, %s554
                %s569 = sphi %s549, %s549
              $region84: #{tpu_custom_call.1} parent=80 // loop_header_branch
                %566 = sbr.rel (%p564) target = $region88
              $region85: #{tpu_custom_call.1} parent=80 // loop_body
                %v570 = vld [vmem:[%s568] sm:$0xf]
                %571 = vst [vmem:[%s569] sm:$0xf] %v570
                %v572 = vld [vmem:[%s568 + $0x4] sm:$0xf]
                %573 = vst [vmem:[%s569 + $0x4] sm:$0xf] %v572
                %v574 = vld [vmem:[%s568 + $0x8] sm:$0xf]
                %575 = vst [vmem:[%s569 + $0x8] sm:$0xf] %v574
                %v576 = vld [vmem:[%s568 + $0xc] sm:$0xf]
                %577 = vst [vmem:[%s569 + $0xc] sm:$0xf] %v576
                %v578 = vld [vmem:[%s568 + $0x10] sm:$0xf]
                %579 = vst [vmem:[%s569 + $0x10] sm:$0xf] %v578
                %v580 = vld [vmem:[%s568 + $0x14] sm:$0xf]
                %581 = vst [vmem:[%s569 + $0x14] sm:$0xf] %v580
                %v582 = vld [vmem:[%s568 + $0x18] sm:$0xf]
                %583 = vst [vmem:[%s569 + $0x18] sm:$0xf] %v582
                %v584 = vld [vmem:[%s568 + $0x1c] sm:$0xf]
                %585 = vst [vmem:[%s569 + $0x1c] sm:$0xf] %v584
                %v586 = vld [vmem:[%s568 + $0x20] sm:$0xf]
                %587 = vst [vmem:[%s569 + $0x20] sm:$0xf] %v586
                %v588 = vld [vmem:[%s568 + $0x24] sm:$0xf]
                %589 = vst [vmem:[%s569 + $0x24] sm:$0xf] %v588
                %v590 = vld [vmem:[%s568 + $0x28] sm:$0xf]
                %591 = vst [vmem:[%s569 + $0x28] sm:$0xf] %v590
                %v592 = vld [vmem:[%s568 + $0x2c] sm:$0xf]
                %593 = vst [vmem:[%s569 + $0x2c] sm:$0xf] %v592
                %v594 = vld [vmem:[%s568 + $0x30] sm:$0xf]
                %595 = vst [vmem:[%s569 + $0x30] sm:$0xf] %v594
                %v596 = vld [vmem:[%s568 + $0x34] sm:$0xf]
                %597 = vst [vmem:[%s569 + $0x34] sm:$0xf] %v596
                %v598 = vld [vmem:[%s568 + $0x38] sm:$0xf]
                %599 = vst [vmem:[%s569 + $0x38] sm:$0xf] %v598
                %v600 = vld [vmem:[%s568 + $0x3c] sm:$0xf]
                %601 = vst [vmem:[%s569 + $0x3c] sm:$0xf] %v600
                %v602 = vld [vmem:[%s568 + $0x80] sm:$0xf]
                %603 = vst [vmem:[%s569 + $0x40] sm:$0xf] %v602
                %v604 = vld [vmem:[%s568 + $0x84] sm:$0xf]
                %605 = vst [vmem:[%s569 + $0x44] sm:$0xf] %v604
                %v606 = vld [vmem:[%s568 + $0x88] sm:$0xf]
                %607 = vst [vmem:[%s569 + $0x48] sm:$0xf] %v606
                %v608 = vld [vmem:[%s568 + $0x8c] sm:$0xf]
                %609 = vst [vmem:[%s569 + $0x4c] sm:$0xf] %v608
                %v610 = vld [vmem:[%s568 + $0x90] sm:$0xf]
                %611 = vst [vmem:[%s569 + $0x50] sm:$0xf] %v610
                %v612 = vld [vmem:[%s568 + $0x94] sm:$0xf]
                %613 = vst [vmem:[%s569 + $0x54] sm:$0xf] %v612
                %v614 = vld [vmem:[%s568 + $0x98] sm:$0xf]
                %615 = vst [vmem:[%s569 + $0x58] sm:$0xf] %v614
                %v616 = vld [vmem:[%s568 + $0x9c] sm:$0xf]
                %617 = vst [vmem:[%s569 + $0x5c] sm:$0xf] %v616
                %v618 = vld [vmem:[%s568 + $0xa0] sm:$0xf]
                %619 = vst [vmem:[%s569 + $0x60] sm:$0xf] %v618
                %v620 = vld [vmem:[%s568 + $0xa4] sm:$0xf]
                %621 = vst [vmem:[%s569 + $0x64] sm:$0xf] %v620
                %v622 = vld [vmem:[%s568 + $0xa8] sm:$0xf]
                %623 = vst [vmem:[%s569 + $0x68] sm:$0xf] %v622
                %v624 = vld [vmem:[%s568 + $0xac] sm:$0xf]
                %625 = vst [vmem:[%s569 + $0x6c] sm:$0xf] %v624
                %v626 = vld [vmem:[%s568 + $0xb0] sm:$0xf]
                %627 = vst [vmem:[%s569 + $0x70] sm:$0xf] %v626
                %v628 = vld [vmem:[%s568 + $0xb4] sm:$0xf]
                %629 = vst [vmem:[%s569 + $0x74] sm:$0xf] %v628
                %v630 = vld [vmem:[%s568 + $0xb8] sm:$0xf]
                %631 = vst [vmem:[%s569 + $0x78] sm:$0xf] %v630
                %v632 = vld [vmem:[%s568 + $0xbc] sm:$0xf]
                %633 = vst [vmem:[%s569 + $0x7c] sm:$0xf] %v632
                %v634 = vld [vmem:[%s568 + $0x100] sm:$0xf]
                %635 = vst [vmem:[%s569 + $0x80] sm:$0xf] %v634
                %v636 = vld [vmem:[%s568 + $0x104] sm:$0xf]
                %637 = vst [vmem:[%s569 + $0x84] sm:$0xf] %v636
                %v638 = vld [vmem:[%s568 + $0x108] sm:$0xf]
                %639 = vst [vmem:[%s569 + $0x88] sm:$0xf] %v638
                %v640 = vld [vmem:[%s568 + $0x10c] sm:$0xf]
                %641 = vst [vmem:[%s569 + $0x8c] sm:$0xf] %v640
                %v642 = vld [vmem:[%s568 + $0x110] sm:$0xf]
                %643 = vst [vmem:[%s569 + $0x90] sm:$0xf] %v642
                %v644 = vld [vmem:[%s568 + $0x114] sm:$0xf]
                %645 = vst [vmem:[%s569 + $0x94] sm:$0xf] %v644
                %v646 = vld [vmem:[%s568 + $0x118] sm:$0xf]
                %647 = vst [vmem:[%s569 + $0x98] sm:$0xf] %v646
                %v648 = vld [vmem:[%s568 + $0x11c] sm:$0xf]
                %649 = vst [vmem:[%s569 + $0x9c] sm:$0xf] %v648
                %v650 = vld [vmem:[%s568 + $0x120] sm:$0xf]
                %651 = vst [vmem:[%s569 + $0xa0] sm:$0xf] %v650
                %v652 = vld [vmem:[%s568 + $0x124] sm:$0xf]
                %653 = vst [vmem:[%s569 + $0xa4] sm:$0xf] %v652
                %v654 = vld [vmem:[%s568 + $0x128] sm:$0xf]
                %655 = vst [vmem:[%s569 + $0xa8] sm:$0xf] %v654
                %v656 = vld [vmem:[%s568 + $0x12c] sm:$0xf]
                %657 = vst [vmem:[%s569 + $0xac] sm:$0xf] %v656
                %v658 = vld [vmem:[%s568 + $0x130] sm:$0xf]
                %659 = vst [vmem:[%s569 + $0xb0] sm:$0xf] %v658
                %v660 = vld [vmem:[%s568 + $0x134] sm:$0xf]
                %661 = vst [vmem:[%s569 + $0xb4] sm:$0xf] %v660
                %v662 = vld [vmem:[%s568 + $0x138] sm:$0xf]
                %663 = vst [vmem:[%s569 + $0xb8] sm:$0xf] %v662
                %v664 = vld [vmem:[%s568 + $0x13c] sm:$0xf]
                %665 = vst [vmem:[%s569 + $0xbc] sm:$0xf] %v664
                %v666 = vld [vmem:[%s568 + $0x180] sm:$0xf]
                %667 = vst [vmem:[%s569 + $0xc0] sm:$0xf] %v666
                %v668 = vld [vmem:[%s568 + $0x184] sm:$0xf]
                %669 = vst [vmem:[%s569 + $0xc4] sm:$0xf] %v668
                %v670 = vld [vmem:[%s568 + $0x188] sm:$0xf]
                %671 = vst [vmem:[%s569 + $0xc8] sm:$0xf] %v670
                %v672 = vld [vmem:[%s568 + $0x18c] sm:$0xf]
                %673 = vst [vmem:[%s569 + $0xcc] sm:$0xf] %v672
                %v674 = vld [vmem:[%s568 + $0x190] sm:$0xf]
                %675 = vst [vmem:[%s569 + $0xd0] sm:$0xf] %v674
                %v676 = vld [vmem:[%s568 + $0x194] sm:$0xf]
                %677 = vst [vmem:[%s569 + $0xd4] sm:$0xf] %v676
                %v678 = vld [vmem:[%s568 + $0x198] sm:$0xf]
                %679 = vst [vmem:[%s569 + $0xd8] sm:$0xf] %v678
                %v680 = vld [vmem:[%s568 + $0x19c] sm:$0xf]
                %681 = vst [vmem:[%s569 + $0xdc] sm:$0xf] %v680
                %v682 = vld [vmem:[%s568 + $0x1a0] sm:$0xf]
                %683 = vst [vmem:[%s569 + $0xe0] sm:$0xf] %v682
                %v684 = vld [vmem:[%s568 + $0x1a4] sm:$0xf]
                %685 = vst [vmem:[%s569 + $0xe4] sm:$0xf] %v684
                %v686 = vld [vmem:[%s568 + $0x1a8] sm:$0xf]
                %687 = vst [vmem:[%s569 + $0xe8] sm:$0xf] %v686
                %v688 = vld [vmem:[%s568 + $0x1ac] sm:$0xf]
                %689 = vst [vmem:[%s569 + $0xec] sm:$0xf] %v688
                %v690 = vld [vmem:[%s568 + $0x1b0] sm:$0xf]
                %691 = vst [vmem:[%s569 + $0xf0] sm:$0xf] %v690
                %v692 = vld [vmem:[%s568 + $0x1b4] sm:$0xf]
                %693 = vst [vmem:[%s569 + $0xf4] sm:$0xf] %v692
                %v694 = vld [vmem:[%s568 + $0x1b8] sm:$0xf]
                %695 = vst [vmem:[%s569 + $0xf8] sm:$0xf] %v694
                %v696 = vld [vmem:[%s568 + $0x1bc] sm:$0xf]
                %697 = vst [vmem:[%s569 + $0xfc] sm:$0xf] %v696
              $region86: #{tpu_custom_call.1} parent=80 // loop_footer
                %s567 = sadd.s32 1, %s563
              $region87: #{tpu_custom_call.1} parent=80 // loop_footer_branch
                %562 = sbr.rel target = $region83
              $region88: #{tpu_custom_call.1} parent=80 // loop_exit
                _
            $region81: #{tpu_custom_call.1} parent=72 // pred_fallthru
              _
          $region73: #{tpu_custom_call.1} parent=68 // pred_fallthru
            _
          %845 = vnop
        $region69: #{tpu_custom_call.1} parent=23 // pred_fallthru
          _
        // Predicated region
        $region107: #{tpu_custom_call.1} parent=23 // pred_check
          %p846 = pneg %p109
        $region108: #{tpu_custom_call.1} parent=23 // pred_check_branch
          %848 = sbr.rel (%p846) target = $region110
        $region109: #{tpu_custom_call.1} parent=23 // pred_region
          %s849 = sand.u32 %s99, 1
          %s850 = sand.u32 %s99, 1
          %s851 = smul.addr %s850, 256
          %s852 = scalar_lea.vmem [#allocation8], %s851
          %s853 = smul.u32 16, %s21
          %s854 = smul.addr %s19, 128
          %s855 = sadd.s32 %s853, %s854
          %s856 = smul.addr %s855, 4
          %s857 = scalar_lea.vmem %s2, %s856
          // Predicated region
          $region111: #{tpu_custom_call.1} parent=109 // pred_check
            _
          $region112: #{tpu_custom_call.1} parent=109 // pred_check_branch
            %859 = sbr.rel (0) target = $region114
          $region113: #{tpu_custom_call.1} parent=109 // pred_region
            // Predicated region
            $region115: #{tpu_custom_call.1} parent=113 // pred_check
              _
            $region116: #{tpu_custom_call.1} parent=113 // pred_check_branch
              %861 = sbr.rel target = $region118
            $region117: #{tpu_custom_call.1} parent=113 // pred_region
              // Predicated region
              $region130: #{tpu_custom_call.1} parent=117 // pred_check
                _
              $region131: #{tpu_custom_call.1} parent=117 // pred_check_branch
                %1002 = sbr.rel (0) target = $region133
              $region132: #{tpu_custom_call.1} parent=117 // pred_region
                loop: start=0, step=1, limit=1
                $region134: #{tpu_custom_call.1} parent=132 // loop_pre_header
                  _
                $region135: #{tpu_custom_call.1} parent=132 // loop_header
                  %s1004 = sphi 0, %s1008
                  %p1005 = scmp.ge.s32.totalorder %s1004, 1
                  %s1009 = sphi %s857, %s857
                  %s1010 = sphi %s852, %s852
                $region136: #{tpu_custom_call.1} parent=132 // loop_header_branch
                  %1007 = sbr.rel (%p1005) target = $region140
                $region137: #{tpu_custom_call.1} parent=132 // loop_body
                  _
                $region138: #{tpu_custom_call.1} parent=132 // loop_footer
                  %s1008 = sadd.s32 1, %s1004
                $region139: #{tpu_custom_call.1} parent=132 // loop_footer_branch
                  %1003 = sbr.rel target = $region135
                $region140: #{tpu_custom_call.1} parent=132 // loop_exit
                  _
                loop: start=0, step=1, limit=1
                $region141: #{tpu_custom_call.1} parent=132 // loop_pre_header
                  _
                $region142: #{tpu_custom_call.1} parent=132 // loop_header
                  %s1013 = sphi 0, %s1017
                  %p1014 = scmp.ge.s32.totalorder %s1013, 1
                  %s1018 = sphi %s857, %s857
                  %s1019 = sphi %s852, %s852
                $region143: #{tpu_custom_call.1} parent=132 // loop_header_branch
                  %1016 = sbr.rel (%p1014) target = $region147
                $region144: #{tpu_custom_call.1} parent=132 // loop_body
                  %v1020 = vld [vmem:[%s1018] sm:$0xf]
                  %1021 = vst [vmem:[%s1019] sm:$0xf] %v1020
                  %v1022 = vld [vmem:[%s1018 + $0x4] sm:$0xf]
                  %1023 = vst [vmem:[%s1019 + $0x4] sm:$0xf] %v1022
                  %v1024 = vld [vmem:[%s1018 + $0x8] sm:$0xf]
                  %1025 = vst [vmem:[%s1019 + $0x8] sm:$0xf] %v1024
                  %v1026 = vld [vmem:[%s1018 + $0xc] sm:$0xf]
                  %1027 = vst [vmem:[%s1019 + $0xc] sm:$0xf] %v1026
                  %v1028 = vld [vmem:[%s1018 + $0x10] sm:$0xf]
                  %1029 = vst [vmem:[%s1019 + $0x10] sm:$0xf] %v1028
                  %v1030 = vld [vmem:[%s1018 + $0x14] sm:$0xf]
                  %1031 = vst [vmem:[%s1019 + $0x14] sm:$0xf] %v1030
                  %v1032 = vld [vmem:[%s1018 + $0x18] sm:$0xf]
                  %1033 = vst [vmem:[%s1019 + $0x18] sm:$0xf] %v1032
                  %v1034 = vld [vmem:[%s1018 + $0x1c] sm:$0xf]
                  %1035 = vst [vmem:[%s1019 + $0x1c] sm:$0xf] %v1034
                  %v1036 = vld [vmem:[%s1018 + $0x20] sm:$0xf]
                  %1037 = vst [vmem:[%s1019 + $0x20] sm:$0xf] %v1036
                  %v1038 = vld [vmem:[%s1018 + $0x24] sm:$0xf]
                  %1039 = vst [vmem:[%s1019 + $0x24] sm:$0xf] %v1038
                  %v1040 = vld [vmem:[%s1018 + $0x28] sm:$0xf]
                  %1041 = vst [vmem:[%s1019 + $0x28] sm:$0xf] %v1040
                  %v1042 = vld [vmem:[%s1018 + $0x2c] sm:$0xf]
                  %1043 = vst [vmem:[%s1019 + $0x2c] sm:$0xf] %v1042
                  %v1044 = vld [vmem:[%s1018 + $0x30] sm:$0xf]
                  %1045 = vst [vmem:[%s1019 + $0x30] sm:$0xf] %v1044
                  %v1046 = vld [vmem:[%s1018 + $0x34] sm:$0xf]
                  %1047 = vst [vmem:[%s1019 + $0x34] sm:$0xf] %v1046
                  %v1048 = vld [vmem:[%s1018 + $0x38] sm:$0xf]
                  %1049 = vst [vmem:[%s1019 + $0x38] sm:$0xf] %v1048
                  %v1050 = vld [vmem:[%s1018 + $0x3c] sm:$0xf]
                  %1051 = vst [vmem:[%s1019 + $0x3c] sm:$0xf] %v1050
                  %v1052 = vld [vmem:[%s1018 + $0x80] sm:$0xf]
                  %1053 = vst [vmem:[%s1019 + $0x40] sm:$0xf] %v1052
                  %v1054 = vld [vmem:[%s1018 + $0x84] sm:$0xf]
                  %1055 = vst [vmem:[%s1019 + $0x44] sm:$0xf] %v1054
                  %v1056 = vld [vmem:[%s1018 + $0x88] sm:$0xf]
                  %1057 = vst [vmem:[%s1019 + $0x48] sm:$0xf] %v1056
                  %v1058 = vld [vmem:[%s1018 + $0x8c] sm:$0xf]
                  %1059 = vst [vmem:[%s1019 + $0x4c] sm:$0xf] %v1058
                  %v1060 = vld [vmem:[%s1018 + $0x90] sm:$0xf]
                  %1061 = vst [vmem:[%s1019 + $0x50] sm:$0xf] %v1060
                  %v1062 = vld [vmem:[%s1018 + $0x94] sm:$0xf]
                  %1063 = vst [vmem:[%s1019 + $0x54] sm:$0xf] %v1062
                  %v1064 = vld [vmem:[%s1018 + $0x98] sm:$0xf]
                  %1065 = vst [vmem:[%s1019 + $0x58] sm:$0xf] %v1064
                  %v1066 = vld [vmem:[%s1018 + $0x9c] sm:$0xf]
                  %1067 = vst [vmem:[%s1019 + $0x5c] sm:$0xf] %v1066
                  %v1068 = vld [vmem:[%s1018 + $0xa0] sm:$0xf]
                  %1069 = vst [vmem:[%s1019 + $0x60] sm:$0xf] %v1068
                  %v1070 = vld [vmem:[%s1018 + $0xa4] sm:$0xf]
                  %1071 = vst [vmem:[%s1019 + $0x64] sm:$0xf] %v1070
                  %v1072 = vld [vmem:[%s1018 + $0xa8] sm:$0xf]
                  %1073 = vst [vmem:[%s1019 + $0x68] sm:$0xf] %v1072
                  %v1074 = vld [vmem:[%s1018 + $0xac] sm:$0xf]
                  %1075 = vst [vmem:[%s1019 + $0x6c] sm:$0xf] %v1074
                  %v1076 = vld [vmem:[%s1018 + $0xb0] sm:$0xf]
                  %1077 = vst [vmem:[%s1019 + $0x70] sm:$0xf] %v1076
                  %v1078 = vld [vmem:[%s1018 + $0xb4] sm:$0xf]
                  %1079 = vst [vmem:[%s1019 + $0x74] sm:$0xf] %v1078
                  %v1080 = vld [vmem:[%s1018 + $0xb8] sm:$0xf]
                  %1081 = vst [vmem:[%s1019 + $0x78] sm:$0xf] %v1080
                  %v1082 = vld [vmem:[%s1018 + $0xbc] sm:$0xf]
                  %1083 = vst [vmem:[%s1019 + $0x7c] sm:$0xf] %v1082
                  %v1084 = vld [vmem:[%s1018 + $0x100] sm:$0xf]
                  %1085 = vst [vmem:[%s1019 + $0x80] sm:$0xf] %v1084
                  %v1086 = vld [vmem:[%s1018 + $0x104] sm:$0xf]
                  %1087 = vst [vmem:[%s1019 + $0x84] sm:$0xf] %v1086
                  %v1088 = vld [vmem:[%s1018 + $0x108] sm:$0xf]
                  %1089 = vst [vmem:[%s1019 + $0x88] sm:$0xf] %v1088
                  %v1090 = vld [vmem:[%s1018 + $0x10c] sm:$0xf]
                  %1091 = vst [vmem:[%s1019 + $0x8c] sm:$0xf] %v1090
                  %v1092 = vld [vmem:[%s1018 + $0x110] sm:$0xf]
                  %1093 = vst [vmem:[%s1019 + $0x90] sm:$0xf] %v1092
                  %v1094 = vld [vmem:[%s1018 + $0x114] sm:$0xf]
                  %1095 = vst [vmem:[%s1019 + $0x94] sm:$0xf] %v1094
                  %v1096 = vld [vmem:[%s1018 + $0x118] sm:$0xf]
                  %1097 = vst [vmem:[%s1019 + $0x98] sm:$0xf] %v1096
                  %v1098 = vld [vmem:[%s1018 + $0x11c] sm:$0xf]
                  %1099 = vst [vmem:[%s1019 + $0x9c] sm:$0xf] %v1098
                  %v1100 = vld [vmem:[%s1018 + $0x120] sm:$0xf]
                  %1101 = vst [vmem:[%s1019 + $0xa0] sm:$0xf] %v1100
                  %v1102 = vld [vmem:[%s1018 + $0x124] sm:$0xf]
                  %1103 = vst [vmem:[%s1019 + $0xa4] sm:$0xf] %v1102
                  %v1104 = vld [vmem:[%s1018 + $0x128] sm:$0xf]
                  %1105 = vst [vmem:[%s1019 + $0xa8] sm:$0xf] %v1104
                  %v1106 = vld [vmem:[%s1018 + $0x12c] sm:$0xf]
                  %1107 = vst [vmem:[%s1019 + $0xac] sm:$0xf] %v1106
                  %v1108 = vld [vmem:[%s1018 + $0x130] sm:$0xf]
                  %1109 = vst [vmem:[%s1019 + $0xb0] sm:$0xf] %v1108
                  %v1110 = vld [vmem:[%s1018 + $0x134] sm:$0xf]
                  %1111 = vst [vmem:[%s1019 + $0xb4] sm:$0xf] %v1110
                  %v1112 = vld [vmem:[%s1018 + $0x138] sm:$0xf]
                  %1113 = vst [vmem:[%s1019 + $0xb8] sm:$0xf] %v1112
                  %v1114 = vld [vmem:[%s1018 + $0x13c] sm:$0xf]
                  %1115 = vst [vmem:[%s1019 + $0xbc] sm:$0xf] %v1114
                  %v1116 = vld [vmem:[%s1018 + $0x180] sm:$0xf]
                  %1117 = vst [vmem:[%s1019 + $0xc0] sm:$0xf] %v1116
                  %v1118 = vld [vmem:[%s1018 + $0x184] sm:$0xf]
                  %1119 = vst [vmem:[%s1019 + $0xc4] sm:$0xf] %v1118
                  %v1120 = vld [vmem:[%s1018 + $0x188] sm:$0xf]
                  %1121 = vst [vmem:[%s1019 + $0xc8] sm:$0xf] %v1120
                  %v1122 = vld [vmem:[%s1018 + $0x18c] sm:$0xf]
                  %1123 = vst [vmem:[%s1019 + $0xcc] sm:$0xf] %v1122
                  %v1124 = vld [vmem:[%s1018 + $0x190] sm:$0xf]
                  %1125 = vst [vmem:[%s1019 + $0xd0] sm:$0xf] %v1124
                  %v1126 = vld [vmem:[%s1018 + $0x194] sm:$0xf]
                  %1127 = vst [vmem:[%s1019 + $0xd4] sm:$0xf] %v1126
                  %v1128 = vld [vmem:[%s1018 + $0x198] sm:$0xf]
                  %1129 = vst [vmem:[%s1019 + $0xd8] sm:$0xf] %v1128
                  %v1130 = vld [vmem:[%s1018 + $0x19c] sm:$0xf]
                  %1131 = vst [vmem:[%s1019 + $0xdc] sm:$0xf] %v1130
                  %v1132 = vld [vmem:[%s1018 + $0x1a0] sm:$0xf]
                  %1133 = vst [vmem:[%s1019 + $0xe0] sm:$0xf] %v1132
                  %v1134 = vld [vmem:[%s1018 + $0x1a4] sm:$0xf]
                  %1135 = vst [vmem:[%s1019 + $0xe4] sm:$0xf] %v1134
                  %v1136 = vld [vmem:[%s1018 + $0x1a8] sm:$0xf]
                  %1137 = vst [vmem:[%s1019 + $0xe8] sm:$0xf] %v1136
                  %v1138 = vld [vmem:[%s1018 + $0x1ac] sm:$0xf]
                  %1139 = vst [vmem:[%s1019 + $0xec] sm:$0xf] %v1138
                  %v1140 = vld [vmem:[%s1018 + $0x1b0] sm:$0xf]
                  %1141 = vst [vmem:[%s1019 + $0xf0] sm:$0xf] %v1140
                  %v1142 = vld [vmem:[%s1018 + $0x1b4] sm:$0xf]
                  %1143 = vst [vmem:[%s1019 + $0xf4] sm:$0xf] %v1142
                  %v1144 = vld [vmem:[%s1018 + $0x1b8] sm:$0xf]
                  %1145 = vst [vmem:[%s1019 + $0xf8] sm:$0xf] %v1144
                  %v1146 = vld [vmem:[%s1018 + $0x1bc] sm:$0xf]
                  %1147 = vst [vmem:[%s1019 + $0xfc] sm:$0xf] %v1146
                $region145: #{tpu_custom_call.1} parent=132 // loop_footer
                  %s1017 = sadd.s32 1, %s1013
                $region146: #{tpu_custom_call.1} parent=132 // loop_footer_branch
                  %1012 = sbr.rel target = $region142
                $region147: #{tpu_custom_call.1} parent=132 // loop_exit
                  _
              $region133: #{tpu_custom_call.1} parent=117 // pred_fallthru
                _
            $region118: #{tpu_custom_call.1} parent=113 // pred_fallthru
              _
            // Predicated region
            $region119: #{tpu_custom_call.1} parent=113 // pred_check
              _
            $region120: #{tpu_custom_call.1} parent=113 // pred_check_branch
              %863 = sbr.rel (0) target = $region122
            $region121: #{tpu_custom_call.1} parent=113 // pred_region
              loop: start=0, step=1, limit=1
              $region123: #{tpu_custom_call.1} parent=121 // loop_pre_header
                _
              $region124: #{tpu_custom_call.1} parent=121 // loop_header
                %s866 = sphi 0, %s870
                %p867 = scmp.ge.s32.totalorder %s866, 1
                %s871 = sphi %s857, %s857
                %s872 = sphi %s852, %s852
              $region125: #{tpu_custom_call.1} parent=121 // loop_header_branch
                %869 = sbr.rel (%p867) target = $region129
              $region126: #{tpu_custom_call.1} parent=121 // loop_body
                %v873 = vld [vmem:[%s871] sm:$0xf]
                %874 = vst [vmem:[%s872] sm:$0xf] %v873
                %v875 = vld [vmem:[%s871 + $0x4] sm:$0xf]
                %876 = vst [vmem:[%s872 + $0x4] sm:$0xf] %v875
                %v877 = vld [vmem:[%s871 + $0x8] sm:$0xf]
                %878 = vst [vmem:[%s872 + $0x8] sm:$0xf] %v877
                %v879 = vld [vmem:[%s871 + $0xc] sm:$0xf]
                %880 = vst [vmem:[%s872 + $0xc] sm:$0xf] %v879
                %v881 = vld [vmem:[%s871 + $0x10] sm:$0xf]
                %882 = vst [vmem:[%s872 + $0x10] sm:$0xf] %v881
                %v883 = vld [vmem:[%s871 + $0x14] sm:$0xf]
                %884 = vst [vmem:[%s872 + $0x14] sm:$0xf] %v883
                %v885 = vld [vmem:[%s871 + $0x18] sm:$0xf]
                %886 = vst [vmem:[%s872 + $0x18] sm:$0xf] %v885
                %v887 = vld [vmem:[%s871 + $0x1c] sm:$0xf]
                %888 = vst [vmem:[%s872 + $0x1c] sm:$0xf] %v887
                %v889 = vld [vmem:[%s871 + $0x20] sm:$0xf]
                %890 = vst [vmem:[%s872 + $0x20] sm:$0xf] %v889
                %v891 = vld [vmem:[%s871 + $0x24] sm:$0xf]
                %892 = vst [vmem:[%s872 + $0x24] sm:$0xf] %v891
                %v893 = vld [vmem:[%s871 + $0x28] sm:$0xf]
                %894 = vst [vmem:[%s872 + $0x28] sm:$0xf] %v893
                %v895 = vld [vmem:[%s871 + $0x2c] sm:$0xf]
                %896 = vst [vmem:[%s872 + $0x2c] sm:$0xf] %v895
                %v897 = vld [vmem:[%s871 + $0x30] sm:$0xf]
                %898 = vst [vmem:[%s872 + $0x30] sm:$0xf] %v897
                %v899 = vld [vmem:[%s871 + $0x34] sm:$0xf]
                %900 = vst [vmem:[%s872 + $0x34] sm:$0xf] %v899
                %v901 = vld [vmem:[%s871 + $0x38] sm:$0xf]
                %902 = vst [vmem:[%s872 + $0x38] sm:$0xf] %v901
                %v903 = vld [vmem:[%s871 + $0x3c] sm:$0xf]
                %904 = vst [vmem:[%s872 + $0x3c] sm:$0xf] %v903
                %v905 = vld [vmem:[%s871 + $0x80] sm:$0xf]
                %906 = vst [vmem:[%s872 + $0x40] sm:$0xf] %v905
                %v907 = vld [vmem:[%s871 + $0x84] sm:$0xf]
                %908 = vst [vmem:[%s872 + $0x44] sm:$0xf] %v907
                %v909 = vld [vmem:[%s871 + $0x88] sm:$0xf]
                %910 = vst [vmem:[%s872 + $0x48] sm:$0xf] %v909
                %v911 = vld [vmem:[%s871 + $0x8c] sm:$0xf]
                %912 = vst [vmem:[%s872 + $0x4c] sm:$0xf] %v911
                %v913 = vld [vmem:[%s871 + $0x90] sm:$0xf]
                %914 = vst [vmem:[%s872 + $0x50] sm:$0xf] %v913
                %v915 = vld [vmem:[%s871 + $0x94] sm:$0xf]
                %916 = vst [vmem:[%s872 + $0x54] sm:$0xf] %v915
                %v917 = vld [vmem:[%s871 + $0x98] sm:$0xf]
                %918 = vst [vmem:[%s872 + $0x58] sm:$0xf] %v917
                %v919 = vld [vmem:[%s871 + $0x9c] sm:$0xf]
                %920 = vst [vmem:[%s872 + $0x5c] sm:$0xf] %v919
                %v921 = vld [vmem:[%s871 + $0xa0] sm:$0xf]
                %922 = vst [vmem:[%s872 + $0x60] sm:$0xf] %v921
                %v923 = vld [vmem:[%s871 + $0xa4] sm:$0xf]
                %924 = vst [vmem:[%s872 + $0x64] sm:$0xf] %v923
                %v925 = vld [vmem:[%s871 + $0xa8] sm:$0xf]
                %926 = vst [vmem:[%s872 + $0x68] sm:$0xf] %v925
                %v927 = vld [vmem:[%s871 + $0xac] sm:$0xf]
                %928 = vst [vmem:[%s872 + $0x6c] sm:$0xf] %v927
                %v929 = vld [vmem:[%s871 + $0xb0] sm:$0xf]
                %930 = vst [vmem:[%s872 + $0x70] sm:$0xf] %v929
                %v931 = vld [vmem:[%s871 + $0xb4] sm:$0xf]
                %932 = vst [vmem:[%s872 + $0x74] sm:$0xf] %v931
                %v933 = vld [vmem:[%s871 + $0xb8] sm:$0xf]
                %934 = vst [vmem:[%s872 + $0x78] sm:$0xf] %v933
                %v935 = vld [vmem:[%s871 + $0xbc] sm:$0xf]
                %936 = vst [vmem:[%s872 + $0x7c] sm:$0xf] %v935
                %v937 = vld [vmem:[%s871 + $0x100] sm:$0xf]
                %938 = vst [vmem:[%s872 + $0x80] sm:$0xf] %v937
                %v939 = vld [vmem:[%s871 + $0x104] sm:$0xf]
                %940 = vst [vmem:[%s872 + $0x84] sm:$0xf] %v939
                %v941 = vld [vmem:[%s871 + $0x108] sm:$0xf]
                %942 = vst [vmem:[%s872 + $0x88] sm:$0xf] %v941
                %v943 = vld [vmem:[%s871 + $0x10c] sm:$0xf]
                %944 = vst [vmem:[%s872 + $0x8c] sm:$0xf] %v943
                %v945 = vld [vmem:[%s871 + $0x110] sm:$0xf]
                %946 = vst [vmem:[%s872 + $0x90] sm:$0xf] %v945
                %v947 = vld [vmem:[%s871 + $0x114] sm:$0xf]
                %948 = vst [vmem:[%s872 + $0x94] sm:$0xf] %v947
                %v949 = vld [vmem:[%s871 + $0x118] sm:$0xf]
                %950 = vst [vmem:[%s872 + $0x98] sm:$0xf] %v949
                %v951 = vld [vmem:[%s871 + $0x11c] sm:$0xf]
                %952 = vst [vmem:[%s872 + $0x9c] sm:$0xf] %v951
                %v953 = vld [vmem:[%s871 + $0x120] sm:$0xf]
                %954 = vst [vmem:[%s872 + $0xa0] sm:$0xf] %v953
                %v955 = vld [vmem:[%s871 + $0x124] sm:$0xf]
                %956 = vst [vmem:[%s872 + $0xa4] sm:$0xf] %v955
                %v957 = vld [vmem:[%s871 + $0x128] sm:$0xf]
                %958 = vst [vmem:[%s872 + $0xa8] sm:$0xf] %v957
                %v959 = vld [vmem:[%s871 + $0x12c] sm:$0xf]
                %960 = vst [vmem:[%s872 + $0xac] sm:$0xf] %v959
                %v961 = vld [vmem:[%s871 + $0x130] sm:$0xf]
                %962 = vst [vmem:[%s872 + $0xb0] sm:$0xf] %v961
                %v963 = vld [vmem:[%s871 + $0x134] sm:$0xf]
                %964 = vst [vmem:[%s872 + $0xb4] sm:$0xf] %v963
                %v965 = vld [vmem:[%s871 + $0x138] sm:$0xf]
                %966 = vst [vmem:[%s872 + $0xb8] sm:$0xf] %v965
                %v967 = vld [vmem:[%s871 + $0x13c] sm:$0xf]
                %968 = vst [vmem:[%s872 + $0xbc] sm:$0xf] %v967
                %v969 = vld [vmem:[%s871 + $0x180] sm:$0xf]
                %970 = vst [vmem:[%s872 + $0xc0] sm:$0xf] %v969
                %v971 = vld [vmem:[%s871 + $0x184] sm:$0xf]
                %972 = vst [vmem:[%s872 + $0xc4] sm:$0xf] %v971
                %v973 = vld [vmem:[%s871 + $0x188] sm:$0xf]
                %974 = vst [vmem:[%s872 + $0xc8] sm:$0xf] %v973
                %v975 = vld [vmem:[%s871 + $0x18c] sm:$0xf]
                %976 = vst [vmem:[%s872 + $0xcc] sm:$0xf] %v975
                %v977 = vld [vmem:[%s871 + $0x190] sm:$0xf]
                %978 = vst [vmem:[%s872 + $0xd0] sm:$0xf] %v977
                %v979 = vld [vmem:[%s871 + $0x194] sm:$0xf]
                %980 = vst [vmem:[%s872 + $0xd4] sm:$0xf] %v979
                %v981 = vld [vmem:[%s871 + $0x198] sm:$0xf]
                %982 = vst [vmem:[%s872 + $0xd8] sm:$0xf] %v981
                %v983 = vld [vmem:[%s871 + $0x19c] sm:$0xf]
                %984 = vst [vmem:[%s872 + $0xdc] sm:$0xf] %v983
                %v985 = vld [vmem:[%s871 + $0x1a0] sm:$0xf]
                %986 = vst [vmem:[%s872 + $0xe0] sm:$0xf] %v985
                %v987 = vld [vmem:[%s871 + $0x1a4] sm:$0xf]
                %988 = vst [vmem:[%s872 + $0xe4] sm:$0xf] %v987
                %v989 = vld [vmem:[%s871 + $0x1a8] sm:$0xf]
                %990 = vst [vmem:[%s872 + $0xe8] sm:$0xf] %v989
                %v991 = vld [vmem:[%s871 + $0x1ac] sm:$0xf]
                %992 = vst [vmem:[%s872 + $0xec] sm:$0xf] %v991
                %v993 = vld [vmem:[%s871 + $0x1b0] sm:$0xf]
                %994 = vst [vmem:[%s872 + $0xf0] sm:$0xf] %v993
                %v995 = vld [vmem:[%s871 + $0x1b4] sm:$0xf]
                %996 = vst [vmem:[%s872 + $0xf4] sm:$0xf] %v995
                %v997 = vld [vmem:[%s871 + $0x1b8] sm:$0xf]
                %998 = vst [vmem:[%s872 + $0xf8] sm:$0xf] %v997
                %v999 = vld [vmem:[%s871 + $0x1bc] sm:$0xf]
                %1000 = vst [vmem:[%s872 + $0xfc] sm:$0xf] %v999
              $region127: #{tpu_custom_call.1} parent=121 // loop_footer
                %s870 = sadd.s32 1, %s866
              $region128: #{tpu_custom_call.1} parent=121 // loop_footer_branch
                %865 = sbr.rel target = $region124
              $region129: #{tpu_custom_call.1} parent=121 // loop_exit
                _
            $region122: #{tpu_custom_call.1} parent=113 // pred_fallthru
              _
          $region114: #{tpu_custom_call.1} parent=109 // pred_fallthru
            _
          %1148 = vnop
        $region110: #{tpu_custom_call.1} parent=23 // pred_fallthru
          _
        // Predicated region
        $region148: #{tpu_custom_call.1} parent=23 // pred_check
          %p1149 = pneg %p139
        $region149: #{tpu_custom_call.1} parent=23 // pred_check_branch
          %1151 = sbr.rel (%p1149) target = $region151
        $region150: #{tpu_custom_call.1} parent=23 // pred_region
          %s1152 = sand.u32 %s129, 1
          %s1153 = sand.u32 %s129, 1
          %s1154 = smul.addr %s1153, 64
          %s1155 = scalar_lea.vmem [#allocation9], %s1154
          %s1156 = smul.u32 16, %s20
          %s1157 = smul.addr %s1156, 2
          %s1158 = sadd.s32 %s21, %s1157
          %s1159 = smul.addr %s19, 64
          %s1160 = sadd.s32 %s1158, %s1159
          %s1161 = smul.addr %s1160, 4
          %s1162 = scalar_lea.vmem %s3, %s1161
          // Predicated region
          $region152: #{tpu_custom_call.1} parent=150 // pred_check
            _
          $region153: #{tpu_custom_call.1} parent=150 // pred_check_branch
            %1164 = sbr.rel (0) target = $region155
          $region154: #{tpu_custom_call.1} parent=150 // pred_region
            // Predicated region
            $region156: #{tpu_custom_call.1} parent=154 // pred_check
              _
            $region157: #{tpu_custom_call.1} parent=154 // pred_check_branch
              %1166 = sbr.rel target = $region159
            $region158: #{tpu_custom_call.1} parent=154 // pred_region
              // Predicated region
              $region171: #{tpu_custom_call.1} parent=158 // pred_check
                _
              $region172: #{tpu_custom_call.1} parent=158 // pred_check_branch
                %1211 = sbr.rel (0) target = $region174
              $region173: #{tpu_custom_call.1} parent=158 // pred_region
                loop: start=0, step=1, limit=1
                $region175: #{tpu_custom_call.1} parent=173 // loop_pre_header
                  _
                $region176: #{tpu_custom_call.1} parent=173 // loop_header
                  %s1213 = sphi 0, %s1217
                  %p1214 = scmp.ge.s32.totalorder %s1213, 1
                  %s1218 = sphi %s1162, %s1162
                  %s1219 = sphi %s1155, %s1155
                $region177: #{tpu_custom_call.1} parent=173 // loop_header_branch
                  %1216 = sbr.rel (%p1214) target = $region181
                $region178: #{tpu_custom_call.1} parent=173 // loop_body
                  _
                $region179: #{tpu_custom_call.1} parent=173 // loop_footer
                  %s1217 = sadd.s32 1, %s1213
                $region180: #{tpu_custom_call.1} parent=173 // loop_footer_branch
                  %1212 = sbr.rel target = $region176
                $region181: #{tpu_custom_call.1} parent=173 // loop_exit
                  _
                loop: start=0, step=1, limit=1
                $region182: #{tpu_custom_call.1} parent=173 // loop_pre_header
                  _
                $region183: #{tpu_custom_call.1} parent=173 // loop_header
                  %s1222 = sphi 0, %s1226
                  %p1223 = scmp.ge.s32.totalorder %s1222, 1
                  %s1227 = sphi %s1162, %s1162
                  %s1228 = sphi %s1155, %s1155
                $region184: #{tpu_custom_call.1} parent=173 // loop_header_branch
                  %1225 = sbr.rel (%p1223) target = $region188
                $region185: #{tpu_custom_call.1} parent=173 // loop_body
                  %v1229 = vld [vmem:[%s1227] sm:$0xf]
                  %1230 = vst [vmem:[%s1228] sm:$0xf] %v1229
                  %v1231 = vld [vmem:[%s1227 + $0x8] sm:$0xf]
                  %1232 = vst [vmem:[%s1228 + $0x4] sm:$0xf] %v1231
                  %v1233 = vld [vmem:[%s1227 + $0x10] sm:$0xf]
                  %1234 = vst [vmem:[%s1228 + $0x8] sm:$0xf] %v1233
                  %v1235 = vld [vmem:[%s1227 + $0x18] sm:$0xf]
                  %1236 = vst [vmem:[%s1228 + $0xc] sm:$0xf] %v1235
                  %v1237 = vld [vmem:[%s1227 + $0x20] sm:$0xf]
                  %1238 = vst [vmem:[%s1228 + $0x10] sm:$0xf] %v1237
                  %v1239 = vld [vmem:[%s1227 + $0x28] sm:$0xf]
                  %1240 = vst [vmem:[%s1228 + $0x14] sm:$0xf] %v1239
                  %v1241 = vld [vmem:[%s1227 + $0x30] sm:$0xf]
                  %1242 = vst [vmem:[%s1228 + $0x18] sm:$0xf] %v1241
                  %v1243 = vld [vmem:[%s1227 + $0x38] sm:$0xf]
                  %1244 = vst [vmem:[%s1228 + $0x1c] sm:$0xf] %v1243
                  %v1245 = vld [vmem:[%s1227 + $0x40] sm:$0xf]
                  %1246 = vst [vmem:[%s1228 + $0x20] sm:$0xf] %v1245
                  %v1247 = vld [vmem:[%s1227 + $0x48] sm:$0xf]
                  %1248 = vst [vmem:[%s1228 + $0x24] sm:$0xf] %v1247
                  %v1249 = vld [vmem:[%s1227 + $0x50] sm:$0xf]
                  %1250 = vst [vmem:[%s1228 + $0x28] sm:$0xf] %v1249
                  %v1251 = vld [vmem:[%s1227 + $0x58] sm:$0xf]
                  %1252 = vst [vmem:[%s1228 + $0x2c] sm:$0xf] %v1251
                  %v1253 = vld [vmem:[%s1227 + $0x60] sm:$0xf]
                  %1254 = vst [vmem:[%s1228 + $0x30] sm:$0xf] %v1253
                  %v1255 = vld [vmem:[%s1227 + $0x68] sm:$0xf]
                  %1256 = vst [vmem:[%s1228 + $0x34] sm:$0xf] %v1255
                  %v1257 = vld [vmem:[%s1227 + $0x70] sm:$0xf]
                  %1258 = vst [vmem:[%s1228 + $0x38] sm:$0xf] %v1257
                  %v1259 = vld [vmem:[%s1227 + $0x78] sm:$0xf]
                  %1260 = vst [vmem:[%s1228 + $0x3c] sm:$0xf] %v1259
                $region186: #{tpu_custom_call.1} parent=173 // loop_footer
                  %s1226 = sadd.s32 1, %s1222
                $region187: #{tpu_custom_call.1} parent=173 // loop_footer_branch
                  %1221 = sbr.rel target = $region183
                $region188: #{tpu_custom_call.1} parent=173 // loop_exit
                  _
              $region174: #{tpu_custom_call.1} parent=158 // pred_fallthru
                _
            $region159: #{tpu_custom_call.1} parent=154 // pred_fallthru
              _
            // Predicated region
            $region160: #{tpu_custom_call.1} parent=154 // pred_check
              _
            $region161: #{tpu_custom_call.1} parent=154 // pred_check_branch
              %1168 = sbr.rel (0) target = $region163
            $region162: #{tpu_custom_call.1} parent=154 // pred_region
              loop: start=0, step=1, limit=1
              $region164: #{tpu_custom_call.1} parent=162 // loop_pre_header
                _
              $region165: #{tpu_custom_call.1} parent=162 // loop_header
                %s1171 = sphi 0, %s1175
                %p1172 = scmp.ge.s32.totalorder %s1171, 1
                %s1176 = sphi %s1162, %s1162
                %s1177 = sphi %s1155, %s1155
              $region166: #{tpu_custom_call.1} parent=162 // loop_header_branch
                %1174 = sbr.rel (%p1172) target = $region170
              $region167: #{tpu_custom_call.1} parent=162 // loop_body
                %v1178 = vld [vmem:[%s1176] sm:$0xf]
                %1179 = vst [vmem:[%s1177] sm:$0xf] %v1178
                %v1180 = vld [vmem:[%s1176 + $0x8] sm:$0xf]
                %1181 = vst [vmem:[%s1177 + $0x4] sm:$0xf] %v1180
                %v1182 = vld [vmem:[%s1176 + $0x10] sm:$0xf]
                %1183 = vst [vmem:[%s1177 + $0x8] sm:$0xf] %v1182
                %v1184 = vld [vmem:[%s1176 + $0x18] sm:$0xf]
                %1185 = vst [vmem:[%s1177 + $0xc] sm:$0xf] %v1184
                %v1186 = vld [vmem:[%s1176 + $0x20] sm:$0xf]
                %1187 = vst [vmem:[%s1177 + $0x10] sm:$0xf] %v1186
                %v1188 = vld [vmem:[%s1176 + $0x28] sm:$0xf]
                %1189 = vst [vmem:[%s1177 + $0x14] sm:$0xf] %v1188
                %v1190 = vld [vmem:[%s1176 + $0x30] sm:$0xf]
                %1191 = vst [vmem:[%s1177 + $0x18] sm:$0xf] %v1190
                %v1192 = vld [vmem:[%s1176 + $0x38] sm:$0xf]
                %1193 = vst [vmem:[%s1177 + $0x1c] sm:$0xf] %v1192
                %v1194 = vld [vmem:[%s1176 + $0x40] sm:$0xf]
                %1195 = vst [vmem:[%s1177 + $0x20] sm:$0xf] %v1194
                %v1196 = vld [vmem:[%s1176 + $0x48] sm:$0xf]
                %1197 = vst [vmem:[%s1177 + $0x24] sm:$0xf] %v1196
                %v1198 = vld [vmem:[%s1176 + $0x50] sm:$0xf]
                %1199 = vst [vmem:[%s1177 + $0x28] sm:$0xf] %v1198
                %v1200 = vld [vmem:[%s1176 + $0x58] sm:$0xf]
                %1201 = vst [vmem:[%s1177 + $0x2c] sm:$0xf] %v1200
                %v1202 = vld [vmem:[%s1176 + $0x60] sm:$0xf]
                %1203 = vst [vmem:[%s1177 + $0x30] sm:$0xf] %v1202
                %v1204 = vld [vmem:[%s1176 + $0x68] sm:$0xf]
                %1205 = vst [vmem:[%s1177 + $0x34] sm:$0xf] %v1204
                %v1206 = vld [vmem:[%s1176 + $0x70] sm:$0xf]
                %1207 = vst [vmem:[%s1177 + $0x38] sm:$0xf] %v1206
                %v1208 = vld [vmem:[%s1176 + $0x78] sm:$0xf]
                %1209 = vst [vmem:[%s1177 + $0x3c] sm:$0xf] %v1208
              $region168: #{tpu_custom_call.1} parent=162 // loop_footer
                %s1175 = sadd.s32 1, %s1171
              $region169: #{tpu_custom_call.1} parent=162 // loop_footer_branch
                %1170 = sbr.rel target = $region165
              $region170: #{tpu_custom_call.1} parent=162 // loop_exit
                _
            $region163: #{tpu_custom_call.1} parent=154 // pred_fallthru
              _
          $region155: #{tpu_custom_call.1} parent=150 // pred_fallthru
            _
          %1261 = vnop
        $region151: #{tpu_custom_call.1} parent=23 // pred_fallthru
          _
      $region24: #{tpu_custom_call.1} parent=5 // pred_fallthru
        _
      %p1262 = scmp.le.s32.totalorder 1, %s12
      %p1263 = scmp.lt.s32.totalorder %s12, 9
      %p1264 = pnand %p1262, %p1263
      %p1265 = pneg %p1264
      // Predicated region
      $region189: #{tpu_custom_call.1} parent=5 // pred_check
        _
      $region190: #{tpu_custom_call.1} parent=5 // pred_check_branch
        %1267 = sbr.rel (%p1264) target = $region192
      $region191: #{tpu_custom_call.1} parent=5 // pred_region
        %s1268 = ssub.s32 %s12, 1
        %s1269 = sand.u32 %s46, 1
        %s1270 = sand.u32 %s46, 1
        %s1271 = smul.addr %s1270, 256
        %s1272 = scalar_lea.vmem [#allocation6], %s1271
        // Predicated region
        $region193: #{tpu_custom_call.1} parent=191 // pred_check
          %p1273 = pneg %p59
        $region194: #{tpu_custom_call.1} parent=191 // pred_check_branch
          %1275 = sbr.rel (%p1273) target = $region196
        $region195: #{tpu_custom_call.1} parent=191 // pred_region
          _
        $region196: #{tpu_custom_call.1} parent=191 // pred_fallthru
          _
        %s1276 = sand.u32 %s74, 1
        %s1277 = sand.u32 %s74, 1
        %s1278 = smul.addr %s1277, 256
        %s1279 = scalar_lea.vmem [#allocation7], %s1278
        // Predicated region
        $region197: #{tpu_custom_call.1} parent=191 // pred_check
          %p1280 = pneg %p87
        $region198: #{tpu_custom_call.1} parent=191 // pred_check_branch
          %1282 = sbr.rel (%p1280) target = $region200
        $region199: #{tpu_custom_call.1} parent=191 // pred_region
          _
        $region200: #{tpu_custom_call.1} parent=191 // pred_fallthru
          _
        %s1283 = sand.u32 %s102, 1
        %s1284 = sand.u32 %s102, 1
        %s1285 = smul.addr %s1284, 256
        %s1286 = scalar_lea.vmem [#allocation8], %s1285
        // Predicated region
        $region201: #{tpu_custom_call.1} parent=191 // pred_check
          %p1287 = pneg %p115
        $region202: #{tpu_custom_call.1} parent=191 // pred_check_branch
          %1289 = sbr.rel (%p1287) target = $region204
        $region203: #{tpu_custom_call.1} parent=191 // pred_region
          _
        $region204: #{tpu_custom_call.1} parent=191 // pred_fallthru
          _
        %s1290 = sand.u32 %s132, 1
        %s1291 = sand.u32 %s132, 1
        %s1292 = smul.addr %s1291, 64
        %s1293 = scalar_lea.vmem [#allocation9], %s1292
        // Predicated region
        $region205: #{tpu_custom_call.1} parent=191 // pred_check
          %p1294 = pneg %p145
        $region206: #{tpu_custom_call.1} parent=191 // pred_check_branch
          %1296 = sbr.rel (%p1294) target = $region208
        $region207: #{tpu_custom_call.1} parent=191 // pred_region
          _
        $region208: #{tpu_custom_call.1} parent=191 // pred_fallthru
          _
        %s1297 = sand.u32 %s46, 1
        %s1298 = sand.u32 %s46, 1
        %s1299 = smul.addr %s1298, 256
        %s1300 = scalar_lea.vmem [#allocation6], %s1299
        %p1301 = pneg %p59
        %p1302 = pneg %p56
        %s1303 = sand.u32 %s74, 1
        %s1304 = sand.u32 %s74, 1
        %s1305 = smul.addr %s1304, 256
        %s1306 = scalar_lea.vmem [#allocation7], %s1305
        %p1307 = pneg %p87
        %p1308 = pneg %p84
        %s1309 = sand.u32 %s102, 1
        %s1310 = sand.u32 %s102, 1
        %s1311 = smul.addr %s1310, 256
        %s1312 = scalar_lea.vmem [#allocation8], %s1311
        %p1313 = pneg %p115
        %p1314 = pneg %p112
        %s1315 = sand.u32 %s132, 1
        %s1316 = sand.u32 %s132, 1
        %s1317 = smul.addr %s1316, 64
        %s1318 = scalar_lea.vmem [#allocation9], %s1317
        %p1319 = pneg %p145
        %p1320 = pneg %p142
        %p1321 = pneg %p166
        %p1322 = pneg %p163
        %p1323 = pneg %p187
        %p1324 = pneg %p184
        %p1325 = pneg %p215
        %p1326 = pneg %p212
        %s1327 = smul.u32 16, %s23
        %p1328 = scmp.lt.s32.totalorder %s22, 1
        %s1329 = scalar_select %p1328, %s22, 1
        %p1330 = scmp.lt.s32.totalorder %s1327, 31
        %s1331 = scalar_select %p1330, %s1327, 31
        %s1332 = smul.addr %s1329, 32
        %s1333 = sadd.s32 %s1331, %s1332
        %s1334 = smul.addr %s1333, 8
        %s1335 = scalar_lea.vmem %s6, %s1334
        %s1336 = smul.u32 16, %s23
        %s1337 = smul.u32 16, %s24
        %s1338 = smul.u32 16, %s24
        %s1339 = smul.u32 16, %s23
        %s1340 = smul.u32 16, %s23
        %p1341 = scmp.lt.s32.totalorder %s22, 1
        %s1342 = scalar_select %p1341, %s22, 1
        %p1343 = scmp.lt.s32.totalorder %s1340, 31
        %s1344 = scalar_select %p1343, %s1340, 31
        %s1345 = smul.addr %s1342, 32
        %s1346 = sadd.s32 %s1344, %s1345
        %s1347 = smul.addr %s1346, 8
        %s1348 = scalar_lea.vmem %s6, %s1347
        %s1349 = smul.u32 16, %s23
        %p1351 = scmp.eq.s32.totalorder %s24, 0
        // Predicated region
        $region209: #{tpu_custom_call.1} parent=191 // pred_check
          %p1352 = pneg %p1351
        $region210: #{tpu_custom_call.1} parent=191 // pred_check_branch
          %1354 = sbr.rel (%p1352) target = $region212
        $region211: #{tpu_custom_call.1} parent=191 // pred_region
          %vm1355 = vcmask 7168
          %1356 = vst.msk [vmem:[#allocation2] sm:$0xff] %vm1355, -inf
          %1357 = vst.msk [vmem:[#allocation2 + $0x8] sm:$0xff] %vm1355, -inf
          %1358 = vst.msk [vmem:[#allocation2 + $0x10] sm:$0xff] %vm1355, -inf
          %1359 = vst.msk [vmem:[#allocation2 + $0x18] sm:$0xff] %vm1355, -inf
          %1360 = vst.msk [vmem:[#allocation2 + $0x20] sm:$0xff] %vm1355, -inf
          %1361 = vst.msk [vmem:[#allocation2 + $0x28] sm:$0xff] %vm1355, -inf
          %1362 = vst.msk [vmem:[#allocation2 + $0x30] sm:$0xff] %vm1355, -inf
          %1363 = vst.msk [vmem:[#allocation2 + $0x38] sm:$0xff] %vm1355, -inf
          %1364 = vst.msk [vmem:[#allocation2 + $0x40] sm:$0xff] %vm1355, -inf
          %1365 = vst.msk [vmem:[#allocation2 + $0x48] sm:$0xff] %vm1355, -inf
          %1366 = vst.msk [vmem:[#allocation2 + $0x50] sm:$0xff] %vm1355, -inf
          %1367 = vst.msk [vmem:[#allocation2 + $0x58] sm:$0xff] %vm1355, -inf
          %1368 = vst.msk [vmem:[#allocation2 + $0x60] sm:$0xff] %vm1355, -inf
          %1369 = vst.msk [vmem:[#allocation2 + $0x68] sm:$0xff] %vm1355, -inf
          %1370 = vst.msk [vmem:[#allocation2 + $0x70] sm:$0xff] %vm1355, -inf
          %1371 = vst.msk [vmem:[#allocation2 + $0x78] sm:$0xff] %vm1355, -inf
          %1372 = vst.msk [vmem:[#allocation2 + $0x80] sm:$0xff] %vm1355, -inf
          %1373 = vst.msk [vmem:[#allocation2 + $0x88] sm:$0xff] %vm1355, -inf
          %1374 = vst.msk [vmem:[#allocation2 + $0x90] sm:$0xff] %vm1355, -inf
          %1375 = vst.msk [vmem:[#allocation2 + $0x98] sm:$0xff] %vm1355, -inf
          %1376 = vst.msk [vmem:[#allocation2 + $0xa0] sm:$0xff] %vm1355, -inf
          %1377 = vst.msk [vmem:[#allocation2 + $0xa8] sm:$0xff] %vm1355, -inf
          %1378 = vst.msk [vmem:[#allocation2 + $0xb0] sm:$0xff] %vm1355, -inf
          %1379 = vst.msk [vmem:[#allocation2 + $0xb8] sm:$0xff] %vm1355, -inf
          %1380 = vst.msk [vmem:[#allocation2 + $0xc0] sm:$0xff] %vm1355, -inf
          %1381 = vst.msk [vmem:[#allocation2 + $0xc8] sm:$0xff] %vm1355, -inf
          %1382 = vst.msk [vmem:[#allocation2 + $0xd0] sm:$0xff] %vm1355, -inf
          %1383 = vst.msk [vmem:[#allocation2 + $0xd8] sm:$0xff] %vm1355, -inf
          %1384 = vst.msk [vmem:[#allocation2 + $0xe0] sm:$0xff] %vm1355, -inf
          %1385 = vst.msk [vmem:[#allocation2 + $0xe8] sm:$0xff] %vm1355, -inf
          %1386 = vst.msk [vmem:[#allocation2 + $0xf0] sm:$0xff] %vm1355, -inf
          %1387 = vst.msk [vmem:[#allocation2 + $0xf8] sm:$0xff] %vm1355, -inf
          %1388 = vst.msk [vmem:[#allocation2 + $0x100] sm:$0xff] %vm1355, -inf
          %1389 = vst.msk [vmem:[#allocation2 + $0x108] sm:$0xff] %vm1355, -inf
          %1390 = vst.msk [vmem:[#allocation2 + $0x110] sm:$0xff] %vm1355, -inf
          %1391 = vst.msk [vmem:[#allocation2 + $0x118] sm:$0xff] %vm1355, -inf
          %1392 = vst.msk [vmem:[#allocation2 + $0x120] sm:$0xff] %vm1355, -inf
          %1393 = vst.msk [vmem:[#allocation2 + $0x128] sm:$0xff] %vm1355, -inf
          %1394 = vst.msk [vmem:[#allocation2 + $0x130] sm:$0xff] %vm1355, -inf
          %1395 = vst.msk [vmem:[#allocation2 + $0x138] sm:$0xff] %vm1355, -inf
          %1396 = vst.msk [vmem:[#allocation2 + $0x140] sm:$0xff] %vm1355, -inf
          %1397 = vst.msk [vmem:[#allocation2 + $0x148] sm:$0xff] %vm1355, -inf
          %1398 = vst.msk [vmem:[#allocation2 + $0x150] sm:$0xff] %vm1355, -inf
          %1399 = vst.msk [vmem:[#allocation2 + $0x158] sm:$0xff] %vm1355, -inf
          %1400 = vst.msk [vmem:[#allocation2 + $0x160] sm:$0xff] %vm1355, -inf
          %1401 = vst.msk [vmem:[#allocation2 + $0x168] sm:$0xff] %vm1355, -inf
          %1402 = vst.msk [vmem:[#allocation2 + $0x170] sm:$0xff] %vm1355, -inf
          %1403 = vst.msk [vmem:[#allocation2 + $0x178] sm:$0xff] %vm1355, -inf
          %1404 = vst.msk [vmem:[#allocation2 + $0x180] sm:$0xff] %vm1355, -inf
          %1405 = vst.msk [vmem:[#allocation2 + $0x188] sm:$0xff] %vm1355, -inf
          %1406 = vst.msk [vmem:[#allocation2 + $0x190] sm:$0xff] %vm1355, -inf
          %1407 = vst.msk [vmem:[#allocation2 + $0x198] sm:$0xff] %vm1355, -inf
          %1408 = vst.msk [vmem:[#allocation2 + $0x1a0] sm:$0xff] %vm1355, -inf
          %1409 = vst.msk [vmem:[#allocation2 + $0x1a8] sm:$0xff] %vm1355, -inf
          %1410 = vst.msk [vmem:[#allocation2 + $0x1b0] sm:$0xff] %vm1355, -inf
          %1411 = vst.msk [vmem:[#allocation2 + $0x1b8] sm:$0xff] %vm1355, -inf
          %1412 = vst.msk [vmem:[#allocation2 + $0x1c0] sm:$0xff] %vm1355, -inf
          %1413 = vst.msk [vmem:[#allocation2 + $0x1c8] sm:$0xff] %vm1355, -inf
          %1414 = vst.msk [vmem:[#allocation2 + $0x1d0] sm:$0xff] %vm1355, -inf
          %1415 = vst.msk [vmem:[#allocation2 + $0x1d8] sm:$0xff] %vm1355, -inf
          %1416 = vst.msk [vmem:[#allocation2 + $0x1e0] sm:$0xff] %vm1355, -inf
          %1417 = vst.msk [vmem:[#allocation2 + $0x1e8] sm:$0xff] %vm1355, -inf
          %1418 = vst.msk [vmem:[#allocation2 + $0x1f0] sm:$0xff] %vm1355, -inf
          %1419 = vst.msk [vmem:[#allocation2 + $0x1f8] sm:$0xff] %vm1355, -inf
          %1420 = vst.msk [vmem:[#allocation3] sm:$0xff] %vm1355, 0.0
          %1421 = vst.msk [vmem:[#allocation3 + $0x8] sm:$0xff] %vm1355, 0.0
          %1422 = vst.msk [vmem:[#allocation3 + $0x10] sm:$0xff] %vm1355, 0.0
          %1423 = vst.msk [vmem:[#allocation3 + $0x18] sm:$0xff] %vm1355, 0.0
          %1424 = vst.msk [vmem:[#allocation3 + $0x20] sm:$0xff] %vm1355, 0.0
          %1425 = vst.msk [vmem:[#allocation3 + $0x28] sm:$0xff] %vm1355, 0.0
          %1426 = vst.msk [vmem:[#allocation3 + $0x30] sm:$0xff] %vm1355, 0.0
          %1427 = vst.msk [vmem:[#allocation3 + $0x38] sm:$0xff] %vm1355, 0.0
          %1428 = vst.msk [vmem:[#allocation3 + $0x40] sm:$0xff] %vm1355, 0.0
          %1429 = vst.msk [vmem:[#allocation3 + $0x48] sm:$0xff] %vm1355, 0.0
          %1430 = vst.msk [vmem:[#allocation3 + $0x50] sm:$0xff] %vm1355, 0.0
          %1431 = vst.msk [vmem:[#allocation3 + $0x58] sm:$0xff] %vm1355, 0.0
          %1432 = vst.msk [vmem:[#allocation3 + $0x60] sm:$0xff] %vm1355, 0.0
          %1433 = vst.msk [vmem:[#allocation3 + $0x68] sm:$0xff] %vm1355, 0.0
          %1434 = vst.msk [vmem:[#allocation3 + $0x70] sm:$0xff] %vm1355, 0.0
          %1435 = vst.msk [vmem:[#allocation3 + $0x78] sm:$0xff] %vm1355, 0.0
          %1436 = vst.msk [vmem:[#allocation3 + $0x80] sm:$0xff] %vm1355, 0.0
          %1437 = vst.msk [vmem:[#allocation3 + $0x88] sm:$0xff] %vm1355, 0.0
          %1438 = vst.msk [vmem:[#allocation3 + $0x90] sm:$0xff] %vm1355, 0.0
          %1439 = vst.msk [vmem:[#allocation3 + $0x98] sm:$0xff] %vm1355, 0.0
          %1440 = vst.msk [vmem:[#allocation3 + $0xa0] sm:$0xff] %vm1355, 0.0
          %1441 = vst.msk [vmem:[#allocation3 + $0xa8] sm:$0xff] %vm1355, 0.0
          %1442 = vst.msk [vmem:[#allocation3 + $0xb0] sm:$0xff] %vm1355, 0.0
          %1443 = vst.msk [vmem:[#allocation3 + $0xb8] sm:$0xff] %vm1355, 0.0
          %1444 = vst.msk [vmem:[#allocation3 + $0xc0] sm:$0xff] %vm1355, 0.0
          %1445 = vst.msk [vmem:[#allocation3 + $0xc8] sm:$0xff] %vm1355, 0.0
          %1446 = vst.msk [vmem:[#allocation3 + $0xd0] sm:$0xff] %vm1355, 0.0
          %1447 = vst.msk [vmem:[#allocation3 + $0xd8] sm:$0xff] %vm1355, 0.0
          %1448 = vst.msk [vmem:[#allocation3 + $0xe0] sm:$0xff] %vm1355, 0.0
          %1449 = vst.msk [vmem:[#allocation3 + $0xe8] sm:$0xff] %vm1355, 0.0
          %1450 = vst.msk [vmem:[#allocation3 + $0xf0] sm:$0xff] %vm1355, 0.0
          %1451 = vst.msk [vmem:[#allocation3 + $0xf8] sm:$0xff] %vm1355, 0.0
          %1452 = vst.msk [vmem:[#allocation3 + $0x100] sm:$0xff] %vm1355, 0.0
          %1453 = vst.msk [vmem:[#allocation3 + $0x108] sm:$0xff] %vm1355, 0.0
          %1454 = vst.msk [vmem:[#allocation3 + $0x110] sm:$0xff] %vm1355, 0.0
          %1455 = vst.msk [vmem:[#allocation3 + $0x118] sm:$0xff] %vm1355, 0.0
          %1456 = vst.msk [vmem:[#allocation3 + $0x120] sm:$0xff] %vm1355, 0.0
          %1457 = vst.msk [vmem:[#allocation3 + $0x128] sm:$0xff] %vm1355, 0.0
          %1458 = vst.msk [vmem:[#allocation3 + $0x130] sm:$0xff] %vm1355, 0.0
          %1459 = vst.msk [vmem:[#allocation3 + $0x138] sm:$0xff] %vm1355, 0.0
          %1460 = vst.msk [vmem:[#allocation3 + $0x140] sm:$0xff] %vm1355, 0.0
          %1461 = vst.msk [vmem:[#allocation3 + $0x148] sm:$0xff] %vm1355, 0.0
          %1462 = vst.msk [vmem:[#allocation3 + $0x150] sm:$0xff] %vm1355, 0.0
          %1463 = vst.msk [vmem:[#allocation3 + $0x158] sm:$0xff] %vm1355, 0.0
          %1464 = vst.msk [vmem:[#allocation3 + $0x160] sm:$0xff] %vm1355, 0.0
          %1465 = vst.msk [vmem:[#allocation3 + $0x168] sm:$0xff] %vm1355, 0.0
          %1466 = vst.msk [vmem:[#allocation3 + $0x170] sm:$0xff] %vm1355, 0.0
          %1467 = vst.msk [vmem:[#allocation3 + $0x178] sm:$0xff] %vm1355, 0.0
          %1468 = vst.msk [vmem:[#allocation3 + $0x180] sm:$0xff] %vm1355, 0.0
          %1469 = vst.msk [vmem:[#allocation3 + $0x188] sm:$0xff] %vm1355, 0.0
          %1470 = vst.msk [vmem:[#allocation3 + $0x190] sm:$0xff] %vm1355, 0.0
          %1471 = vst.msk [vmem:[#allocation3 + $0x198] sm:$0xff] %vm1355, 0.0
          %1472 = vst.msk [vmem:[#allocation3 + $0x1a0] sm:$0xff] %vm1355, 0.0
          %1473 = vst.msk [vmem:[#allocation3 + $0x1a8] sm:$0xff] %vm1355, 0.0
          %1474 = vst.msk [vmem:[#allocation3 + $0x1b0] sm:$0xff] %vm1355, 0.0
          %1475 = vst.msk [vmem:[#allocation3 + $0x1b8] sm:$0xff] %vm1355, 0.0
          %1476 = vst.msk [vmem:[#allocation3 + $0x1c0] sm:$0xff] %vm1355, 0.0
          %1477 = vst.msk [vmem:[#allocation3 + $0x1c8] sm:$0xff] %vm1355, 0.0
          %1478 = vst.msk [vmem:[#allocation3 + $0x1d0] sm:$0xff] %vm1355, 0.0
          %1479 = vst.msk [vmem:[#allocation3 + $0x1d8] sm:$0xff] %vm1355, 0.0
          %1480 = vst.msk [vmem:[#allocation3 + $0x1e0] sm:$0xff] %vm1355, 0.0
          %1481 = vst.msk [vmem:[#allocation3 + $0x1e8] sm:$0xff] %vm1355, 0.0
          %1482 = vst.msk [vmem:[#allocation3 + $0x1f0] sm:$0xff] %vm1355, 0.0
          %1483 = vst.msk [vmem:[#allocation3 + $0x1f8] sm:$0xff] %vm1355, 0.0
          %vm1484 = vcmask 64512
          %1485 = vst.msk [vmem:[#allocation4] sm:$0xff] %vm1484, 0.0
          %1486 = vst.msk [vmem:[#allocation4 + $0x8] sm:$0xff] %vm1484, 0.0
          %1487 = vst.msk [vmem:[#allocation4 + $0x10] sm:$0xff] %vm1484, 0.0
          %1488 = vst.msk [vmem:[#allocation4 + $0x18] sm:$0xff] %vm1484, 0.0
          %1489 = vst.msk [vmem:[#allocation4 + $0x20] sm:$0xff] %vm1484, 0.0
          %1490 = vst.msk [vmem:[#allocation4 + $0x28] sm:$0xff] %vm1484, 0.0
          %1491 = vst.msk [vmem:[#allocation4 + $0x30] sm:$0xff] %vm1484, 0.0
          %1492 = vst.msk [vmem:[#allocation4 + $0x38] sm:$0xff] %vm1484, 0.0
          %1493 = vst.msk [vmem:[#allocation4 + $0x40] sm:$0xff] %vm1484, 0.0
          %1494 = vst.msk [vmem:[#allocation4 + $0x48] sm:$0xff] %vm1484, 0.0
          %1495 = vst.msk [vmem:[#allocation4 + $0x50] sm:$0xff] %vm1484, 0.0
          %1496 = vst.msk [vmem:[#allocation4 + $0x58] sm:$0xff] %vm1484, 0.0
          %1497 = vst.msk [vmem:[#allocation4 + $0x60] sm:$0xff] %vm1484, 0.0
          %1498 = vst.msk [vmem:[#allocation4 + $0x68] sm:$0xff] %vm1484, 0.0
          %1499 = vst.msk [vmem:[#allocation4 + $0x70] sm:$0xff] %vm1484, 0.0
          %1500 = vst.msk [vmem:[#allocation4 + $0x78] sm:$0xff] %vm1484, 0.0
          %1501 = vst.msk [vmem:[#allocation4 + $0x80] sm:$0xff] %vm1484, 0.0
          %1502 = vst.msk [vmem:[#allocation4 + $0x88] sm:$0xff] %vm1484, 0.0
          %1503 = vst.msk [vmem:[#allocation4 + $0x90] sm:$0xff] %vm1484, 0.0
          %1504 = vst.msk [vmem:[#allocation4 + $0x98] sm:$0xff] %vm1484, 0.0
          %1505 = vst.msk [vmem:[#allocation4 + $0xa0] sm:$0xff] %vm1484, 0.0
          %1506 = vst.msk [vmem:[#allocation4 + $0xa8] sm:$0xff] %vm1484, 0.0
          %1507 = vst.msk [vmem:[#allocation4 + $0xb0] sm:$0xff] %vm1484, 0.0
          %1508 = vst.msk [vmem:[#allocation4 + $0xb8] sm:$0xff] %vm1484, 0.0
          %1509 = vst.msk [vmem:[#allocation4 + $0xc0] sm:$0xff] %vm1484, 0.0
          %1510 = vst.msk [vmem:[#allocation4 + $0xc8] sm:$0xff] %vm1484, 0.0
          %1511 = vst.msk [vmem:[#allocation4 + $0xd0] sm:$0xff] %vm1484, 0.0
          %1512 = vst.msk [vmem:[#allocation4 + $0xd8] sm:$0xff] %vm1484, 0.0
          %1513 = vst.msk [vmem:[#allocation4 + $0xe0] sm:$0xff] %vm1484, 0.0
          %1514 = vst.msk [vmem:[#allocation4 + $0xe8] sm:$0xff] %vm1484, 0.0
          %1515 = vst.msk [vmem:[#allocation4 + $0xf0] sm:$0xff] %vm1484, 0.0
          %1516 = vst.msk [vmem:[#allocation4 + $0xf8] sm:$0xff] %vm1484, 0.0
          %1517 = vst.msk [vmem:[#allocation4 + $0x100] sm:$0xff] %vm1484, 0.0
          %1518 = vst.msk [vmem:[#allocation4 + $0x108] sm:$0xff] %vm1484, 0.0
          %1519 = vst.msk [vmem:[#allocation4 + $0x110] sm:$0xff] %vm1484, 0.0
          %1520 = vst.msk [vmem:[#allocation4 + $0x118] sm:$0xff] %vm1484, 0.0
          %1521 = vst.msk [vmem:[#allocation4 + $0x120] sm:$0xff] %vm1484, 0.0
          %1522 = vst.msk [vmem:[#allocation4 + $0x128] sm:$0xff] %vm1484, 0.0
          %1523 = vst.msk [vmem:[#allocation4 + $0x130] sm:$0xff] %vm1484, 0.0
          %1524 = vst.msk [vmem:[#allocation4 + $0x138] sm:$0xff] %vm1484, 0.0
          %1525 = vst.msk [vmem:[#allocation4 + $0x140] sm:$0xff] %vm1484, 0.0
          %1526 = vst.msk [vmem:[#allocation4 + $0x148] sm:$0xff] %vm1484, 0.0
          %1527 = vst.msk [vmem:[#allocation4 + $0x150] sm:$0xff] %vm1484, 0.0
          %1528 = vst.msk [vmem:[#allocation4 + $0x158] sm:$0xff] %vm1484, 0.0
          %1529 = vst.msk [vmem:[#allocation4 + $0x160] sm:$0xff] %vm1484, 0.0
          %1530 = vst.msk [vmem:[#allocation4 + $0x168] sm:$0xff] %vm1484, 0.0
          %1531 = vst.msk [vmem:[#allocation4 + $0x170] sm:$0xff] %vm1484, 0.0
          %1532 = vst.msk [vmem:[#allocation4 + $0x178] sm:$0xff] %vm1484, 0.0
          %1533 = vst.msk [vmem:[#allocation4 + $0x180] sm:$0xff] %vm1484, 0.0
          %1534 = vst.msk [vmem:[#allocation4 + $0x188] sm:$0xff] %vm1484, 0.0
          %1535 = vst.msk [vmem:[#allocation4 + $0x190] sm:$0xff] %vm1484, 0.0
          %1536 = vst.msk [vmem:[#allocation4 + $0x198] sm:$0xff] %vm1484, 0.0
          %1537 = vst.msk [vmem:[#allocation4 + $0x1a0] sm:$0xff] %vm1484, 0.0
          %1538 = vst.msk [vmem:[#allocation4 + $0x1a8] sm:$0xff] %vm1484, 0.0
          %1539 = vst.msk [vmem:[#allocation4 + $0x1b0] sm:$0xff] %vm1484, 0.0
          %1540 = vst.msk [vmem:[#allocation4 + $0x1b8] sm:$0xff] %vm1484, 0.0
          %1541 = vst.msk [vmem:[#allocation4 + $0x1c0] sm:$0xff] %vm1484, 0.0
          %1542 = vst.msk [vmem:[#allocation4 + $0x1c8] sm:$0xff] %vm1484, 0.0
          %1543 = vst.msk [vmem:[#allocation4 + $0x1d0] sm:$0xff] %vm1484, 0.0
          %1544 = vst.msk [vmem:[#allocation4 + $0x1d8] sm:$0xff] %vm1484, 0.0
          %1545 = vst.msk [vmem:[#allocation4 + $0x1e0] sm:$0xff] %vm1484, 0.0
          %1546 = vst.msk [vmem:[#allocation4 + $0x1e8] sm:$0xff] %vm1484, 0.0
          %1547 = vst.msk [vmem:[#allocation4 + $0x1f0] sm:$0xff] %vm1484, 0.0
          %1548 = vst.msk [vmem:[#allocation4 + $0x1f8] sm:$0xff] %vm1484, 0.0
        $region212: #{tpu_custom_call.1} parent=191 // pred_fallthru
          _
        %v1549 = vld [vmem:[%s1272] sm:$0xf]
        %v1550 = vld [vmem:[%s1272 + $0x4] sm:$0xf]
        %v1551 = vld [vmem:[%s1272 + $0x8] sm:$0xf]
        %v1552 = vld [vmem:[%s1272 + $0xc] sm:$0xf]
        %v1553 = vld [vmem:[%s1272 + $0x10] sm:$0xf]
        %v1554 = vld [vmem:[%s1272 + $0x14] sm:$0xf]
        %v1555 = vld [vmem:[%s1272 + $0x18] sm:$0xf]
        %v1556 = vld [vmem:[%s1272 + $0x1c] sm:$0xf]
        %v1557 = vld [vmem:[%s1272 + $0x20] sm:$0xf]
        %v1558 = vld [vmem:[%s1272 + $0x24] sm:$0xf]
        %v1559 = vld [vmem:[%s1272 + $0x28] sm:$0xf]
        %v1560 = vld [vmem:[%s1272 + $0x2c] sm:$0xf]
        %v1561 = vld [vmem:[%s1272 + $0x30] sm:$0xf]
        %v1562 = vld [vmem:[%s1272 + $0x34] sm:$0xf]
        %v1563 = vld [vmem:[%s1272 + $0x38] sm:$0xf]
        %v1564 = vld [vmem:[%s1272 + $0x3c] sm:$0xf]
        %v1565 = vld [vmem:[%s1272 + $0x40] sm:$0xf]
        %v1566 = vld [vmem:[%s1272 + $0x44] sm:$0xf]
        %v1567 = vld [vmem:[%s1272 + $0x48] sm:$0xf]
        %v1568 = vld [vmem:[%s1272 + $0x4c] sm:$0xf]
        %v1569 = vld [vmem:[%s1272 + $0x50] sm:$0xf]
        %v1570 = vld [vmem:[%s1272 + $0x54] sm:$0xf]
        %v1571 = vld [vmem:[%s1272 + $0x58] sm:$0xf]
        %v1572 = vld [vmem:[%s1272 + $0x5c] sm:$0xf]
        %v1573 = vld [vmem:[%s1272 + $0x60] sm:$0xf]
        %v1574 = vld [vmem:[%s1272 + $0x64] sm:$0xf]
        %v1575 = vld [vmem:[%s1272 + $0x68] sm:$0xf]
        %v1576 = vld [vmem:[%s1272 + $0x6c] sm:$0xf]
        %v1577 = vld [vmem:[%s1272 + $0x70] sm:$0xf]
        %v1578 = vld [vmem:[%s1272 + $0x74] sm:$0xf]
        %v1579 = vld [vmem:[%s1272 + $0x78] sm:$0xf]
        %v1580 = vld [vmem:[%s1272 + $0x7c] sm:$0xf]
        %v1581 = vld [vmem:[%s1272 + $0x80] sm:$0xf]
        %v1582 = vld [vmem:[%s1272 + $0x84] sm:$0xf]
        %v1583 = vld [vmem:[%s1272 + $0x88] sm:$0xf]
        %v1584 = vld [vmem:[%s1272 + $0x8c] sm:$0xf]
        %v1585 = vld [vmem:[%s1272 + $0x90] sm:$0xf]
        %v1586 = vld [vmem:[%s1272 + $0x94] sm:$0xf]
        %v1587 = vld [vmem:[%s1272 + $0x98] sm:$0xf]
        %v1588 = vld [vmem:[%s1272 + $0x9c] sm:$0xf]
        %v1589 = vld [vmem:[%s1272 + $0xa0] sm:$0xf]
        %v1590 = vld [vmem:[%s1272 + $0xa4] sm:$0xf]
        %v1591 = vld [vmem:[%s1272 + $0xa8] sm:$0xf]
        %v1592 = vld [vmem:[%s1272 + $0xac] sm:$0xf]
        %v1593 = vld [vmem:[%s1272 + $0xb0] sm:$0xf]
        %v1594 = vld [vmem:[%s1272 + $0xb4] sm:$0xf]
        %v1595 = vld [vmem:[%s1272 + $0xb8] sm:$0xf]
        %v1596 = vld [vmem:[%s1272 + $0xbc] sm:$0xf]
        %v1597 = vld [vmem:[%s1272 + $0xc0] sm:$0xf]
        %v1598 = vld [vmem:[%s1272 + $0xc4] sm:$0xf]
        %v1599 = vld [vmem:[%s1272 + $0xc8] sm:$0xf]
        %v1600 = vld [vmem:[%s1272 + $0xcc] sm:$0xf]
        %v1601 = vld [vmem:[%s1272 + $0xd0] sm:$0xf]
        %v1602 = vld [vmem:[%s1272 + $0xd4] sm:$0xf]
        %v1603 = vld [vmem:[%s1272 + $0xd8] sm:$0xf]
        %v1604 = vld [vmem:[%s1272 + $0xdc] sm:$0xf]
        %v1605 = vld [vmem:[%s1272 + $0xe0] sm:$0xf]
        %v1606 = vld [vmem:[%s1272 + $0xe4] sm:$0xf]
        %v1607 = vld [vmem:[%s1272 + $0xe8] sm:$0xf]
        %v1608 = vld [vmem:[%s1272 + $0xec] sm:$0xf]
        %v1609 = vld [vmem:[%s1272 + $0xf0] sm:$0xf]
        %v1610 = vld [vmem:[%s1272 + $0xf4] sm:$0xf]
        %v1611 = vld [vmem:[%s1272 + $0xf8] sm:$0xf]
        %v1612 = vld [vmem:[%s1272 + $0xfc] sm:$0xf]
        %v1613 = vld [vmem:[%s1279] sm:$0xf]
        %v1614 = vld [vmem:[%s1279 + $0x4] sm:$0xf]
        %v1615 = vld [vmem:[%s1279 + $0x8] sm:$0xf]
        %v1616 = vld [vmem:[%s1279 + $0xc] sm:$0xf]
        %v1617 = vld [vmem:[%s1279 + $0x10] sm:$0xf]
        %v1618 = vld [vmem:[%s1279 + $0x14] sm:$0xf]
        %v1619 = vld [vmem:[%s1279 + $0x18] sm:$0xf]
        %v1620 = vld [vmem:[%s1279 + $0x1c] sm:$0xf]
        %v1621 = vld [vmem:[%s1279 + $0x20] sm:$0xf]
        %v1622 = vld [vmem:[%s1279 + $0x24] sm:$0xf]
        %v1623 = vld [vmem:[%s1279 + $0x28] sm:$0xf]
        %v1624 = vld [vmem:[%s1279 + $0x2c] sm:$0xf]
        %v1625 = vld [vmem:[%s1279 + $0x30] sm:$0xf]
        %v1626 = vld [vmem:[%s1279 + $0x34] sm:$0xf]
        %v1627 = vld [vmem:[%s1279 + $0x38] sm:$0xf]
        %v1628 = vld [vmem:[%s1279 + $0x3c] sm:$0xf]
        %v1629 = vld [vmem:[%s1279 + $0x40] sm:$0xf]
        %v1630 = vld [vmem:[%s1279 + $0x44] sm:$0xf]
        %v1631 = vld [vmem:[%s1279 + $0x48] sm:$0xf]
        %v1632 = vld [vmem:[%s1279 + $0x4c] sm:$0xf]
        %v1633 = vld [vmem:[%s1279 + $0x50] sm:$0xf]
        %v1634 = vld [vmem:[%s1279 + $0x54] sm:$0xf]
        %v1635 = vld [vmem:[%s1279 + $0x58] sm:$0xf]
        %v1636 = vld [vmem:[%s1279 + $0x5c] sm:$0xf]
        %v1637 = vld [vmem:[%s1279 + $0x60] sm:$0xf]
        %v1638 = vld [vmem:[%s1279 + $0x64] sm:$0xf]
        %v1639 = vld [vmem:[%s1279 + $0x68] sm:$0xf]
        %v1640 = vld [vmem:[%s1279 + $0x6c] sm:$0xf]
        %v1641 = vld [vmem:[%s1279 + $0x70] sm:$0xf]
        %v1642 = vld [vmem:[%s1279 + $0x74] sm:$0xf]
        %v1643 = vld [vmem:[%s1279 + $0x78] sm:$0xf]
        %v1644 = vld [vmem:[%s1279 + $0x7c] sm:$0xf]
        %v1645 = vld [vmem:[%s1279 + $0x80] sm:$0xf]
        %v1646 = vld [vmem:[%s1279 + $0x84] sm:$0xf]
        %v1647 = vld [vmem:[%s1279 + $0x88] sm:$0xf]
        %v1648 = vld [vmem:[%s1279 + $0x8c] sm:$0xf]
        %v1649 = vld [vmem:[%s1279 + $0x90] sm:$0xf]
        %v1650 = vld [vmem:[%s1279 + $0x94] sm:$0xf]
        %v1651 = vld [vmem:[%s1279 + $0x98] sm:$0xf]
        %v1652 = vld [vmem:[%s1279 + $0x9c] sm:$0xf]
        %v1653 = vld [vmem:[%s1279 + $0xa0] sm:$0xf]
        %v1654 = vld [vmem:[%s1279 + $0xa4] sm:$0xf]
        %v1655 = vld [vmem:[%s1279 + $0xa8] sm:$0xf]
        %v1656 = vld [vmem:[%s1279 + $0xac] sm:$0xf]
        %v1657 = vld [vmem:[%s1279 + $0xb0] sm:$0xf]
        %v1658 = vld [vmem:[%s1279 + $0xb4] sm:$0xf]
        %v1659 = vld [vmem:[%s1279 + $0xb8] sm:$0xf]
        %v1660 = vld [vmem:[%s1279 + $0xbc] sm:$0xf]
        %v1661 = vld [vmem:[%s1279 + $0xc0] sm:$0xf]
        %v1662 = vld [vmem:[%s1279 + $0xc4] sm:$0xf]
        %v1663 = vld [vmem:[%s1279 + $0xc8] sm:$0xf]
        %v1664 = vld [vmem:[%s1279 + $0xcc] sm:$0xf]
        %v1665 = vld [vmem:[%s1279 + $0xd0] sm:$0xf]
        %v1666 = vld [vmem:[%s1279 + $0xd4] sm:$0xf]
        %v1667 = vld [vmem:[%s1279 + $0xd8] sm:$0xf]
        %v1668 = vld [vmem:[%s1279 + $0xdc] sm:$0xf]
        %v1669 = vld [vmem:[%s1279 + $0xe0] sm:$0xf]
        %v1670 = vld [vmem:[%s1279 + $0xe4] sm:$0xf]
        %v1671 = vld [vmem:[%s1279 + $0xe8] sm:$0xf]
        %v1672 = vld [vmem:[%s1279 + $0xec] sm:$0xf]
        %v1673 = vld [vmem:[%s1279 + $0xf0] sm:$0xf]
        %v1674 = vld [vmem:[%s1279 + $0xf4] sm:$0xf]
        %v1675 = vld [vmem:[%s1279 + $0xf8] sm:$0xf]
        %v1676 = vld [vmem:[%s1279 + $0xfc] sm:$0xf]
        %v1677 = vld [vmem:[%s1286] sm:$0xf]
        %v1678 = vld [vmem:[%s1286 + $0x4] sm:$0xf]
        %v1679 = vld [vmem:[%s1286 + $0x8] sm:$0xf]
        %v1680 = vld [vmem:[%s1286 + $0xc] sm:$0xf]
        %v1681 = vld [vmem:[%s1286 + $0x10] sm:$0xf]
        %v1682 = vld [vmem:[%s1286 + $0x14] sm:$0xf]
        %v1683 = vld [vmem:[%s1286 + $0x18] sm:$0xf]
        %v1684 = vld [vmem:[%s1286 + $0x1c] sm:$0xf]
        %v1685 = vld [vmem:[%s1286 + $0x20] sm:$0xf]
        %v1686 = vld [vmem:[%s1286 + $0x24] sm:$0xf]
        %v1687 = vld [vmem:[%s1286 + $0x28] sm:$0xf]
        %v1688 = vld [vmem:[%s1286 + $0x2c] sm:$0xf]
        %v1689 = vld [vmem:[%s1286 + $0x30] sm:$0xf]
        %v1690 = vld [vmem:[%s1286 + $0x34] sm:$0xf]
        %v1691 = vld [vmem:[%s1286 + $0x38] sm:$0xf]
        %v1692 = vld [vmem:[%s1286 + $0x3c] sm:$0xf]
        %v1693 = vld [vmem:[%s1286 + $0x40] sm:$0xf]
        %v1694 = vld [vmem:[%s1286 + $0x44] sm:$0xf]
        %v1695 = vld [vmem:[%s1286 + $0x48] sm:$0xf]
        %v1696 = vld [vmem:[%s1286 + $0x4c] sm:$0xf]
        %v1697 = vld [vmem:[%s1286 + $0x50] sm:$0xf]
        %v1698 = vld [vmem:[%s1286 + $0x54] sm:$0xf]
        %v1699 = vld [vmem:[%s1286 + $0x58] sm:$0xf]
        %v1700 = vld [vmem:[%s1286 + $0x5c] sm:$0xf]
        %v1701 = vld [vmem:[%s1286 + $0x60] sm:$0xf]
        %v1702 = vld [vmem:[%s1286 + $0x64] sm:$0xf]
        %v1703 = vld [vmem:[%s1286 + $0x68] sm:$0xf]
        %v1704 = vld [vmem:[%s1286 + $0x6c] sm:$0xf]
        %v1705 = vld [vmem:[%s1286 + $0x70] sm:$0xf]
        %v1706 = vld [vmem:[%s1286 + $0x74] sm:$0xf]
        %v1707 = vld [vmem:[%s1286 + $0x78] sm:$0xf]
        %v1708 = vld [vmem:[%s1286 + $0x7c] sm:$0xf]
        %v1709 = vld [vmem:[%s1286 + $0x80] sm:$0xf]
        %v1710 = vld [vmem:[%s1286 + $0x84] sm:$0xf]
        %v1711 = vld [vmem:[%s1286 + $0x88] sm:$0xf]
        %v1712 = vld [vmem:[%s1286 + $0x8c] sm:$0xf]
        %v1713 = vld [vmem:[%s1286 + $0x90] sm:$0xf]
        %v1714 = vld [vmem:[%s1286 + $0x94] sm:$0xf]
        %v1715 = vld [vmem:[%s1286 + $0x98] sm:$0xf]
        %v1716 = vld [vmem:[%s1286 + $0x9c] sm:$0xf]
        %v1717 = vld [vmem:[%s1286 + $0xa0] sm:$0xf]
        %v1718 = vld [vmem:[%s1286 + $0xa4] sm:$0xf]
        %v1719 = vld [vmem:[%s1286 + $0xa8] sm:$0xf]
        %v1720 = vld [vmem:[%s1286 + $0xac] sm:$0xf]
        %v1721 = vld [vmem:[%s1286 + $0xb0] sm:$0xf]
        %v1722 = vld [vmem:[%s1286 + $0xb4] sm:$0xf]
        %v1723 = vld [vmem:[%s1286 + $0xb8] sm:$0xf]
        %v1724 = vld [vmem:[%s1286 + $0xbc] sm:$0xf]
        %v1725 = vld [vmem:[%s1286 + $0xc0] sm:$0xf]
        %v1726 = vld [vmem:[%s1286 + $0xc4] sm:$0xf]
        %v1727 = vld [vmem:[%s1286 + $0xc8] sm:$0xf]
        %v1728 = vld [vmem:[%s1286 + $0xcc] sm:$0xf]
        %v1729 = vld [vmem:[%s1286 + $0xd0] sm:$0xf]
        %v1730 = vld [vmem:[%s1286 + $0xd4] sm:$0xf]
        %v1731 = vld [vmem:[%s1286 + $0xd8] sm:$0xf]
        %v1732 = vld [vmem:[%s1286 + $0xdc] sm:$0xf]
        %v1733 = vld [vmem:[%s1286 + $0xe0] sm:$0xf]
        %v1734 = vld [vmem:[%s1286 + $0xe4] sm:$0xf]
        %v1735 = vld [vmem:[%s1286 + $0xe8] sm:$0xf]
        %v1736 = vld [vmem:[%s1286 + $0xec] sm:$0xf]
        %v1737 = vld [vmem:[%s1286 + $0xf0] sm:$0xf]
        %v1738 = vld [vmem:[%s1286 + $0xf4] sm:$0xf]
        %v1739 = vld [vmem:[%s1286 + $0xf8] sm:$0xf]
        %v1740 = vld [vmem:[%s1286 + $0xfc] sm:$0xf]
        %v1741 = vld [vmem:[%s1293] sm:$0xf]
        %v1742 = vld [vmem:[%s1293 + $0x4] sm:$0xf]
        %v1743 = vld [vmem:[%s1293 + $0x8] sm:$0xf]
        %v1744 = vld [vmem:[%s1293 + $0xc] sm:$0xf]
        %v1745 = vld [vmem:[%s1293 + $0x10] sm:$0xf]
        %v1746 = vld [vmem:[%s1293 + $0x14] sm:$0xf]
        %v1747 = vld [vmem:[%s1293 + $0x18] sm:$0xf]
        %v1748 = vld [vmem:[%s1293 + $0x1c] sm:$0xf]
        %v1749 = vld [vmem:[%s1293 + $0x20] sm:$0xf]
        %v1750 = vld [vmem:[%s1293 + $0x24] sm:$0xf]
        %v1751 = vld [vmem:[%s1293 + $0x28] sm:$0xf]
        %v1752 = vld [vmem:[%s1293 + $0x2c] sm:$0xf]
        %v1753 = vld [vmem:[%s1293 + $0x30] sm:$0xf]
        %v1754 = vld [vmem:[%s1293 + $0x34] sm:$0xf]
        %v1755 = vld [vmem:[%s1293 + $0x38] sm:$0xf]
        %v1756 = vld [vmem:[%s1293 + $0x3c] sm:$0xf]
        %v1757 = vunpack.c.l.bf16 %v1741
        %v1758 = vunpack.c.l.bf16 %v1742
        %v1759 = vunpack.c.l.bf16 %v1743
        %v1760 = vunpack.c.l.bf16 %v1744
        %v1761 = vunpack.c.l.bf16 %v1745
        %v1762 = vunpack.c.l.bf16 %v1746
        %v1763 = vunpack.c.l.bf16 %v1747
        %v1764 = vunpack.c.l.bf16 %v1748
        %v1765 = vunpack.c.l.bf16 %v1749
        %v1766 = vunpack.c.l.bf16 %v1750
        %v1767 = vunpack.c.l.bf16 %v1751
        %v1768 = vunpack.c.l.bf16 %v1752
        %v1769 = vunpack.c.l.bf16 %v1753
        %v1770 = vunpack.c.l.bf16 %v1754
        %v1771 = vunpack.c.l.bf16 %v1755
        %v1772 = vunpack.c.l.bf16 %v1756
        %v1789 = vunpack.c.l.b16 %v1549
        %v1790 = vunpack.c.l.b16 %v1550
        %v1791 = vunpack.c.l.b16 %v1551
        %v1792 = vunpack.c.l.b16 %v1552
        %v1793 = vunpack.c.l.b16 %v1553
        %v1794 = vunpack.c.l.b16 %v1554
        %v1795 = vunpack.c.l.b16 %v1555
        %v1796 = vunpack.c.l.b16 %v1556
        %v1797 = vunpack.c.l.b16 %v1557
        %v1798 = vunpack.c.l.b16 %v1558
        %v1799 = vunpack.c.l.b16 %v1559
        %v1800 = vunpack.c.l.b16 %v1560
        %v1801 = vunpack.c.l.b16 %v1561
        %v1802 = vunpack.c.l.b16 %v1562
        %v1803 = vunpack.c.l.b16 %v1563
        %v1804 = vunpack.c.l.b16 %v1564
        %v1805 = vpack.c.b16 %v1790, %v1789
        %v1806 = vpack.c.b16 %v1792, %v1791
        %v1807 = vpack.c.b16 %v1794, %v1793
        %v1808 = vpack.c.b16 %v1796, %v1795
        %v1809 = vpack.c.b16 %v1798, %v1797
        %v1810 = vpack.c.b16 %v1800, %v1799
        %v1811 = vpack.c.b16 %v1802, %v1801
        %v1812 = vpack.c.b16 %v1804, %v1803
        %v1829 = vunpack.c.l.b16 %v1613
        %v1830 = vunpack.c.l.b16 %v1614
        %v1831 = vunpack.c.l.b16 %v1615
        %v1832 = vunpack.c.l.b16 %v1616
        %v1833 = vunpack.c.l.b16 %v1617
        %v1834 = vunpack.c.l.b16 %v1618
        %v1835 = vunpack.c.l.b16 %v1619
        %v1836 = vunpack.c.l.b16 %v1620
        %v1837 = vunpack.c.l.b16 %v1621
        %v1838 = vunpack.c.l.b16 %v1622
        %v1839 = vunpack.c.l.b16 %v1623
        %v1840 = vunpack.c.l.b16 %v1624
        %v1841 = vunpack.c.l.b16 %v1625
        %v1842 = vunpack.c.l.b16 %v1626
        %v1843 = vunpack.c.l.b16 %v1627
        %v1844 = vunpack.c.l.b16 %v1628
        %v1845 = vpack.c.b16 %v1830, %v1829
        %v1846 = vpack.c.b16 %v1832, %v1831
        %v1847 = vpack.c.b16 %v1834, %v1833
        %v1848 = vpack.c.b16 %v1836, %v1835
        %v1849 = vpack.c.b16 %v1838, %v1837
        %v1850 = vpack.c.b16 %v1840, %v1839
        %v1851 = vpack.c.b16 %v1842, %v1841
        %v1852 = vpack.c.b16 %v1844, %v1843
        %vm1853 = vcmask 64512
        %v1855 = vsel %vm1853, %v1805, 0
        %v1858 = vsel %vm1853, %v1806, 0
        %v1861 = vsel %vm1853, %v1807, 0
        %v1864 = vsel %vm1853, %v1808, 0
        %v1867 = vsel %vm1853, %v1809, 0
        %v1870 = vsel %vm1853, %v1810, 0
        %v1873 = vsel %vm1853, %v1811, 0
        %v1876 = vsel %vm1853, %v1812, 0
        %v1879 = vsel %vm1853, %v1845, 0
        %v1882 = vsel %vm1853, %v1846, 0
        %v1885 = vsel %vm1853, %v1847, 0
        %v1888 = vsel %vm1853, %v1848, 0
        %v1891 = vsel %vm1853, %v1849, 0
        %v1894 = vsel %vm1853, %v1850, 0
        %v1897 = vsel %vm1853, %v1851, 0
        %v1900 = vsel %vm1853, %v1852, 0
        %1902 = vmatprep.subr.bf16.mxu0 0
        %1903 = vmatpush1.bf16.xpose.msra.mxu0 %v1879
        %1904 = vmatprep.subr.bf16.mxu0 0
        %1905 = vmatpush1.bf16.xpose.msra.mxu0 %v1882
        %1906 = vmatprep.subr.bf16.mxu0 0
        %1907 = vmatpush1.bf16.xpose.msra.mxu0 %v1885
        %1908 = vmatprep.subr.bf16.mxu0 0
        %1909 = vmatpush1.bf16.xpose.msra.mxu0 %v1888
        %1910 = vmatprep.subr.bf16.mxu0 0
        %1911 = vmatpush1.bf16.xpose.msra.mxu0 %v1891
        %1912 = vmatprep.subr.bf16.mxu0 0
        %1913 = vmatpush1.bf16.xpose.msra.mxu0 %v1894
        %1914 = vmatprep.subr.bf16.mxu0 0
        %1915 = vmatpush1.bf16.xpose.msra.mxu0 %v1897
        %1916 = vmatprep.subr.bf16.mxu0 0
        %1917 = vmatpush1.bf16.xpose.msra.mxu0 %v1900
        %1918 = vmatprep.subr.bf16.mxu0 0
        %1919 = vmatpush1.bf16.xpose.msra.mxu0 0
        %1920 = vmatprep.subr.bf16.mxu0 0
        %1921 = vmatpush1.bf16.xpose.msra.mxu0 0
        %1922 = vmatprep.subr.bf16.mxu0 0
        %1923 = vmatpush1.bf16.xpose.msra.mxu0 0
        %1924 = vmatprep.subr.bf16.mxu0 0
        %1925 = vmatpush1.bf16.xpose.msra.mxu0 0
        %1926 = vmatprep.subr.bf16.mxu0 0
        %1927 = vmatpush1.bf16.xpose.msra.mxu0 0
        %1928 = vmatprep.subr.bf16.mxu0 0
        %1929 = vmatpush1.bf16.xpose.msra.mxu0 0
        %1930 = vmatprep.subr.bf16.mxu0 0
        %1931 = vmatpush1.bf16.xpose.msra.mxu0 0
        %1932 = vmatprep.subr.bf16.mxu0 0
        %1933 = vmatpush1.bf16.xpose.msra.mxu0 0
        %1934 = vmatprep.mubr.bf16.mxu0 0
        %1935 = vmatmul.mubr.bf16.gmra.mrb[0].mxu0 %v1855
        %v1936 = vpop.f32.mrb[0].mxu0
        %v1937 = vadd.f32 0.0, %v1936
        %v1938 = vpop.f32.mrb[0].mxu0
        %v1939 = vpop.f32.mrb[0].mxu0
        %v1940 = vadd.f32 0.0, %v1939
        %v1941 = vpop.f32.mrb[0].mxu0
        %1942 = vmatprep.mubr.bf16.mxu0 0
        %1943 = vmatmul.mubr.bf16.gmra.mrb[0].mxu0 %v1858
        %v1944 = vpop.f32.mrb[0].mxu0
        %v1945 = vadd.f32 0.0, %v1944
        %v1946 = vpop.f32.mrb[0].mxu0
        %v1947 = vpop.f32.mrb[0].mxu0
        %v1948 = vadd.f32 0.0, %v1947
        %v1949 = vpop.f32.mrb[0].mxu0
        %1950 = vmatprep.mubr.bf16.mxu0 0
        %1951 = vmatmul.mubr.bf16.gmra.mrb[0].mxu0 %v1861
        %v1952 = vpop.f32.mrb[0].mxu0
        %v1953 = vadd.f32 0.0, %v1952
        %v1954 = vpop.f32.mrb[0].mxu0
        %v1955 = vpop.f32.mrb[0].mxu0
        %v1956 = vadd.f32 0.0, %v1955
        %v1957 = vpop.f32.mrb[0].mxu0
        %1958 = vmatprep.mubr.bf16.mxu0 0
        %1959 = vmatmul.mubr.bf16.gmra.mrb[0].mxu0 %v1864
        %v1960 = vpop.f32.mrb[0].mxu0
        %v1961 = vadd.f32 0.0, %v1960
        %v1962 = vpop.f32.mrb[0].mxu0
        %v1963 = vpop.f32.mrb[0].mxu0
        %v1964 = vadd.f32 0.0, %v1963
        %v1965 = vpop.f32.mrb[0].mxu0
        %1966 = vmatprep.mubr.bf16.mxu0 0
        %1967 = vmatmul.mubr.bf16.gmra.mrb[0].mxu0 %v1867
        %v1968 = vpop.f32.mrb[0].mxu0
        %v1969 = vadd.f32 0.0, %v1968
        %v1970 = vpop.f32.mrb[0].mxu0
        %v1971 = vpop.f32.mrb[0].mxu0
        %v1972 = vadd.f32 0.0, %v1971
        %v1973 = vpop.f32.mrb[0].mxu0
        %1974 = vmatprep.mubr.bf16.mxu0 0
        %1975 = vmatmul.mubr.bf16.gmra.mrb[0].mxu0 %v1870
        %v1976 = vpop.f32.mrb[0].mxu0
        %v1977 = vadd.f32 0.0, %v1976
        %v1978 = vpop.f32.mrb[0].mxu0
        %v1979 = vpop.f32.mrb[0].mxu0
        %v1980 = vadd.f32 0.0, %v1979
        %v1981 = vpop.f32.mrb[0].mxu0
        %1982 = vmatprep.mubr.bf16.mxu0 0
        %1983 = vmatmul.mubr.bf16.gmra.mrb[0].mxu0 %v1873
        %v1984 = vpop.f32.mrb[0].mxu0
        %v1985 = vadd.f32 0.0, %v1984
        %v1986 = vpop.f32.mrb[0].mxu0
        %v1987 = vpop.f32.mrb[0].mxu0
        %v1988 = vadd.f32 0.0, %v1987
        %v1989 = vpop.f32.mrb[0].mxu0
        %1990 = vmatprep.mubr.bf16.mxu0 0
        %1991 = vmatmul.mubr.bf16.gmra.mrb[0].mxu0 %v1876
        %v1992 = vpop.f32.mrb[0].mxu0
        %v1993 = vadd.f32 0.0, %v1992
        %v1994 = vpop.f32.mrb[0].mxu0
        %v1995 = vpop.f32.mrb[0].mxu0
        %v1996 = vadd.f32 0.0, %v1995
        %v1997 = vpop.f32.mrb[0].mxu0
        %1998 = vdwg.mxu0
        %v2015 = vunpack.c.l.b16 %v1565
        %v2016 = vunpack.c.l.b16 %v1566
        %v2017 = vunpack.c.l.b16 %v1567
        %v2018 = vunpack.c.l.b16 %v1568
        %v2019 = vunpack.c.l.b16 %v1569
        %v2020 = vunpack.c.l.b16 %v1570
        %v2021 = vunpack.c.l.b16 %v1571
        %v2022 = vunpack.c.l.b16 %v1572
        %v2023 = vunpack.c.l.b16 %v1573
        %v2024 = vunpack.c.l.b16 %v1574
        %v2025 = vunpack.c.l.b16 %v1575
        %v2026 = vunpack.c.l.b16 %v1576
        %v2027 = vunpack.c.l.b16 %v1577
        %v2028 = vunpack.c.l.b16 %v1578
        %v2029 = vunpack.c.l.b16 %v1579
        %v2030 = vunpack.c.l.b16 %v1580
        %v2031 = vpack.c.b16 %v2016, %v2015
        %v2032 = vpack.c.b16 %v2018, %v2017
        %v2033 = vpack.c.b16 %v2020, %v2019
        %v2034 = vpack.c.b16 %v2022, %v2021
        %v2035 = vpack.c.b16 %v2024, %v2023
        %v2036 = vpack.c.b16 %v2026, %v2025
        %v2037 = vpack.c.b16 %v2028, %v2027
        %v2038 = vpack.c.b16 %v2030, %v2029
        %v2055 = vunpack.c.l.b16 %v1629
        %v2056 = vunpack.c.l.b16 %v1630
        %v2057 = vunpack.c.l.b16 %v1631
        %v2058 = vunpack.c.l.b16 %v1632
        %v2059 = vunpack.c.l.b16 %v1633
        %v2060 = vunpack.c.l.b16 %v1634
        %v2061 = vunpack.c.l.b16 %v1635
        %v2062 = vunpack.c.l.b16 %v1636
        %v2063 = vunpack.c.l.b16 %v1637
        %v2064 = vunpack.c.l.b16 %v1638
        %v2065 = vunpack.c.l.b16 %v1639
        %v2066 = vunpack.c.l.b16 %v1640
        %v2067 = vunpack.c.l.b16 %v1641
        %v2068 = vunpack.c.l.b16 %v1642
        %v2069 = vunpack.c.l.b16 %v1643
        %v2070 = vunpack.c.l.b16 %v1644
        %v2071 = vpack.c.b16 %v2056, %v2055
        %v2072 = vpack.c.b16 %v2058, %v2057
        %v2073 = vpack.c.b16 %v2060, %v2059
        %v2074 = vpack.c.b16 %v2062, %v2061
        %v2075 = vpack.c.b16 %v2064, %v2063
        %v2076 = vpack.c.b16 %v2066, %v2065
        %v2077 = vpack.c.b16 %v2068, %v2067
        %v2078 = vpack.c.b16 %v2070, %v2069
        %v2080 = vsel %vm1853, %v2031, 0
        %v2083 = vsel %vm1853, %v2032, 0
        %v2086 = vsel %vm1853, %v2033, 0
        %v2089 = vsel %vm1853, %v2034, 0
        %v2092 = vsel %vm1853, %v2035, 0
        %v2095 = vsel %vm1853, %v2036, 0
        %v2098 = vsel %vm1853, %v2037, 0
        %v2101 = vsel %vm1853, %v2038, 0
        %v2104 = vsel %vm1853, %v2071, 0
        %v2107 = vsel %vm1853, %v2072, 0
        %v2110 = vsel %vm1853, %v2073, 0
        %v2113 = vsel %vm1853, %v2074, 0
        %v2116 = vsel %vm1853, %v2075, 0
        %v2119 = vsel %vm1853, %v2076, 0
        %v2122 = vsel %vm1853, %v2077, 0
        %v2125 = vsel %vm1853, %v2078, 0
        %2127 = vmatprep.subr.bf16.mxu0 0
        %2128 = vmatpush1.bf16.xpose.msra.mxu0 %v2104
        %2129 = vmatprep.subr.bf16.mxu0 0
        %2130 = vmatpush1.bf16.xpose.msra.mxu0 %v2107
        %2131 = vmatprep.subr.bf16.mxu0 0
        %2132 = vmatpush1.bf16.xpose.msra.mxu0 %v2110
        %2133 = vmatprep.subr.bf16.mxu0 0
        %2134 = vmatpush1.bf16.xpose.msra.mxu0 %v2113
        %2135 = vmatprep.subr.bf16.mxu0 0
        %2136 = vmatpush1.bf16.xpose.msra.mxu0 %v2116
        %2137 = vmatprep.subr.bf16.mxu0 0
        %2138 = vmatpush1.bf16.xpose.msra.mxu0 %v2119
        %2139 = vmatprep.subr.bf16.mxu0 0
        %2140 = vmatpush1.bf16.xpose.msra.mxu0 %v2122
        %2141 = vmatprep.subr.bf16.mxu0 0
        %2142 = vmatpush1.bf16.xpose.msra.mxu0 %v2125
        %2143 = vmatprep.subr.bf16.mxu0 0
        %2144 = vmatpush1.bf16.xpose.msra.mxu0 0
        %2145 = vmatprep.subr.bf16.mxu0 0
        %2146 = vmatpush1.bf16.xpose.msra.mxu0 0
        %2147 = vmatprep.subr.bf16.mxu0 0
        %2148 = vmatpush1.bf16.xpose.msra.mxu0 0
        %2149 = vmatprep.subr.bf16.mxu0 0
        %2150 = vmatpush1.bf16.xpose.msra.mxu0 0
        %2151 = vmatprep.subr.bf16.mxu0 0
        %2152 = vmatpush1.bf16.xpose.msra.mxu0 0
        %2153 = vmatprep.subr.bf16.mxu0 0
        %2154 = vmatpush1.bf16.xpose.msra.mxu0 0
        %2155 = vmatprep.subr.bf16.mxu0 0
        %2156 = vmatpush1.bf16.xpose.msra.mxu0 0
        %2157 = vmatprep.subr.bf16.mxu0 0
        %2158 = vmatpush1.bf16.xpose.msra.mxu0 0
        %2159 = vmatprep.mubr.bf16.mxu0 0
        %2160 = vmatmul.mubr.bf16.gmra.mrb[0].mxu0 %v2080
        %v2161 = vpop.f32.mrb[0].mxu0
        %v2162 = vadd.f32 0.0, %v2161
        %v2163 = vpop.f32.mrb[0].mxu0
        %v2164 = vpop.f32.mrb[0].mxu0
        %v2165 = vadd.f32 0.0, %v2164
        %v2166 = vpop.f32.mrb[0].mxu0
        %2167 = vmatprep.mubr.bf16.mxu0 0
        %2168 = vmatmul.mubr.bf16.gmra.mrb[0].mxu0 %v2083
        %v2169 = vpop.f32.mrb[0].mxu0
        %v2170 = vadd.f32 0.0, %v2169
        %v2171 = vpop.f32.mrb[0].mxu0
        %v2172 = vpop.f32.mrb[0].mxu0
        %v2173 = vadd.f32 0.0, %v2172
        %v2174 = vpop.f32.mrb[0].mxu0
        %2175 = vmatprep.mubr.bf16.mxu0 0
        %2176 = vmatmul.mubr.bf16.gmra.mrb[0].mxu0 %v2086
        %v2177 = vpop.f32.mrb[0].mxu0
        %v2178 = vadd.f32 0.0, %v2177
        %v2179 = vpop.f32.mrb[0].mxu0
        %v2180 = vpop.f32.mrb[0].mxu0
        %v2181 = vadd.f32 0.0, %v2180
        %v2182 = vpop.f32.mrb[0].mxu0
        %2183 = vmatprep.mubr.bf16.mxu0 0
        %2184 = vmatmul.mubr.bf16.gmra.mrb[0].mxu0 %v2089
        %v2185 = vpop.f32.mrb[0].mxu0
        %v2186 = vadd.f32 0.0, %v2185
        %v2187 = vpop.f32.mrb[0].mxu0
        %v2188 = vpop.f32.mrb[0].mxu0
        %v2189 = vadd.f32 0.0, %v2188
        %v2190 = vpop.f32.mrb[0].mxu0
        %2191 = vmatprep.mubr.bf16.mxu0 0
        %2192 = vmatmul.mubr.bf16.gmra.mrb[0].mxu0 %v2092
        %v2193 = vpop.f32.mrb[0].mxu0
        %v2194 = vadd.f32 0.0, %v2193
        %v2195 = vpop.f32.mrb[0].mxu0
        %v2196 = vpop.f32.mrb[0].mxu0
        %v2197 = vadd.f32 0.0, %v2196
        %v2198 = vpop.f32.mrb[0].mxu0
        %2199 = vmatprep.mubr.bf16.mxu0 0
        %2200 = vmatmul.mubr.bf16.gmra.mrb[0].mxu0 %v2095
        %v2201 = vpop.f32.mrb[0].mxu0
        %v2202 = vadd.f32 0.0, %v2201
        %v2203 = vpop.f32.mrb[0].mxu0
        %v2204 = vpop.f32.mrb[0].mxu0
        %v2205 = vadd.f32 0.0, %v2204
        %v2206 = vpop.f32.mrb[0].mxu0
        %2207 = vmatprep.mubr.bf16.mxu0 0
        %2208 = vmatmul.mubr.bf16.gmra.mrb[0].mxu0 %v2098
        %v2209 = vpop.f32.mrb[0].mxu0
        %v2210 = vadd.f32 0.0, %v2209
        %v2211 = vpop.f32.mrb[0].mxu0
        %v2212 = vpop.f32.mrb[0].mxu0
        %v2213 = vadd.f32 0.0, %v2212
        %v2214 = vpop.f32.mrb[0].mxu0
        %2215 = vmatprep.mubr.bf16.mxu0 0
        %2216 = vmatmul.mubr.bf16.gmra.mrb[0].mxu0 %v2101
        %v2217 = vpop.f32.mrb[0].mxu0
        %v2218 = vadd.f32 0.0, %v2217
        %v2219 = vpop.f32.mrb[0].mxu0
        %v2220 = vpop.f32.mrb[0].mxu0
        %v2221 = vadd.f32 0.0, %v2220
        %v2222 = vpop.f32.mrb[0].mxu0
        %2223 = vdwg.mxu0
        %v2240 = vunpack.c.l.b16 %v1581
        %v2241 = vunpack.c.l.b16 %v1582
        %v2242 = vunpack.c.l.b16 %v1583
        %v2243 = vunpack.c.l.b16 %v1584
        %v2244 = vunpack.c.l.b16 %v1585
        %v2245 = vunpack.c.l.b16 %v1586
        %v2246 = vunpack.c.l.b16 %v1587
        %v2247 = vunpack.c.l.b16 %v1588
        %v2248 = vunpack.c.l.b16 %v1589
        %v2249 = vunpack.c.l.b16 %v1590
        %v2250 = vunpack.c.l.b16 %v1591
        %v2251 = vunpack.c.l.b16 %v1592
        %v2252 = vunpack.c.l.b16 %v1593
        %v2253 = vunpack.c.l.b16 %v1594
        %v2254 = vunpack.c.l.b16 %v1595
        %v2255 = vunpack.c.l.b16 %v1596
        %v2256 = vpack.c.b16 %v2241, %v2240
        %v2257 = vpack.c.b16 %v2243, %v2242
        %v2258 = vpack.c.b16 %v2245, %v2244
        %v2259 = vpack.c.b16 %v2247, %v2246
        %v2260 = vpack.c.b16 %v2249, %v2248
        %v2261 = vpack.c.b16 %v2251, %v2250
        %v2262 = vpack.c.b16 %v2253, %v2252
        %v2263 = vpack.c.b16 %v2255, %v2254
        %v2280 = vunpack.c.l.b16 %v1645
        %v2281 = vunpack.c.l.b16 %v1646
        %v2282 = vunpack.c.l.b16 %v1647
        %v2283 = vunpack.c.l.b16 %v1648
        %v2284 = vunpack.c.l.b16 %v1649
        %v2285 = vunpack.c.l.b16 %v1650
        %v2286 = vunpack.c.l.b16 %v1651
        %v2287 = vunpack.c.l.b16 %v1652
        %v2288 = vunpack.c.l.b16 %v1653
        %v2289 = vunpack.c.l.b16 %v1654
        %v2290 = vunpack.c.l.b16 %v1655
        %v2291 = vunpack.c.l.b16 %v1656
        %v2292 = vunpack.c.l.b16 %v1657
        %v2293 = vunpack.c.l.b16 %v1658
        %v2294 = vunpack.c.l.b16 %v1659
        %v2295 = vunpack.c.l.b16 %v1660
        %v2296 = vpack.c.b16 %v2281, %v2280
        %v2297 = vpack.c.b16 %v2283, %v2282
        %v2298 = vpack.c.b16 %v2285, %v2284
        %v2299 = vpack.c.b16 %v2287, %v2286
        %v2300 = vpack.c.b16 %v2289, %v2288
        %v2301 = vpack.c.b16 %v2291, %v2290
        %v2302 = vpack.c.b16 %v2293, %v2292
        %v2303 = vpack.c.b16 %v2295, %v2294
        %v2305 = vsel %vm1853, %v2256, 0
        %v2308 = vsel %vm1853, %v2257, 0
        %v2311 = vsel %vm1853, %v2258, 0
        %v2314 = vsel %vm1853, %v2259, 0
        %v2317 = vsel %vm1853, %v2260, 0
        %v2320 = vsel %vm1853, %v2261, 0
        %v2323 = vsel %vm1853, %v2262, 0
        %v2326 = vsel %vm1853, %v2263, 0
        %v2329 = vsel %vm1853, %v2296, 0
        %v2332 = vsel %vm1853, %v2297, 0
        %v2335 = vsel %vm1853, %v2298, 0
        %v2338 = vsel %vm1853, %v2299, 0
        %v2341 = vsel %vm1853, %v2300, 0
        %v2344 = vsel %vm1853, %v2301, 0
        %v2347 = vsel %vm1853, %v2302, 0
        %v2350 = vsel %vm1853, %v2303, 0
        %2352 = vmatprep.subr.bf16.mxu0 0
        %2353 = vmatpush1.bf16.xpose.msra.mxu0 %v2329
        %2354 = vmatprep.subr.bf16.mxu0 0
        %2355 = vmatpush1.bf16.xpose.msra.mxu0 %v2332
        %2356 = vmatprep.subr.bf16.mxu0 0
        %2357 = vmatpush1.bf16.xpose.msra.mxu0 %v2335
        %2358 = vmatprep.subr.bf16.mxu0 0
        %2359 = vmatpush1.bf16.xpose.msra.mxu0 %v2338
        %2360 = vmatprep.subr.bf16.mxu0 0
        %2361 = vmatpush1.bf16.xpose.msra.mxu0 %v2341
        %2362 = vmatprep.subr.bf16.mxu0 0
        %2363 = vmatpush1.bf16.xpose.msra.mxu0 %v2344
        %2364 = vmatprep.subr.bf16.mxu0 0
        %2365 = vmatpush1.bf16.xpose.msra.mxu0 %v2347
        %2366 = vmatprep.subr.bf16.mxu0 0
        %2367 = vmatpush1.bf16.xpose.msra.mxu0 %v2350
        %2368 = vmatprep.subr.bf16.mxu0 0
        %2369 = vmatpush1.bf16.xpose.msra.mxu0 0
        %2370 = vmatprep.subr.bf16.mxu0 0
        %2371 = vmatpush1.bf16.xpose.msra.mxu0 0
        %2372 = vmatprep.subr.bf16.mxu0 0
        %2373 = vmatpush1.bf16.xpose.msra.mxu0 0
        %2374 = vmatprep.subr.bf16.mxu0 0
        %2375 = vmatpush1.bf16.xpose.msra.mxu0 0
        %2376 = vmatprep.subr.bf16.mxu0 0
        %2377 = vmatpush1.bf16.xpose.msra.mxu0 0
        %2378 = vmatprep.subr.bf16.mxu0 0
        %2379 = vmatpush1.bf16.xpose.msra.mxu0 0
        %2380 = vmatprep.subr.bf16.mxu0 0
        %2381 = vmatpush1.bf16.xpose.msra.mxu0 0
        %2382 = vmatprep.subr.bf16.mxu0 0
        %2383 = vmatpush1.bf16.xpose.msra.mxu0 0
        %2384 = vmatprep.mubr.bf16.mxu0 0
        %2385 = vmatmul.mubr.bf16.gmra.mrb[0].mxu0 %v2305
        %v2386 = vpop.f32.mrb[0].mxu0
        %v2387 = vadd.f32 0.0, %v2386
        %v2388 = vpop.f32.mrb[0].mxu0
        %v2389 = vpop.f32.mrb[0].mxu0
        %v2390 = vadd.f32 0.0, %v2389
        %v2391 = vpop.f32.mrb[0].mxu0
        %2392 = vmatprep.mubr.bf16.mxu0 0
        %2393 = vmatmul.mubr.bf16.gmra.mrb[0].mxu0 %v2308
        %v2394 = vpop.f32.mrb[0].mxu0
        %v2395 = vadd.f32 0.0, %v2394
        %v2396 = vpop.f32.mrb[0].mxu0
        %v2397 = vpop.f32.mrb[0].mxu0
        %v2398 = vadd.f32 0.0, %v2397
        %v2399 = vpop.f32.mrb[0].mxu0
        %2400 = vmatprep.mubr.bf16.mxu0 0
        %2401 = vmatmul.mubr.bf16.gmra.mrb[0].mxu0 %v2311
        %v2402 = vpop.f32.mrb[0].mxu0
        %v2403 = vadd.f32 0.0, %v2402
        %v2404 = vpop.f32.mrb[0].mxu0
        %v2405 = vpop.f32.mrb[0].mxu0
        %v2406 = vadd.f32 0.0, %v2405
        %v2407 = vpop.f32.mrb[0].mxu0
        %2408 = vmatprep.mubr.bf16.mxu0 0
        %2409 = vmatmul.mubr.bf16.gmra.mrb[0].mxu0 %v2314
        %v2410 = vpop.f32.mrb[0].mxu0
        %v2411 = vadd.f32 0.0, %v2410
        %v2412 = vpop.f32.mrb[0].mxu0
        %v2413 = vpop.f32.mrb[0].mxu0
        %v2414 = vadd.f32 0.0, %v2413
        %v2415 = vpop.f32.mrb[0].mxu0
        %2416 = vmatprep.mubr.bf16.mxu0 0
        %2417 = vmatmul.mubr.bf16.gmra.mrb[0].mxu0 %v2317
        %v2418 = vpop.f32.mrb[0].mxu0
        %v2419 = vadd.f32 0.0, %v2418
        %v2420 = vpop.f32.mrb[0].mxu0
        %v2421 = vpop.f32.mrb[0].mxu0
        %v2422 = vadd.f32 0.0, %v2421
        %v2423 = vpop.f32.mrb[0].mxu0
        %2424 = vmatprep.mubr.bf16.mxu0 0
        %2425 = vmatmul.mubr.bf16.gmra.mrb[0].mxu0 %v2320
        %v2426 = vpop.f32.mrb[0].mxu0
        %v2427 = vadd.f32 0.0, %v2426
        %v2428 = vpop.f32.mrb[0].mxu0
        %v2429 = vpop.f32.mrb[0].mxu0
        %v2430 = vadd.f32 0.0, %v2429
        %v2431 = vpop.f32.mrb[0].mxu0
        %2432 = vmatprep.mubr.bf16.mxu0 0
        %2433 = vmatmul.mubr.bf16.gmra.mrb[0].mxu0 %v2323
        %v2434 = vpop.f32.mrb[0].mxu0
        %v2435 = vadd.f32 0.0, %v2434
        %v2436 = vpop.f32.mrb[0].mxu0
        %v2437 = vpop.f32.mrb[0].mxu0
        %v2438 = vadd.f32 0.0, %v2437
        %v2439 = vpop.f32.mrb[0].mxu0
        %2440 = vmatprep.mubr.bf16.mxu0 0
        %2441 = vmatmul.mubr.bf16.gmra.mrb[0].mxu0 %v2326
        %v2442 = vpop.f32.mrb[0].mxu0
        %v2443 = vadd.f32 0.0, %v2442
        %v2444 = vpop.f32.mrb[0].mxu0
        %v2445 = vpop.f32.mrb[0].mxu0
        %v2446 = vadd.f32 0.0, %v2445
        %v2447 = vpop.f32.mrb[0].mxu0
        %2448 = vdwg.mxu0
        %v2465 = vunpack.c.l.b16 %v1597
        %v2466 = vunpack.c.l.b16 %v1598
        %v2467 = vunpack.c.l.b16 %v1599
        %v2468 = vunpack.c.l.b16 %v1600
        %v2469 = vunpack.c.l.b16 %v1601
        %v2470 = vunpack.c.l.b16 %v1602
        %v2471 = vunpack.c.l.b16 %v1603
        %v2472 = vunpack.c.l.b16 %v1604
        %v2473 = vunpack.c.l.b16 %v1605
        %v2474 = vunpack.c.l.b16 %v1606
        %v2475 = vunpack.c.l.b16 %v1607
        %v2476 = vunpack.c.l.b16 %v1608
        %v2477 = vunpack.c.l.b16 %v1609
        %v2478 = vunpack.c.l.b16 %v1610
        %v2479 = vunpack.c.l.b16 %v1611
        %v2480 = vunpack.c.l.b16 %v1612
        %v2481 = vpack.c.b16 %v2466, %v2465
        %v2482 = vpack.c.b16 %v2468, %v2467
        %v2483 = vpack.c.b16 %v2470, %v2469
        %v2484 = vpack.c.b16 %v2472, %v2471
        %v2485 = vpack.c.b16 %v2474, %v2473
        %v2486 = vpack.c.b16 %v2476, %v2475
        %v2487 = vpack.c.b16 %v2478, %v2477
        %v2488 = vpack.c.b16 %v2480, %v2479
        %v2505 = vunpack.c.l.b16 %v1661
        %v2506 = vunpack.c.l.b16 %v1662
        %v2507 = vunpack.c.l.b16 %v1663
        %v2508 = vunpack.c.l.b16 %v1664
        %v2509 = vunpack.c.l.b16 %v1665
        %v2510 = vunpack.c.l.b16 %v1666
        %v2511 = vunpack.c.l.b16 %v1667
        %v2512 = vunpack.c.l.b16 %v1668
        %v2513 = vunpack.c.l.b16 %v1669
        %v2514 = vunpack.c.l.b16 %v1670
        %v2515 = vunpack.c.l.b16 %v1671
        %v2516 = vunpack.c.l.b16 %v1672
        %v2517 = vunpack.c.l.b16 %v1673
        %v2518 = vunpack.c.l.b16 %v1674
        %v2519 = vunpack.c.l.b16 %v1675
        %v2520 = vunpack.c.l.b16 %v1676
        %v2521 = vpack.c.b16 %v2506, %v2505
        %v2522 = vpack.c.b16 %v2508, %v2507
        %v2523 = vpack.c.b16 %v2510, %v2509
        %v2524 = vpack.c.b16 %v2512, %v2511
        %v2525 = vpack.c.b16 %v2514, %v2513
        %v2526 = vpack.c.b16 %v2516, %v2515
        %v2527 = vpack.c.b16 %v2518, %v2517
        %v2528 = vpack.c.b16 %v2520, %v2519
        %v2530 = vsel %vm1853, %v2481, 0
        %v2533 = vsel %vm1853, %v2482, 0
        %v2536 = vsel %vm1853, %v2483, 0
        %v2539 = vsel %vm1853, %v2484, 0
        %v2542 = vsel %vm1853, %v2485, 0
        %v2545 = vsel %vm1853, %v2486, 0
        %v2548 = vsel %vm1853, %v2487, 0
        %v2551 = vsel %vm1853, %v2488, 0
        %v2554 = vsel %vm1853, %v2521, 0
        %v2557 = vsel %vm1853, %v2522, 0
        %v2560 = vsel %vm1853, %v2523, 0
        %v2563 = vsel %vm1853, %v2524, 0
        %v2566 = vsel %vm1853, %v2525, 0
        %v2569 = vsel %vm1853, %v2526, 0
        %v2572 = vsel %vm1853, %v2527, 0
        %v2575 = vsel %vm1853, %v2528, 0
        %2577 = vmatprep.subr.bf16.mxu0 0
        %2578 = vmatpush1.bf16.xpose.msra.mxu0 %v2554
        %2579 = vmatprep.subr.bf16.mxu0 0
        %2580 = vmatpush1.bf16.xpose.msra.mxu0 %v2557
        %2581 = vmatprep.subr.bf16.mxu0 0
        %2582 = vmatpush1.bf16.xpose.msra.mxu0 %v2560
        %2583 = vmatprep.subr.bf16.mxu0 0
        %2584 = vmatpush1.bf16.xpose.msra.mxu0 %v2563
        %2585 = vmatprep.subr.bf16.mxu0 0
        %2586 = vmatpush1.bf16.xpose.msra.mxu0 %v2566
        %2587 = vmatprep.subr.bf16.mxu0 0
        %2588 = vmatpush1.bf16.xpose.msra.mxu0 %v2569
        %2589 = vmatprep.subr.bf16.mxu0 0
        %2590 = vmatpush1.bf16.xpose.msra.mxu0 %v2572
        %2591 = vmatprep.subr.bf16.mxu0 0
        %2592 = vmatpush1.bf16.xpose.msra.mxu0 %v2575
        %2593 = vmatprep.subr.bf16.mxu0 0
        %2594 = vmatpush1.bf16.xpose.msra.mxu0 0
        %2595 = vmatprep.subr.bf16.mxu0 0
        %2596 = vmatpush1.bf16.xpose.msra.mxu0 0
        %2597 = vmatprep.subr.bf16.mxu0 0
        %2598 = vmatpush1.bf16.xpose.msra.mxu0 0
        %2599 = vmatprep.subr.bf16.mxu0 0
        %2600 = vmatpush1.bf16.xpose.msra.mxu0 0
        %2601 = vmatprep.subr.bf16.mxu0 0
        %2602 = vmatpush1.bf16.xpose.msra.mxu0 0
        %2603 = vmatprep.subr.bf16.mxu0 0
        %2604 = vmatpush1.bf16.xpose.msra.mxu0 0
        %2605 = vmatprep.subr.bf16.mxu0 0
        %2606 = vmatpush1.bf16.xpose.msra.mxu0 0
        %2607 = vmatprep.subr.bf16.mxu0 0
        %2608 = vmatpush1.bf16.xpose.msra.mxu0 0
        %2609 = vmatprep.mubr.bf16.mxu0 0
        %2610 = vmatmul.mubr.bf16.gmra.mrb[0].mxu0 %v2530
        %v2611 = vpop.f32.mrb[0].mxu0
        %v2612 = vadd.f32 0.0, %v2611
        %v2613 = vpop.f32.mrb[0].mxu0
        %v2614 = vpop.f32.mrb[0].mxu0
        %v2615 = vadd.f32 0.0, %v2614
        %v2616 = vpop.f32.mrb[0].mxu0
        %2617 = vmatprep.mubr.bf16.mxu0 0
        %2618 = vmatmul.mubr.bf16.gmra.mrb[0].mxu0 %v2533
        %v2619 = vpop.f32.mrb[0].mxu0
        %v2620 = vadd.f32 0.0, %v2619
        %v2621 = vpop.f32.mrb[0].mxu0
        %v2622 = vpop.f32.mrb[0].mxu0
        %v2623 = vadd.f32 0.0, %v2622
        %v2624 = vpop.f32.mrb[0].mxu0
        %2625 = vmatprep.mubr.bf16.mxu0 0
        %2626 = vmatmul.mubr.bf16.gmra.mrb[0].mxu0 %v2536
        %v2627 = vpop.f32.mrb[0].mxu0
        %v2628 = vadd.f32 0.0, %v2627
        %v2629 = vpop.f32.mrb[0].mxu0
        %v2630 = vpop.f32.mrb[0].mxu0
        %v2631 = vadd.f32 0.0, %v2630
        %v2632 = vpop.f32.mrb[0].mxu0
        %2633 = vmatprep.mubr.bf16.mxu0 0
        %2634 = vmatmul.mubr.bf16.gmra.mrb[0].mxu0 %v2539
        %v2635 = vpop.f32.mrb[0].mxu0
        %v2636 = vadd.f32 0.0, %v2635
        %v2637 = vpop.f32.mrb[0].mxu0
        %v2638 = vpop.f32.mrb[0].mxu0
        %v2639 = vadd.f32 0.0, %v2638
        %v2640 = vpop.f32.mrb[0].mxu0
        %2641 = vmatprep.mubr.bf16.mxu0 0
        %2642 = vmatmul.mubr.bf16.gmra.mrb[0].mxu0 %v2542
        %v2643 = vpop.f32.mrb[0].mxu0
        %v2644 = vadd.f32 0.0, %v2643
        %v2645 = vpop.f32.mrb[0].mxu0
        %v2646 = vpop.f32.mrb[0].mxu0
        %v2647 = vadd.f32 0.0, %v2646
        %v2648 = vpop.f32.mrb[0].mxu0
        %2649 = vmatprep.mubr.bf16.mxu0 0
        %2650 = vmatmul.mubr.bf16.gmra.mrb[0].mxu0 %v2545
        %v2651 = vpop.f32.mrb[0].mxu0
        %v2652 = vadd.f32 0.0, %v2651
        %v2653 = vpop.f32.mrb[0].mxu0
        %v2654 = vpop.f32.mrb[0].mxu0
        %v2655 = vadd.f32 0.0, %v2654
        %v2656 = vpop.f32.mrb[0].mxu0
        %2657 = vmatprep.mubr.bf16.mxu0 0
        %2658 = vmatmul.mubr.bf16.gmra.mrb[0].mxu0 %v2548
        %v2659 = vpop.f32.mrb[0].mxu0
        %v2660 = vadd.f32 0.0, %v2659
        %v2661 = vpop.f32.mrb[0].mxu0
        %v2662 = vpop.f32.mrb[0].mxu0
        %v2663 = vadd.f32 0.0, %v2662
        %v2664 = vpop.f32.mrb[0].mxu0
        %2665 = vmatprep.mubr.bf16.mxu0 0
        %2666 = vmatmul.mubr.bf16.gmra.mrb[0].mxu0 %v2551
        %v2667 = vpop.f32.mrb[0].mxu0
        %v2668 = vadd.f32 0.0, %v2667
        %v2669 = vpop.f32.mrb[0].mxu0
        %v2670 = vpop.f32.mrb[0].mxu0
        %v2671 = vadd.f32 0.0, %v2670
        %v2672 = vpop.f32.mrb[0].mxu0
        %2673 = vdwg.mxu0
        %v2674 = vmul.f32 %v1937, 0.35355338
        %v2675 = vmul.f32 %v1940, 0.35355338
        %v2676 = vmul.f32 %v1945, 0.35355338
        %v2677 = vmul.f32 %v1948, 0.35355338
        %v2678 = vmul.f32 %v1953, 0.35355338
        %v2679 = vmul.f32 %v1956, 0.35355338
        %v2680 = vmul.f32 %v1961, 0.35355338
        %v2681 = vmul.f32 %v1964, 0.35355338
        %v2682 = vmul.f32 %v1969, 0.35355338
        %v2683 = vmul.f32 %v1972, 0.35355338
        %v2684 = vmul.f32 %v1977, 0.35355338
        %v2685 = vmul.f32 %v1980, 0.35355338
        %v2686 = vmul.f32 %v1985, 0.35355338
        %v2687 = vmul.f32 %v1988, 0.35355338
        %v2688 = vmul.f32 %v1993, 0.35355338
        %v2689 = vmul.f32 %v1996, 0.35355338
        %v2690 = vmul.f32 %v2162, 0.35355338
        %v2691 = vmul.f32 %v2165, 0.35355338
        %v2692 = vmul.f32 %v2170, 0.35355338
        %v2693 = vmul.f32 %v2173, 0.35355338
        %v2694 = vmul.f32 %v2178, 0.35355338
        %v2695 = vmul.f32 %v2181, 0.35355338
        %v2696 = vmul.f32 %v2186, 0.35355338
        %v2697 = vmul.f32 %v2189, 0.35355338
        %v2698 = vmul.f32 %v2194, 0.35355338
        %v2699 = vmul.f32 %v2197, 0.35355338
        %v2700 = vmul.f32 %v2202, 0.35355338
        %v2701 = vmul.f32 %v2205, 0.35355338
        %v2702 = vmul.f32 %v2210, 0.35355338
        %v2703 = vmul.f32 %v2213, 0.35355338
        %v2704 = vmul.f32 %v2218, 0.35355338
        %v2705 = vmul.f32 %v2221, 0.35355338
        %v2706 = vmul.f32 %v2387, 0.35355338
        %v2707 = vmul.f32 %v2390, 0.35355338
        %v2708 = vmul.f32 %v2395, 0.35355338
        %v2709 = vmul.f32 %v2398, 0.35355338
        %v2710 = vmul.f32 %v2403, 0.35355338
        %v2711 = vmul.f32 %v2406, 0.35355338
        %v2712 = vmul.f32 %v2411, 0.35355338
        %v2713 = vmul.f32 %v2414, 0.35355338
        %v2714 = vmul.f32 %v2419, 0.35355338
        %v2715 = vmul.f32 %v2422, 0.35355338
        %v2716 = vmul.f32 %v2427, 0.35355338
        %v2717 = vmul.f32 %v2430, 0.35355338
        %v2718 = vmul.f32 %v2435, 0.35355338
        %v2719 = vmul.f32 %v2438, 0.35355338
        %v2720 = vmul.f32 %v2443, 0.35355338
        %v2721 = vmul.f32 %v2446, 0.35355338
        %v2722 = vmul.f32 %v2612, 0.35355338
        %v2723 = vmul.f32 %v2615, 0.35355338
        %v2724 = vmul.f32 %v2620, 0.35355338
        %v2725 = vmul.f32 %v2623, 0.35355338
        %v2726 = vmul.f32 %v2628, 0.35355338
        %v2727 = vmul.f32 %v2631, 0.35355338
        %v2728 = vmul.f32 %v2636, 0.35355338
        %v2729 = vmul.f32 %v2639, 0.35355338
        %v2730 = vmul.f32 %v2644, 0.35355338
        %v2731 = vmul.f32 %v2647, 0.35355338
        %v2732 = vmul.f32 %v2652, 0.35355338
        %v2733 = vmul.f32 %v2655, 0.35355338
        %v2734 = vmul.f32 %v2660, 0.35355338
        %v2735 = vmul.f32 %v2663, 0.35355338
        %v2736 = vmul.f32 %v2668, 0.35355338
        %v2737 = vmul.f32 %v2671, 0.35355338
        %v2738 = vadd.f32 %v2674, %v1757
        %v2739 = vadd.f32 %v2675, %v1758
        %v2740 = vadd.f32 %v2676, %v1759
        %v2741 = vadd.f32 %v2677, %v1760
        %v2742 = vadd.f32 %v2678, %v1761
        %v2743 = vadd.f32 %v2679, %v1762
        %v2744 = vadd.f32 %v2680, %v1763
        %v2745 = vadd.f32 %v2681, %v1764
        %v2746 = vadd.f32 %v2682, %v1765
        %v2747 = vadd.f32 %v2683, %v1766
        %v2748 = vadd.f32 %v2684, %v1767
        %v2749 = vadd.f32 %v2685, %v1768
        %v2750 = vadd.f32 %v2686, %v1769
        %v2751 = vadd.f32 %v2687, %v1770
        %v2752 = vadd.f32 %v2688, %v1771
        %v2753 = vadd.f32 %v2689, %v1772
        %v2754 = vadd.f32 %v2690, %v1757
        %v2755 = vadd.f32 %v2691, %v1758
        %v2756 = vadd.f32 %v2692, %v1759
        %v2757 = vadd.f32 %v2693, %v1760
        %v2758 = vadd.f32 %v2694, %v1761
        %v2759 = vadd.f32 %v2695, %v1762
        %v2760 = vadd.f32 %v2696, %v1763
        %v2761 = vadd.f32 %v2697, %v1764
        %v2762 = vadd.f32 %v2698, %v1765
        %v2763 = vadd.f32 %v2699, %v1766
        %v2764 = vadd.f32 %v2700, %v1767
        %v2765 = vadd.f32 %v2701, %v1768
        %v2766 = vadd.f32 %v2702, %v1769
        %v2767 = vadd.f32 %v2703, %v1770
        %v2768 = vadd.f32 %v2704, %v1771
        %v2769 = vadd.f32 %v2705, %v1772
        %v2770 = vadd.f32 %v2706, %v1757
        %v2771 = vadd.f32 %v2707, %v1758
        %v2772 = vadd.f32 %v2708, %v1759
        %v2773 = vadd.f32 %v2709, %v1760
        %v2774 = vadd.f32 %v2710, %v1761
        %v2775 = vadd.f32 %v2711, %v1762
        %v2776 = vadd.f32 %v2712, %v1763
        %v2777 = vadd.f32 %v2713, %v1764
        %v2778 = vadd.f32 %v2714, %v1765
        %v2779 = vadd.f32 %v2715, %v1766
        %v2780 = vadd.f32 %v2716, %v1767
        %v2781 = vadd.f32 %v2717, %v1768
        %v2782 = vadd.f32 %v2718, %v1769
        %v2783 = vadd.f32 %v2719, %v1770
        %v2784 = vadd.f32 %v2720, %v1771
        %v2785 = vadd.f32 %v2721, %v1772
        %v2786 = vadd.f32 %v2722, %v1757
        %v2787 = vadd.f32 %v2723, %v1758
        %v2788 = vadd.f32 %v2724, %v1759
        %v2789 = vadd.f32 %v2725, %v1760
        %v2790 = vadd.f32 %v2726, %v1761
        %v2791 = vadd.f32 %v2727, %v1762
        %v2792 = vadd.f32 %v2728, %v1763
        %v2793 = vadd.f32 %v2729, %v1764
        %v2794 = vadd.f32 %v2730, %v1765
        %v2795 = vadd.f32 %v2731, %v1766
        %v2796 = vadd.f32 %v2732, %v1767
        %v2797 = vadd.f32 %v2733, %v1768
        %v2798 = vadd.f32 %v2734, %v1769
        %v2799 = vadd.f32 %v2735, %v1770
        %v2800 = vadd.f32 %v2736, %v1771
        %v2801 = vadd.f32 %v2737, %v1772
        %v2802 = vld [vmem:[#allocation2] sm:$0xff]
        %v2803 = vld [vmem:[#allocation2 + $0x8] sm:$0xff]
        %v2804 = vld [vmem:[#allocation2 + $0x10] sm:$0xff]
        %v2805 = vld [vmem:[#allocation2 + $0x18] sm:$0xff]
        %v2806 = vld [vmem:[#allocation2 + $0x20] sm:$0xff]
        %v2807 = vld [vmem:[#allocation2 + $0x28] sm:$0xff]
        %v2808 = vld [vmem:[#allocation2 + $0x30] sm:$0xff]
        %v2809 = vld [vmem:[#allocation2 + $0x38] sm:$0xff]
        %v2810 = vld [vmem:[#allocation2 + $0x40] sm:$0xff]
        %v2811 = vld [vmem:[#allocation2 + $0x48] sm:$0xff]
        %v2812 = vld [vmem:[#allocation2 + $0x50] sm:$0xff]
        %v2813 = vld [vmem:[#allocation2 + $0x58] sm:$0xff]
        %v2814 = vld [vmem:[#allocation2 + $0x60] sm:$0xff]
        %v2815 = vld [vmem:[#allocation2 + $0x68] sm:$0xff]
        %v2816 = vld [vmem:[#allocation2 + $0x70] sm:$0xff]
        %v2817 = vld [vmem:[#allocation2 + $0x78] sm:$0xff]
        %v2818 = vld [vmem:[#allocation2 + $0x80] sm:$0xff]
        %v2819 = vld [vmem:[#allocation2 + $0x88] sm:$0xff]
        %v2820 = vld [vmem:[#allocation2 + $0x90] sm:$0xff]
        %v2821 = vld [vmem:[#allocation2 + $0x98] sm:$0xff]
        %v2822 = vld [vmem:[#allocation2 + $0xa0] sm:$0xff]
        %v2823 = vld [vmem:[#allocation2 + $0xa8] sm:$0xff]
        %v2824 = vld [vmem:[#allocation2 + $0xb0] sm:$0xff]
        %v2825 = vld [vmem:[#allocation2 + $0xb8] sm:$0xff]
        %v2826 = vld [vmem:[#allocation2 + $0xc0] sm:$0xff]
        %v2827 = vld [vmem:[#allocation2 + $0xc8] sm:$0xff]
        %v2828 = vld [vmem:[#allocation2 + $0xd0] sm:$0xff]
        %v2829 = vld [vmem:[#allocation2 + $0xd8] sm:$0xff]
        %v2830 = vld [vmem:[#allocation2 + $0xe0] sm:$0xff]
        %v2831 = vld [vmem:[#allocation2 + $0xe8] sm:$0xff]
        %v2832 = vld [vmem:[#allocation2 + $0xf0] sm:$0xff]
        %v2833 = vld [vmem:[#allocation2 + $0xf8] sm:$0xff]
        %v2834 = vld [vmem:[#allocation2 + $0x100] sm:$0xff]
        %v2835 = vld [vmem:[#allocation2 + $0x108] sm:$0xff]
        %v2836 = vld [vmem:[#allocation2 + $0x110] sm:$0xff]
        %v2837 = vld [vmem:[#allocation2 + $0x118] sm:$0xff]
        %v2838 = vld [vmem:[#allocation2 + $0x120] sm:$0xff]
        %v2839 = vld [vmem:[#allocation2 + $0x128] sm:$0xff]
        %v2840 = vld [vmem:[#allocation2 + $0x130] sm:$0xff]
        %v2841 = vld [vmem:[#allocation2 + $0x138] sm:$0xff]
        %v2842 = vld [vmem:[#allocation2 + $0x140] sm:$0xff]
        %v2843 = vld [vmem:[#allocation2 + $0x148] sm:$0xff]
        %v2844 = vld [vmem:[#allocation2 + $0x150] sm:$0xff]
        %v2845 = vld [vmem:[#allocation2 + $0x158] sm:$0xff]
        %v2846 = vld [vmem:[#allocation2 + $0x160] sm:$0xff]
        %v2847 = vld [vmem:[#allocation2 + $0x168] sm:$0xff]
        %v2848 = vld [vmem:[#allocation2 + $0x170] sm:$0xff]
        %v2849 = vld [vmem:[#allocation2 + $0x178] sm:$0xff]
        %v2850 = vld [vmem:[#allocation2 + $0x180] sm:$0xff]
        %v2851 = vld [vmem:[#allocation2 + $0x188] sm:$0xff]
        %v2852 = vld [vmem:[#allocation2 + $0x190] sm:$0xff]
        %v2853 = vld [vmem:[#allocation2 + $0x198] sm:$0xff]
        %v2854 = vld [vmem:[#allocation2 + $0x1a0] sm:$0xff]
        %v2855 = vld [vmem:[#allocation2 + $0x1a8] sm:$0xff]
        %v2856 = vld [vmem:[#allocation2 + $0x1b0] sm:$0xff]
        %v2857 = vld [vmem:[#allocation2 + $0x1b8] sm:$0xff]
        %v2858 = vld [vmem:[#allocation2 + $0x1c0] sm:$0xff]
        %v2859 = vld [vmem:[#allocation2 + $0x1c8] sm:$0xff]
        %v2860 = vld [vmem:[#allocation2 + $0x1d0] sm:$0xff]
        %v2861 = vld [vmem:[#allocation2 + $0x1d8] sm:$0xff]
        %v2862 = vld [vmem:[#allocation2 + $0x1e0] sm:$0xff]
        %v2863 = vld [vmem:[#allocation2 + $0x1e8] sm:$0xff]
        %v2864 = vld [vmem:[#allocation2 + $0x1f0] sm:$0xff]
        %v2865 = vld [vmem:[#allocation2 + $0x1f8] sm:$0xff]
        %2866 = vmax.xlane.f32.xlu0 %v2738
        %v2867 = vpop.xlane.xlu0 %2866
        %2868 = vmax.xlane.f32.xlu0 %v2739
        %v2869 = vpop.xlane.xlu0 %2868
        %2870 = vmax.xlane.f32.xlu0 %v2740
        %v2871 = vpop.xlane.xlu0 %2870
        %2872 = vmax.xlane.f32.xlu0 %v2741
        %v2873 = vpop.xlane.xlu0 %2872
        %2874 = vmax.xlane.f32.xlu0 %v2742
        %v2875 = vpop.xlane.xlu0 %2874
        %2876 = vmax.xlane.f32.xlu0 %v2743
        %v2877 = vpop.xlane.xlu0 %2876
        %2878 = vmax.xlane.f32.xlu0 %v2744
        %v2879 = vpop.xlane.xlu0 %2878
        %2880 = vmax.xlane.f32.xlu0 %v2745
        %v2881 = vpop.xlane.xlu0 %2880
        %2882 = vmax.xlane.f32.xlu0 %v2746
        %v2883 = vpop.xlane.xlu0 %2882
        %2884 = vmax.xlane.f32.xlu0 %v2747
        %v2885 = vpop.xlane.xlu0 %2884
        %2886 = vmax.xlane.f32.xlu0 %v2748
        %v2887 = vpop.xlane.xlu0 %2886
        %2888 = vmax.xlane.f32.xlu0 %v2749
        %v2889 = vpop.xlane.xlu0 %2888
        %2890 = vmax.xlane.f32.xlu0 %v2750
        %v2891 = vpop.xlane.xlu0 %2890
        %2892 = vmax.xlane.f32.xlu0 %v2751
        %v2893 = vpop.xlane.xlu0 %2892
        %2894 = vmax.xlane.f32.xlu0 %v2752
        %v2895 = vpop.xlane.xlu0 %2894
        %2896 = vmax.xlane.f32.xlu0 %v2753
        %v2897 = vpop.xlane.xlu0 %2896
        %2898 = vmax.xlane.f32.xlu0 %v2754
        %v2899 = vpop.xlane.xlu0 %2898
        %2900 = vmax.xlane.f32.xlu0 %v2755
        %v2901 = vpop.xlane.xlu0 %2900
        %2902 = vmax.xlane.f32.xlu0 %v2756
        %v2903 = vpop.xlane.xlu0 %2902
        %2904 = vmax.xlane.f32.xlu0 %v2757
        %v2905 = vpop.xlane.xlu0 %2904
        %2906 = vmax.xlane.f32.xlu0 %v2758
        %v2907 = vpop.xlane.xlu0 %2906
        %2908 = vmax.xlane.f32.xlu0 %v2759
        %v2909 = vpop.xlane.xlu0 %2908
        %2910 = vmax.xlane.f32.xlu0 %v2760
        %v2911 = vpop.xlane.xlu0 %2910
        %2912 = vmax.xlane.f32.xlu0 %v2761
        %v2913 = vpop.xlane.xlu0 %2912
        %2914 = vmax.xlane.f32.xlu0 %v2762
        %v2915 = vpop.xlane.xlu0 %2914
        %2916 = vmax.xlane.f32.xlu0 %v2763
        %v2917 = vpop.xlane.xlu0 %2916
        %2918 = vmax.xlane.f32.xlu0 %v2764
        %v2919 = vpop.xlane.xlu0 %2918
        %2920 = vmax.xlane.f32.xlu0 %v2765
        %v2921 = vpop.xlane.xlu0 %2920
        %2922 = vmax.xlane.f32.xlu0 %v2766
        %v2923 = vpop.xlane.xlu0 %2922
        %2924 = vmax.xlane.f32.xlu0 %v2767
        %v2925 = vpop.xlane.xlu0 %2924
        %2926 = vmax.xlane.f32.xlu0 %v2768
        %v2927 = vpop.xlane.xlu0 %2926
        %2928 = vmax.xlane.f32.xlu0 %v2769
        %v2929 = vpop.xlane.xlu0 %2928
        %2930 = vmax.xlane.f32.xlu0 %v2770
        %v2931 = vpop.xlane.xlu0 %2930
        %2932 = vmax.xlane.f32.xlu0 %v2771
        %v2933 = vpop.xlane.xlu0 %2932
        %2934 = vmax.xlane.f32.xlu0 %v2772
        %v2935 = vpop.xlane.xlu0 %2934
        %2936 = vmax.xlane.f32.xlu0 %v2773
        %v2937 = vpop.xlane.xlu0 %2936
        %2938 = vmax.xlane.f32.xlu0 %v2774
        %v2939 = vpop.xlane.xlu0 %2938
        %2940 = vmax.xlane.f32.xlu0 %v2775
        %v2941 = vpop.xlane.xlu0 %2940
        %2942 = vmax.xlane.f32.xlu0 %v2776
        %v2943 = vpop.xlane.xlu0 %2942
        %2944 = vmax.xlane.f32.xlu0 %v2777
        %v2945 = vpop.xlane.xlu0 %2944
        %2946 = vmax.xlane.f32.xlu0 %v2778
        %v2947 = vpop.xlane.xlu0 %2946
        %2948 = vmax.xlane.f32.xlu0 %v2779
        %v2949 = vpop.xlane.xlu0 %2948
        %2950 = vmax.xlane.f32.xlu0 %v2780
        %v2951 = vpop.xlane.xlu0 %2950
        %2952 = vmax.xlane.f32.xlu0 %v2781
        %v2953 = vpop.xlane.xlu0 %2952
        %2954 = vmax.xlane.f32.xlu0 %v2782
        %v2955 = vpop.xlane.xlu0 %2954
        %2956 = vmax.xlane.f32.xlu0 %v2783
        %v2957 = vpop.xlane.xlu0 %2956
        %2958 = vmax.xlane.f32.xlu0 %v2784
        %v2959 = vpop.xlane.xlu0 %2958
        %2960 = vmax.xlane.f32.xlu0 %v2785
        %v2961 = vpop.xlane.xlu0 %2960
        %2962 = vmax.xlane.f32.xlu0 %v2786
        %v2963 = vpop.xlane.xlu0 %2962
        %2964 = vmax.xlane.f32.xlu0 %v2787
        %v2965 = vpop.xlane.xlu0 %2964
        %2966 = vmax.xlane.f32.xlu0 %v2788
        %v2967 = vpop.xlane.xlu0 %2966
        %2968 = vmax.xlane.f32.xlu0 %v2789
        %v2969 = vpop.xlane.xlu0 %2968
        %2970 = vmax.xlane.f32.xlu0 %v2790
        %v2971 = vpop.xlane.xlu0 %2970
        %2972 = vmax.xlane.f32.xlu0 %v2791
        %v2973 = vpop.xlane.xlu0 %2972
        %2974 = vmax.xlane.f32.xlu0 %v2792
        %v2975 = vpop.xlane.xlu0 %2974
        %2976 = vmax.xlane.f32.xlu0 %v2793
        %v2977 = vpop.xlane.xlu0 %2976
        %2978 = vmax.xlane.f32.xlu0 %v2794
        %v2979 = vpop.xlane.xlu0 %2978
        %2980 = vmax.xlane.f32.xlu0 %v2795
        %v2981 = vpop.xlane.xlu0 %2980
        %2982 = vmax.xlane.f32.xlu0 %v2796
        %v2983 = vpop.xlane.xlu0 %2982
        %2984 = vmax.xlane.f32.xlu0 %v2797
        %v2985 = vpop.xlane.xlu0 %2984
        %2986 = vmax.xlane.f32.xlu0 %v2798
        %v2987 = vpop.xlane.xlu0 %2986
        %2988 = vmax.xlane.f32.xlu0 %v2799
        %v2989 = vpop.xlane.xlu0 %2988
        %2990 = vmax.xlane.f32.xlu0 %v2800
        %v2991 = vpop.xlane.xlu0 %2990
        %2992 = vmax.xlane.f32.xlu0 %v2801
        %v2993 = vpop.xlane.xlu0 %2992
        %v2994 = vmax.f32 %v2802, %v2867
        %v2995 = vmax.f32 %v2803, %v2869
        %v2996 = vmax.f32 %v2804, %v2871
        %v2997 = vmax.f32 %v2805, %v2873
        %v2998 = vmax.f32 %v2806, %v2875
        %v2999 = vmax.f32 %v2807, %v2877
        %v3000 = vmax.f32 %v2808, %v2879
        %v3001 = vmax.f32 %v2809, %v2881
        %v3002 = vmax.f32 %v2810, %v2883
        %v3003 = vmax.f32 %v2811, %v2885
        %v3004 = vmax.f32 %v2812, %v2887
        %v3005 = vmax.f32 %v2813, %v2889
        %v3006 = vmax.f32 %v2814, %v2891
        %v3007 = vmax.f32 %v2815, %v2893
        %v3008 = vmax.f32 %v2816, %v2895
        %v3009 = vmax.f32 %v2817, %v2897
        %v3010 = vmax.f32 %v2818, %v2899
        %v3011 = vmax.f32 %v2819, %v2901
        %v3012 = vmax.f32 %v2820, %v2903
        %v3013 = vmax.f32 %v2821, %v2905
        %v3014 = vmax.f32 %v2822, %v2907
        %v3015 = vmax.f32 %v2823, %v2909
        %v3016 = vmax.f32 %v2824, %v2911
        %v3017 = vmax.f32 %v2825, %v2913
        %v3018 = vmax.f32 %v2826, %v2915
        %v3019 = vmax.f32 %v2827, %v2917
        %v3020 = vmax.f32 %v2828, %v2919
        %v3021 = vmax.f32 %v2829, %v2921
        %v3022 = vmax.f32 %v2830, %v2923
        %v3023 = vmax.f32 %v2831, %v2925
        %v3024 = vmax.f32 %v2832, %v2927
        %v3025 = vmax.f32 %v2833, %v2929
        %v3026 = vmax.f32 %v2834, %v2931
        %v3027 = vmax.f32 %v2835, %v2933
        %v3028 = vmax.f32 %v2836, %v2935
        %v3029 = vmax.f32 %v2837, %v2937
        %v3030 = vmax.f32 %v2838, %v2939
        %v3031 = vmax.f32 %v2839, %v2941
        %v3032 = vmax.f32 %v2840, %v2943
        %v3033 = vmax.f32 %v2841, %v2945
        %v3034 = vmax.f32 %v2842, %v2947
        %v3035 = vmax.f32 %v2843, %v2949
        %v3036 = vmax.f32 %v2844, %v2951
        %v3037 = vmax.f32 %v2845, %v2953
        %v3038 = vmax.f32 %v2846, %v2955
        %v3039 = vmax.f32 %v2847, %v2957
        %v3040 = vmax.f32 %v2848, %v2959
        %v3041 = vmax.f32 %v2849, %v2961
        %v3042 = vmax.f32 %v2850, %v2963
        %v3043 = vmax.f32 %v2851, %v2965
        %v3044 = vmax.f32 %v2852, %v2967
        %v3045 = vmax.f32 %v2853, %v2969
        %v3046 = vmax.f32 %v2854, %v2971
        %v3047 = vmax.f32 %v2855, %v2973
        %v3048 = vmax.f32 %v2856, %v2975
        %v3049 = vmax.f32 %v2857, %v2977
        %v3050 = vmax.f32 %v2858, %v2979
        %v3051 = vmax.f32 %v2859, %v2981
        %v3052 = vmax.f32 %v2860, %v2983
        %v3053 = vmax.f32 %v2861, %v2985
        %v3054 = vmax.f32 %v2862, %v2987
        %v3055 = vmax.f32 %v2863, %v2989
        %v3056 = vmax.f32 %v2864, %v2991
        %v3057 = vmax.f32 %v2865, %v2993
        %v3058 = vsub.f32 %v2802, %v2994
        %v3059 = vsub.f32 %v2803, %v2995
        %v3060 = vsub.f32 %v2804, %v2996
        %v3061 = vsub.f32 %v2805, %v2997
        %v3062 = vsub.f32 %v2806, %v2998
        %v3063 = vsub.f32 %v2807, %v2999
        %v3064 = vsub.f32 %v2808, %v3000
        %v3065 = vsub.f32 %v2809, %v3001
        %v3066 = vsub.f32 %v2810, %v3002
        %v3067 = vsub.f32 %v2811, %v3003
        %v3068 = vsub.f32 %v2812, %v3004
        %v3069 = vsub.f32 %v2813, %v3005
        %v3070 = vsub.f32 %v2814, %v3006
        %v3071 = vsub.f32 %v2815, %v3007
        %v3072 = vsub.f32 %v2816, %v3008
        %v3073 = vsub.f32 %v2817, %v3009
        %v3074 = vsub.f32 %v2818, %v3010
        %v3075 = vsub.f32 %v2819, %v3011
        %v3076 = vsub.f32 %v2820, %v3012
        %v3077 = vsub.f32 %v2821, %v3013
        %v3078 = vsub.f32 %v2822, %v3014
        %v3079 = vsub.f32 %v2823, %v3015
        %v3080 = vsub.f32 %v2824, %v3016
        %v3081 = vsub.f32 %v2825, %v3017
        %v3082 = vsub.f32 %v2826, %v3018
        %v3083 = vsub.f32 %v2827, %v3019
        %v3084 = vsub.f32 %v2828, %v3020
        %v3085 = vsub.f32 %v2829, %v3021
        %v3086 = vsub.f32 %v2830, %v3022
        %v3087 = vsub.f32 %v2831, %v3023
        %v3088 = vsub.f32 %v2832, %v3024
        %v3089 = vsub.f32 %v2833, %v3025
        %v3090 = vsub.f32 %v2834, %v3026
        %v3091 = vsub.f32 %v2835, %v3027
        %v3092 = vsub.f32 %v2836, %v3028
        %v3093 = vsub.f32 %v2837, %v3029
        %v3094 = vsub.f32 %v2838, %v3030
        %v3095 = vsub.f32 %v2839, %v3031
        %v3096 = vsub.f32 %v2840, %v3032
        %v3097 = vsub.f32 %v2841, %v3033
        %v3098 = vsub.f32 %v2842, %v3034
        %v3099 = vsub.f32 %v2843, %v3035
        %v3100 = vsub.f32 %v2844, %v3036
        %v3101 = vsub.f32 %v2845, %v3037
        %v3102 = vsub.f32 %v2846, %v3038
        %v3103 = vsub.f32 %v2847, %v3039
        %v3104 = vsub.f32 %v2848, %v3040
        %v3105 = vsub.f32 %v2849, %v3041
        %v3106 = vsub.f32 %v2850, %v3042
        %v3107 = vsub.f32 %v2851, %v3043
        %v3108 = vsub.f32 %v2852, %v3044
        %v3109 = vsub.f32 %v2853, %v3045
        %v3110 = vsub.f32 %v2854, %v3046
        %v3111 = vsub.f32 %v2855, %v3047
        %v3112 = vsub.f32 %v2856, %v3048
        %v3113 = vsub.f32 %v2857, %v3049
        %v3114 = vsub.f32 %v2858, %v3050
        %v3115 = vsub.f32 %v2859, %v3051
        %v3116 = vsub.f32 %v2860, %v3052
        %v3117 = vsub.f32 %v2861, %v3053
        %v3118 = vsub.f32 %v2862, %v3054
        %v3119 = vsub.f32 %v2863, %v3055
        %v3120 = vsub.f32 %v2864, %v3056
        %v3121 = vsub.f32 %v2865, %v3057
        %v3122 = vmul.f32 %v3058, 1.442695
        %v3123 = vpow.pop %v3122
        %v3124 = vmul.f32 %v3059, 1.442695
        %v3125 = vpow.pop %v3124
        %v3126 = vmul.f32 %v3060, 1.442695
        %v3127 = vpow.pop %v3126
        %v3128 = vmul.f32 %v3061, 1.442695
        %v3129 = vpow.pop %v3128
        %v3130 = vmul.f32 %v3062, 1.442695
        %v3131 = vpow.pop %v3130
        %v3132 = vmul.f32 %v3063, 1.442695
        %v3133 = vpow.pop %v3132
        %v3134 = vmul.f32 %v3064, 1.442695
        %v3135 = vpow.pop %v3134
        %v3136 = vmul.f32 %v3065, 1.442695
        %v3137 = vpow.pop %v3136
        %v3138 = vmul.f32 %v3066, 1.442695
        %v3139 = vpow.pop %v3138
        %v3140 = vmul.f32 %v3067, 1.442695
        %v3141 = vpow.pop %v3140
        %v3142 = vmul.f32 %v3068, 1.442695
        %v3143 = vpow.pop %v3142
        %v3144 = vmul.f32 %v3069, 1.442695
        %v3145 = vpow.pop %v3144
        %v3146 = vmul.f32 %v3070, 1.442695
        %v3147 = vpow.pop %v3146
        %v3148 = vmul.f32 %v3071, 1.442695
        %v3149 = vpow.pop %v3148
        %v3150 = vmul.f32 %v3072, 1.442695
        %v3151 = vpow.pop %v3150
        %v3152 = vmul.f32 %v3073, 1.442695
        %v3153 = vpow.pop %v3152
        %v3154 = vmul.f32 %v3074, 1.442695
        %v3155 = vpow.pop %v3154
        %v3156 = vmul.f32 %v3075, 1.442695
        %v3157 = vpow.pop %v3156
        %v3158 = vmul.f32 %v3076, 1.442695
        %v3159 = vpow.pop %v3158
        %v3160 = vmul.f32 %v3077, 1.442695
        %v3161 = vpow.pop %v3160
        %v3162 = vmul.f32 %v3078, 1.442695
        %v3163 = vpow.pop %v3162
        %v3164 = vmul.f32 %v3079, 1.442695
        %v3165 = vpow.pop %v3164
        %v3166 = vmul.f32 %v3080, 1.442695
        %v3167 = vpow.pop %v3166
        %v3168 = vmul.f32 %v3081, 1.442695
        %v3169 = vpow.pop %v3168
        %v3170 = vmul.f32 %v3082, 1.442695
        %v3171 = vpow.pop %v3170
        %v3172 = vmul.f32 %v3083, 1.442695
        %v3173 = vpow.pop %v3172
        %v3174 = vmul.f32 %v3084, 1.442695
        %v3175 = vpow.pop %v3174
        %v3176 = vmul.f32 %v3085, 1.442695
        %v3177 = vpow.pop %v3176
        %v3178 = vmul.f32 %v3086, 1.442695
        %v3179 = vpow.pop %v3178
        %v3180 = vmul.f32 %v3087, 1.442695
        %v3181 = vpow.pop %v3180
        %v3182 = vmul.f32 %v3088, 1.442695
        %v3183 = vpow.pop %v3182
        %v3184 = vmul.f32 %v3089, 1.442695
        %v3185 = vpow.pop %v3184
        %v3186 = vmul.f32 %v3090, 1.442695
        %v3187 = vpow.pop %v3186
        %v3188 = vmul.f32 %v3091, 1.442695
        %v3189 = vpow.pop %v3188
        %v3190 = vmul.f32 %v3092, 1.442695
        %v3191 = vpow.pop %v3190
        %v3192 = vmul.f32 %v3093, 1.442695
        %v3193 = vpow.pop %v3192
        %v3194 = vmul.f32 %v3094, 1.442695
        %v3195 = vpow.pop %v3194
        %v3196 = vmul.f32 %v3095, 1.442695
        %v3197 = vpow.pop %v3196
        %v3198 = vmul.f32 %v3096, 1.442695
        %v3199 = vpow.pop %v3198
        %v3200 = vmul.f32 %v3097, 1.442695
        %v3201 = vpow.pop %v3200
        %v3202 = vmul.f32 %v3098, 1.442695
        %v3203 = vpow.pop %v3202
        %v3204 = vmul.f32 %v3099, 1.442695
        %v3205 = vpow.pop %v3204
        %v3206 = vmul.f32 %v3100, 1.442695
        %v3207 = vpow.pop %v3206
        %v3208 = vmul.f32 %v3101, 1.442695
        %v3209 = vpow.pop %v3208
        %v3210 = vmul.f32 %v3102, 1.442695
        %v3211 = vpow.pop %v3210
        %v3212 = vmul.f32 %v3103, 1.442695
        %v3213 = vpow.pop %v3212
        %v3214 = vmul.f32 %v3104, 1.442695
        %v3215 = vpow.pop %v3214
        %v3216 = vmul.f32 %v3105, 1.442695
        %v3217 = vpow.pop %v3216
        %v3218 = vmul.f32 %v3106, 1.442695
        %v3219 = vpow.pop %v3218
        %v3220 = vmul.f32 %v3107, 1.442695
        %v3221 = vpow.pop %v3220
        %v3222 = vmul.f32 %v3108, 1.442695
        %v3223 = vpow.pop %v3222
        %v3224 = vmul.f32 %v3109, 1.442695
        %v3225 = vpow.pop %v3224
        %v3226 = vmul.f32 %v3110, 1.442695
        %v3227 = vpow.pop %v3226
        %v3228 = vmul.f32 %v3111, 1.442695
        %v3229 = vpow.pop %v3228
        %v3230 = vmul.f32 %v3112, 1.442695
        %v3231 = vpow.pop %v3230
        %v3232 = vmul.f32 %v3113, 1.442695
        %v3233 = vpow.pop %v3232
        %v3234 = vmul.f32 %v3114, 1.442695
        %v3235 = vpow.pop %v3234
        %v3236 = vmul.f32 %v3115, 1.442695
        %v3237 = vpow.pop %v3236
        %v3238 = vmul.f32 %v3116, 1.442695
        %v3239 = vpow.pop %v3238
        %v3240 = vmul.f32 %v3117, 1.442695
        %v3241 = vpow.pop %v3240
        %v3242 = vmul.f32 %v3118, 1.442695
        %v3243 = vpow.pop %v3242
        %v3244 = vmul.f32 %v3119, 1.442695
        %v3245 = vpow.pop %v3244
        %v3246 = vmul.f32 %v3120, 1.442695
        %v3247 = vpow.pop %v3246
        %v3248 = vmul.f32 %v3121, 1.442695
        %v3249 = vpow.pop %v3248
        %3251 = vset.pattern.permute.xlu0 0
        %3252 = vperm.xlu0 %3251, %v2994
        %v3253 = vpop.permute.xlu0 %3252
        %3256 = vset.pattern.permute.xlu0 0
        %3257 = vperm.xlu0 %3256, %v2995
        %v3258 = vpop.permute.xlu0 %3257
        %3261 = vset.pattern.permute.xlu0 0
        %3262 = vperm.xlu0 %3261, %v2996
        %v3263 = vpop.permute.xlu0 %3262
        %3266 = vset.pattern.permute.xlu0 0
        %3267 = vperm.xlu0 %3266, %v2997
        %v3268 = vpop.permute.xlu0 %3267
        %3271 = vset.pattern.permute.xlu0 0
        %3272 = vperm.xlu0 %3271, %v2998
        %v3273 = vpop.permute.xlu0 %3272
        %3276 = vset.pattern.permute.xlu0 0
        %3277 = vperm.xlu0 %3276, %v2999
        %v3278 = vpop.permute.xlu0 %3277
        %3281 = vset.pattern.permute.xlu0 0
        %3282 = vperm.xlu0 %3281, %v3000
        %v3283 = vpop.permute.xlu0 %3282
        %3286 = vset.pattern.permute.xlu0 0
        %3287 = vperm.xlu0 %3286, %v3001
        %v3288 = vpop.permute.xlu0 %3287
        %3291 = vset.pattern.permute.xlu0 0
        %3292 = vperm.xlu0 %3291, %v3002
        %v3293 = vpop.permute.xlu0 %3292
        %3296 = vset.pattern.permute.xlu0 0
        %3297 = vperm.xlu0 %3296, %v3003
        %v3298 = vpop.permute.xlu0 %3297
        %3301 = vset.pattern.permute.xlu0 0
        %3302 = vperm.xlu0 %3301, %v3004
        %v3303 = vpop.permute.xlu0 %3302
        %3306 = vset.pattern.permute.xlu0 0
        %3307 = vperm.xlu0 %3306, %v3005
        %v3308 = vpop.permute.xlu0 %3307
        %3311 = vset.pattern.permute.xlu0 0
        %3312 = vperm.xlu0 %3311, %v3006
        %v3313 = vpop.permute.xlu0 %3312
        %3316 = vset.pattern.permute.xlu0 0
        %3317 = vperm.xlu0 %3316, %v3007
        %v3318 = vpop.permute.xlu0 %3317
        %3321 = vset.pattern.permute.xlu0 0
        %3322 = vperm.xlu0 %3321, %v3008
        %v3323 = vpop.permute.xlu0 %3322
        %3326 = vset.pattern.permute.xlu0 0
        %3327 = vperm.xlu0 %3326, %v3009
        %v3328 = vpop.permute.xlu0 %3327
        %3331 = vset.pattern.permute.xlu0 0
        %3332 = vperm.xlu0 %3331, %v3010
        %v3333 = vpop.permute.xlu0 %3332
        %3336 = vset.pattern.permute.xlu0 0
        %3337 = vperm.xlu0 %3336, %v3011
        %v3338 = vpop.permute.xlu0 %3337
        %3341 = vset.pattern.permute.xlu0 0
        %3342 = vperm.xlu0 %3341, %v3012
        %v3343 = vpop.permute.xlu0 %3342
        %3346 = vset.pattern.permute.xlu0 0
        %3347 = vperm.xlu0 %3346, %v3013
        %v3348 = vpop.permute.xlu0 %3347
        %3351 = vset.pattern.permute.xlu0 0
        %3352 = vperm.xlu0 %3351, %v3014
        %v3353 = vpop.permute.xlu0 %3352
        %3356 = vset.pattern.permute.xlu0 0
        %3357 = vperm.xlu0 %3356, %v3015
        %v3358 = vpop.permute.xlu0 %3357
        %3361 = vset.pattern.permute.xlu0 0
        %3362 = vperm.xlu0 %3361, %v3016
        %v3363 = vpop.permute.xlu0 %3362
        %3366 = vset.pattern.permute.xlu0 0
        %3367 = vperm.xlu0 %3366, %v3017
        %v3368 = vpop.permute.xlu0 %3367
        %3371 = vset.pattern.permute.xlu0 0
        %3372 = vperm.xlu0 %3371, %v3018
        %v3373 = vpop.permute.xlu0 %3372
        %3376 = vset.pattern.permute.xlu0 0
        %3377 = vperm.xlu0 %3376, %v3019
        %v3378 = vpop.permute.xlu0 %3377
        %3381 = vset.pattern.permute.xlu0 0
        %3382 = vperm.xlu0 %3381, %v3020
        %v3383 = vpop.permute.xlu0 %3382
        %3386 = vset.pattern.permute.xlu0 0
        %3387 = vperm.xlu0 %3386, %v3021
        %v3388 = vpop.permute.xlu0 %3387
        %3391 = vset.pattern.permute.xlu0 0
        %3392 = vperm.xlu0 %3391, %v3022
        %v3393 = vpop.permute.xlu0 %3392
        %3396 = vset.pattern.permute.xlu0 0
        %3397 = vperm.xlu0 %3396, %v3023
        %v3398 = vpop.permute.xlu0 %3397
        %3401 = vset.pattern.permute.xlu0 0
        %3402 = vperm.xlu0 %3401, %v3024
        %v3403 = vpop.permute.xlu0 %3402
        %3406 = vset.pattern.permute.xlu0 0
        %3407 = vperm.xlu0 %3406, %v3025
        %v3408 = vpop.permute.xlu0 %3407
        %3411 = vset.pattern.permute.xlu0 0
        %3412 = vperm.xlu0 %3411, %v3026
        %v3413 = vpop.permute.xlu0 %3412
        %3416 = vset.pattern.permute.xlu0 0
        %3417 = vperm.xlu0 %3416, %v3027
        %v3418 = vpop.permute.xlu0 %3417
        %3421 = vset.pattern.permute.xlu0 0
        %3422 = vperm.xlu0 %3421, %v3028
        %v3423 = vpop.permute.xlu0 %3422
        %3426 = vset.pattern.permute.xlu0 0
        %3427 = vperm.xlu0 %3426, %v3029
        %v3428 = vpop.permute.xlu0 %3427
        %3431 = vset.pattern.permute.xlu0 0
        %3432 = vperm.xlu0 %3431, %v3030
        %v3433 = vpop.permute.xlu0 %3432
        %3436 = vset.pattern.permute.xlu0 0
        %3437 = vperm.xlu0 %3436, %v3031
        %v3438 = vpop.permute.xlu0 %3437
        %3441 = vset.pattern.permute.xlu0 0
        %3442 = vperm.xlu0 %3441, %v3032
        %v3443 = vpop.permute.xlu0 %3442
        %3446 = vset.pattern.permute.xlu0 0
        %3447 = vperm.xlu0 %3446, %v3033
        %v3448 = vpop.permute.xlu0 %3447
        %3451 = vset.pattern.permute.xlu0 0
        %3452 = vperm.xlu0 %3451, %v3034
        %v3453 = vpop.permute.xlu0 %3452
        %3456 = vset.pattern.permute.xlu0 0
        %3457 = vperm.xlu0 %3456, %v3035
        %v3458 = vpop.permute.xlu0 %3457
        %3461 = vset.pattern.permute.xlu0 0
        %3462 = vperm.xlu0 %3461, %v3036
        %v3463 = vpop.permute.xlu0 %3462
        %3466 = vset.pattern.permute.xlu0 0
        %3467 = vperm.xlu0 %3466, %v3037
        %v3468 = vpop.permute.xlu0 %3467
        %3471 = vset.pattern.permute.xlu0 0
        %3472 = vperm.xlu0 %3471, %v3038
        %v3473 = vpop.permute.xlu0 %3472
        %3476 = vset.pattern.permute.xlu0 0
        %3477 = vperm.xlu0 %3476, %v3039
        %v3478 = vpop.permute.xlu0 %3477
        %3481 = vset.pattern.permute.xlu0 0
        %3482 = vperm.xlu0 %3481, %v3040
        %v3483 = vpop.permute.xlu0 %3482
        %3486 = vset.pattern.permute.xlu0 0
        %3487 = vperm.xlu0 %3486, %v3041
        %v3488 = vpop.permute.xlu0 %3487
        %3491 = vset.pattern.permute.xlu0 0
        %3492 = vperm.xlu0 %3491, %v3042
        %v3493 = vpop.permute.xlu0 %3492
        %3496 = vset.pattern.permute.xlu0 0
        %3497 = vperm.xlu0 %3496, %v3043
        %v3498 = vpop.permute.xlu0 %3497
        %3501 = vset.pattern.permute.xlu0 0
        %3502 = vperm.xlu0 %3501, %v3044
        %v3503 = vpop.permute.xlu0 %3502
        %3506 = vset.pattern.permute.xlu0 0
        %3507 = vperm.xlu0 %3506, %v3045
        %v3508 = vpop.permute.xlu0 %3507
        %3511 = vset.pattern.permute.xlu0 0
        %3512 = vperm.xlu0 %3511, %v3046
        %v3513 = vpop.permute.xlu0 %3512
        %3516 = vset.pattern.permute.xlu0 0
        %3517 = vperm.xlu0 %3516, %v3047
        %v3518 = vpop.permute.xlu0 %3517
        %3521 = vset.pattern.permute.xlu0 0
        %3522 = vperm.xlu0 %3521, %v3048
        %v3523 = vpop.permute.xlu0 %3522
        %3526 = vset.pattern.permute.xlu0 0
        %3527 = vperm.xlu0 %3526, %v3049
        %v3528 = vpop.permute.xlu0 %3527
        %3531 = vset.pattern.permute.xlu0 0
        %3532 = vperm.xlu0 %3531, %v3050
        %v3533 = vpop.permute.xlu0 %3532
        %3536 = vset.pattern.permute.xlu0 0
        %3537 = vperm.xlu0 %3536, %v3051
        %v3538 = vpop.permute.xlu0 %3537
        %3541 = vset.pattern.permute.xlu0 0
        %3542 = vperm.xlu0 %3541, %v3052
        %v3543 = vpop.permute.xlu0 %3542
        %3546 = vset.pattern.permute.xlu0 0
        %3547 = vperm.xlu0 %3546, %v3053
        %v3548 = vpop.permute.xlu0 %3547
        %3551 = vset.pattern.permute.xlu0 0
        %3552 = vperm.xlu0 %3551, %v3054
        %v3553 = vpop.permute.xlu0 %3552
        %3556 = vset.pattern.permute.xlu0 0
        %3557 = vperm.xlu0 %3556, %v3055
        %v3558 = vpop.permute.xlu0 %3557
        %3561 = vset.pattern.permute.xlu0 0
        %3562 = vperm.xlu0 %3561, %v3056
        %v3563 = vpop.permute.xlu0 %3562
        %3566 = vset.pattern.permute.xlu0 0
        %3567 = vperm.xlu0 %3566, %v3057
        %v3568 = vpop.permute.xlu0 %3567
        %v3570 = vsub.f32 %v2738, %v3253
        %v3571 = vsub.f32 %v2739, %v3258
        %v3572 = vsub.f32 %v2740, %v3263
        %v3573 = vsub.f32 %v2741, %v3268
        %v3574 = vsub.f32 %v2742, %v3273
        %v3575 = vsub.f32 %v2743, %v3278
        %v3576 = vsub.f32 %v2744, %v3283
        %v3577 = vsub.f32 %v2745, %v3288
        %v3578 = vsub.f32 %v2746, %v3293
        %v3579 = vsub.f32 %v2747, %v3298
        %v3580 = vsub.f32 %v2748, %v3303
        %v3581 = vsub.f32 %v2749, %v3308
        %v3582 = vsub.f32 %v2750, %v3313
        %v3583 = vsub.f32 %v2751, %v3318
        %v3584 = vsub.f32 %v2752, %v3323
        %v3585 = vsub.f32 %v2753, %v3328
        %v3586 = vsub.f32 %v2754, %v3333
        %v3587 = vsub.f32 %v2755, %v3338
        %v3588 = vsub.f32 %v2756, %v3343
        %v3589 = vsub.f32 %v2757, %v3348
        %v3590 = vsub.f32 %v2758, %v3353
        %v3591 = vsub.f32 %v2759, %v3358
        %v3592 = vsub.f32 %v2760, %v3363
        %v3593 = vsub.f32 %v2761, %v3368
        %v3594 = vsub.f32 %v2762, %v3373
        %v3595 = vsub.f32 %v2763, %v3378
        %v3596 = vsub.f32 %v2764, %v3383
        %v3597 = vsub.f32 %v2765, %v3388
        %v3598 = vsub.f32 %v2766, %v3393
        %v3599 = vsub.f32 %v2767, %v3398
        %v3600 = vsub.f32 %v2768, %v3403
        %v3601 = vsub.f32 %v2769, %v3408
        %v3602 = vsub.f32 %v2770, %v3413
        %v3603 = vsub.f32 %v2771, %v3418
        %v3604 = vsub.f32 %v2772, %v3423
        %v3605 = vsub.f32 %v2773, %v3428
        %v3606 = vsub.f32 %v2774, %v3433
        %v3607 = vsub.f32 %v2775, %v3438
        %v3608 = vsub.f32 %v2776, %v3443
        %v3609 = vsub.f32 %v2777, %v3448
        %v3610 = vsub.f32 %v2778, %v3453
        %v3611 = vsub.f32 %v2779, %v3458
        %v3612 = vsub.f32 %v2780, %v3463
        %v3613 = vsub.f32 %v2781, %v3468
        %v3614 = vsub.f32 %v2782, %v3473
        %v3615 = vsub.f32 %v2783, %v3478
        %v3616 = vsub.f32 %v2784, %v3483
        %v3617 = vsub.f32 %v2785, %v3488
        %v3618 = vsub.f32 %v2786, %v3493
        %v3619 = vsub.f32 %v2787, %v3498
        %v3620 = vsub.f32 %v2788, %v3503
        %v3621 = vsub.f32 %v2789, %v3508
        %v3622 = vsub.f32 %v2790, %v3513
        %v3623 = vsub.f32 %v2791, %v3518
        %v3624 = vsub.f32 %v2792, %v3523
        %v3625 = vsub.f32 %v2793, %v3528
        %v3626 = vsub.f32 %v2794, %v3533
        %v3627 = vsub.f32 %v2795, %v3538
        %v3628 = vsub.f32 %v2796, %v3543
        %v3629 = vsub.f32 %v2797, %v3548
        %v3630 = vsub.f32 %v2798, %v3553
        %v3631 = vsub.f32 %v2799, %v3558
        %v3632 = vsub.f32 %v2800, %v3563
        %v3633 = vsub.f32 %v2801, %v3568
        %v3634 = vmul.f32 %v3570, 1.442695
        %v3635 = vpow.pop %v3634
        %v3636 = vmul.f32 %v3571, 1.442695
        %v3637 = vpow.pop %v3636
        %v3638 = vmul.f32 %v3572, 1.442695
        %v3639 = vpow.pop %v3638
        %v3640 = vmul.f32 %v3573, 1.442695
        %v3641 = vpow.pop %v3640
        %v3642 = vmul.f32 %v3574, 1.442695
        %v3643 = vpow.pop %v3642
        %v3644 = vmul.f32 %v3575, 1.442695
        %v3645 = vpow.pop %v3644
        %v3646 = vmul.f32 %v3576, 1.442695
        %v3647 = vpow.pop %v3646
        %v3648 = vmul.f32 %v3577, 1.442695
        %v3649 = vpow.pop %v3648
        %v3650 = vmul.f32 %v3578, 1.442695
        %v3651 = vpow.pop %v3650
        %v3652 = vmul.f32 %v3579, 1.442695
        %v3653 = vpow.pop %v3652
        %v3654 = vmul.f32 %v3580, 1.442695
        %v3655 = vpow.pop %v3654
        %v3656 = vmul.f32 %v3581, 1.442695
        %v3657 = vpow.pop %v3656
        %v3658 = vmul.f32 %v3582, 1.442695
        %v3659 = vpow.pop %v3658
        %v3660 = vmul.f32 %v3583, 1.442695
        %v3661 = vpow.pop %v3660
        %v3662 = vmul.f32 %v3584, 1.442695
        %v3663 = vpow.pop %v3662
        %v3664 = vmul.f32 %v3585, 1.442695
        %v3665 = vpow.pop %v3664
        %v3666 = vmul.f32 %v3586, 1.442695
        %v3667 = vpow.pop %v3666
        %v3668 = vmul.f32 %v3587, 1.442695
        %v3669 = vpow.pop %v3668
        %v3670 = vmul.f32 %v3588, 1.442695
        %v3671 = vpow.pop %v3670
        %v3672 = vmul.f32 %v3589, 1.442695
        %v3673 = vpow.pop %v3672
        %v3674 = vmul.f32 %v3590, 1.442695
        %v3675 = vpow.pop %v3674
        %v3676 = vmul.f32 %v3591, 1.442695
        %v3677 = vpow.pop %v3676
        %v3678 = vmul.f32 %v3592, 1.442695
        %v3679 = vpow.pop %v3678
        %v3680 = vmul.f32 %v3593, 1.442695
        %v3681 = vpow.pop %v3680
        %v3682 = vmul.f32 %v3594, 1.442695
        %v3683 = vpow.pop %v3682
        %v3684 = vmul.f32 %v3595, 1.442695
        %v3685 = vpow.pop %v3684
        %v3686 = vmul.f32 %v3596, 1.442695
        %v3687 = vpow.pop %v3686
        %v3688 = vmul.f32 %v3597, 1.442695
        %v3689 = vpow.pop %v3688
        %v3690 = vmul.f32 %v3598, 1.442695
        %v3691 = vpow.pop %v3690
        %v3692 = vmul.f32 %v3599, 1.442695
        %v3693 = vpow.pop %v3692
        %v3694 = vmul.f32 %v3600, 1.442695
        %v3695 = vpow.pop %v3694
        %v3696 = vmul.f32 %v3601, 1.442695
        %v3697 = vpow.pop %v3696
        %v3698 = vmul.f32 %v3602, 1.442695
        %v3699 = vpow.pop %v3698
        %v3700 = vmul.f32 %v3603, 1.442695
        %v3701 = vpow.pop %v3700
        %v3702 = vmul.f32 %v3604, 1.442695
        %v3703 = vpow.pop %v3702
        %v3704 = vmul.f32 %v3605, 1.442695
        %v3705 = vpow.pop %v3704
        %v3706 = vmul.f32 %v3606, 1.442695
        %v3707 = vpow.pop %v3706
        %v3708 = vmul.f32 %v3607, 1.442695
        %v3709 = vpow.pop %v3708
        %v3710 = vmul.f32 %v3608, 1.442695
        %v3711 = vpow.pop %v3710
        %v3712 = vmul.f32 %v3609, 1.442695
        %v3713 = vpow.pop %v3712
        %v3714 = vmul.f32 %v3610, 1.442695
        %v3715 = vpow.pop %v3714
        %v3716 = vmul.f32 %v3611, 1.442695
        %v3717 = vpow.pop %v3716
        %v3718 = vmul.f32 %v3612, 1.442695
        %v3719 = vpow.pop %v3718
        %v3720 = vmul.f32 %v3613, 1.442695
        %v3721 = vpow.pop %v3720
        %v3722 = vmul.f32 %v3614, 1.442695
        %v3723 = vpow.pop %v3722
        %v3724 = vmul.f32 %v3615, 1.442695
        %v3725 = vpow.pop %v3724
        %v3726 = vmul.f32 %v3616, 1.442695
        %v3727 = vpow.pop %v3726
        %v3728 = vmul.f32 %v3617, 1.442695
        %v3729 = vpow.pop %v3728
        %v3730 = vmul.f32 %v3618, 1.442695
        %v3731 = vpow.pop %v3730
        %v3732 = vmul.f32 %v3619, 1.442695
        %v3733 = vpow.pop %v3732
        %v3734 = vmul.f32 %v3620, 1.442695
        %v3735 = vpow.pop %v3734
        %v3736 = vmul.f32 %v3621, 1.442695
        %v3737 = vpow.pop %v3736
        %v3738 = vmul.f32 %v3622, 1.442695
        %v3739 = vpow.pop %v3738
        %v3740 = vmul.f32 %v3623, 1.442695
        %v3741 = vpow.pop %v3740
        %v3742 = vmul.f32 %v3624, 1.442695
        %v3743 = vpow.pop %v3742
        %v3744 = vmul.f32 %v3625, 1.442695
        %v3745 = vpow.pop %v3744
        %v3746 = vmul.f32 %v3626, 1.442695
        %v3747 = vpow.pop %v3746
        %v3748 = vmul.f32 %v3627, 1.442695
        %v3749 = vpow.pop %v3748
        %v3750 = vmul.f32 %v3628, 1.442695
        %v3751 = vpow.pop %v3750
        %v3752 = vmul.f32 %v3629, 1.442695
        %v3753 = vpow.pop %v3752
        %v3754 = vmul.f32 %v3630, 1.442695
        %v3755 = vpow.pop %v3754
        %v3756 = vmul.f32 %v3631, 1.442695
        %v3757 = vpow.pop %v3756
        %v3758 = vmul.f32 %v3632, 1.442695
        %v3759 = vpow.pop %v3758
        %v3760 = vmul.f32 %v3633, 1.442695
        %v3761 = vpow.pop %v3760
        %v3762 = vld [vmem:[#allocation3] sm:$0xff]
        %v3763 = vld [vmem:[#allocation3 + $0x8] sm:$0xff]
        %v3764 = vld [vmem:[#allocation3 + $0x10] sm:$0xff]
        %v3765 = vld [vmem:[#allocation3 + $0x18] sm:$0xff]
        %v3766 = vld [vmem:[#allocation3 + $0x20] sm:$0xff]
        %v3767 = vld [vmem:[#allocation3 + $0x28] sm:$0xff]
        %v3768 = vld [vmem:[#allocation3 + $0x30] sm:$0xff]
        %v3769 = vld [vmem:[#allocation3 + $0x38] sm:$0xff]
        %v3770 = vld [vmem:[#allocation3 + $0x40] sm:$0xff]
        %v3771 = vld [vmem:[#allocation3 + $0x48] sm:$0xff]
        %v3772 = vld [vmem:[#allocation3 + $0x50] sm:$0xff]
        %v3773 = vld [vmem:[#allocation3 + $0x58] sm:$0xff]
        %v3774 = vld [vmem:[#allocation3 + $0x60] sm:$0xff]
        %v3775 = vld [vmem:[#allocation3 + $0x68] sm:$0xff]
        %v3776 = vld [vmem:[#allocation3 + $0x70] sm:$0xff]
        %v3777 = vld [vmem:[#allocation3 + $0x78] sm:$0xff]
        %v3778 = vld [vmem:[#allocation3 + $0x80] sm:$0xff]
        %v3779 = vld [vmem:[#allocation3 + $0x88] sm:$0xff]
        %v3780 = vld [vmem:[#allocation3 + $0x90] sm:$0xff]
        %v3781 = vld [vmem:[#allocation3 + $0x98] sm:$0xff]
        %v3782 = vld [vmem:[#allocation3 + $0xa0] sm:$0xff]
        %v3783 = vld [vmem:[#allocation3 + $0xa8] sm:$0xff]
        %v3784 = vld [vmem:[#allocation3 + $0xb0] sm:$0xff]
        %v3785 = vld [vmem:[#allocation3 + $0xb8] sm:$0xff]
        %v3786 = vld [vmem:[#allocation3 + $0xc0] sm:$0xff]
        %v3787 = vld [vmem:[#allocation3 + $0xc8] sm:$0xff]
        %v3788 = vld [vmem:[#allocation3 + $0xd0] sm:$0xff]
        %v3789 = vld [vmem:[#allocation3 + $0xd8] sm:$0xff]
        %v3790 = vld [vmem:[#allocation3 + $0xe0] sm:$0xff]
        %v3791 = vld [vmem:[#allocation3 + $0xe8] sm:$0xff]
        %v3792 = vld [vmem:[#allocation3 + $0xf0] sm:$0xff]
        %v3793 = vld [vmem:[#allocation3 + $0xf8] sm:$0xff]
        %v3794 = vld [vmem:[#allocation3 + $0x100] sm:$0xff]
        %v3795 = vld [vmem:[#allocation3 + $0x108] sm:$0xff]
        %v3796 = vld [vmem:[#allocation3 + $0x110] sm:$0xff]
        %v3797 = vld [vmem:[#allocation3 + $0x118] sm:$0xff]
        %v3798 = vld [vmem:[#allocation3 + $0x120] sm:$0xff]
        %v3799 = vld [vmem:[#allocation3 + $0x128] sm:$0xff]
        %v3800 = vld [vmem:[#allocation3 + $0x130] sm:$0xff]
        %v3801 = vld [vmem:[#allocation3 + $0x138] sm:$0xff]
        %v3802 = vld [vmem:[#allocation3 + $0x140] sm:$0xff]
        %v3803 = vld [vmem:[#allocation3 + $0x148] sm:$0xff]
        %v3804 = vld [vmem:[#allocation3 + $0x150] sm:$0xff]
        %v3805 = vld [vmem:[#allocation3 + $0x158] sm:$0xff]
        %v3806 = vld [vmem:[#allocation3 + $0x160] sm:$0xff]
        %v3807 = vld [vmem:[#allocation3 + $0x168] sm:$0xff]
        %v3808 = vld [vmem:[#allocation3 + $0x170] sm:$0xff]
        %v3809 = vld [vmem:[#allocation3 + $0x178] sm:$0xff]
        %v3810 = vld [vmem:[#allocation3 + $0x180] sm:$0xff]
        %v3811 = vld [vmem:[#allocation3 + $0x188] sm:$0xff]
        %v3812 = vld [vmem:[#allocation3 + $0x190] sm:$0xff]
        %v3813 = vld [vmem:[#allocation3 + $0x198] sm:$0xff]
        %v3814 = vld [vmem:[#allocation3 + $0x1a0] sm:$0xff]
        %v3815 = vld [vmem:[#allocation3 + $0x1a8] sm:$0xff]
        %v3816 = vld [vmem:[#allocation3 + $0x1b0] sm:$0xff]
        %v3817 = vld [vmem:[#allocation3 + $0x1b8] sm:$0xff]
        %v3818 = vld [vmem:[#allocation3 + $0x1c0] sm:$0xff]
        %v3819 = vld [vmem:[#allocation3 + $0x1c8] sm:$0xff]
        %v3820 = vld [vmem:[#allocation3 + $0x1d0] sm:$0xff]
        %v3821 = vld [vmem:[#allocation3 + $0x1d8] sm:$0xff]
        %v3822 = vld [vmem:[#allocation3 + $0x1e0] sm:$0xff]
        %v3823 = vld [vmem:[#allocation3 + $0x1e8] sm:$0xff]
        %v3824 = vld [vmem:[#allocation3 + $0x1f0] sm:$0xff]
        %v3825 = vld [vmem:[#allocation3 + $0x1f8] sm:$0xff]
        %v3826 = vmul.f32 %v3123, %v3762
        %v3827 = vmul.f32 %v3125, %v3763
        %v3828 = vmul.f32 %v3127, %v3764
        %v3829 = vmul.f32 %v3129, %v3765
        %v3830 = vmul.f32 %v3131, %v3766
        %v3831 = vmul.f32 %v3133, %v3767
        %v3832 = vmul.f32 %v3135, %v3768
        %v3833 = vmul.f32 %v3137, %v3769
        %v3834 = vmul.f32 %v3139, %v3770
        %v3835 = vmul.f32 %v3141, %v3771
        %v3836 = vmul.f32 %v3143, %v3772
        %v3837 = vmul.f32 %v3145, %v3773
        %v3838 = vmul.f32 %v3147, %v3774
        %v3839 = vmul.f32 %v3149, %v3775
        %v3840 = vmul.f32 %v3151, %v3776
        %v3841 = vmul.f32 %v3153, %v3777
        %v3842 = vmul.f32 %v3155, %v3778
        %v3843 = vmul.f32 %v3157, %v3779
        %v3844 = vmul.f32 %v3159, %v3780
        %v3845 = vmul.f32 %v3161, %v3781
        %v3846 = vmul.f32 %v3163, %v3782
        %v3847 = vmul.f32 %v3165, %v3783
        %v3848 = vmul.f32 %v3167, %v3784
        %v3849 = vmul.f32 %v3169, %v3785
        %v3850 = vmul.f32 %v3171, %v3786
        %v3851 = vmul.f32 %v3173, %v3787
        %v3852 = vmul.f32 %v3175, %v3788
        %v3853 = vmul.f32 %v3177, %v3789
        %v3854 = vmul.f32 %v3179, %v3790
        %v3855 = vmul.f32 %v3181, %v3791
        %v3856 = vmul.f32 %v3183, %v3792
        %v3857 = vmul.f32 %v3185, %v3793
        %v3858 = vmul.f32 %v3187, %v3794
        %v3859 = vmul.f32 %v3189, %v3795
        %v3860 = vmul.f32 %v3191, %v3796
        %v3861 = vmul.f32 %v3193, %v3797
        %v3862 = vmul.f32 %v3195, %v3798
        %v3863 = vmul.f32 %v3197, %v3799
        %v3864 = vmul.f32 %v3199, %v3800
        %v3865 = vmul.f32 %v3201, %v3801
        %v3866 = vmul.f32 %v3203, %v3802
        %v3867 = vmul.f32 %v3205, %v3803
        %v3868 = vmul.f32 %v3207, %v3804
        %v3869 = vmul.f32 %v3209, %v3805
        %v3870 = vmul.f32 %v3211, %v3806
        %v3871 = vmul.f32 %v3213, %v3807
        %v3872 = vmul.f32 %v3215, %v3808
        %v3873 = vmul.f32 %v3217, %v3809
        %v3874 = vmul.f32 %v3219, %v3810
        %v3875 = vmul.f32 %v3221, %v3811
        %v3876 = vmul.f32 %v3223, %v3812
        %v3877 = vmul.f32 %v3225, %v3813
        %v3878 = vmul.f32 %v3227, %v3814
        %v3879 = vmul.f32 %v3229, %v3815
        %v3880 = vmul.f32 %v3231, %v3816
        %v3881 = vmul.f32 %v3233, %v3817
        %v3882 = vmul.f32 %v3235, %v3818
        %v3883 = vmul.f32 %v3237, %v3819
        %v3884 = vmul.f32 %v3239, %v3820
        %v3885 = vmul.f32 %v3241, %v3821
        %v3886 = vmul.f32 %v3243, %v3822
        %v3887 = vmul.f32 %v3245, %v3823
        %v3888 = vmul.f32 %v3247, %v3824
        %v3889 = vmul.f32 %v3249, %v3825
        %3890 = vadd.xlane.f32.xlu0 %v3635
        %v3891 = vpop.xlane.xlu0 %3890
        %3892 = vadd.xlane.f32.xlu0 %v3637
        %v3893 = vpop.xlane.xlu0 %3892
        %3894 = vadd.xlane.f32.xlu0 %v3639
        %v3895 = vpop.xlane.xlu0 %3894
        %3896 = vadd.xlane.f32.xlu0 %v3641
        %v3897 = vpop.xlane.xlu0 %3896
        %3898 = vadd.xlane.f32.xlu0 %v3643
        %v3899 = vpop.xlane.xlu0 %3898
        %3900 = vadd.xlane.f32.xlu0 %v3645
        %v3901 = vpop.xlane.xlu0 %3900
        %3902 = vadd.xlane.f32.xlu0 %v3647
        %v3903 = vpop.xlane.xlu0 %3902
        %3904 = vadd.xlane.f32.xlu0 %v3649
        %v3905 = vpop.xlane.xlu0 %3904
        %3906 = vadd.xlane.f32.xlu0 %v3651
        %v3907 = vpop.xlane.xlu0 %3906
        %3908 = vadd.xlane.f32.xlu0 %v3653
        %v3909 = vpop.xlane.xlu0 %3908
        %3910 = vadd.xlane.f32.xlu0 %v3655
        %v3911 = vpop.xlane.xlu0 %3910
        %3912 = vadd.xlane.f32.xlu0 %v3657
        %v3913 = vpop.xlane.xlu0 %3912
        %3914 = vadd.xlane.f32.xlu0 %v3659
        %v3915 = vpop.xlane.xlu0 %3914
        %3916 = vadd.xlane.f32.xlu0 %v3661
        %v3917 = vpop.xlane.xlu0 %3916
        %3918 = vadd.xlane.f32.xlu0 %v3663
        %v3919 = vpop.xlane.xlu0 %3918
        %3920 = vadd.xlane.f32.xlu0 %v3665
        %v3921 = vpop.xlane.xlu0 %3920
        %3922 = vadd.xlane.f32.xlu0 %v3667
        %v3923 = vpop.xlane.xlu0 %3922
        %3924 = vadd.xlane.f32.xlu0 %v3669
        %v3925 = vpop.xlane.xlu0 %3924
        %3926 = vadd.xlane.f32.xlu0 %v3671
        %v3927 = vpop.xlane.xlu0 %3926
        %3928 = vadd.xlane.f32.xlu0 %v3673
        %v3929 = vpop.xlane.xlu0 %3928
        %3930 = vadd.xlane.f32.xlu0 %v3675
        %v3931 = vpop.xlane.xlu0 %3930
        %3932 = vadd.xlane.f32.xlu0 %v3677
        %v3933 = vpop.xlane.xlu0 %3932
        %3934 = vadd.xlane.f32.xlu0 %v3679
        %v3935 = vpop.xlane.xlu0 %3934
        %3936 = vadd.xlane.f32.xlu0 %v3681
        %v3937 = vpop.xlane.xlu0 %3936
        %3938 = vadd.xlane.f32.xlu0 %v3683
        %v3939 = vpop.xlane.xlu0 %3938
        %3940 = vadd.xlane.f32.xlu0 %v3685
        %v3941 = vpop.xlane.xlu0 %3940
        %3942 = vadd.xlane.f32.xlu0 %v3687
        %v3943 = vpop.xlane.xlu0 %3942
        %3944 = vadd.xlane.f32.xlu0 %v3689
        %v3945 = vpop.xlane.xlu0 %3944
        %3946 = vadd.xlane.f32.xlu0 %v3691
        %v3947 = vpop.xlane.xlu0 %3946
        %3948 = vadd.xlane.f32.xlu0 %v3693
        %v3949 = vpop.xlane.xlu0 %3948
        %3950 = vadd.xlane.f32.xlu0 %v3695
        %v3951 = vpop.xlane.xlu0 %3950
        %3952 = vadd.xlane.f32.xlu0 %v3697
        %v3953 = vpop.xlane.xlu0 %3952
        %3954 = vadd.xlane.f32.xlu0 %v3699
        %v3955 = vpop.xlane.xlu0 %3954
        %3956 = vadd.xlane.f32.xlu0 %v3701
        %v3957 = vpop.xlane.xlu0 %3956
        %3958 = vadd.xlane.f32.xlu0 %v3703
        %v3959 = vpop.xlane.xlu0 %3958
        %3960 = vadd.xlane.f32.xlu0 %v3705
        %v3961 = vpop.xlane.xlu0 %3960
        %3962 = vadd.xlane.f32.xlu0 %v3707
        %v3963 = vpop.xlane.xlu0 %3962
        %3964 = vadd.xlane.f32.xlu0 %v3709
        %v3965 = vpop.xlane.xlu0 %3964
        %3966 = vadd.xlane.f32.xlu0 %v3711
        %v3967 = vpop.xlane.xlu0 %3966
        %3968 = vadd.xlane.f32.xlu0 %v3713
        %v3969 = vpop.xlane.xlu0 %3968
        %3970 = vadd.xlane.f32.xlu0 %v3715
        %v3971 = vpop.xlane.xlu0 %3970
        %3972 = vadd.xlane.f32.xlu0 %v3717
        %v3973 = vpop.xlane.xlu0 %3972
        %3974 = vadd.xlane.f32.xlu0 %v3719
        %v3975 = vpop.xlane.xlu0 %3974
        %3976 = vadd.xlane.f32.xlu0 %v3721
        %v3977 = vpop.xlane.xlu0 %3976
        %3978 = vadd.xlane.f32.xlu0 %v3723
        %v3979 = vpop.xlane.xlu0 %3978
        %3980 = vadd.xlane.f32.xlu0 %v3725
        %v3981 = vpop.xlane.xlu0 %3980
        %3982 = vadd.xlane.f32.xlu0 %v3727
        %v3983 = vpop.xlane.xlu0 %3982
        %3984 = vadd.xlane.f32.xlu0 %v3729
        %v3985 = vpop.xlane.xlu0 %3984
        %3986 = vadd.xlane.f32.xlu0 %v3731
        %v3987 = vpop.xlane.xlu0 %3986
        %3988 = vadd.xlane.f32.xlu0 %v3733
        %v3989 = vpop.xlane.xlu0 %3988
        %3990 = vadd.xlane.f32.xlu0 %v3735
        %v3991 = vpop.xlane.xlu0 %3990
        %3992 = vadd.xlane.f32.xlu0 %v3737
        %v3993 = vpop.xlane.xlu0 %3992
        %3994 = vadd.xlane.f32.xlu0 %v3739
        %v3995 = vpop.xlane.xlu0 %3994
        %3996 = vadd.xlane.f32.xlu0 %v3741
        %v3997 = vpop.xlane.xlu0 %3996
        %3998 = vadd.xlane.f32.xlu0 %v3743
        %v3999 = vpop.xlane.xlu0 %3998
        %4000 = vadd.xlane.f32.xlu0 %v3745
        %v4001 = vpop.xlane.xlu0 %4000
        %4002 = vadd.xlane.f32.xlu0 %v3747
        %v4003 = vpop.xlane.xlu0 %4002
        %4004 = vadd.xlane.f32.xlu0 %v3749
        %v4005 = vpop.xlane.xlu0 %4004
        %4006 = vadd.xlane.f32.xlu0 %v3751
        %v4007 = vpop.xlane.xlu0 %4006
        %4008 = vadd.xlane.f32.xlu0 %v3753
        %v4009 = vpop.xlane.xlu0 %4008
        %4010 = vadd.xlane.f32.xlu0 %v3755
        %v4011 = vpop.xlane.xlu0 %4010
        %4012 = vadd.xlane.f32.xlu0 %v3757
        %v4013 = vpop.xlane.xlu0 %4012
        %4014 = vadd.xlane.f32.xlu0 %v3759
        %v4015 = vpop.xlane.xlu0 %4014
        %4016 = vadd.xlane.f32.xlu0 %v3761
        %v4017 = vpop.xlane.xlu0 %4016
        %v4018 = vadd.f32 %v3826, %v3891
        %v4019 = vadd.f32 %v3827, %v3893
        %v4020 = vadd.f32 %v3828, %v3895
        %v4021 = vadd.f32 %v3829, %v3897
        %v4022 = vadd.f32 %v3830, %v3899
        %v4023 = vadd.f32 %v3831, %v3901
        %v4024 = vadd.f32 %v3832, %v3903
        %v4025 = vadd.f32 %v3833, %v3905
        %v4026 = vadd.f32 %v3834, %v3907
        %v4027 = vadd.f32 %v3835, %v3909
        %v4028 = vadd.f32 %v3836, %v3911
        %v4029 = vadd.f32 %v3837, %v3913
        %v4030 = vadd.f32 %v3838, %v3915
        %v4031 = vadd.f32 %v3839, %v3917
        %v4032 = vadd.f32 %v3840, %v3919
        %v4033 = vadd.f32 %v3841, %v3921
        %v4034 = vadd.f32 %v3842, %v3923
        %v4035 = vadd.f32 %v3843, %v3925
        %v4036 = vadd.f32 %v3844, %v3927
        %v4037 = vadd.f32 %v3845, %v3929
        %v4038 = vadd.f32 %v3846, %v3931
        %v4039 = vadd.f32 %v3847, %v3933
        %v4040 = vadd.f32 %v3848, %v3935
        %v4041 = vadd.f32 %v3849, %v3937
        %v4042 = vadd.f32 %v3850, %v3939
        %v4043 = vadd.f32 %v3851, %v3941
        %v4044 = vadd.f32 %v3852, %v3943
        %v4045 = vadd.f32 %v3853, %v3945
        %v4046 = vadd.f32 %v3854, %v3947
        %v4047 = vadd.f32 %v3855, %v3949
        %v4048 = vadd.f32 %v3856, %v3951
        %v4049 = vadd.f32 %v3857, %v3953
        %v4050 = vadd.f32 %v3858, %v3955
        %v4051 = vadd.f32 %v3859, %v3957
        %v4052 = vadd.f32 %v3860, %v3959
        %v4053 = vadd.f32 %v3861, %v3961
        %v4054 = vadd.f32 %v3862, %v3963
        %v4055 = vadd.f32 %v3863, %v3965
        %v4056 = vadd.f32 %v3864, %v3967
        %v4057 = vadd.f32 %v3865, %v3969
        %v4058 = vadd.f32 %v3866, %v3971
        %v4059 = vadd.f32 %v3867, %v3973
        %v4060 = vadd.f32 %v3868, %v3975
        %v4061 = vadd.f32 %v3869, %v3977
        %v4062 = vadd.f32 %v3870, %v3979
        %v4063 = vadd.f32 %v3871, %v3981
        %v4064 = vadd.f32 %v3872, %v3983
        %v4065 = vadd.f32 %v3873, %v3985
        %v4066 = vadd.f32 %v3874, %v3987
        %v4067 = vadd.f32 %v3875, %v3989
        %v4068 = vadd.f32 %v3876, %v3991
        %v4069 = vadd.f32 %v3877, %v3993
        %v4070 = vadd.f32 %v3878, %v3995
        %v4071 = vadd.f32 %v3879, %v3997
        %v4072 = vadd.f32 %v3880, %v3999
        %v4073 = vadd.f32 %v3881, %v4001
        %v4074 = vadd.f32 %v3882, %v4003
        %v4075 = vadd.f32 %v3883, %v4005
        %v4076 = vadd.f32 %v3884, %v4007
        %v4077 = vadd.f32 %v3885, %v4009
        %v4078 = vadd.f32 %v3886, %v4011
        %v4079 = vadd.f32 %v3887, %v4013
        %v4080 = vadd.f32 %v3888, %v4015
        %v4081 = vadd.f32 %v3889, %v4017
        %vm4082 = vcmask 7168
        %4083 = vst.msk [vmem:[#allocation3] sm:$0xff] %vm4082, %v4018
        %4084 = vst.msk [vmem:[#allocation3 + $0x8] sm:$0xff] %vm4082, %v4019
        %4085 = vst.msk [vmem:[#allocation3 + $0x10] sm:$0xff] %vm4082, %v4020
        %4086 = vst.msk [vmem:[#allocation3 + $0x18] sm:$0xff] %vm4082, %v4021
        %4087 = vst.msk [vmem:[#allocation3 + $0x20] sm:$0xff] %vm4082, %v4022
        %4088 = vst.msk [vmem:[#allocation3 + $0x28] sm:$0xff] %vm4082, %v4023
        %4089 = vst.msk [vmem:[#allocation3 + $0x30] sm:$0xff] %vm4082, %v4024
        %4090 = vst.msk [vmem:[#allocation3 + $0x38] sm:$0xff] %vm4082, %v4025
        %4091 = vst.msk [vmem:[#allocation3 + $0x40] sm:$0xff] %vm4082, %v4026
        %4092 = vst.msk [vmem:[#allocation3 + $0x48] sm:$0xff] %vm4082, %v4027
        %4093 = vst.msk [vmem:[#allocation3 + $0x50] sm:$0xff] %vm4082, %v4028
        %4094 = vst.msk [vmem:[#allocation3 + $0x58] sm:$0xff] %vm4082, %v4029
        %4095 = vst.msk [vmem:[#allocation3 + $0x60] sm:$0xff] %vm4082, %v4030
        %4096 = vst.msk [vmem:[#allocation3 + $0x68] sm:$0xff] %vm4082, %v4031
        %4097 = vst.msk [vmem:[#allocation3 + $0x70] sm:$0xff] %vm4082, %v4032
        %4098 = vst.msk [vmem:[#allocation3 + $0x78] sm:$0xff] %vm4082, %v4033
        %4099 = vst.msk [vmem:[#allocation3 + $0x80] sm:$0xff] %vm4082, %v4034
        %4100 = vst.msk [vmem:[#allocation3 + $0x88] sm:$0xff] %vm4082, %v4035
        %4101 = vst.msk [vmem:[#allocation3 + $0x90] sm:$0xff] %vm4082, %v4036
        %4102 = vst.msk [vmem:[#allocation3 + $0x98] sm:$0xff] %vm4082, %v4037
        %4103 = vst.msk [vmem:[#allocation3 + $0xa0] sm:$0xff] %vm4082, %v4038
        %4104 = vst.msk [vmem:[#allocation3 + $0xa8] sm:$0xff] %vm4082, %v4039
        %4105 = vst.msk [vmem:[#allocation3 + $0xb0] sm:$0xff] %vm4082, %v4040
        %4106 = vst.msk [vmem:[#allocation3 + $0xb8] sm:$0xff] %vm4082, %v4041
        %4107 = vst.msk [vmem:[#allocation3 + $0xc0] sm:$0xff] %vm4082, %v4042
        %4108 = vst.msk [vmem:[#allocation3 + $0xc8] sm:$0xff] %vm4082, %v4043
        %4109 = vst.msk [vmem:[#allocation3 + $0xd0] sm:$0xff] %vm4082, %v4044
        %4110 = vst.msk [vmem:[#allocation3 + $0xd8] sm:$0xff] %vm4082, %v4045
        %4111 = vst.msk [vmem:[#allocation3 + $0xe0] sm:$0xff] %vm4082, %v4046
        %4112 = vst.msk [vmem:[#allocation3 + $0xe8] sm:$0xff] %vm4082, %v4047
        %4113 = vst.msk [vmem:[#allocation3 + $0xf0] sm:$0xff] %vm4082, %v4048
        %4114 = vst.msk [vmem:[#allocation3 + $0xf8] sm:$0xff] %vm4082, %v4049
        %4115 = vst.msk [vmem:[#allocation3 + $0x100] sm:$0xff] %vm4082, %v4050
        %4116 = vst.msk [vmem:[#allocation3 + $0x108] sm:$0xff] %vm4082, %v4051
        %4117 = vst.msk [vmem:[#allocation3 + $0x110] sm:$0xff] %vm4082, %v4052
        %4118 = vst.msk [vmem:[#allocation3 + $0x118] sm:$0xff] %vm4082, %v4053
        %4119 = vst.msk [vmem:[#allocation3 + $0x120] sm:$0xff] %vm4082, %v4054
        %4120 = vst.msk [vmem:[#allocation3 + $0x128] sm:$0xff] %vm4082, %v4055
        %4121 = vst.msk [vmem:[#allocation3 + $0x130] sm:$0xff] %vm4082, %v4056
        %4122 = vst.msk [vmem:[#allocation3 + $0x138] sm:$0xff] %vm4082, %v4057
        %4123 = vst.msk [vmem:[#allocation3 + $0x140] sm:$0xff] %vm4082, %v4058
        %4124 = vst.msk [vmem:[#allocation3 + $0x148] sm:$0xff] %vm4082, %v4059
        %4125 = vst.msk [vmem:[#allocation3 + $0x150] sm:$0xff] %vm4082, %v4060
        %4126 = vst.msk [vmem:[#allocation3 + $0x158] sm:$0xff] %vm4082, %v4061
        %4127 = vst.msk [vmem:[#allocation3 + $0x160] sm:$0xff] %vm4082, %v4062
        %4128 = vst.msk [vmem:[#allocation3 + $0x168] sm:$0xff] %vm4082, %v4063
        %4129 = vst.msk [vmem:[#allocation3 + $0x170] sm:$0xff] %vm4082, %v4064
        %4130 = vst.msk [vmem:[#allocation3 + $0x178] sm:$0xff] %vm4082, %v4065
        %4131 = vst.msk [vmem:[#allocation3 + $0x180] sm:$0xff] %vm4082, %v4066
        %4132 = vst.msk [vmem:[#allocation3 + $0x188] sm:$0xff] %vm4082, %v4067
        %4133 = vst.msk [vmem:[#allocation3 + $0x190] sm:$0xff] %vm4082, %v4068
        %4134 = vst.msk [vmem:[#allocation3 + $0x198] sm:$0xff] %vm4082, %v4069
        %4135 = vst.msk [vmem:[#allocation3 + $0x1a0] sm:$0xff] %vm4082, %v4070
        %4136 = vst.msk [vmem:[#allocation3 + $0x1a8] sm:$0xff] %vm4082, %v4071
        %4137 = vst.msk [vmem:[#allocation3 + $0x1b0] sm:$0xff] %vm4082, %v4072
        %4138 = vst.msk [vmem:[#allocation3 + $0x1b8] sm:$0xff] %vm4082, %v4073
        %4139 = vst.msk [vmem:[#allocation3 + $0x1c0] sm:$0xff] %vm4082, %v4074
        %4140 = vst.msk [vmem:[#allocation3 + $0x1c8] sm:$0xff] %vm4082, %v4075
        %4141 = vst.msk [vmem:[#allocation3 + $0x1d0] sm:$0xff] %vm4082, %v4076
        %4142 = vst.msk [vmem:[#allocation3 + $0x1d8] sm:$0xff] %vm4082, %v4077
        %4143 = vst.msk [vmem:[#allocation3 + $0x1e0] sm:$0xff] %vm4082, %v4078
        %4144 = vst.msk [vmem:[#allocation3 + $0x1e8] sm:$0xff] %vm4082, %v4079
        %4145 = vst.msk [vmem:[#allocation3 + $0x1f0] sm:$0xff] %vm4082, %v4080
        %4146 = vst.msk [vmem:[#allocation3 + $0x1f8] sm:$0xff] %vm4082, %v4081
        %v4147 = vld [vmem:[#allocation4] sm:$0xff]
        %v4148 = vld [vmem:[#allocation4 + $0x8] sm:$0xff]
        %v4149 = vld [vmem:[#allocation4 + $0x10] sm:$0xff]
        %v4150 = vld [vmem:[#allocation4 + $0x18] sm:$0xff]
        %v4151 = vld [vmem:[#allocation4 + $0x20] sm:$0xff]
        %v4152 = vld [vmem:[#allocation4 + $0x28] sm:$0xff]
        %v4153 = vld [vmem:[#allocation4 + $0x30] sm:$0xff]
        %v4154 = vld [vmem:[#allocation4 + $0x38] sm:$0xff]
        %v4155 = vld [vmem:[#allocation4 + $0x40] sm:$0xff]
        %v4156 = vld [vmem:[#allocation4 + $0x48] sm:$0xff]
        %v4157 = vld [vmem:[#allocation4 + $0x50] sm:$0xff]
        %v4158 = vld [vmem:[#allocation4 + $0x58] sm:$0xff]
        %v4159 = vld [vmem:[#allocation4 + $0x60] sm:$0xff]
        %v4160 = vld [vmem:[#allocation4 + $0x68] sm:$0xff]
        %v4161 = vld [vmem:[#allocation4 + $0x70] sm:$0xff]
        %v4162 = vld [vmem:[#allocation4 + $0x78] sm:$0xff]
        %v4163 = vld [vmem:[#allocation4 + $0x80] sm:$0xff]
        %v4164 = vld [vmem:[#allocation4 + $0x88] sm:$0xff]
        %v4165 = vld [vmem:[#allocation4 + $0x90] sm:$0xff]
        %v4166 = vld [vmem:[#allocation4 + $0x98] sm:$0xff]
        %v4167 = vld [vmem:[#allocation4 + $0xa0] sm:$0xff]
        %v4168 = vld [vmem:[#allocation4 + $0xa8] sm:$0xff]
        %v4169 = vld [vmem:[#allocation4 + $0xb0] sm:$0xff]
        %v4170 = vld [vmem:[#allocation4 + $0xb8] sm:$0xff]
        %v4171 = vld [vmem:[#allocation4 + $0xc0] sm:$0xff]
        %v4172 = vld [vmem:[#allocation4 + $0xc8] sm:$0xff]
        %v4173 = vld [vmem:[#allocation4 + $0xd0] sm:$0xff]
        %v4174 = vld [vmem:[#allocation4 + $0xd8] sm:$0xff]
        %v4175 = vld [vmem:[#allocation4 + $0xe0] sm:$0xff]
        %v4176 = vld [vmem:[#allocation4 + $0xe8] sm:$0xff]
        %v4177 = vld [vmem:[#allocation4 + $0xf0] sm:$0xff]
        %v4178 = vld [vmem:[#allocation4 + $0xf8] sm:$0xff]
        %v4179 = vld [vmem:[#allocation4 + $0x100] sm:$0xff]
        %v4180 = vld [vmem:[#allocation4 + $0x108] sm:$0xff]
        %v4181 = vld [vmem:[#allocation4 + $0x110] sm:$0xff]
        %v4182 = vld [vmem:[#allocation4 + $0x118] sm:$0xff]
        %v4183 = vld [vmem:[#allocation4 + $0x120] sm:$0xff]
        %v4184 = vld [vmem:[#allocation4 + $0x128] sm:$0xff]
        %v4185 = vld [vmem:[#allocation4 + $0x130] sm:$0xff]
        %v4186 = vld [vmem:[#allocation4 + $0x138] sm:$0xff]
        %v4187 = vld [vmem:[#allocation4 + $0x140] sm:$0xff]
        %v4188 = vld [vmem:[#allocation4 + $0x148] sm:$0xff]
        %v4189 = vld [vmem:[#allocation4 + $0x150] sm:$0xff]
        %v4190 = vld [vmem:[#allocation4 + $0x158] sm:$0xff]
        %v4191 = vld [vmem:[#allocation4 + $0x160] sm:$0xff]
        %v4192 = vld [vmem:[#allocation4 + $0x168] sm:$0xff]
        %v4193 = vld [vmem:[#allocation4 + $0x170] sm:$0xff]
        %v4194 = vld [vmem:[#allocation4 + $0x178] sm:$0xff]
        %v4195 = vld [vmem:[#allocation4 + $0x180] sm:$0xff]
        %v4196 = vld [vmem:[#allocation4 + $0x188] sm:$0xff]
        %v4197 = vld [vmem:[#allocation4 + $0x190] sm:$0xff]
        %v4198 = vld [vmem:[#allocation4 + $0x198] sm:$0xff]
        %v4199 = vld [vmem:[#allocation4 + $0x1a0] sm:$0xff]
        %v4200 = vld [vmem:[#allocation4 + $0x1a8] sm:$0xff]
        %v4201 = vld [vmem:[#allocation4 + $0x1b0] sm:$0xff]
        %v4202 = vld [vmem:[#allocation4 + $0x1b8] sm:$0xff]
        %v4203 = vld [vmem:[#allocation4 + $0x1c0] sm:$0xff]
        %v4204 = vld [vmem:[#allocation4 + $0x1c8] sm:$0xff]
        %v4205 = vld [vmem:[#allocation4 + $0x1d0] sm:$0xff]
        %v4206 = vld [vmem:[#allocation4 + $0x1d8] sm:$0xff]
        %v4207 = vld [vmem:[#allocation4 + $0x1e0] sm:$0xff]
        %v4208 = vld [vmem:[#allocation4 + $0x1e8] sm:$0xff]
        %v4209 = vld [vmem:[#allocation4 + $0x1f0] sm:$0xff]
        %v4210 = vld [vmem:[#allocation4 + $0x1f8] sm:$0xff]
        %4212 = vset.pattern.permute.xlu0 0
        %4213 = vperm.xlu0 %4212, %v3123
        %v4214 = vpop.permute.xlu0 %4213
        %4217 = vset.pattern.permute.xlu0 0
        %4218 = vperm.xlu0 %4217, %v3125
        %v4219 = vpop.permute.xlu0 %4218
        %4222 = vset.pattern.permute.xlu0 0
        %4223 = vperm.xlu0 %4222, %v3127
        %v4224 = vpop.permute.xlu0 %4223
        %4227 = vset.pattern.permute.xlu0 0
        %4228 = vperm.xlu0 %4227, %v3129
        %v4229 = vpop.permute.xlu0 %4228
        %4232 = vset.pattern.permute.xlu0 0
        %4233 = vperm.xlu0 %4232, %v3131
        %v4234 = vpop.permute.xlu0 %4233
        %4237 = vset.pattern.permute.xlu0 0
        %4238 = vperm.xlu0 %4237, %v3133
        %v4239 = vpop.permute.xlu0 %4238
        %4242 = vset.pattern.permute.xlu0 0
        %4243 = vperm.xlu0 %4242, %v3135
        %v4244 = vpop.permute.xlu0 %4243
        %4247 = vset.pattern.permute.xlu0 0
        %4248 = vperm.xlu0 %4247, %v3137
        %v4249 = vpop.permute.xlu0 %4248
        %4252 = vset.pattern.permute.xlu0 0
        %4253 = vperm.xlu0 %4252, %v3139
        %v4254 = vpop.permute.xlu0 %4253
        %4257 = vset.pattern.permute.xlu0 0
        %4258 = vperm.xlu0 %4257, %v3141
        %v4259 = vpop.permute.xlu0 %4258
        %4262 = vset.pattern.permute.xlu0 0
        %4263 = vperm.xlu0 %4262, %v3143
        %v4264 = vpop.permute.xlu0 %4263
        %4267 = vset.pattern.permute.xlu0 0
        %4268 = vperm.xlu0 %4267, %v3145
        %v4269 = vpop.permute.xlu0 %4268
        %4272 = vset.pattern.permute.xlu0 0
        %4273 = vperm.xlu0 %4272, %v3147
        %v4274 = vpop.permute.xlu0 %4273
        %4277 = vset.pattern.permute.xlu0 0
        %4278 = vperm.xlu0 %4277, %v3149
        %v4279 = vpop.permute.xlu0 %4278
        %4282 = vset.pattern.permute.xlu0 0
        %4283 = vperm.xlu0 %4282, %v3151
        %v4284 = vpop.permute.xlu0 %4283
        %4287 = vset.pattern.permute.xlu0 0
        %4288 = vperm.xlu0 %4287, %v3153
        %v4289 = vpop.permute.xlu0 %4288
        %4292 = vset.pattern.permute.xlu0 0
        %4293 = vperm.xlu0 %4292, %v3155
        %v4294 = vpop.permute.xlu0 %4293
        %4297 = vset.pattern.permute.xlu0 0
        %4298 = vperm.xlu0 %4297, %v3157
        %v4299 = vpop.permute.xlu0 %4298
        %4302 = vset.pattern.permute.xlu0 0
        %4303 = vperm.xlu0 %4302, %v3159
        %v4304 = vpop.permute.xlu0 %4303
        %4307 = vset.pattern.permute.xlu0 0
        %4308 = vperm.xlu0 %4307, %v3161
        %v4309 = vpop.permute.xlu0 %4308
        %4312 = vset.pattern.permute.xlu0 0
        %4313 = vperm.xlu0 %4312, %v3163
        %v4314 = vpop.permute.xlu0 %4313
        %4317 = vset.pattern.permute.xlu0 0
        %4318 = vperm.xlu0 %4317, %v3165
        %v4319 = vpop.permute.xlu0 %4318
        %4322 = vset.pattern.permute.xlu0 0
        %4323 = vperm.xlu0 %4322, %v3167
        %v4324 = vpop.permute.xlu0 %4323
        %4327 = vset.pattern.permute.xlu0 0
        %4328 = vperm.xlu0 %4327, %v3169
        %v4329 = vpop.permute.xlu0 %4328
        %4332 = vset.pattern.permute.xlu0 0
        %4333 = vperm.xlu0 %4332, %v3171
        %v4334 = vpop.permute.xlu0 %4333
        %4337 = vset.pattern.permute.xlu0 0
        %4338 = vperm.xlu0 %4337, %v3173
        %v4339 = vpop.permute.xlu0 %4338
        %4342 = vset.pattern.permute.xlu0 0
        %4343 = vperm.xlu0 %4342, %v3175
        %v4344 = vpop.permute.xlu0 %4343
        %4347 = vset.pattern.permute.xlu0 0
        %4348 = vperm.xlu0 %4347, %v3177
        %v4349 = vpop.permute.xlu0 %4348
        %4352 = vset.pattern.permute.xlu0 0
        %4353 = vperm.xlu0 %4352, %v3179
        %v4354 = vpop.permute.xlu0 %4353
        %4357 = vset.pattern.permute.xlu0 0
        %4358 = vperm.xlu0 %4357, %v3181
        %v4359 = vpop.permute.xlu0 %4358
        %4362 = vset.pattern.permute.xlu0 0
        %4363 = vperm.xlu0 %4362, %v3183
        %v4364 = vpop.permute.xlu0 %4363
        %4367 = vset.pattern.permute.xlu0 0
        %4368 = vperm.xlu0 %4367, %v3185
        %v4369 = vpop.permute.xlu0 %4368
        %4372 = vset.pattern.permute.xlu0 0
        %4373 = vperm.xlu0 %4372, %v3187
        %v4374 = vpop.permute.xlu0 %4373
        %4377 = vset.pattern.permute.xlu0 0
        %4378 = vperm.xlu0 %4377, %v3189
        %v4379 = vpop.permute.xlu0 %4378
        %4382 = vset.pattern.permute.xlu0 0
        %4383 = vperm.xlu0 %4382, %v3191
        %v4384 = vpop.permute.xlu0 %4383
        %4387 = vset.pattern.permute.xlu0 0
        %4388 = vperm.xlu0 %4387, %v3193
        %v4389 = vpop.permute.xlu0 %4388
        %4392 = vset.pattern.permute.xlu0 0
        %4393 = vperm.xlu0 %4392, %v3195
        %v4394 = vpop.permute.xlu0 %4393
        %4397 = vset.pattern.permute.xlu0 0
        %4398 = vperm.xlu0 %4397, %v3197
        %v4399 = vpop.permute.xlu0 %4398
        %4402 = vset.pattern.permute.xlu0 0
        %4403 = vperm.xlu0 %4402, %v3199
        %v4404 = vpop.permute.xlu0 %4403
        %4407 = vset.pattern.permute.xlu0 0
        %4408 = vperm.xlu0 %4407, %v3201
        %v4409 = vpop.permute.xlu0 %4408
        %4412 = vset.pattern.permute.xlu0 0
        %4413 = vperm.xlu0 %4412, %v3203
        %v4414 = vpop.permute.xlu0 %4413
        %4417 = vset.pattern.permute.xlu0 0
        %4418 = vperm.xlu0 %4417, %v3205
        %v4419 = vpop.permute.xlu0 %4418
        %4422 = vset.pattern.permute.xlu0 0
        %4423 = vperm.xlu0 %4422, %v3207
        %v4424 = vpop.permute.xlu0 %4423
        %4427 = vset.pattern.permute.xlu0 0
        %4428 = vperm.xlu0 %4427, %v3209
        %v4429 = vpop.permute.xlu0 %4428
        %4432 = vset.pattern.permute.xlu0 0
        %4433 = vperm.xlu0 %4432, %v3211
        %v4434 = vpop.permute.xlu0 %4433
        %4437 = vset.pattern.permute.xlu0 0
        %4438 = vperm.xlu0 %4437, %v3213
        %v4439 = vpop.permute.xlu0 %4438
        %4442 = vset.pattern.permute.xlu0 0
        %4443 = vperm.xlu0 %4442, %v3215
        %v4444 = vpop.permute.xlu0 %4443
        %4447 = vset.pattern.permute.xlu0 0
        %4448 = vperm.xlu0 %4447, %v3217
        %v4449 = vpop.permute.xlu0 %4448
        %4452 = vset.pattern.permute.xlu0 0
        %4453 = vperm.xlu0 %4452, %v3219
        %v4454 = vpop.permute.xlu0 %4453
        %4457 = vset.pattern.permute.xlu0 0
        %4458 = vperm.xlu0 %4457, %v3221
        %v4459 = vpop.permute.xlu0 %4458
        %4462 = vset.pattern.permute.xlu0 0
        %4463 = vperm.xlu0 %4462, %v3223
        %v4464 = vpop.permute.xlu0 %4463
        %4467 = vset.pattern.permute.xlu0 0
        %4468 = vperm.xlu0 %4467, %v3225
        %v4469 = vpop.permute.xlu0 %4468
        %4472 = vset.pattern.permute.xlu0 0
        %4473 = vperm.xlu0 %4472, %v3227
        %v4474 = vpop.permute.xlu0 %4473
        %4477 = vset.pattern.permute.xlu0 0
        %4478 = vperm.xlu0 %4477, %v3229
        %v4479 = vpop.permute.xlu0 %4478
        %4482 = vset.pattern.permute.xlu0 0
        %4483 = vperm.xlu0 %4482, %v3231
        %v4484 = vpop.permute.xlu0 %4483
        %4487 = vset.pattern.permute.xlu0 0
        %4488 = vperm.xlu0 %4487, %v3233
        %v4489 = vpop.permute.xlu0 %4488
        %4492 = vset.pattern.permute.xlu0 0
        %4493 = vperm.xlu0 %4492, %v3235
        %v4494 = vpop.permute.xlu0 %4493
        %4497 = vset.pattern.permute.xlu0 0
        %4498 = vperm.xlu0 %4497, %v3237
        %v4499 = vpop.permute.xlu0 %4498
        %4502 = vset.pattern.permute.xlu0 0
        %4503 = vperm.xlu0 %4502, %v3239
        %v4504 = vpop.permute.xlu0 %4503
        %4507 = vset.pattern.permute.xlu0 0
        %4508 = vperm.xlu0 %4507, %v3241
        %v4509 = vpop.permute.xlu0 %4508
        %4512 = vset.pattern.permute.xlu0 0
        %4513 = vperm.xlu0 %4512, %v3243
        %v4514 = vpop.permute.xlu0 %4513
        %4517 = vset.pattern.permute.xlu0 0
        %4518 = vperm.xlu0 %4517, %v3245
        %v4519 = vpop.permute.xlu0 %4518
        %4522 = vset.pattern.permute.xlu0 0
        %4523 = vperm.xlu0 %4522, %v3247
        %v4524 = vpop.permute.xlu0 %4523
        %4527 = vset.pattern.permute.xlu0 0
        %4528 = vperm.xlu0 %4527, %v3249
        %v4529 = vpop.permute.xlu0 %4528
        %v4531 = vmul.f32 %v4214, %v4147
        %v4532 = vmul.f32 %v4219, %v4148
        %v4533 = vmul.f32 %v4224, %v4149
        %v4534 = vmul.f32 %v4229, %v4150
        %v4535 = vmul.f32 %v4234, %v4151
        %v4536 = vmul.f32 %v4239, %v4152
        %v4537 = vmul.f32 %v4244, %v4153
        %v4538 = vmul.f32 %v4249, %v4154
        %v4539 = vmul.f32 %v4254, %v4155
        %v4540 = vmul.f32 %v4259, %v4156
        %v4541 = vmul.f32 %v4264, %v4157
        %v4542 = vmul.f32 %v4269, %v4158
        %v4543 = vmul.f32 %v4274, %v4159
        %v4544 = vmul.f32 %v4279, %v4160
        %v4545 = vmul.f32 %v4284, %v4161
        %v4546 = vmul.f32 %v4289, %v4162
        %v4547 = vmul.f32 %v4294, %v4163
        %v4548 = vmul.f32 %v4299, %v4164
        %v4549 = vmul.f32 %v4304, %v4165
        %v4550 = vmul.f32 %v4309, %v4166
        %v4551 = vmul.f32 %v4314, %v4167
        %v4552 = vmul.f32 %v4319, %v4168
        %v4553 = vmul.f32 %v4324, %v4169
        %v4554 = vmul.f32 %v4329, %v4170
        %v4555 = vmul.f32 %v4334, %v4171
        %v4556 = vmul.f32 %v4339, %v4172
        %v4557 = vmul.f32 %v4344, %v4173
        %v4558 = vmul.f32 %v4349, %v4174
        %v4559 = vmul.f32 %v4354, %v4175
        %v4560 = vmul.f32 %v4359, %v4176
        %v4561 = vmul.f32 %v4364, %v4177
        %v4562 = vmul.f32 %v4369, %v4178
        %v4563 = vmul.f32 %v4374, %v4179
        %v4564 = vmul.f32 %v4379, %v4180
        %v4565 = vmul.f32 %v4384, %v4181
        %v4566 = vmul.f32 %v4389, %v4182
        %v4567 = vmul.f32 %v4394, %v4183
        %v4568 = vmul.f32 %v4399, %v4184
        %v4569 = vmul.f32 %v4404, %v4185
        %v4570 = vmul.f32 %v4409, %v4186
        %v4571 = vmul.f32 %v4414, %v4187
        %v4572 = vmul.f32 %v4419, %v4188
        %v4573 = vmul.f32 %v4424, %v4189
        %v4574 = vmul.f32 %v4429, %v4190
        %v4575 = vmul.f32 %v4434, %v4191
        %v4576 = vmul.f32 %v4439, %v4192
        %v4577 = vmul.f32 %v4444, %v4193
        %v4578 = vmul.f32 %v4449, %v4194
        %v4579 = vmul.f32 %v4454, %v4195
        %v4580 = vmul.f32 %v4459, %v4196
        %v4581 = vmul.f32 %v4464, %v4197
        %v4582 = vmul.f32 %v4469, %v4198
        %v4583 = vmul.f32 %v4474, %v4199
        %v4584 = vmul.f32 %v4479, %v4200
        %v4585 = vmul.f32 %v4484, %v4201
        %v4586 = vmul.f32 %v4489, %v4202
        %v4587 = vmul.f32 %v4494, %v4203
        %v4588 = vmul.f32 %v4499, %v4204
        %v4589 = vmul.f32 %v4504, %v4205
        %v4590 = vmul.f32 %v4509, %v4206
        %v4591 = vmul.f32 %v4514, %v4207
        %v4592 = vmul.f32 %v4519, %v4208
        %v4593 = vmul.f32 %v4524, %v4209
        %v4594 = vmul.f32 %v4529, %v4210
        %v4595 = vpack.c.bf16 %v3637, %v3635
        %v4596 = vpack.c.bf16 %v3641, %v3639
        %v4597 = vpack.c.bf16 %v3645, %v3643
        %v4598 = vpack.c.bf16 %v3649, %v3647
        %v4599 = vpack.c.bf16 %v3653, %v3651
        %v4600 = vpack.c.bf16 %v3657, %v3655
        %v4601 = vpack.c.bf16 %v3661, %v3659
        %v4602 = vpack.c.bf16 %v3665, %v3663
        %v4603 = vpack.c.bf16 %v3669, %v3667
        %v4604 = vpack.c.bf16 %v3673, %v3671
        %v4605 = vpack.c.bf16 %v3677, %v3675
        %v4606 = vpack.c.bf16 %v3681, %v3679
        %v4607 = vpack.c.bf16 %v3685, %v3683
        %v4608 = vpack.c.bf16 %v3689, %v3687
        %v4609 = vpack.c.bf16 %v3693, %v3691
        %v4610 = vpack.c.bf16 %v3697, %v3695
        %v4611 = vpack.c.bf16 %v3701, %v3699
        %v4612 = vpack.c.bf16 %v3705, %v3703
        %v4613 = vpack.c.bf16 %v3709, %v3707
        %v4614 = vpack.c.bf16 %v3713, %v3711
        %v4615 = vpack.c.bf16 %v3717, %v3715
        %v4616 = vpack.c.bf16 %v3721, %v3719
        %v4617 = vpack.c.bf16 %v3725, %v3723
        %v4618 = vpack.c.bf16 %v3729, %v3727
        %v4619 = vpack.c.bf16 %v3733, %v3731
        %v4620 = vpack.c.bf16 %v3737, %v3735
        %v4621 = vpack.c.bf16 %v3741, %v3739
        %v4622 = vpack.c.bf16 %v3745, %v3743
        %v4623 = vpack.c.bf16 %v3749, %v3747
        %v4624 = vpack.c.bf16 %v3753, %v3751
        %v4625 = vpack.c.bf16 %v3757, %v3755
        %v4626 = vpack.c.bf16 %v3761, %v3759
        %v4643 = vunpack.c.l.b16 %v1677
        %v4644 = vunpack.c.l.b16 %v1678
        %v4645 = vunpack.c.l.b16 %v1679
        %v4646 = vunpack.c.l.b16 %v1680
        %v4647 = vunpack.c.l.b16 %v1681
        %v4648 = vunpack.c.l.b16 %v1682
        %v4649 = vunpack.c.l.b16 %v1683
        %v4650 = vunpack.c.l.b16 %v1684
        %v4651 = vunpack.c.l.b16 %v1685
        %v4652 = vunpack.c.l.b16 %v1686
        %v4653 = vunpack.c.l.b16 %v1687
        %v4654 = vunpack.c.l.b16 %v1688
        %v4655 = vunpack.c.l.b16 %v1689
        %v4656 = vunpack.c.l.b16 %v1690
        %v4657 = vunpack.c.l.b16 %v1691
        %v4658 = vunpack.c.l.b16 %v1692
        %v4659 = vpack.c.b16 %v4644, %v4643
        %v4660 = vpack.c.b16 %v4646, %v4645
        %v4661 = vpack.c.b16 %v4648, %v4647
        %v4662 = vpack.c.b16 %v4650, %v4649
        %v4663 = vpack.c.b16 %v4652, %v4651
        %v4664 = vpack.c.b16 %v4654, %v4653
        %v4665 = vpack.c.b16 %v4656, %v4655
        %v4666 = vpack.c.b16 %v4658, %v4657
        %4675 = vmatprep.subr.bf16.mxu0 0
        %4676 = vmatpush1.bf16.msra.mxu0 %v4659
        %4677 = vmatprep.subr.bf16.mxu0 0
        %4678 = vmatpush1.bf16.msra.mxu0 %v4660
        %4679 = vmatprep.subr.bf16.mxu0 0
        %4680 = vmatpush1.bf16.msra.mxu0 %v4661
        %4681 = vmatprep.subr.bf16.mxu0 0
        %4682 = vmatpush1.bf16.msra.mxu0 %v4662
        %4683 = vmatprep.subr.bf16.mxu0 0
        %4684 = vmatpush1.bf16.msra.mxu0 %v4663
        %4685 = vmatprep.subr.bf16.mxu0 0
        %4686 = vmatpush1.bf16.msra.mxu0 %v4664
        %4687 = vmatprep.subr.bf16.mxu0 0
        %4688 = vmatpush1.bf16.msra.mxu0 %v4665
        %4689 = vmatprep.subr.bf16.mxu0 0
        %4690 = vmatpush1.bf16.msra.mxu0 %v4666
        %4691 = vmatprep.subr.bf16.mxu0 0
        %4692 = vmatpush1.bf16.msra.mxu0 0
        %4693 = vmatprep.subr.bf16.mxu0 0
        %4694 = vmatpush1.bf16.msra.mxu0 0
        %4695 = vmatprep.subr.bf16.mxu0 0
        %4696 = vmatpush1.bf16.msra.mxu0 0
        %4697 = vmatprep.subr.bf16.mxu0 0
        %4698 = vmatpush1.bf16.msra.mxu0 0
        %4699 = vmatprep.subr.bf16.mxu0 0
        %4700 = vmatpush1.bf16.msra.mxu0 0
        %4701 = vmatprep.subr.bf16.mxu0 0
        %4702 = vmatpush1.bf16.msra.mxu0 0
        %4703 = vmatprep.subr.bf16.mxu0 0
        %4704 = vmatpush1.bf16.msra.mxu0 0
        %4705 = vmatprep.subr.bf16.mxu0 0
        %4706 = vmatpush1.bf16.msra.mxu0 0
        %4707 = vmatprep.mubr.bf16.mxu0 0
        %4708 = vmatmul.mubr.bf16.gmra.mrb[0].mxu0 %v4595
        %v4709 = vpop.f32.mrb[0].mxu0
        %v4710 = vadd.f32 0.0, %v4709
        %v4711 = vpop.f32.mrb[0].mxu0
        %v4712 = vpop.f32.mrb[0].mxu0
        %v4713 = vadd.f32 0.0, %v4712
        %v4714 = vpop.f32.mrb[0].mxu0
        %4715 = vmatprep.mubr.bf16.mxu0 0
        %4716 = vmatmul.mubr.bf16.gmra.mrb[0].mxu0 %v4596
        %v4717 = vpop.f32.mrb[0].mxu0
        %v4718 = vadd.f32 0.0, %v4717
        %v4719 = vpop.f32.mrb[0].mxu0
        %v4720 = vpop.f32.mrb[0].mxu0
        %v4721 = vadd.f32 0.0, %v4720
        %v4722 = vpop.f32.mrb[0].mxu0
        %4723 = vmatprep.mubr.bf16.mxu0 0
        %4724 = vmatmul.mubr.bf16.gmra.mrb[0].mxu0 %v4597
        %v4725 = vpop.f32.mrb[0].mxu0
        %v4726 = vadd.f32 0.0, %v4725
        %v4727 = vpop.f32.mrb[0].mxu0
        %v4728 = vpop.f32.mrb[0].mxu0
        %v4729 = vadd.f32 0.0, %v4728
        %v4730 = vpop.f32.mrb[0].mxu0
        %4731 = vmatprep.mubr.bf16.mxu0 0
        %4732 = vmatmul.mubr.bf16.gmra.mrb[0].mxu0 %v4598
        %v4733 = vpop.f32.mrb[0].mxu0
        %v4734 = vadd.f32 0.0, %v4733
        %v4735 = vpop.f32.mrb[0].mxu0
        %v4736 = vpop.f32.mrb[0].mxu0
        %v4737 = vadd.f32 0.0, %v4736
        %v4738 = vpop.f32.mrb[0].mxu0
        %4739 = vmatprep.mubr.bf16.mxu0 0
        %4740 = vmatmul.mubr.bf16.gmra.mrb[0].mxu0 %v4599
        %v4741 = vpop.f32.mrb[0].mxu0
        %v4742 = vadd.f32 0.0, %v4741
        %v4743 = vpop.f32.mrb[0].mxu0
        %v4744 = vpop.f32.mrb[0].mxu0
        %v4745 = vadd.f32 0.0, %v4744
        %v4746 = vpop.f32.mrb[0].mxu0
        %4747 = vmatprep.mubr.bf16.mxu0 0
        %4748 = vmatmul.mubr.bf16.gmra.mrb[0].mxu0 %v4600
        %v4749 = vpop.f32.mrb[0].mxu0
        %v4750 = vadd.f32 0.0, %v4749
        %v4751 = vpop.f32.mrb[0].mxu0
        %v4752 = vpop.f32.mrb[0].mxu0
        %v4753 = vadd.f32 0.0, %v4752
        %v4754 = vpop.f32.mrb[0].mxu0
        %4755 = vmatprep.mubr.bf16.mxu0 0
        %4756 = vmatmul.mubr.bf16.gmra.mrb[0].mxu0 %v4601
        %v4757 = vpop.f32.mrb[0].mxu0
        %v4758 = vadd.f32 0.0, %v4757
        %v4759 = vpop.f32.mrb[0].mxu0
        %v4760 = vpop.f32.mrb[0].mxu0
        %v4761 = vadd.f32 0.0, %v4760
        %v4762 = vpop.f32.mrb[0].mxu0
        %4763 = vmatprep.mubr.bf16.mxu0 0
        %4764 = vmatmul.mubr.bf16.gmra.mrb[0].mxu0 %v4602
        %v4765 = vpop.f32.mrb[0].mxu0
        %v4766 = vadd.f32 0.0, %v4765
        %v4767 = vpop.f32.mrb[0].mxu0
        %v4768 = vpop.f32.mrb[0].mxu0
        %v4769 = vadd.f32 0.0, %v4768
        %v4770 = vpop.f32.mrb[0].mxu0
        %4771 = vdwg.mxu0
        %v4788 = vunpack.c.l.b16 %v1693
        %v4789 = vunpack.c.l.b16 %v1694
        %v4790 = vunpack.c.l.b16 %v1695
        %v4791 = vunpack.c.l.b16 %v1696
        %v4792 = vunpack.c.l.b16 %v1697
        %v4793 = vunpack.c.l.b16 %v1698
        %v4794 = vunpack.c.l.b16 %v1699
        %v4795 = vunpack.c.l.b16 %v1700
        %v4796 = vunpack.c.l.b16 %v1701
        %v4797 = vunpack.c.l.b16 %v1702
        %v4798 = vunpack.c.l.b16 %v1703
        %v4799 = vunpack.c.l.b16 %v1704
        %v4800 = vunpack.c.l.b16 %v1705
        %v4801 = vunpack.c.l.b16 %v1706
        %v4802 = vunpack.c.l.b16 %v1707
        %v4803 = vunpack.c.l.b16 %v1708
        %v4804 = vpack.c.b16 %v4789, %v4788
        %v4805 = vpack.c.b16 %v4791, %v4790
        %v4806 = vpack.c.b16 %v4793, %v4792
        %v4807 = vpack.c.b16 %v4795, %v4794
        %v4808 = vpack.c.b16 %v4797, %v4796
        %v4809 = vpack.c.b16 %v4799, %v4798
        %v4810 = vpack.c.b16 %v4801, %v4800
        %v4811 = vpack.c.b16 %v4803, %v4802
        %4820 = vmatprep.subr.bf16.mxu0 0
        %4821 = vmatpush1.bf16.msra.mxu0 %v4804
        %4822 = vmatprep.subr.bf16.mxu0 0
        %4823 = vmatpush1.bf16.msra.mxu0 %v4805
        %4824 = vmatprep.subr.bf16.mxu0 0
        %4825 = vmatpush1.bf16.msra.mxu0 %v4806
        %4826 = vmatprep.subr.bf16.mxu0 0
        %4827 = vmatpush1.bf16.msra.mxu0 %v4807
        %4828 = vmatprep.subr.bf16.mxu0 0
        %4829 = vmatpush1.bf16.msra.mxu0 %v4808
        %4830 = vmatprep.subr.bf16.mxu0 0
        %4831 = vmatpush1.bf16.msra.mxu0 %v4809
        %4832 = vmatprep.subr.bf16.mxu0 0
        %4833 = vmatpush1.bf16.msra.mxu0 %v4810
        %4834 = vmatprep.subr.bf16.mxu0 0
        %4835 = vmatpush1.bf16.msra.mxu0 %v4811
        %4836 = vmatprep.subr.bf16.mxu0 0
        %4837 = vmatpush1.bf16.msra.mxu0 0
        %4838 = vmatprep.subr.bf16.mxu0 0
        %4839 = vmatpush1.bf16.msra.mxu0 0
        %4840 = vmatprep.subr.bf16.mxu0 0
        %4841 = vmatpush1.bf16.msra.mxu0 0
        %4842 = vmatprep.subr.bf16.mxu0 0
        %4843 = vmatpush1.bf16.msra.mxu0 0
        %4844 = vmatprep.subr.bf16.mxu0 0
        %4845 = vmatpush1.bf16.msra.mxu0 0
        %4846 = vmatprep.subr.bf16.mxu0 0
        %4847 = vmatpush1.bf16.msra.mxu0 0
        %4848 = vmatprep.subr.bf16.mxu0 0
        %4849 = vmatpush1.bf16.msra.mxu0 0
        %4850 = vmatprep.subr.bf16.mxu0 0
        %4851 = vmatpush1.bf16.msra.mxu0 0
        %4852 = vmatprep.mubr.bf16.mxu0 0
        %4853 = vmatmul.mubr.bf16.gmra.mrb[0].mxu0 %v4603
        %v4854 = vpop.f32.mrb[0].mxu0
        %v4855 = vadd.f32 0.0, %v4854
        %v4856 = vpop.f32.mrb[0].mxu0
        %v4857 = vpop.f32.mrb[0].mxu0
        %v4858 = vadd.f32 0.0, %v4857
        %v4859 = vpop.f32.mrb[0].mxu0
        %4860 = vmatprep.mubr.bf16.mxu0 0
        %4861 = vmatmul.mubr.bf16.gmra.mrb[0].mxu0 %v4604
        %v4862 = vpop.f32.mrb[0].mxu0
        %v4863 = vadd.f32 0.0, %v4862
        %v4864 = vpop.f32.mrb[0].mxu0
        %v4865 = vpop.f32.mrb[0].mxu0
        %v4866 = vadd.f32 0.0, %v4865
        %v4867 = vpop.f32.mrb[0].mxu0
        %4868 = vmatprep.mubr.bf16.mxu0 0
        %4869 = vmatmul.mubr.bf16.gmra.mrb[0].mxu0 %v4605
        %v4870 = vpop.f32.mrb[0].mxu0
        %v4871 = vadd.f32 0.0, %v4870
        %v4872 = vpop.f32.mrb[0].mxu0
        %v4873 = vpop.f32.mrb[0].mxu0
        %v4874 = vadd.f32 0.0, %v4873
        %v4875 = vpop.f32.mrb[0].mxu0
        %4876 = vmatprep.mubr.bf16.mxu0 0
        %4877 = vmatmul.mubr.bf16.gmra.mrb[0].mxu0 %v4606
        %v4878 = vpop.f32.mrb[0].mxu0
        %v4879 = vadd.f32 0.0, %v4878
        %v4880 = vpop.f32.mrb[0].mxu0
        %v4881 = vpop.f32.mrb[0].mxu0
        %v4882 = vadd.f32 0.0, %v4881
        %v4883 = vpop.f32.mrb[0].mxu0
        %4884 = vmatprep.mubr.bf16.mxu0 0
        %4885 = vmatmul.mubr.bf16.gmra.mrb[0].mxu0 %v4607
        %v4886 = vpop.f32.mrb[0].mxu0
        %v4887 = vadd.f32 0.0, %v4886
        %v4888 = vpop.f32.mrb[0].mxu0
        %v4889 = vpop.f32.mrb[0].mxu0
        %v4890 = vadd.f32 0.0, %v4889
        %v4891 = vpop.f32.mrb[0].mxu0
        %4892 = vmatprep.mubr.bf16.mxu0 0
        %4893 = vmatmul.mubr.bf16.gmra.mrb[0].mxu0 %v4608
        %v4894 = vpop.f32.mrb[0].mxu0
        %v4895 = vadd.f32 0.0, %v4894
        %v4896 = vpop.f32.mrb[0].mxu0
        %v4897 = vpop.f32.mrb[0].mxu0
        %v4898 = vadd.f32 0.0, %v4897
        %v4899 = vpop.f32.mrb[0].mxu0
        %4900 = vmatprep.mubr.bf16.mxu0 0
        %4901 = vmatmul.mubr.bf16.gmra.mrb[0].mxu0 %v4609
        %v4902 = vpop.f32.mrb[0].mxu0
        %v4903 = vadd.f32 0.0, %v4902
        %v4904 = vpop.f32.mrb[0].mxu0
        %v4905 = vpop.f32.mrb[0].mxu0
        %v4906 = vadd.f32 0.0, %v4905
        %v4907 = vpop.f32.mrb[0].mxu0
        %4908 = vmatprep.mubr.bf16.mxu0 0
        %4909 = vmatmul.mubr.bf16.gmra.mrb[0].mxu0 %v4610
        %v4910 = vpop.f32.mrb[0].mxu0
        %v4911 = vadd.f32 0.0, %v4910
        %v4912 = vpop.f32.mrb[0].mxu0
        %v4913 = vpop.f32.mrb[0].mxu0
        %v4914 = vadd.f32 0.0, %v4913
        %v4915 = vpop.f32.mrb[0].mxu0
        %4916 = vdwg.mxu0
        %v4933 = vunpack.c.l.b16 %v1709
        %v4934 = vunpack.c.l.b16 %v1710
        %v4935 = vunpack.c.l.b16 %v1711
        %v4936 = vunpack.c.l.b16 %v1712
        %v4937 = vunpack.c.l.b16 %v1713
        %v4938 = vunpack.c.l.b16 %v1714
        %v4939 = vunpack.c.l.b16 %v1715
        %v4940 = vunpack.c.l.b16 %v1716
        %v4941 = vunpack.c.l.b16 %v1717
        %v4942 = vunpack.c.l.b16 %v1718
        %v4943 = vunpack.c.l.b16 %v1719
        %v4944 = vunpack.c.l.b16 %v1720
        %v4945 = vunpack.c.l.b16 %v1721
        %v4946 = vunpack.c.l.b16 %v1722
        %v4947 = vunpack.c.l.b16 %v1723
        %v4948 = vunpack.c.l.b16 %v1724
        %v4949 = vpack.c.b16 %v4934, %v4933
        %v4950 = vpack.c.b16 %v4936, %v4935
        %v4951 = vpack.c.b16 %v4938, %v4937
        %v4952 = vpack.c.b16 %v4940, %v4939
        %v4953 = vpack.c.b16 %v4942, %v4941
        %v4954 = vpack.c.b16 %v4944, %v4943
        %v4955 = vpack.c.b16 %v4946, %v4945
        %v4956 = vpack.c.b16 %v4948, %v4947
        %4965 = vmatprep.subr.bf16.mxu0 0
        %4966 = vmatpush1.bf16.msra.mxu0 %v4949
        %4967 = vmatprep.subr.bf16.mxu0 0
        %4968 = vmatpush1.bf16.msra.mxu0 %v4950
        %4969 = vmatprep.subr.bf16.mxu0 0
        %4970 = vmatpush1.bf16.msra.mxu0 %v4951
        %4971 = vmatprep.subr.bf16.mxu0 0
        %4972 = vmatpush1.bf16.msra.mxu0 %v4952
        %4973 = vmatprep.subr.bf16.mxu0 0
        %4974 = vmatpush1.bf16.msra.mxu0 %v4953
        %4975 = vmatprep.subr.bf16.mxu0 0
        %4976 = vmatpush1.bf16.msra.mxu0 %v4954
        %4977 = vmatprep.subr.bf16.mxu0 0
        %4978 = vmatpush1.bf16.msra.mxu0 %v4955
        %4979 = vmatprep.subr.bf16.mxu0 0
        %4980 = vmatpush1.bf16.msra.mxu0 %v4956
        %4981 = vmatprep.subr.bf16.mxu0 0
        %4982 = vmatpush1.bf16.msra.mxu0 0
        %4983 = vmatprep.subr.bf16.mxu0 0
        %4984 = vmatpush1.bf16.msra.mxu0 0
        %4985 = vmatprep.subr.bf16.mxu0 0
        %4986 = vmatpush1.bf16.msra.mxu0 0
        %4987 = vmatprep.subr.bf16.mxu0 0
        %4988 = vmatpush1.bf16.msra.mxu0 0
        %4989 = vmatprep.subr.bf16.mxu0 0
        %4990 = vmatpush1.bf16.msra.mxu0 0
        %4991 = vmatprep.subr.bf16.mxu0 0
        %4992 = vmatpush1.bf16.msra.mxu0 0
        %4993 = vmatprep.subr.bf16.mxu0 0
        %4994 = vmatpush1.bf16.msra.mxu0 0
        %4995 = vmatprep.subr.bf16.mxu0 0
        %4996 = vmatpush1.bf16.msra.mxu0 0
        %4997 = vmatprep.mubr.bf16.mxu0 0
        %4998 = vmatmul.mubr.bf16.gmra.mrb[0].mxu0 %v4611
        %v4999 = vpop.f32.mrb[0].mxu0
        %v5000 = vadd.f32 0.0, %v4999
        %v5001 = vpop.f32.mrb[0].mxu0
        %v5002 = vpop.f32.mrb[0].mxu0
        %v5003 = vadd.f32 0.0, %v5002
        %v5004 = vpop.f32.mrb[0].mxu0
        %5005 = vmatprep.mubr.bf16.mxu0 0
        %5006 = vmatmul.mubr.bf16.gmra.mrb[0].mxu0 %v4612
        %v5007 = vpop.f32.mrb[0].mxu0
        %v5008 = vadd.f32 0.0, %v5007
        %v5009 = vpop.f32.mrb[0].mxu0
        %v5010 = vpop.f32.mrb[0].mxu0
        %v5011 = vadd.f32 0.0, %v5010
        %v5012 = vpop.f32.mrb[0].mxu0
        %5013 = vmatprep.mubr.bf16.mxu0 0
        %5014 = vmatmul.mubr.bf16.gmra.mrb[0].mxu0 %v4613
        %v5015 = vpop.f32.mrb[0].mxu0
        %v5016 = vadd.f32 0.0, %v5015
        %v5017 = vpop.f32.mrb[0].mxu0
        %v5018 = vpop.f32.mrb[0].mxu0
        %v5019 = vadd.f32 0.0, %v5018
        %v5020 = vpop.f32.mrb[0].mxu0
        %5021 = vmatprep.mubr.bf16.mxu0 0
        %5022 = vmatmul.mubr.bf16.gmra.mrb[0].mxu0 %v4614
        %v5023 = vpop.f32.mrb[0].mxu0
        %v5024 = vadd.f32 0.0, %v5023
        %v5025 = vpop.f32.mrb[0].mxu0
        %v5026 = vpop.f32.mrb[0].mxu0
        %v5027 = vadd.f32 0.0, %v5026
        %v5028 = vpop.f32.mrb[0].mxu0
        %5029 = vmatprep.mubr.bf16.mxu0 0
        %5030 = vmatmul.mubr.bf16.gmra.mrb[0].mxu0 %v4615
        %v5031 = vpop.f32.mrb[0].mxu0
        %v5032 = vadd.f32 0.0, %v5031
        %v5033 = vpop.f32.mrb[0].mxu0
        %v5034 = vpop.f32.mrb[0].mxu0
        %v5035 = vadd.f32 0.0, %v5034
        %v5036 = vpop.f32.mrb[0].mxu0
        %5037 = vmatprep.mubr.bf16.mxu0 0
        %5038 = vmatmul.mubr.bf16.gmra.mrb[0].mxu0 %v4616
        %v5039 = vpop.f32.mrb[0].mxu0
        %v5040 = vadd.f32 0.0, %v5039
        %v5041 = vpop.f32.mrb[0].mxu0
        %v5042 = vpop.f32.mrb[0].mxu0
        %v5043 = vadd.f32 0.0, %v5042
        %v5044 = vpop.f32.mrb[0].mxu0
        %5045 = vmatprep.mubr.bf16.mxu0 0
        %5046 = vmatmul.mubr.bf16.gmra.mrb[0].mxu0 %v4617
        %v5047 = vpop.f32.mrb[0].mxu0
        %v5048 = vadd.f32 0.0, %v5047
        %v5049 = vpop.f32.mrb[0].mxu0
        %v5050 = vpop.f32.mrb[0].mxu0
        %v5051 = vadd.f32 0.0, %v5050
        %v5052 = vpop.f32.mrb[0].mxu0
        %5053 = vmatprep.mubr.bf16.mxu0 0
        %5054 = vmatmul.mubr.bf16.gmra.mrb[0].mxu0 %v4618
        %v5055 = vpop.f32.mrb[0].mxu0
        %v5056 = vadd.f32 0.0, %v5055
        %v5057 = vpop.f32.mrb[0].mxu0
        %v5058 = vpop.f32.mrb[0].mxu0
        %v5059 = vadd.f32 0.0, %v5058
        %v5060 = vpop.f32.mrb[0].mxu0
        %5061 = vdwg.mxu0
        %v5078 = vunpack.c.l.b16 %v1725
        %v5079 = vunpack.c.l.b16 %v1726
        %v5080 = vunpack.c.l.b16 %v1727
        %v5081 = vunpack.c.l.b16 %v1728
        %v5082 = vunpack.c.l.b16 %v1729
        %v5083 = vunpack.c.l.b16 %v1730
        %v5084 = vunpack.c.l.b16 %v1731
        %v5085 = vunpack.c.l.b16 %v1732
        %v5086 = vunpack.c.l.b16 %v1733
        %v5087 = vunpack.c.l.b16 %v1734
        %v5088 = vunpack.c.l.b16 %v1735
        %v5089 = vunpack.c.l.b16 %v1736
        %v5090 = vunpack.c.l.b16 %v1737
        %v5091 = vunpack.c.l.b16 %v1738
        %v5092 = vunpack.c.l.b16 %v1739
        %v5093 = vunpack.c.l.b16 %v1740
        %v5094 = vpack.c.b16 %v5079, %v5078
        %v5095 = vpack.c.b16 %v5081, %v5080
        %v5096 = vpack.c.b16 %v5083, %v5082
        %v5097 = vpack.c.b16 %v5085, %v5084
        %v5098 = vpack.c.b16 %v5087, %v5086
        %v5099 = vpack.c.b16 %v5089, %v5088
        %v5100 = vpack.c.b16 %v5091, %v5090
        %v5101 = vpack.c.b16 %v5093, %v5092
        %5110 = vmatprep.subr.bf16.mxu0 0
        %5111 = vmatpush1.bf16.msra.mxu0 %v5094
        %5112 = vmatprep.subr.bf16.mxu0 0
        %5113 = vmatpush1.bf16.msra.mxu0 %v5095
        %5114 = vmatprep.subr.bf16.mxu0 0
        %5115 = vmatpush1.bf16.msra.mxu0 %v5096
        %5116 = vmatprep.subr.bf16.mxu0 0
        %5117 = vmatpush1.bf16.msra.mxu0 %v5097
        %5118 = vmatprep.subr.bf16.mxu0 0
        %5119 = vmatpush1.bf16.msra.mxu0 %v5098
        %5120 = vmatprep.subr.bf16.mxu0 0
        %5121 = vmatpush1.bf16.msra.mxu0 %v5099
        %5122 = vmatprep.subr.bf16.mxu0 0
        %5123 = vmatpush1.bf16.msra.mxu0 %v5100
        %5124 = vmatprep.subr.bf16.mxu0 0
        %5125 = vmatpush1.bf16.msra.mxu0 %v5101
        %5126 = vmatprep.subr.bf16.mxu0 0
        %5127 = vmatpush1.bf16.msra.mxu0 0
        %5128 = vmatprep.subr.bf16.mxu0 0
        %5129 = vmatpush1.bf16.msra.mxu0 0
        %5130 = vmatprep.subr.bf16.mxu0 0
        %5131 = vmatpush1.bf16.msra.mxu0 0
        %5132 = vmatprep.subr.bf16.mxu0 0
        %5133 = vmatpush1.bf16.msra.mxu0 0
        %5134 = vmatprep.subr.bf16.mxu0 0
        %5135 = vmatpush1.bf16.msra.mxu0 0
        %5136 = vmatprep.subr.bf16.mxu0 0
        %5137 = vmatpush1.bf16.msra.mxu0 0
        %5138 = vmatprep.subr.bf16.mxu0 0
        %5139 = vmatpush1.bf16.msra.mxu0 0
        %5140 = vmatprep.subr.bf16.mxu0 0
        %5141 = vmatpush1.bf16.msra.mxu0 0
        %5142 = vmatprep.mubr.bf16.mxu0 0
        %5143 = vmatmul.mubr.bf16.gmra.mrb[0].mxu0 %v4619
        %v5144 = vpop.f32.mrb[0].mxu0
        %v5145 = vadd.f32 0.0, %v5144
        %v5146 = vpop.f32.mrb[0].mxu0
        %v5147 = vpop.f32.mrb[0].mxu0
        %v5148 = vadd.f32 0.0, %v5147
        %v5149 = vpop.f32.mrb[0].mxu0
        %5150 = vmatprep.mubr.bf16.mxu0 0
        %5151 = vmatmul.mubr.bf16.gmra.mrb[0].mxu0 %v4620
        %v5152 = vpop.f32.mrb[0].mxu0
        %v5153 = vadd.f32 0.0, %v5152
        %v5154 = vpop.f32.mrb[0].mxu0
        %v5155 = vpop.f32.mrb[0].mxu0
        %v5156 = vadd.f32 0.0, %v5155
        %v5157 = vpop.f32.mrb[0].mxu0
        %5158 = vmatprep.mubr.bf16.mxu0 0
        %5159 = vmatmul.mubr.bf16.gmra.mrb[0].mxu0 %v4621
        %v5160 = vpop.f32.mrb[0].mxu0
        %v5161 = vadd.f32 0.0, %v5160
        %v5162 = vpop.f32.mrb[0].mxu0
        %v5163 = vpop.f32.mrb[0].mxu0
        %v5164 = vadd.f32 0.0, %v5163
        %v5165 = vpop.f32.mrb[0].mxu0
        %5166 = vmatprep.mubr.bf16.mxu0 0
        %5167 = vmatmul.mubr.bf16.gmra.mrb[0].mxu0 %v4622
        %v5168 = vpop.f32.mrb[0].mxu0
        %v5169 = vadd.f32 0.0, %v5168
        %v5170 = vpop.f32.mrb[0].mxu0
        %v5171 = vpop.f32.mrb[0].mxu0
        %v5172 = vadd.f32 0.0, %v5171
        %v5173 = vpop.f32.mrb[0].mxu0
        %5174 = vmatprep.mubr.bf16.mxu0 0
        %5175 = vmatmul.mubr.bf16.gmra.mrb[0].mxu0 %v4623
        %v5176 = vpop.f32.mrb[0].mxu0
        %v5177 = vadd.f32 0.0, %v5176
        %v5178 = vpop.f32.mrb[0].mxu0
        %v5179 = vpop.f32.mrb[0].mxu0
        %v5180 = vadd.f32 0.0, %v5179
        %v5181 = vpop.f32.mrb[0].mxu0
        %5182 = vmatprep.mubr.bf16.mxu0 0
        %5183 = vmatmul.mubr.bf16.gmra.mrb[0].mxu0 %v4624
        %v5184 = vpop.f32.mrb[0].mxu0
        %v5185 = vadd.f32 0.0, %v5184
        %v5186 = vpop.f32.mrb[0].mxu0
        %v5187 = vpop.f32.mrb[0].mxu0
        %v5188 = vadd.f32 0.0, %v5187
        %v5189 = vpop.f32.mrb[0].mxu0
        %5190 = vmatprep.mubr.bf16.mxu0 0
        %5191 = vmatmul.mubr.bf16.gmra.mrb[0].mxu0 %v4625
        %v5192 = vpop.f32.mrb[0].mxu0
        %v5193 = vadd.f32 0.0, %v5192
        %v5194 = vpop.f32.mrb[0].mxu0
        %v5195 = vpop.f32.mrb[0].mxu0
        %v5196 = vadd.f32 0.0, %v5195
        %v5197 = vpop.f32.mrb[0].mxu0
        %5198 = vmatprep.mubr.bf16.mxu0 0
        %5199 = vmatmul.mubr.bf16.gmra.mrb[0].mxu0 %v4626
        %v5200 = vpop.f32.mrb[0].mxu0
        %v5201 = vadd.f32 0.0, %v5200
        %v5202 = vpop.f32.mrb[0].mxu0
        %v5203 = vpop.f32.mrb[0].mxu0
        %v5204 = vadd.f32 0.0, %v5203
        %v5205 = vpop.f32.mrb[0].mxu0
        %5206 = vdwg.mxu0
        %v5207 = vadd.f32 %v4531, %v4710
        %v5208 = vadd.f32 %v4532, %v4713
        %v5209 = vadd.f32 %v4533, %v4718
        %v5210 = vadd.f32 %v4534, %v4721
        %v5211 = vadd.f32 %v4535, %v4726
        %v5212 = vadd.f32 %v4536, %v4729
        %v5213 = vadd.f32 %v4537, %v4734
        %v5214 = vadd.f32 %v4538, %v4737
        %v5215 = vadd.f32 %v4539, %v4742
        %v5216 = vadd.f32 %v4540, %v4745
        %v5217 = vadd.f32 %v4541, %v4750
        %v5218 = vadd.f32 %v4542, %v4753
        %v5219 = vadd.f32 %v4543, %v4758
        %v5220 = vadd.f32 %v4544, %v4761
        %v5221 = vadd.f32 %v4545, %v4766
        %v5222 = vadd.f32 %v4546, %v4769
        %v5223 = vadd.f32 %v4547, %v4855
        %v5224 = vadd.f32 %v4548, %v4858
        %v5225 = vadd.f32 %v4549, %v4863
        %v5226 = vadd.f32 %v4550, %v4866
        %v5227 = vadd.f32 %v4551, %v4871
        %v5228 = vadd.f32 %v4552, %v4874
        %v5229 = vadd.f32 %v4553, %v4879
        %v5230 = vadd.f32 %v4554, %v4882
        %v5231 = vadd.f32 %v4555, %v4887
        %v5232 = vadd.f32 %v4556, %v4890
        %v5233 = vadd.f32 %v4557, %v4895
        %v5234 = vadd.f32 %v4558, %v4898
        %v5235 = vadd.f32 %v4559, %v4903
        %v5236 = vadd.f32 %v4560, %v4906
        %v5237 = vadd.f32 %v4561, %v4911
        %v5238 = vadd.f32 %v4562, %v4914
        %v5239 = vadd.f32 %v4563, %v5000
        %v5240 = vadd.f32 %v4564, %v5003
        %v5241 = vadd.f32 %v4565, %v5008
        %v5242 = vadd.f32 %v4566, %v5011
        %v5243 = vadd.f32 %v4567, %v5016
        %v5244 = vadd.f32 %v4568, %v5019
        %v5245 = vadd.f32 %v4569, %v5024
        %v5246 = vadd.f32 %v4570, %v5027
        %v5247 = vadd.f32 %v4571, %v5032
        %v5248 = vadd.f32 %v4572, %v5035
        %v5249 = vadd.f32 %v4573, %v5040
        %v5250 = vadd.f32 %v4574, %v5043
        %v5251 = vadd.f32 %v4575, %v5048
        %v5252 = vadd.f32 %v4576, %v5051
        %v5253 = vadd.f32 %v4577, %v5056
        %v5254 = vadd.f32 %v4578, %v5059
        %v5255 = vadd.f32 %v4579, %v5145
        %v5256 = vadd.f32 %v4580, %v5148
        %v5257 = vadd.f32 %v4581, %v5153
        %v5258 = vadd.f32 %v4582, %v5156
        %v5259 = vadd.f32 %v4583, %v5161
        %v5260 = vadd.f32 %v4584, %v5164
        %v5261 = vadd.f32 %v4585, %v5169
        %v5262 = vadd.f32 %v4586, %v5172
        %v5263 = vadd.f32 %v4587, %v5177
        %v5264 = vadd.f32 %v4588, %v5180
        %v5265 = vadd.f32 %v4589, %v5185
        %v5266 = vadd.f32 %v4590, %v5188
        %v5267 = vadd.f32 %v4591, %v5193
        %v5268 = vadd.f32 %v4592, %v5196
        %v5269 = vadd.f32 %v4593, %v5201
        %v5270 = vadd.f32 %v4594, %v5204
        %5271 = vst.msk [vmem:[#allocation4] sm:$0xff] %vm1853, %v5207
        %5272 = vst.msk [vmem:[#allocation4 + $0x8] sm:$0xff] %vm1853, %v5208
        %5273 = vst.msk [vmem:[#allocation4 + $0x10] sm:$0xff] %vm1853, %v5209
        %5274 = vst.msk [vmem:[#allocation4 + $0x18] sm:$0xff] %vm1853, %v5210
        %5275 = vst.msk [vmem:[#allocation4 + $0x20] sm:$0xff] %vm1853, %v5211
        %5276 = vst.msk [vmem:[#allocation4 + $0x28] sm:$0xff] %vm1853, %v5212
        %5277 = vst.msk [vmem:[#allocation4 + $0x30] sm:$0xff] %vm1853, %v5213
        %5278 = vst.msk [vmem:[#allocation4 + $0x38] sm:$0xff] %vm1853, %v5214
        %5279 = vst.msk [vmem:[#allocation4 + $0x40] sm:$0xff] %vm1853, %v5215
        %5280 = vst.msk [vmem:[#allocation4 + $0x48] sm:$0xff] %vm1853, %v5216
        %5281 = vst.msk [vmem:[#allocation4 + $0x50] sm:$0xff] %vm1853, %v5217
        %5282 = vst.msk [vmem:[#allocation4 + $0x58] sm:$0xff] %vm1853, %v5218
        %5283 = vst.msk [vmem:[#allocation4 + $0x60] sm:$0xff] %vm1853, %v5219
        %5284 = vst.msk [vmem:[#allocation4 + $0x68] sm:$0xff] %vm1853, %v5220
        %5285 = vst.msk [vmem:[#allocation4 + $0x70] sm:$0xff] %vm1853, %v5221
        %5286 = vst.msk [vmem:[#allocation4 + $0x78] sm:$0xff] %vm1853, %v5222
        %5287 = vst.msk [vmem:[#allocation4 + $0x80] sm:$0xff] %vm1853, %v5223
        %5288 = vst.msk [vmem:[#allocation4 + $0x88] sm:$0xff] %vm1853, %v5224
        %5289 = vst.msk [vmem:[#allocation4 + $0x90] sm:$0xff] %vm1853, %v5225
        %5290 = vst.msk [vmem:[#allocation4 + $0x98] sm:$0xff] %vm1853, %v5226
        %5291 = vst.msk [vmem:[#allocation4 + $0xa0] sm:$0xff] %vm1853, %v5227
        %5292 = vst.msk [vmem:[#allocation4 + $0xa8] sm:$0xff] %vm1853, %v5228
        %5293 = vst.msk [vmem:[#allocation4 + $0xb0] sm:$0xff] %vm1853, %v5229
        %5294 = vst.msk [vmem:[#allocation4 + $0xb8] sm:$0xff] %vm1853, %v5230
        %5295 = vst.msk [vmem:[#allocation4 + $0xc0] sm:$0xff] %vm1853, %v5231
        %5296 = vst.msk [vmem:[#allocation4 + $0xc8] sm:$0xff] %vm1853, %v5232
        %5297 = vst.msk [vmem:[#allocation4 + $0xd0] sm:$0xff] %vm1853, %v5233
        %5298 = vst.msk [vmem:[#allocation4 + $0xd8] sm:$0xff] %vm1853, %v5234
        %5299 = vst.msk [vmem:[#allocation4 + $0xe0] sm:$0xff] %vm1853, %v5235
        %5300 = vst.msk [vmem:[#allocation4 + $0xe8] sm:$0xff] %vm1853, %v5236
        %5301 = vst.msk [vmem:[#allocation4 + $0xf0] sm:$0xff] %vm1853, %v5237
        %5302 = vst.msk [vmem:[#allocation4 + $0xf8] sm:$0xff] %vm1853, %v5238
        %5303 = vst.msk [vmem:[#allocation4 + $0x100] sm:$0xff] %vm1853, %v5239
        %5304 = vst.msk [vmem:[#allocation4 + $0x108] sm:$0xff] %vm1853, %v5240
        %5305 = vst.msk [vmem:[#allocation4 + $0x110] sm:$0xff] %vm1853, %v5241
        %5306 = vst.msk [vmem:[#allocation4 + $0x118] sm:$0xff] %vm1853, %v5242
        %5307 = vst.msk [vmem:[#allocation4 + $0x120] sm:$0xff] %vm1853, %v5243
        %5308 = vst.msk [vmem:[#allocation4 + $0x128] sm:$0xff] %vm1853, %v5244
        %5309 = vst.msk [vmem:[#allocation4 + $0x130] sm:$0xff] %vm1853, %v5245
        %5310 = vst.msk [vmem:[#allocation4 + $0x138] sm:$0xff] %vm1853, %v5246
        %5311 = vst.msk [vmem:[#allocation4 + $0x140] sm:$0xff] %vm1853, %v5247
        %5312 = vst.msk [vmem:[#allocation4 + $0x148] sm:$0xff] %vm1853, %v5248
        %5313 = vst.msk [vmem:[#allocation4 + $0x150] sm:$0xff] %vm1853, %v5249
        %5314 = vst.msk [vmem:[#allocation4 + $0x158] sm:$0xff] %vm1853, %v5250
        %5315 = vst.msk [vmem:[#allocation4 + $0x160] sm:$0xff] %vm1853, %v5251
        %5316 = vst.msk [vmem:[#allocation4 + $0x168] sm:$0xff] %vm1853, %v5252
        %5317 = vst.msk [vmem:[#allocation4 + $0x170] sm:$0xff] %vm1853, %v5253
        %5318 = vst.msk [vmem:[#allocation4 + $0x178] sm:$0xff] %vm1853, %v5254
        %5319 = vst.msk [vmem:[#allocation4 + $0x180] sm:$0xff] %vm1853, %v5255
        %5320 = vst.msk [vmem:[#allocation4 + $0x188] sm:$0xff] %vm1853, %v5256
        %5321 = vst.msk [vmem:[#allocation4 + $0x190] sm:$0xff] %vm1853, %v5257
        %5322 = vst.msk [vmem:[#allocation4 + $0x198] sm:$0xff] %vm1853, %v5258
        %5323 = vst.msk [vmem:[#allocation4 + $0x1a0] sm:$0xff] %vm1853, %v5259
        %5324 = vst.msk [vmem:[#allocation4 + $0x1a8] sm:$0xff] %vm1853, %v5260
        %5325 = vst.msk [vmem:[#allocation4 + $0x1b0] sm:$0xff] %vm1853, %v5261
        %5326 = vst.msk [vmem:[#allocation4 + $0x1b8] sm:$0xff] %vm1853, %v5262
        %5327 = vst.msk [vmem:[#allocation4 + $0x1c0] sm:$0xff] %vm1853, %v5263
        %5328 = vst.msk [vmem:[#allocation4 + $0x1c8] sm:$0xff] %vm1853, %v5264
        %5329 = vst.msk [vmem:[#allocation4 + $0x1d0] sm:$0xff] %vm1853, %v5265
        %5330 = vst.msk [vmem:[#allocation4 + $0x1d8] sm:$0xff] %vm1853, %v5266
        %5331 = vst.msk [vmem:[#allocation4 + $0x1e0] sm:$0xff] %vm1853, %v5267
        %5332 = vst.msk [vmem:[#allocation4 + $0x1e8] sm:$0xff] %vm1853, %v5268
        %5333 = vst.msk [vmem:[#allocation4 + $0x1f0] sm:$0xff] %vm1853, %v5269
        %5334 = vst.msk [vmem:[#allocation4 + $0x1f8] sm:$0xff] %vm1853, %v5270
        %5335 = vst.msk [vmem:[#allocation2] sm:$0xff] %vm4082, %v2994
        %5336 = vst.msk [vmem:[#allocation2 + $0x8] sm:$0xff] %vm4082, %v2995
        %5337 = vst.msk [vmem:[#allocation2 + $0x10] sm:$0xff] %vm4082, %v2996
        %5338 = vst.msk [vmem:[#allocation2 + $0x18] sm:$0xff] %vm4082, %v2997
        %5339 = vst.msk [vmem:[#allocation2 + $0x20] sm:$0xff] %vm4082, %v2998
        %5340 = vst.msk [vmem:[#allocation2 + $0x28] sm:$0xff] %vm4082, %v2999
        %5341 = vst.msk [vmem:[#allocation2 + $0x30] sm:$0xff] %vm4082, %v3000
        %5342 = vst.msk [vmem:[#allocation2 + $0x38] sm:$0xff] %vm4082, %v3001
        %5343 = vst.msk [vmem:[#allocation2 + $0x40] sm:$0xff] %vm4082, %v3002
        %5344 = vst.msk [vmem:[#allocation2 + $0x48] sm:$0xff] %vm4082, %v3003
        %5345 = vst.msk [vmem:[#allocation2 + $0x50] sm:$0xff] %vm4082, %v3004
        %5346 = vst.msk [vmem:[#allocation2 + $0x58] sm:$0xff] %vm4082, %v3005
        %5347 = vst.msk [vmem:[#allocation2 + $0x60] sm:$0xff] %vm4082, %v3006
        %5348 = vst.msk [vmem:[#allocation2 + $0x68] sm:$0xff] %vm4082, %v3007
        %5349 = vst.msk [vmem:[#allocation2 + $0x70] sm:$0xff] %vm4082, %v3008
        %5350 = vst.msk [vmem:[#allocation2 + $0x78] sm:$0xff] %vm4082, %v3009
        %5351 = vst.msk [vmem:[#allocation2 + $0x80] sm:$0xff] %vm4082, %v3010
        %5352 = vst.msk [vmem:[#allocation2 + $0x88] sm:$0xff] %vm4082, %v3011
        %5353 = vst.msk [vmem:[#allocation2 + $0x90] sm:$0xff] %vm4082, %v3012
        %5354 = vst.msk [vmem:[#allocation2 + $0x98] sm:$0xff] %vm4082, %v3013
        %5355 = vst.msk [vmem:[#allocation2 + $0xa0] sm:$0xff] %vm4082, %v3014
        %5356 = vst.msk [vmem:[#allocation2 + $0xa8] sm:$0xff] %vm4082, %v3015
        %5357 = vst.msk [vmem:[#allocation2 + $0xb0] sm:$0xff] %vm4082, %v3016
        %5358 = vst.msk [vmem:[#allocation2 + $0xb8] sm:$0xff] %vm4082, %v3017
        %5359 = vst.msk [vmem:[#allocation2 + $0xc0] sm:$0xff] %vm4082, %v3018
        %5360 = vst.msk [vmem:[#allocation2 + $0xc8] sm:$0xff] %vm4082, %v3019
        %5361 = vst.msk [vmem:[#allocation2 + $0xd0] sm:$0xff] %vm4082, %v3020
        %5362 = vst.msk [vmem:[#allocation2 + $0xd8] sm:$0xff] %vm4082, %v3021
        %5363 = vst.msk [vmem:[#allocation2 + $0xe0] sm:$0xff] %vm4082, %v3022
        %5364 = vst.msk [vmem:[#allocation2 + $0xe8] sm:$0xff] %vm4082, %v3023
        %5365 = vst.msk [vmem:[#allocation2 + $0xf0] sm:$0xff] %vm4082, %v3024
        %5366 = vst.msk [vmem:[#allocation2 + $0xf8] sm:$0xff] %vm4082, %v3025
        %5367 = vst.msk [vmem:[#allocation2 + $0x100] sm:$0xff] %vm4082, %v3026
        %5368 = vst.msk [vmem:[#allocation2 + $0x108] sm:$0xff] %vm4082, %v3027
        %5369 = vst.msk [vmem:[#allocation2 + $0x110] sm:$0xff] %vm4082, %v3028
        %5370 = vst.msk [vmem:[#allocation2 + $0x118] sm:$0xff] %vm4082, %v3029
        %5371 = vst.msk [vmem:[#allocation2 + $0x120] sm:$0xff] %vm4082, %v3030
        %5372 = vst.msk [vmem:[#allocation2 + $0x128] sm:$0xff] %vm4082, %v3031
        %5373 = vst.msk [vmem:[#allocation2 + $0x130] sm:$0xff] %vm4082, %v3032
        %5374 = vst.msk [vmem:[#allocation2 + $0x138] sm:$0xff] %vm4082, %v3033
        %5375 = vst.msk [vmem:[#allocation2 + $0x140] sm:$0xff] %vm4082, %v3034
        %5376 = vst.msk [vmem:[#allocation2 + $0x148] sm:$0xff] %vm4082, %v3035
        %5377 = vst.msk [vmem:[#allocation2 + $0x150] sm:$0xff] %vm4082, %v3036
        %5378 = vst.msk [vmem:[#allocation2 + $0x158] sm:$0xff] %vm4082, %v3037
        %5379 = vst.msk [vmem:[#allocation2 + $0x160] sm:$0xff] %vm4082, %v3038
        %5380 = vst.msk [vmem:[#allocation2 + $0x168] sm:$0xff] %vm4082, %v3039
        %5381 = vst.msk [vmem:[#allocation2 + $0x170] sm:$0xff] %vm4082, %v3040
        %5382 = vst.msk [vmem:[#allocation2 + $0x178] sm:$0xff] %vm4082, %v3041
        %5383 = vst.msk [vmem:[#allocation2 + $0x180] sm:$0xff] %vm4082, %v3042
        %5384 = vst.msk [vmem:[#allocation2 + $0x188] sm:$0xff] %vm4082, %v3043
        %5385 = vst.msk [vmem:[#allocation2 + $0x190] sm:$0xff] %vm4082, %v3044
        %5386 = vst.msk [vmem:[#allocation2 + $0x198] sm:$0xff] %vm4082, %v3045
        %5387 = vst.msk [vmem:[#allocation2 + $0x1a0] sm:$0xff] %vm4082, %v3046
        %5388 = vst.msk [vmem:[#allocation2 + $0x1a8] sm:$0xff] %vm4082, %v3047
        %5389 = vst.msk [vmem:[#allocation2 + $0x1b0] sm:$0xff] %vm4082, %v3048
        %5390 = vst.msk [vmem:[#allocation2 + $0x1b8] sm:$0xff] %vm4082, %v3049
        %5391 = vst.msk [vmem:[#allocation2 + $0x1c0] sm:$0xff] %vm4082, %v3050
        %5392 = vst.msk [vmem:[#allocation2 + $0x1c8] sm:$0xff] %vm4082, %v3051
        %5393 = vst.msk [vmem:[#allocation2 + $0x1d0] sm:$0xff] %vm4082, %v3052
        %5394 = vst.msk [vmem:[#allocation2 + $0x1d8] sm:$0xff] %vm4082, %v3053
        %5395 = vst.msk [vmem:[#allocation2 + $0x1e0] sm:$0xff] %vm4082, %v3054
        %5396 = vst.msk [vmem:[#allocation2 + $0x1e8] sm:$0xff] %vm4082, %v3055
        %5397 = vst.msk [vmem:[#allocation2 + $0x1f0] sm:$0xff] %vm4082, %v3056
        %5398 = vst.msk [vmem:[#allocation2 + $0x1f8] sm:$0xff] %vm4082, %v3057
        %p5399 = scmp.eq.s32.totalorder %s24, 1
        // Predicated region
        $region213: #{tpu_custom_call.1} parent=191 // pred_check
          %p5400 = pneg %p5399
        $region214: #{tpu_custom_call.1} parent=191 // pred_check_branch
          %5402 = sbr.rel (%p5400) target = $region216
        $region215: #{tpu_custom_call.1} parent=191 // pred_region
          %v5403 = vld [vmem:[#allocation3] sm:$0xff]
          %v5404 = vld [vmem:[#allocation3 + $0x8] sm:$0xff]
          %v5405 = vld [vmem:[#allocation3 + $0x10] sm:$0xff]
          %v5406 = vld [vmem:[#allocation3 + $0x18] sm:$0xff]
          %v5407 = vld [vmem:[#allocation3 + $0x20] sm:$0xff]
          %v5408 = vld [vmem:[#allocation3 + $0x28] sm:$0xff]
          %v5409 = vld [vmem:[#allocation3 + $0x30] sm:$0xff]
          %v5410 = vld [vmem:[#allocation3 + $0x38] sm:$0xff]
          %v5411 = vld [vmem:[#allocation3 + $0x40] sm:$0xff]
          %v5412 = vld [vmem:[#allocation3 + $0x48] sm:$0xff]
          %v5413 = vld [vmem:[#allocation3 + $0x50] sm:$0xff]
          %v5414 = vld [vmem:[#allocation3 + $0x58] sm:$0xff]
          %v5415 = vld [vmem:[#allocation3 + $0x60] sm:$0xff]
          %v5416 = vld [vmem:[#allocation3 + $0x68] sm:$0xff]
          %v5417 = vld [vmem:[#allocation3 + $0x70] sm:$0xff]
          %v5418 = vld [vmem:[#allocation3 + $0x78] sm:$0xff]
          %v5419 = vld [vmem:[#allocation3 + $0x80] sm:$0xff]
          %v5420 = vld [vmem:[#allocation3 + $0x88] sm:$0xff]
          %v5421 = vld [vmem:[#allocation3 + $0x90] sm:$0xff]
          %v5422 = vld [vmem:[#allocation3 + $0x98] sm:$0xff]
          %v5423 = vld [vmem:[#allocation3 + $0xa0] sm:$0xff]
          %v5424 = vld [vmem:[#allocation3 + $0xa8] sm:$0xff]
          %v5425 = vld [vmem:[#allocation3 + $0xb0] sm:$0xff]
          %v5426 = vld [vmem:[#allocation3 + $0xb8] sm:$0xff]
          %v5427 = vld [vmem:[#allocation3 + $0xc0] sm:$0xff]
          %v5428 = vld [vmem:[#allocation3 + $0xc8] sm:$0xff]
          %v5429 = vld [vmem:[#allocation3 + $0xd0] sm:$0xff]
          %v5430 = vld [vmem:[#allocation3 + $0xd8] sm:$0xff]
          %v5431 = vld [vmem:[#allocation3 + $0xe0] sm:$0xff]
          %v5432 = vld [vmem:[#allocation3 + $0xe8] sm:$0xff]
          %v5433 = vld [vmem:[#allocation3 + $0xf0] sm:$0xff]
          %v5434 = vld [vmem:[#allocation3 + $0xf8] sm:$0xff]
          %v5435 = vld [vmem:[#allocation3 + $0x100] sm:$0xff]
          %v5436 = vld [vmem:[#allocation3 + $0x108] sm:$0xff]
          %v5437 = vld [vmem:[#allocation3 + $0x110] sm:$0xff]
          %v5438 = vld [vmem:[#allocation3 + $0x118] sm:$0xff]
          %v5439 = vld [vmem:[#allocation3 + $0x120] sm:$0xff]
          %v5440 = vld [vmem:[#allocation3 + $0x128] sm:$0xff]
          %v5441 = vld [vmem:[#allocation3 + $0x130] sm:$0xff]
          %v5442 = vld [vmem:[#allocation3 + $0x138] sm:$0xff]
          %v5443 = vld [vmem:[#allocation3 + $0x140] sm:$0xff]
          %v5444 = vld [vmem:[#allocation3 + $0x148] sm:$0xff]
          %v5445 = vld [vmem:[#allocation3 + $0x150] sm:$0xff]
          %v5446 = vld [vmem:[#allocation3 + $0x158] sm:$0xff]
          %v5447 = vld [vmem:[#allocation3 + $0x160] sm:$0xff]
          %v5448 = vld [vmem:[#allocation3 + $0x168] sm:$0xff]
          %v5449 = vld [vmem:[#allocation3 + $0x170] sm:$0xff]
          %v5450 = vld [vmem:[#allocation3 + $0x178] sm:$0xff]
          %v5451 = vld [vmem:[#allocation3 + $0x180] sm:$0xff]
          %v5452 = vld [vmem:[#allocation3 + $0x188] sm:$0xff]
          %v5453 = vld [vmem:[#allocation3 + $0x190] sm:$0xff]
          %v5454 = vld [vmem:[#allocation3 + $0x198] sm:$0xff]
          %v5455 = vld [vmem:[#allocation3 + $0x1a0] sm:$0xff]
          %v5456 = vld [vmem:[#allocation3 + $0x1a8] sm:$0xff]
          %v5457 = vld [vmem:[#allocation3 + $0x1b0] sm:$0xff]
          %v5458 = vld [vmem:[#allocation3 + $0x1b8] sm:$0xff]
          %v5459 = vld [vmem:[#allocation3 + $0x1c0] sm:$0xff]
          %v5460 = vld [vmem:[#allocation3 + $0x1c8] sm:$0xff]
          %v5461 = vld [vmem:[#allocation3 + $0x1d0] sm:$0xff]
          %v5462 = vld [vmem:[#allocation3 + $0x1d8] sm:$0xff]
          %v5463 = vld [vmem:[#allocation3 + $0x1e0] sm:$0xff]
          %v5464 = vld [vmem:[#allocation3 + $0x1e8] sm:$0xff]
          %v5465 = vld [vmem:[#allocation3 + $0x1f0] sm:$0xff]
          %v5466 = vld [vmem:[#allocation3 + $0x1f8] sm:$0xff]
          %v5467 = vrcp.pop %v5403
          %v5468 = vrcp.pop %v5404
          %v5469 = vrcp.pop %v5405
          %v5470 = vrcp.pop %v5406
          %v5471 = vrcp.pop %v5407
          %v5472 = vrcp.pop %v5408
          %v5473 = vrcp.pop %v5409
          %v5474 = vrcp.pop %v5410
          %v5475 = vrcp.pop %v5411
          %v5476 = vrcp.pop %v5412
          %v5477 = vrcp.pop %v5413
          %v5478 = vrcp.pop %v5414
          %v5479 = vrcp.pop %v5415
          %v5480 = vrcp.pop %v5416
          %v5481 = vrcp.pop %v5417
          %v5482 = vrcp.pop %v5418
          %v5483 = vrcp.pop %v5419
          %v5484 = vrcp.pop %v5420
          %v5485 = vrcp.pop %v5421
          %v5486 = vrcp.pop %v5422
          %v5487 = vrcp.pop %v5423
          %v5488 = vrcp.pop %v5424
          %v5489 = vrcp.pop %v5425
          %v5490 = vrcp.pop %v5426
          %v5491 = vrcp.pop %v5427
          %v5492 = vrcp.pop %v5428
          %v5493 = vrcp.pop %v5429
          %v5494 = vrcp.pop %v5430
          %v5495 = vrcp.pop %v5431
          %v5496 = vrcp.pop %v5432
          %v5497 = vrcp.pop %v5433
          %v5498 = vrcp.pop %v5434
          %v5499 = vrcp.pop %v5435
          %v5500 = vrcp.pop %v5436
          %v5501 = vrcp.pop %v5437
          %v5502 = vrcp.pop %v5438
          %v5503 = vrcp.pop %v5439
          %v5504 = vrcp.pop %v5440
          %v5505 = vrcp.pop %v5441
          %v5506 = vrcp.pop %v5442
          %v5507 = vrcp.pop %v5443
          %v5508 = vrcp.pop %v5444
          %v5509 = vrcp.pop %v5445
          %v5510 = vrcp.pop %v5446
          %v5511 = vrcp.pop %v5447
          %v5512 = vrcp.pop %v5448
          %v5513 = vrcp.pop %v5449
          %v5514 = vrcp.pop %v5450
          %v5515 = vrcp.pop %v5451
          %v5516 = vrcp.pop %v5452
          %v5517 = vrcp.pop %v5453
          %v5518 = vrcp.pop %v5454
          %v5519 = vrcp.pop %v5455
          %v5520 = vrcp.pop %v5456
          %v5521 = vrcp.pop %v5457
          %v5522 = vrcp.pop %v5458
          %v5523 = vrcp.pop %v5459
          %v5524 = vrcp.pop %v5460
          %v5525 = vrcp.pop %v5461
          %v5526 = vrcp.pop %v5462
          %v5527 = vrcp.pop %v5463
          %v5528 = vrcp.pop %v5464
          %v5529 = vrcp.pop %v5465
          %v5530 = vrcp.pop %v5466
          %v5531 = vld [vmem:[#allocation4] sm:$0xff]
          %v5532 = vld [vmem:[#allocation4 + $0x8] sm:$0xff]
          %v5533 = vld [vmem:[#allocation4 + $0x10] sm:$0xff]
          %v5534 = vld [vmem:[#allocation4 + $0x18] sm:$0xff]
          %v5535 = vld [vmem:[#allocation4 + $0x20] sm:$0xff]
          %v5536 = vld [vmem:[#allocation4 + $0x28] sm:$0xff]
          %v5537 = vld [vmem:[#allocation4 + $0x30] sm:$0xff]
          %v5538 = vld [vmem:[#allocation4 + $0x38] sm:$0xff]
          %v5539 = vld [vmem:[#allocation4 + $0x40] sm:$0xff]
          %v5540 = vld [vmem:[#allocation4 + $0x48] sm:$0xff]
          %v5541 = vld [vmem:[#allocation4 + $0x50] sm:$0xff]
          %v5542 = vld [vmem:[#allocation4 + $0x58] sm:$0xff]
          %v5543 = vld [vmem:[#allocation4 + $0x60] sm:$0xff]
          %v5544 = vld [vmem:[#allocation4 + $0x68] sm:$0xff]
          %v5545 = vld [vmem:[#allocation4 + $0x70] sm:$0xff]
          %v5546 = vld [vmem:[#allocation4 + $0x78] sm:$0xff]
          %5548 = vset.pattern.permute.xlu0 0
          %5549 = vperm.xlu0 %5548, %v5467
          %v5550 = vpop.permute.xlu0 %5549
          %5553 = vset.pattern.permute.xlu0 0
          %5554 = vperm.xlu0 %5553, %v5468
          %v5555 = vpop.permute.xlu0 %5554
          %5558 = vset.pattern.permute.xlu0 0
          %5559 = vperm.xlu0 %5558, %v5469
          %v5560 = vpop.permute.xlu0 %5559
          %5563 = vset.pattern.permute.xlu0 0
          %5564 = vperm.xlu0 %5563, %v5470
          %v5565 = vpop.permute.xlu0 %5564
          %5568 = vset.pattern.permute.xlu0 0
          %5569 = vperm.xlu0 %5568, %v5471
          %v5570 = vpop.permute.xlu0 %5569
          %5573 = vset.pattern.permute.xlu0 0
          %5574 = vperm.xlu0 %5573, %v5472
          %v5575 = vpop.permute.xlu0 %5574
          %5578 = vset.pattern.permute.xlu0 0
          %5579 = vperm.xlu0 %5578, %v5473
          %v5580 = vpop.permute.xlu0 %5579
          %5583 = vset.pattern.permute.xlu0 0
          %5584 = vperm.xlu0 %5583, %v5474
          %v5585 = vpop.permute.xlu0 %5584
          %5588 = vset.pattern.permute.xlu0 0
          %5589 = vperm.xlu0 %5588, %v5475
          %v5590 = vpop.permute.xlu0 %5589
          %5593 = vset.pattern.permute.xlu0 0
          %5594 = vperm.xlu0 %5593, %v5476
          %v5595 = vpop.permute.xlu0 %5594
          %5598 = vset.pattern.permute.xlu0 0
          %5599 = vperm.xlu0 %5598, %v5477
          %v5600 = vpop.permute.xlu0 %5599
          %5603 = vset.pattern.permute.xlu0 0
          %5604 = vperm.xlu0 %5603, %v5478
          %v5605 = vpop.permute.xlu0 %5604
          %5608 = vset.pattern.permute.xlu0 0
          %5609 = vperm.xlu0 %5608, %v5479
          %v5610 = vpop.permute.xlu0 %5609
          %5613 = vset.pattern.permute.xlu0 0
          %5614 = vperm.xlu0 %5613, %v5480
          %v5615 = vpop.permute.xlu0 %5614
          %5618 = vset.pattern.permute.xlu0 0
          %5619 = vperm.xlu0 %5618, %v5481
          %v5620 = vpop.permute.xlu0 %5619
          %5623 = vset.pattern.permute.xlu0 0
          %5624 = vperm.xlu0 %5623, %v5482
          %v5625 = vpop.permute.xlu0 %5624
          %v5627 = vmul.f32 %v5531, %v5550
          %v5628 = vmul.f32 %v5532, %v5555
          %v5629 = vmul.f32 %v5533, %v5560
          %v5630 = vmul.f32 %v5534, %v5565
          %v5631 = vmul.f32 %v5535, %v5570
          %v5632 = vmul.f32 %v5536, %v5575
          %v5633 = vmul.f32 %v5537, %v5580
          %v5634 = vmul.f32 %v5538, %v5585
          %v5635 = vmul.f32 %v5539, %v5590
          %v5636 = vmul.f32 %v5540, %v5595
          %v5637 = vmul.f32 %v5541, %v5600
          %v5638 = vmul.f32 %v5542, %v5605
          %v5639 = vmul.f32 %v5543, %v5610
          %v5640 = vmul.f32 %v5544, %v5615
          %v5641 = vmul.f32 %v5545, %v5620
          %v5642 = vmul.f32 %v5546, %v5625
          %5643 = vst.msk [vmem:[#allocation5] sm:$0xff] %vm1853, %v5627
          %5644 = vst.msk [vmem:[#allocation5 + $0x8] sm:$0xff] %vm1853, %v5628
          %5645 = vst.msk [vmem:[#allocation5 + $0x10] sm:$0xff] %vm1853, %v5629
          %5646 = vst.msk [vmem:[#allocation5 + $0x18] sm:$0xff] %vm1853, %v5630
          %5647 = vst.msk [vmem:[#allocation5 + $0x20] sm:$0xff] %vm1853, %v5631
          %5648 = vst.msk [vmem:[#allocation5 + $0x28] sm:$0xff] %vm1853, %v5632
          %5649 = vst.msk [vmem:[#allocation5 + $0x30] sm:$0xff] %vm1853, %v5633
          %5650 = vst.msk [vmem:[#allocation5 + $0x38] sm:$0xff] %vm1853, %v5634
          %5651 = vst.msk [vmem:[#allocation5 + $0x40] sm:$0xff] %vm1853, %v5635
          %5652 = vst.msk [vmem:[#allocation5 + $0x48] sm:$0xff] %vm1853, %v5636
          %5653 = vst.msk [vmem:[#allocation5 + $0x50] sm:$0xff] %vm1853, %v5637
          %5654 = vst.msk [vmem:[#allocation5 + $0x58] sm:$0xff] %vm1853, %v5638
          %5655 = vst.msk [vmem:[#allocation5 + $0x60] sm:$0xff] %vm1853, %v5639
          %5656 = vst.msk [vmem:[#allocation5 + $0x68] sm:$0xff] %vm1853, %v5640
          %5657 = vst.msk [vmem:[#allocation5 + $0x70] sm:$0xff] %vm1853, %v5641
          %5658 = vst.msk [vmem:[#allocation5 + $0x78] sm:$0xff] %vm1853, %v5642
          %s5659 = scalar_lea.vmem [#allocation4], 128
          %v5660 = vld [vmem:[%s5659] sm:$0xff]
          %v5661 = vld [vmem:[%s5659 + $0x8] sm:$0xff]
          %v5662 = vld [vmem:[%s5659 + $0x10] sm:$0xff]
          %v5663 = vld [vmem:[%s5659 + $0x18] sm:$0xff]
          %v5664 = vld [vmem:[%s5659 + $0x20] sm:$0xff]
          %v5665 = vld [vmem:[%s5659 + $0x28] sm:$0xff]
          %v5666 = vld [vmem:[%s5659 + $0x30] sm:$0xff]
          %v5667 = vld [vmem:[%s5659 + $0x38] sm:$0xff]
          %v5668 = vld [vmem:[%s5659 + $0x40] sm:$0xff]
          %v5669 = vld [vmem:[%s5659 + $0x48] sm:$0xff]
          %v5670 = vld [vmem:[%s5659 + $0x50] sm:$0xff]
          %v5671 = vld [vmem:[%s5659 + $0x58] sm:$0xff]
          %v5672 = vld [vmem:[%s5659 + $0x60] sm:$0xff]
          %v5673 = vld [vmem:[%s5659 + $0x68] sm:$0xff]
          %v5674 = vld [vmem:[%s5659 + $0x70] sm:$0xff]
          %v5675 = vld [vmem:[%s5659 + $0x78] sm:$0xff]
          %5677 = vset.pattern.permute.xlu0 0
          %5678 = vperm.xlu0 %5677, %v5483
          %v5679 = vpop.permute.xlu0 %5678
          %5682 = vset.pattern.permute.xlu0 0
          %5683 = vperm.xlu0 %5682, %v5484
          %v5684 = vpop.permute.xlu0 %5683
          %5687 = vset.pattern.permute.xlu0 0
          %5688 = vperm.xlu0 %5687, %v5485
          %v5689 = vpop.permute.xlu0 %5688
          %5692 = vset.pattern.permute.xlu0 0
          %5693 = vperm.xlu0 %5692, %v5486
          %v5694 = vpop.permute.xlu0 %5693
          %5697 = vset.pattern.permute.xlu0 0
          %5698 = vperm.xlu0 %5697, %v5487
          %v5699 = vpop.permute.xlu0 %5698
          %5702 = vset.pattern.permute.xlu0 0
          %5703 = vperm.xlu0 %5702, %v5488
          %v5704 = vpop.permute.xlu0 %5703
          %5707 = vset.pattern.permute.xlu0 0
          %5708 = vperm.xlu0 %5707, %v5489
          %v5709 = vpop.permute.xlu0 %5708
          %5712 = vset.pattern.permute.xlu0 0
          %5713 = vperm.xlu0 %5712, %v5490
          %v5714 = vpop.permute.xlu0 %5713
          %5717 = vset.pattern.permute.xlu0 0
          %5718 = vperm.xlu0 %5717, %v5491
          %v5719 = vpop.permute.xlu0 %5718
          %5722 = vset.pattern.permute.xlu0 0
          %5723 = vperm.xlu0 %5722, %v5492
          %v5724 = vpop.permute.xlu0 %5723
          %5727 = vset.pattern.permute.xlu0 0
          %5728 = vperm.xlu0 %5727, %v5493
          %v5729 = vpop.permute.xlu0 %5728
          %5732 = vset.pattern.permute.xlu0 0
          %5733 = vperm.xlu0 %5732, %v5494
          %v5734 = vpop.permute.xlu0 %5733
          %5737 = vset.pattern.permute.xlu0 0
          %5738 = vperm.xlu0 %5737, %v5495
          %v5739 = vpop.permute.xlu0 %5738
          %5742 = vset.pattern.permute.xlu0 0
          %5743 = vperm.xlu0 %5742, %v5496
          %v5744 = vpop.permute.xlu0 %5743
          %5747 = vset.pattern.permute.xlu0 0
          %5748 = vperm.xlu0 %5747, %v5497
          %v5749 = vpop.permute.xlu0 %5748
          %5752 = vset.pattern.permute.xlu0 0
          %5753 = vperm.xlu0 %5752, %v5498
          %v5754 = vpop.permute.xlu0 %5753
          %v5756 = vmul.f32 %v5660, %v5679
          %v5757 = vmul.f32 %v5661, %v5684
          %v5758 = vmul.f32 %v5662, %v5689
          %v5759 = vmul.f32 %v5663, %v5694
          %v5760 = vmul.f32 %v5664, %v5699
          %v5761 = vmul.f32 %v5665, %v5704
          %v5762 = vmul.f32 %v5666, %v5709
          %v5763 = vmul.f32 %v5667, %v5714
          %v5764 = vmul.f32 %v5668, %v5719
          %v5765 = vmul.f32 %v5669, %v5724
          %v5766 = vmul.f32 %v5670, %v5729
          %v5767 = vmul.f32 %v5671, %v5734
          %v5768 = vmul.f32 %v5672, %v5739
          %v5769 = vmul.f32 %v5673, %v5744
          %v5770 = vmul.f32 %v5674, %v5749
          %v5771 = vmul.f32 %v5675, %v5754
          %5788 = vrot.lane.b32.xlu0 %v5756, 8
          %v5789 = vpop.permute.xlu0 %5788
          %5790 = vrot.lane.b32.xlu0 %v5757, 8
          %v5791 = vpop.permute.xlu0 %5790
          %5792 = vrot.lane.b32.xlu0 %v5758, 8
          %v5793 = vpop.permute.xlu0 %5792
          %5794 = vrot.lane.b32.xlu0 %v5759, 8
          %v5795 = vpop.permute.xlu0 %5794
          %5796 = vrot.lane.b32.xlu0 %v5760, 8
          %v5797 = vpop.permute.xlu0 %5796
          %5798 = vrot.lane.b32.xlu0 %v5761, 8
          %v5799 = vpop.permute.xlu0 %5798
          %5800 = vrot.lane.b32.xlu0 %v5762, 8
          %v5801 = vpop.permute.xlu0 %5800
          %5802 = vrot.lane.b32.xlu0 %v5763, 8
          %v5803 = vpop.permute.xlu0 %5802
          %5804 = vrot.lane.b32.xlu0 %v5764, 8
          %v5805 = vpop.permute.xlu0 %5804
          %5806 = vrot.lane.b32.xlu0 %v5765, 8
          %v5807 = vpop.permute.xlu0 %5806
          %5808 = vrot.lane.b32.xlu0 %v5766, 8
          %v5809 = vpop.permute.xlu0 %5808
          %5810 = vrot.lane.b32.xlu0 %v5767, 8
          %v5811 = vpop.permute.xlu0 %5810
          %5812 = vrot.lane.b32.xlu0 %v5768, 8
          %v5813 = vpop.permute.xlu0 %5812
          %5814 = vrot.lane.b32.xlu0 %v5769, 8
          %v5815 = vpop.permute.xlu0 %5814
          %5816 = vrot.lane.b32.xlu0 %v5770, 8
          %v5817 = vpop.permute.xlu0 %5816
          %5818 = vrot.lane.b32.xlu0 %v5771, 8
          %v5819 = vpop.permute.xlu0 %5818
          %vm5836 = vcmask 130112
          %5837 = vst.msk [vmem:[#allocation5] sm:$0xff] %vm5836, %v5789
          %5838 = vst.msk [vmem:[#allocation5 + $0x8] sm:$0xff] %vm5836, %v5791
          %5839 = vst.msk [vmem:[#allocation5 + $0x10] sm:$0xff] %vm5836, %v5793
          %5840 = vst.msk [vmem:[#allocation5 + $0x18] sm:$0xff] %vm5836, %v5795
          %5841 = vst.msk [vmem:[#allocation5 + $0x20] sm:$0xff] %vm5836, %v5797
          %5842 = vst.msk [vmem:[#allocation5 + $0x28] sm:$0xff] %vm5836, %v5799
          %5843 = vst.msk [vmem:[#allocation5 + $0x30] sm:$0xff] %vm5836, %v5801
          %5844 = vst.msk [vmem:[#allocation5 + $0x38] sm:$0xff] %vm5836, %v5803
          %5845 = vst.msk [vmem:[#allocation5 + $0x40] sm:$0xff] %vm5836, %v5805
          %5846 = vst.msk [vmem:[#allocation5 + $0x48] sm:$0xff] %vm5836, %v5807
          %5847 = vst.msk [vmem:[#allocation5 + $0x50] sm:$0xff] %vm5836, %v5809
          %5848 = vst.msk [vmem:[#allocation5 + $0x58] sm:$0xff] %vm5836, %v5811
          %5849 = vst.msk [vmem:[#allocation5 + $0x60] sm:$0xff] %vm5836, %v5813
          %5850 = vst.msk [vmem:[#allocation5 + $0x68] sm:$0xff] %vm5836, %v5815
          %5851 = vst.msk [vmem:[#allocation5 + $0x70] sm:$0xff] %vm5836, %v5817
          %5852 = vst.msk [vmem:[#allocation5 + $0x78] sm:$0xff] %vm5836, %v5819
          %s5853 = scalar_lea.vmem [#allocation4], 256
          %v5854 = vld [vmem:[%s5853] sm:$0xff]
          %v5855 = vld [vmem:[%s5853 + $0x8] sm:$0xff]
          %v5856 = vld [vmem:[%s5853 + $0x10] sm:$0xff]
          %v5857 = vld [vmem:[%s5853 + $0x18] sm:$0xff]
          %v5858 = vld [vmem:[%s5853 + $0x20] sm:$0xff]
          %v5859 = vld [vmem:[%s5853 + $0x28] sm:$0xff]
          %v5860 = vld [vmem:[%s5853 + $0x30] sm:$0xff]
          %v5861 = vld [vmem:[%s5853 + $0x38] sm:$0xff]
          %v5862 = vld [vmem:[%s5853 + $0x40] sm:$0xff]
          %v5863 = vld [vmem:[%s5853 + $0x48] sm:$0xff]
          %v5864 = vld [vmem:[%s5853 + $0x50] sm:$0xff]
          %v5865 = vld [vmem:[%s5853 + $0x58] sm:$0xff]
          %v5866 = vld [vmem:[%s5853 + $0x60] sm:$0xff]
          %v5867 = vld [vmem:[%s5853 + $0x68] sm:$0xff]
          %v5868 = vld [vmem:[%s5853 + $0x70] sm:$0xff]
          %v5869 = vld [vmem:[%s5853 + $0x78] sm:$0xff]
          %5871 = vset.pattern.permute.xlu0 0
          %5872 = vperm.xlu0 %5871, %v5499
          %v5873 = vpop.permute.xlu0 %5872
          %5876 = vset.pattern.permute.xlu0 0
          %5877 = vperm.xlu0 %5876, %v5500
          %v5878 = vpop.permute.xlu0 %5877
          %5881 = vset.pattern.permute.xlu0 0
          %5882 = vperm.xlu0 %5881, %v5501
          %v5883 = vpop.permute.xlu0 %5882
          %5886 = vset.pattern.permute.xlu0 0
          %5887 = vperm.xlu0 %5886, %v5502
          %v5888 = vpop.permute.xlu0 %5887
          %5891 = vset.pattern.permute.xlu0 0
          %5892 = vperm.xlu0 %5891, %v5503
          %v5893 = vpop.permute.xlu0 %5892
          %5896 = vset.pattern.permute.xlu0 0
          %5897 = vperm.xlu0 %5896, %v5504
          %v5898 = vpop.permute.xlu0 %5897
          %5901 = vset.pattern.permute.xlu0 0
          %5902 = vperm.xlu0 %5901, %v5505
          %v5903 = vpop.permute.xlu0 %5902
          %5906 = vset.pattern.permute.xlu0 0
          %5907 = vperm.xlu0 %5906, %v5506
          %v5908 = vpop.permute.xlu0 %5907
          %5911 = vset.pattern.permute.xlu0 0
          %5912 = vperm.xlu0 %5911, %v5507
          %v5913 = vpop.permute.xlu0 %5912
          %5916 = vset.pattern.permute.xlu0 0
          %5917 = vperm.xlu0 %5916, %v5508
          %v5918 = vpop.permute.xlu0 %5917
          %5921 = vset.pattern.permute.xlu0 0
          %5922 = vperm.xlu0 %5921, %v5509
          %v5923 = vpop.permute.xlu0 %5922
          %5926 = vset.pattern.permute.xlu0 0
          %5927 = vperm.xlu0 %5926, %v5510
          %v5928 = vpop.permute.xlu0 %5927
          %5931 = vset.pattern.permute.xlu0 0
          %5932 = vperm.xlu0 %5931, %v5511
          %v5933 = vpop.permute.xlu0 %5932
          %5936 = vset.pattern.permute.xlu0 0
          %5937 = vperm.xlu0 %5936, %v5512
          %v5938 = vpop.permute.xlu0 %5937
          %5941 = vset.pattern.permute.xlu0 0
          %5942 = vperm.xlu0 %5941, %v5513
          %v5943 = vpop.permute.xlu0 %5942
          %5946 = vset.pattern.permute.xlu0 0
          %5947 = vperm.xlu0 %5946, %v5514
          %v5948 = vpop.permute.xlu0 %5947
          %v5950 = vmul.f32 %v5854, %v5873
          %v5951 = vmul.f32 %v5855, %v5878
          %v5952 = vmul.f32 %v5856, %v5883
          %v5953 = vmul.f32 %v5857, %v5888
          %v5954 = vmul.f32 %v5858, %v5893
          %v5955 = vmul.f32 %v5859, %v5898
          %v5956 = vmul.f32 %v5860, %v5903
          %v5957 = vmul.f32 %v5861, %v5908
          %v5958 = vmul.f32 %v5862, %v5913
          %v5959 = vmul.f32 %v5863, %v5918
          %v5960 = vmul.f32 %v5864, %v5923
          %v5961 = vmul.f32 %v5865, %v5928
          %v5962 = vmul.f32 %v5866, %v5933
          %v5963 = vmul.f32 %v5867, %v5938
          %v5964 = vmul.f32 %v5868, %v5943
          %v5965 = vmul.f32 %v5869, %v5948
          %5982 = vrot.lane.b32.xlu0 %v5950, 16
          %v5983 = vpop.permute.xlu0 %5982
          %5984 = vrot.lane.b32.xlu0 %v5951, 16
          %v5985 = vpop.permute.xlu0 %5984
          %5986 = vrot.lane.b32.xlu0 %v5952, 16
          %v5987 = vpop.permute.xlu0 %5986
          %5988 = vrot.lane.b32.xlu0 %v5953, 16
          %v5989 = vpop.permute.xlu0 %5988
          %5990 = vrot.lane.b32.xlu0 %v5954, 16
          %v5991 = vpop.permute.xlu0 %5990
          %5992 = vrot.lane.b32.xlu0 %v5955, 16
          %v5993 = vpop.permute.xlu0 %5992
          %5994 = vrot.lane.b32.xlu0 %v5956, 16
          %v5995 = vpop.permute.xlu0 %5994
          %5996 = vrot.lane.b32.xlu0 %v5957, 16
          %v5997 = vpop.permute.xlu0 %5996
          %5998 = vrot.lane.b32.xlu0 %v5958, 16
          %v5999 = vpop.permute.xlu0 %5998
          %6000 = vrot.lane.b32.xlu0 %v5959, 16
          %v6001 = vpop.permute.xlu0 %6000
          %6002 = vrot.lane.b32.xlu0 %v5960, 16
          %v6003 = vpop.permute.xlu0 %6002
          %6004 = vrot.lane.b32.xlu0 %v5961, 16
          %v6005 = vpop.permute.xlu0 %6004
          %6006 = vrot.lane.b32.xlu0 %v5962, 16
          %v6007 = vpop.permute.xlu0 %6006
          %6008 = vrot.lane.b32.xlu0 %v5963, 16
          %v6009 = vpop.permute.xlu0 %6008
          %6010 = vrot.lane.b32.xlu0 %v5964, 16
          %v6011 = vpop.permute.xlu0 %6010
          %6012 = vrot.lane.b32.xlu0 %v5965, 16
          %v6013 = vpop.permute.xlu0 %6012
          %vm6030 = vcmask 195712
          %6031 = vst.msk [vmem:[#allocation5] sm:$0xff] %vm6030, %v5983
          %6032 = vst.msk [vmem:[#allocation5 + $0x8] sm:$0xff] %vm6030, %v5985
          %6033 = vst.msk [vmem:[#allocation5 + $0x10] sm:$0xff] %vm6030, %v5987
          %6034 = vst.msk [vmem:[#allocation5 + $0x18] sm:$0xff] %vm6030, %v5989
          %6035 = vst.msk [vmem:[#allocation5 + $0x20] sm:$0xff] %vm6030, %v5991
          %6036 = vst.msk [vmem:[#allocation5 + $0x28] sm:$0xff] %vm6030, %v5993
          %6037 = vst.msk [vmem:[#allocation5 + $0x30] sm:$0xff] %vm6030, %v5995
          %6038 = vst.msk [vmem:[#allocation5 + $0x38] sm:$0xff] %vm6030, %v5997
          %6039 = vst.msk [vmem:[#allocation5 + $0x40] sm:$0xff] %vm6030, %v5999
          %6040 = vst.msk [vmem:[#allocation5 + $0x48] sm:$0xff] %vm6030, %v6001
          %6041 = vst.msk [vmem:[#allocation5 + $0x50] sm:$0xff] %vm6030, %v6003
          %6042 = vst.msk [vmem:[#allocation5 + $0x58] sm:$0xff] %vm6030, %v6005
          %6043 = vst.msk [vmem:[#allocation5 + $0x60] sm:$0xff] %vm6030, %v6007
          %6044 = vst.msk [vmem:[#allocation5 + $0x68] sm:$0xff] %vm6030, %v6009
          %6045 = vst.msk [vmem:[#allocation5 + $0x70] sm:$0xff] %vm6030, %v6011
          %6046 = vst.msk [vmem:[#allocation5 + $0x78] sm:$0xff] %vm6030, %v6013
          %s6047 = scalar_lea.vmem [#allocation4], 384
          %v6048 = vld [vmem:[%s6047] sm:$0xff]
          %v6049 = vld [vmem:[%s6047 + $0x8] sm:$0xff]
          %v6050 = vld [vmem:[%s6047 + $0x10] sm:$0xff]
          %v6051 = vld [vmem:[%s6047 + $0x18] sm:$0xff]
          %v6052 = vld [vmem:[%s6047 + $0x20] sm:$0xff]
          %v6053 = vld [vmem:[%s6047 + $0x28] sm:$0xff]
          %v6054 = vld [vmem:[%s6047 + $0x30] sm:$0xff]
          %v6055 = vld [vmem:[%s6047 + $0x38] sm:$0xff]
          %v6056 = vld [vmem:[%s6047 + $0x40] sm:$0xff]
          %v6057 = vld [vmem:[%s6047 + $0x48] sm:$0xff]
          %v6058 = vld [vmem:[%s6047 + $0x50] sm:$0xff]
          %v6059 = vld [vmem:[%s6047 + $0x58] sm:$0xff]
          %v6060 = vld [vmem:[%s6047 + $0x60] sm:$0xff]
          %v6061 = vld [vmem:[%s6047 + $0x68] sm:$0xff]
          %v6062 = vld [vmem:[%s6047 + $0x70] sm:$0xff]
          %v6063 = vld [vmem:[%s6047 + $0x78] sm:$0xff]
          %6065 = vset.pattern.permute.xlu0 0
          %6066 = vperm.xlu0 %6065, %v5515
          %v6067 = vpop.permute.xlu0 %6066
          %6070 = vset.pattern.permute.xlu0 0
          %6071 = vperm.xlu0 %6070, %v5516
          %v6072 = vpop.permute.xlu0 %6071
          %6075 = vset.pattern.permute.xlu0 0
          %6076 = vperm.xlu0 %6075, %v5517
          %v6077 = vpop.permute.xlu0 %6076
          %6080 = vset.pattern.permute.xlu0 0
          %6081 = vperm.xlu0 %6080, %v5518
          %v6082 = vpop.permute.xlu0 %6081
          %6085 = vset.pattern.permute.xlu0 0
          %6086 = vperm.xlu0 %6085, %v5519
          %v6087 = vpop.permute.xlu0 %6086
          %6090 = vset.pattern.permute.xlu0 0
          %6091 = vperm.xlu0 %6090, %v5520
          %v6092 = vpop.permute.xlu0 %6091
          %6095 = vset.pattern.permute.xlu0 0
          %6096 = vperm.xlu0 %6095, %v5521
          %v6097 = vpop.permute.xlu0 %6096
          %6100 = vset.pattern.permute.xlu0 0
          %6101 = vperm.xlu0 %6100, %v5522
          %v6102 = vpop.permute.xlu0 %6101
          %6105 = vset.pattern.permute.xlu0 0
          %6106 = vperm.xlu0 %6105, %v5523
          %v6107 = vpop.permute.xlu0 %6106
          %6110 = vset.pattern.permute.xlu0 0
          %6111 = vperm.xlu0 %6110, %v5524
          %v6112 = vpop.permute.xlu0 %6111
          %6115 = vset.pattern.permute.xlu0 0
          %6116 = vperm.xlu0 %6115, %v5525
          %v6117 = vpop.permute.xlu0 %6116
          %6120 = vset.pattern.permute.xlu0 0
          %6121 = vperm.xlu0 %6120, %v5526
          %v6122 = vpop.permute.xlu0 %6121
          %6125 = vset.pattern.permute.xlu0 0
          %6126 = vperm.xlu0 %6125, %v5527
          %v6127 = vpop.permute.xlu0 %6126
          %6130 = vset.pattern.permute.xlu0 0
          %6131 = vperm.xlu0 %6130, %v5528
          %v6132 = vpop.permute.xlu0 %6131
          %6135 = vset.pattern.permute.xlu0 0
          %6136 = vperm.xlu0 %6135, %v5529
          %v6137 = vpop.permute.xlu0 %6136
          %6140 = vset.pattern.permute.xlu0 0
          %6141 = vperm.xlu0 %6140, %v5530
          %v6142 = vpop.permute.xlu0 %6141
          %v6144 = vmul.f32 %v6048, %v6067
          %v6145 = vmul.f32 %v6049, %v6072
          %v6146 = vmul.f32 %v6050, %v6077
          %v6147 = vmul.f32 %v6051, %v6082
          %v6148 = vmul.f32 %v6052, %v6087
          %v6149 = vmul.f32 %v6053, %v6092
          %v6150 = vmul.f32 %v6054, %v6097
          %v6151 = vmul.f32 %v6055, %v6102
          %v6152 = vmul.f32 %v6056, %v6107
          %v6153 = vmul.f32 %v6057, %v6112
          %v6154 = vmul.f32 %v6058, %v6117
          %v6155 = vmul.f32 %v6059, %v6122
          %v6156 = vmul.f32 %v6060, %v6127
          %v6157 = vmul.f32 %v6061, %v6132
          %v6158 = vmul.f32 %v6062, %v6137
          %v6159 = vmul.f32 %v6063, %v6142
          %6176 = vrot.lane.b32.xlu0 %v6144, 24
          %v6177 = vpop.permute.xlu0 %6176
          %6178 = vrot.lane.b32.xlu0 %v6145, 24
          %v6179 = vpop.permute.xlu0 %6178
          %6180 = vrot.lane.b32.xlu0 %v6146, 24
          %v6181 = vpop.permute.xlu0 %6180
          %6182 = vrot.lane.b32.xlu0 %v6147, 24
          %v6183 = vpop.permute.xlu0 %6182
          %6184 = vrot.lane.b32.xlu0 %v6148, 24
          %v6185 = vpop.permute.xlu0 %6184
          %6186 = vrot.lane.b32.xlu0 %v6149, 24
          %v6187 = vpop.permute.xlu0 %6186
          %6188 = vrot.lane.b32.xlu0 %v6150, 24
          %v6189 = vpop.permute.xlu0 %6188
          %6190 = vrot.lane.b32.xlu0 %v6151, 24
          %v6191 = vpop.permute.xlu0 %6190
          %6192 = vrot.lane.b32.xlu0 %v6152, 24
          %v6193 = vpop.permute.xlu0 %6192
          %6194 = vrot.lane.b32.xlu0 %v6153, 24
          %v6195 = vpop.permute.xlu0 %6194
          %6196 = vrot.lane.b32.xlu0 %v6154, 24
          %v6197 = vpop.permute.xlu0 %6196
          %6198 = vrot.lane.b32.xlu0 %v6155, 24
          %v6199 = vpop.permute.xlu0 %6198
          %6200 = vrot.lane.b32.xlu0 %v6156, 24
          %v6201 = vpop.permute.xlu0 %6200
          %6202 = vrot.lane.b32.xlu0 %v6157, 24
          %v6203 = vpop.permute.xlu0 %6202
          %6204 = vrot.lane.b32.xlu0 %v6158, 24
          %v6205 = vpop.permute.xlu0 %6204
          %6206 = vrot.lane.b32.xlu0 %v6159, 24
          %v6207 = vpop.permute.xlu0 %6206
          %vm6224 = vcmask 261312
          %6225 = vst.msk [vmem:[#allocation5] sm:$0xff] %vm6224, %v6177
          %6226 = vst.msk [vmem:[#allocation5 + $0x8] sm:$0xff] %vm6224, %v6179
          %6227 = vst.msk [vmem:[#allocation5 + $0x10] sm:$0xff] %vm6224, %v6181
          %6228 = vst.msk [vmem:[#allocation5 + $0x18] sm:$0xff] %vm6224, %v6183
          %6229 = vst.msk [vmem:[#allocation5 + $0x20] sm:$0xff] %vm6224, %v6185
          %6230 = vst.msk [vmem:[#allocation5 + $0x28] sm:$0xff] %vm6224, %v6187
          %6231 = vst.msk [vmem:[#allocation5 + $0x30] sm:$0xff] %vm6224, %v6189
          %6232 = vst.msk [vmem:[#allocation5 + $0x38] sm:$0xff] %vm6224, %v6191
          %6233 = vst.msk [vmem:[#allocation5 + $0x40] sm:$0xff] %vm6224, %v6193
          %6234 = vst.msk [vmem:[#allocation5 + $0x48] sm:$0xff] %vm6224, %v6195
          %6235 = vst.msk [vmem:[#allocation5 + $0x50] sm:$0xff] %vm6224, %v6197
          %6236 = vst.msk [vmem:[#allocation5 + $0x58] sm:$0xff] %vm6224, %v6199
          %6237 = vst.msk [vmem:[#allocation5 + $0x60] sm:$0xff] %vm6224, %v6201
          %6238 = vst.msk [vmem:[#allocation5 + $0x68] sm:$0xff] %vm6224, %v6203
          %6239 = vst.msk [vmem:[#allocation5 + $0x70] sm:$0xff] %vm6224, %v6205
          %6240 = vst.msk [vmem:[#allocation5 + $0x78] sm:$0xff] %vm6224, %v6207
          %v6241 = vld [vmem:[#allocation5] sm:$0xff]
          %v6242 = vld [vmem:[#allocation5 + $0x8] sm:$0xff]
          %v6243 = vld [vmem:[#allocation5 + $0x10] sm:$0xff]
          %v6244 = vld [vmem:[#allocation5 + $0x18] sm:$0xff]
          %v6245 = vld [vmem:[#allocation5 + $0x20] sm:$0xff]
          %v6246 = vld [vmem:[#allocation5 + $0x28] sm:$0xff]
          %v6247 = vld [vmem:[#allocation5 + $0x30] sm:$0xff]
          %v6248 = vld [vmem:[#allocation5 + $0x38] sm:$0xff]
          %v6249 = vld [vmem:[#allocation5 + $0x40] sm:$0xff]
          %v6250 = vld [vmem:[#allocation5 + $0x48] sm:$0xff]
          %v6251 = vld [vmem:[#allocation5 + $0x50] sm:$0xff]
          %v6252 = vld [vmem:[#allocation5 + $0x58] sm:$0xff]
          %v6253 = vld [vmem:[#allocation5 + $0x60] sm:$0xff]
          %v6254 = vld [vmem:[#allocation5 + $0x68] sm:$0xff]
          %v6255 = vld [vmem:[#allocation5 + $0x70] sm:$0xff]
          %v6256 = vld [vmem:[#allocation5 + $0x78] sm:$0xff]
          %v6257 = vpack.c.bf16 %v6242, %v6241
          %v6258 = vpack.c.bf16 %v6244, %v6243
          %v6259 = vpack.c.bf16 %v6246, %v6245
          %v6260 = vpack.c.bf16 %v6248, %v6247
          %v6261 = vpack.c.bf16 %v6250, %v6249
          %v6262 = vpack.c.bf16 %v6252, %v6251
          %v6263 = vpack.c.bf16 %v6254, %v6253
          %v6264 = vpack.c.bf16 %v6256, %v6255
          %v6265 = vld [vmem:[%s4] sm:$0xf]
          %v6266 = vld [vmem:[%s4 + $0x4] sm:$0xf]
          %v6267 = vld [vmem:[%s4 + $0x8] sm:$0xf]
          %v6268 = vld [vmem:[%s4 + $0xc] sm:$0xf]
          %v6269 = vld [vmem:[%s5] sm:$0x1]
          %v6271 = vlaneseq
          %v6272 = vshrl.u32 %v6271, 7
          %v6273 = vsub.s32 0, %v6272
          %v6274 = vrot.slane %v6269, %v6273
          %v6280 = vunpack.c.l.b16 %v6265
          %v6281 = vunpack.c.l.b16 %v6266
          %v6282 = vunpack.c.l.b16 %v6267
          %v6283 = vunpack.c.l.b16 %v6268
          %v6284 = vpack.c.b16 %v6281, %v6280
          %v6285 = vpack.c.b16 %v6283, %v6282
          %vm6288 = vcmask 261120
          %v6290 = vsel %vm6288, %v6257, 0
          %v6293 = vsel %vm6288, %v6258, 0
          %v6296 = vsel %vm6288, %v6259, 0
          %v6299 = vsel %vm6288, %v6260, 0
          %v6302 = vsel %vm6288, %v6261, 0
          %v6305 = vsel %vm6288, %v6262, 0
          %v6308 = vsel %vm6288, %v6263, 0
          %v6311 = vsel %vm6288, %v6264, 0
          %6313 = vmatprep.subr.bf16.mxu0 0
          %6314 = vmatpush1.bf16.msra.mxu0 %v6284
          %6315 = vmatprep.subr.bf16.mxu0 0
          %6316 = vmatpush1.bf16.msra.mxu0 %v6285
          %6317 = vmatprep.subr.bf16.mxu0 0
          %6318 = vmatpush1.bf16.msra.mxu0 0
          %6319 = vmatprep.subr.bf16.mxu0 0
          %6320 = vmatpush1.bf16.msra.mxu0 0
          %6321 = vmatprep.subr.bf16.mxu0 0
          %6322 = vmatpush1.bf16.msra.mxu0 0
          %6323 = vmatprep.subr.bf16.mxu0 0
          %6324 = vmatpush1.bf16.msra.mxu0 0
          %6325 = vmatprep.subr.bf16.mxu0 0
          %6326 = vmatpush1.bf16.msra.mxu0 0
          %6327 = vmatprep.subr.bf16.mxu0 0
          %6328 = vmatpush1.bf16.msra.mxu0 0
          %6329 = vmatprep.subr.bf16.mxu0 0
          %6330 = vmatpush1.bf16.msra.mxu0 0
          %6331 = vmatprep.subr.bf16.mxu0 0
          %6332 = vmatpush1.bf16.msra.mxu0 0
          %6333 = vmatprep.subr.bf16.mxu0 0
          %6334 = vmatpush1.bf16.msra.mxu0 0
          %6335 = vmatprep.subr.bf16.mxu0 0
          %6336 = vmatpush1.bf16.msra.mxu0 0
          %6337 = vmatprep.subr.bf16.mxu0 0
          %6338 = vmatpush1.bf16.msra.mxu0 0
          %6339 = vmatprep.subr.bf16.mxu0 0
          %6340 = vmatpush1.bf16.msra.mxu0 0
          %6341 = vmatprep.subr.bf16.mxu0 0
          %6342 = vmatpush1.bf16.msra.mxu0 0
          %6343 = vmatprep.subr.bf16.mxu0 0
          %6344 = vmatpush1.bf16.msra.mxu0 0
          %6345 = vmatprep.mubr.bf16.mxu0 0
          %6346 = vmatmul.mubr.bf16.gmra.mrb[0].mxu0 %v6290
          %v6347 = vpop.f32.mrb[0].mxu0
          %v6348 = vadd.f32 %v6274, %v6347
          %v6349 = vpop.f32.mrb[0].mxu0
          %v6350 = vpop.f32.mrb[0].mxu0
          %v6351 = vadd.f32 %v6274, %v6350
          %v6352 = vpop.f32.mrb[0].mxu0
          %6353 = vmatprep.mubr.bf16.mxu0 0
          %6354 = vmatmul.mubr.bf16.gmra.mrb[0].mxu0 %v6293
          %v6355 = vpop.f32.mrb[0].mxu0
          %v6356 = vadd.f32 %v6274, %v6355
          %v6357 = vpop.f32.mrb[0].mxu0
          %v6358 = vpop.f32.mrb[0].mxu0
          %v6359 = vadd.f32 %v6274, %v6358
          %v6360 = vpop.f32.mrb[0].mxu0
          %6361 = vmatprep.mubr.bf16.mxu0 0
          %6362 = vmatmul.mubr.bf16.gmra.mrb[0].mxu0 %v6296
          %v6363 = vpop.f32.mrb[0].mxu0
          %v6364 = vadd.f32 %v6274, %v6363
          %v6365 = vpop.f32.mrb[0].mxu0
          %v6366 = vpop.f32.mrb[0].mxu0
          %v6367 = vadd.f32 %v6274, %v6366
          %v6368 = vpop.f32.mrb[0].mxu0
          %6369 = vmatprep.mubr.bf16.mxu0 0
          %6370 = vmatmul.mubr.bf16.gmra.mrb[0].mxu0 %v6299
          %v6371 = vpop.f32.mrb[0].mxu0
          %v6372 = vadd.f32 %v6274, %v6371
          %v6373 = vpop.f32.mrb[0].mxu0
          %v6374 = vpop.f32.mrb[0].mxu0
          %v6375 = vadd.f32 %v6274, %v6374
          %v6376 = vpop.f32.mrb[0].mxu0
          %6377 = vmatprep.mubr.bf16.mxu0 0
          %6378 = vmatmul.mubr.bf16.gmra.mrb[0].mxu0 %v6302
          %v6379 = vpop.f32.mrb[0].mxu0
          %v6380 = vadd.f32 %v6274, %v6379
          %v6381 = vpop.f32.mrb[0].mxu0
          %v6382 = vpop.f32.mrb[0].mxu0
          %v6383 = vadd.f32 %v6274, %v6382
          %v6384 = vpop.f32.mrb[0].mxu0
          %6385 = vmatprep.mubr.bf16.mxu0 0
          %6386 = vmatmul.mubr.bf16.gmra.mrb[0].mxu0 %v6305
          %v6387 = vpop.f32.mrb[0].mxu0
          %v6388 = vadd.f32 %v6274, %v6387
          %v6389 = vpop.f32.mrb[0].mxu0
          %v6390 = vpop.f32.mrb[0].mxu0
          %v6391 = vadd.f32 %v6274, %v6390
          %v6392 = vpop.f32.mrb[0].mxu0
          %6393 = vmatprep.mubr.bf16.mxu0 0
          %6394 = vmatmul.mubr.bf16.gmra.mrb[0].mxu0 %v6308
          %v6395 = vpop.f32.mrb[0].mxu0
          %v6396 = vadd.f32 %v6274, %v6395
          %v6397 = vpop.f32.mrb[0].mxu0
          %v6398 = vpop.f32.mrb[0].mxu0
          %v6399 = vadd.f32 %v6274, %v6398
          %v6400 = vpop.f32.mrb[0].mxu0
          %6401 = vmatprep.mubr.bf16.mxu0 0
          %6402 = vmatmul.mubr.bf16.gmra.mrb[0].mxu0 %v6311
          %v6403 = vpop.f32.mrb[0].mxu0
          %v6404 = vadd.f32 %v6274, %v6403
          %v6405 = vpop.f32.mrb[0].mxu0
          %v6406 = vpop.f32.mrb[0].mxu0
          %v6407 = vadd.f32 %v6274, %v6406
          %v6408 = vpop.f32.mrb[0].mxu0
          %6409 = vdwg.mxu0
          %6410 = vst.msk [vmem:[%s1348] sm:$0xff] %vm6288, %v6348
          %6411 = vst.msk [vmem:[%s1348 + $0x8] sm:$0xff] %vm6288, %v6351
          %6412 = vst.msk [vmem:[%s1348 + $0x10] sm:$0xff] %vm6288, %v6356
          %6413 = vst.msk [vmem:[%s1348 + $0x18] sm:$0xff] %vm6288, %v6359
          %6414 = vst.msk [vmem:[%s1348 + $0x20] sm:$0xff] %vm6288, %v6364
          %6415 = vst.msk [vmem:[%s1348 + $0x28] sm:$0xff] %vm6288, %v6367
          %6416 = vst.msk [vmem:[%s1348 + $0x30] sm:$0xff] %vm6288, %v6372
          %6417 = vst.msk [vmem:[%s1348 + $0x38] sm:$0xff] %vm6288, %v6375
          %6418 = vst.msk [vmem:[%s1348 + $0x40] sm:$0xff] %vm6288, %v6380
          %6419 = vst.msk [vmem:[%s1348 + $0x48] sm:$0xff] %vm6288, %v6383
          %6420 = vst.msk [vmem:[%s1348 + $0x50] sm:$0xff] %vm6288, %v6388
          %6421 = vst.msk [vmem:[%s1348 + $0x58] sm:$0xff] %vm6288, %v6391
          %6422 = vst.msk [vmem:[%s1348 + $0x60] sm:$0xff] %vm6288, %v6396
          %6423 = vst.msk [vmem:[%s1348 + $0x68] sm:$0xff] %vm6288, %v6399
          %6424 = vst.msk [vmem:[%s1348 + $0x70] sm:$0xff] %vm6288, %v6404
          %6425 = vst.msk [vmem:[%s1348 + $0x78] sm:$0xff] %vm6288, %v6407
        $region216: #{tpu_custom_call.1} parent=191 // pred_fallthru
          _
        %s6426 = smul.u32 16, %s23
        %p6427 = scmp.lt.s32.totalorder %s22, 1
        %s6428 = scalar_select %p6427, %s22, 1
        %p6429 = scmp.lt.s32.totalorder %s6426, 31
        %s6430 = scalar_select %p6429, %s6426, 31
        %s6431 = smul.addr %s6428, 32
        %s6432 = sadd.s32 %s6430, %s6431
        %s6433 = smul.addr %s6432, 8
        %s6434 = scalar_lea.vmem %s6, %s6433
        // Predicated region
        $region217: #{tpu_custom_call.1} parent=191 // pred_check
          %p6435 = pneg %p212
        $region218: #{tpu_custom_call.1} parent=191 // pred_check_branch
          %6437 = sbr.rel (%p6435) target = $region220
        $region219: #{tpu_custom_call.1} parent=191 // pred_region
          %s6438 = smul.u32 16, %s23
        $region220: #{tpu_custom_call.1} parent=191 // pred_fallthru
          _
      $region192: #{tpu_custom_call.1} parent=5 // pred_fallthru
        _
      %p6439 = scmp.le.s32.totalorder 2, %s12
      // Predicated region
      $region221: #{tpu_custom_call.1} parent=5 // pred_check
        %p6440 = pneg %p6439
      $region222: #{tpu_custom_call.1} parent=5 // pred_check_branch
        %6442 = sbr.rel (%p6440) target = $region224
      $region223: #{tpu_custom_call.1} parent=5 // pred_region
        %s6443 = ssub.s32 %s12, 2
        // Predicated region
        $region225: #{tpu_custom_call.1} parent=223 // pred_check
          %p6444 = pneg %p218
        $region226: #{tpu_custom_call.1} parent=223 // pred_check_branch
          %6446 = sbr.rel (%p6444) target = $region228
        $region227: #{tpu_custom_call.1} parent=223 // pred_region
          %s6447 = smul.u32 16, %s26
          %p6448 = scmp.lt.s32.totalorder %s25, 1
          %s6449 = scalar_select %p6448, %s25, 1
          %p6450 = scmp.lt.s32.totalorder %s6447, 31
          %s6451 = scalar_select %p6450, %s6447, 31
          %s6452 = smul.addr %s6449, 32
          %s6453 = sadd.s32 %s6451, %s6452
          %s6454 = smul.addr %s6453, 8
          %s6455 = scalar_lea.vmem %s6, %s6454
        $region228: #{tpu_custom_call.1} parent=223 // pred_fallthru
          _
      $region224: #{tpu_custom_call.1} parent=5 // pred_fallthru
        _
    $region6: #{tpu_custom_call.1} parent=1 // loop_footer
      %s16 = sadd.s32 1, %s12
    $region7: #{tpu_custom_call.1} parent=1 // loop_footer_branch
      %11 = sbr.rel target = $region3
    $region8: #{tpu_custom_call.1} parent=1 // loop_exit
      _

</llo_original>
